<compile_context>
chip_gen: v6e
topology: v6e:2x2x1
jax: 0.10.0
libtpu: 0.0.40
codegen_flags: <defaults>
</compile_context>

<pallas_src>
import math
import functools

import numpy as np
import jax
import jax.numpy as jnp
from jax.experimental import pallas as pl
from jax.experimental.pallas import tpu as pltpu


def sdpa_topk_kernel(q_ref, k_ref, v_ref,
                     wq_ref, bq_ref, wk_ref, bk_ref, wv_ref, bv_ref,
                     wa_ref, ba_ref, wo_ref, bo_ref,
                     out_ref, *, h, d_k, d_v, topk):
    B, nq, d_model = q_ref.shape
    nk = k_ref.shape[1]
    R = B * nq            # query rows handled this grid step
    HR = h * R            # head-stacked row count

    # ---- Q/K/V projections as dense (rows, d_model) @ (d_model, h*d) matmuls.
    # 1/sqrt(d_k) is already folded into wq/bq (host side).
    q2d = q_ref[...].reshape(B * nq, d_model)
    k2d = k_ref[...].reshape(B * nk, d_model)
    v2d = v_ref[...].reshape(B * nk, d_model)

    Q = (jnp.dot(q2d, wq_ref[...], preferred_element_type=jnp.float32)
         + bq_ref[...]).reshape(B, nq, h * d_k)
    K = (jnp.dot(k2d, wk_ref[...], preferred_element_type=jnp.float32)
         + bk_ref[...]).reshape(B, nk, h * d_k)
    V = (jnp.dot(v2d, wv_ref[...], preferred_element_type=jnp.float32)
         + bv_ref[...]).reshape(B, nk, h * d_v)

    # ---- per-head scores (clean batched NT matmuls), stacked head-major so the
    # rank / mask / softmax stage below runs once for every head.
    att_heads = []
    for hd in range(h):                               # h is small & static
        qh = Q[:, :, hd * d_k:(hd + 1) * d_k]         # (B, nq, d_k)
        kh = K[:, :, hd * d_k:(hd + 1) * d_k]         # (B, nk, d_k)
        att = jnp.einsum('bqd,bkd->bqk', qh, kh,
                         preferred_element_type=jnp.float32)   # (B, nq, nk)
        att_heads.append(att.reshape(R, nk))
    att_all = jnp.concatenate(att_heads, axis=0)      # (HR, nk), rows = (head, b, q)

    # ---- TOP-K mask in a transposed (nk, HR) layout: the long HR axis sits on
    # the 128-wide lanes. Keep entry j iff fewer than k entries in its row are
    # strictly larger (== torch.topk + scatter(1) for distinct scores; ties at
    # the k-th score all stay unmasked).
    attT = att_all.T                                            # (nk, HR)
    gt = attT[None, :, :] > attT[:, None, :]                    # (nk, nk, HR) bool
    n_greater = jnp.sum(gt.astype(jnp.int32), axis=1)           # (nk, HR)

    col = jax.lax.broadcasted_iota(jnp.int32, (1, HR), 1)       # column -> head = col // R
    thresh = jnp.full((1, HR), topk[h - 1], jnp.int32)
    for hd in range(h - 2, -1, -1):
        thresh = jnp.where(col < (hd + 1) * R, jnp.int32(topk[hd]), thresh)
    attT = jnp.where(n_greater < thresh, attT, 0.0)   # non-top-k scores -> 0 (NOT -inf)

    # ---- numerically stable softmax over nk (zeros participate, as in torch)
    m = jnp.max(attT, axis=0, keepdims=True)
    p = jnp.exp(attT - m)
    p = p * pl.reciprocal(jnp.sum(p, axis=0, keepdims=True))
    # dropout == identity at inference
    p_all = p.T                                       # (HR, nk), rows = (head, b, q)

    # ---- fc_alpha head gate from P column sums (no per-head dyn materialized):
    #   s_h[b] = (sum_q P_h[b]) @ V_h[b];  alpha = [s_0|..|s_{h-1}] @ Wa_red + ba_red
    p_heads, v_heads, s_heads = [], [], []
    for hd in range(h):
        ph = p_all[hd * R:(hd + 1) * R, :].reshape(B, nq, nk)
        vh = V[:, :, hd * d_v:(hd + 1) * d_v]                    # (B, nk, d_v)
        colp = jnp.sum(ph, axis=1)                               # (B, nk)
        s_heads.append(jnp.sum(colp[:, :, None] * vh, axis=1))   # (B, d_v)
        p_heads.append(ph)
        v_heads.append(vh)
    s_flat = jnp.concatenate(s_heads, axis=-1)                   # (B, h*d_v)
    alpha = (jnp.dot(s_flat, wa_ref[...], preferred_element_type=jnp.float32)
             + ba_ref[...])                                      # (B, h)

    am = jnp.max(alpha, axis=-1, keepdims=True)
    ap = jnp.exp(alpha - am)
    soft_alpha = ap * pl.reciprocal(jnp.sum(ap, axis=-1, keepdims=True))   # (B, h)

    # ---- fused, alpha-scaled P @ V: ONE batched matmul with K = h*nk.
    p_cat = jnp.concatenate(
        [p_heads[hd] * soft_alpha[:, hd:hd + 1][:, :, None] for hd in range(h)],
        axis=-1)                                                 # (B, nq, h*nk)
    v_stack = jnp.concatenate(v_heads, axis=1)                   # (B, h*nk, d_v)
    out_v = jnp.einsum('bqm,bmd->bqd', p_cat, v_stack,
                       preferred_element_type=jnp.float32)       # (B, nq, d_v)

    # ---- fc_o, then a lane-dense (B, nq*d_model) store (256-wide, unmasked).
    o = (jnp.dot(out_v.reshape(B * nq, d_v), wo_ref[...],
                 preferred_element_type=jnp.float32)
         + bo_ref[...]).reshape(B, nq, d_model)
    flat = jnp.concatenate([o[:, qq, :] for qq in range(nq)], axis=-1)   # (B, nq*d_model)
    out_ref[...] = flat.astype(out_ref.dtype)


def scaled_dot_product_attention_topk(queries, keys, values, params,
                                      *, h, d_k, d_v, arr, b_blk=None):
    """Pallas forward of ScaledDotProductAttention_TOPK.

    queries: (b_s, nq, d_model); keys/values: (b_s, nk, d_model).
    """
    # TODO(synk): attention_mask / attention_weights (None in this config) are not
    # plumbed into the kernel.
    b_s, nq, d_model = queries.shape
    nk = keys.shape[1]
    assert d_k == d_v, "fc_alpha path requires d_k == d_v (as in the PyTorch module)"

    if b_blk is None:
        # ~256 projection rows per step; cap by a VMEM budget for the rank-count
        # intermediates; keep >=2 grid steps (v7x has 2 TCs on the "parallel"
        # batch axis); prefer an out-block sublane dim that is a multiple of 8.
        cap = max(1, 256 // max(nq, 1))
        rank_bytes_per_b = h * nq * nk * nk * 4 * 3     # bool cube + f32 broadcasts
        cap = min(cap, max(1, (24 * 1024 * 1024) // rank_bytes_per_b))
        if b_s >= 2:
            cap = min(cap, b_s // 2)
        cap = max(1, min(cap, b_s))
        divisors = [d for d in range(1, b_s + 1) if b_s % d == 0 and d <= cap]
        aligned = [d for d in divisors if d % 8 == 0 or d == b_s]
        b_blk = max(aligned) if aligned else max(divisors)
    assert b_s % b_blk == 0

    scale = 1.0 / math.sqrt(d_k)

    # --- host-side (free) weight preprocessing ------------------------------------
    wq = params["wq"] * scale          # fold attention scale into the Q projection
    bq = params["bq"] * scale
    wk, bk = params["wk"], params["bk"]
    wv, bv = params["wv"], params["bv"]
    # fc_alpha: alpha only needs per-head column sums of Wa and a sum over nq, so
    # the full (h*dk, h*dk) weight collapses to (h*d_v, h) and the bias to (1, h).
    wa_red = params["wa"].reshape(h * d_v, h, d_k).sum(axis=-1)          # (h*d_v, h)
    ba_red = (float(nq) * params["ba"].reshape(h, d_k).sum(axis=-1)).reshape(1, h)
    wo, bo = params["wo"], params["bo"]

    kernel = functools.partial(sdpa_topk_kernel, h=h, d_k=d_k, d_v=d_v,
                               topk=tuple(int(x) for x in arr[:h]))

    def full(shape):
        return pl.BlockSpec(shape, lambda b, _n=len(shape): (0,) * _n)

    grid_spec = pltpu.PrefetchScalarGridSpec(
        num_scalar_prefetch=0,
        grid=(b_s // b_blk,),
        in_specs=[
            pl.BlockSpec((b_blk, nq, d_model), lambda b: (b, 0, 0)),   # queries
            pl.BlockSpec((b_blk, nk, d_model), lambda b: (b, 0, 0)),   # keys
            pl.BlockSpec((b_blk, nk, d_model), lambda b: (b, 0, 0)),   # values
            full(wq.shape), full(bq.shape),
            full(wk.shape), full(bk.shape),
            full(wv.shape), full(bv.shape),
            full(wa_red.shape), full(ba_red.shape),
            full(wo.shape), full(bo.shape),
        ],
        out_specs=pl.BlockSpec((b_blk, nq * d_model), lambda b: (b, 0)),
    )

    out_flat = pl.pallas_call(
        kernel,
        out_shape=jax.ShapeDtypeStruct((b_s, nq * d_model), queries.dtype),
        grid_spec=grid_spec,
        compiler_params=pltpu.CompilerParams(
            dimension_semantics=("parallel",),
            vmem_limit_bytes=48 * 1024 * 1024,
        ),
    )(queries, keys, values,
      wq, bq, wk, bk, wv, bv, wa_red, ba_red, wo, bo)

    return out_flat.reshape(b_s, nq, d_model)


def reference_jax(queries, keys, values, params, *, h, d_k, d_v, arr):
    """Pure-JAX mirror of the PyTorch forward, for correctness checking."""
    b_s, nq, d_model = queries.shape
    nk = keys.shape[1]
    q = (queries @ params["wq"] + params["bq"]).reshape(b_s, nq, h, d_k).transpose(0, 2, 1, 3)
    k = (keys @ params["wk"] + params["bk"]).reshape(b_s, nk, h, d_k).transpose(0, 2, 3, 1)
    v = (values @ params["wv"] + params["bv"]).reshape(b_s, nk, h, d_v).transpose(0, 2, 1, 3)
    att = jnp.matmul(q, k) / np.sqrt(d_k)                       # (b, h, nq, nk)
    masks = []
    for i in range(h):
        s = att[:, i]                                           # (b, nq, nk)
        kth = jax.lax.top_k(s, int(arr[i]))[0][..., -1:]
        masks.append((s >= kth).astype(att.dtype))              # == topk scatter mask
    att = att * jnp.stack(masks, axis=1)
    att = jax.nn.softmax(att, axis=-1)
    dyn = jnp.matmul(att, v)                                    # (b, h, nq, d_v)
    out_cat = dyn.transpose(0, 2, 1, 3).reshape(b_s, nq, h * d_v)
    dr = out_cat @ params["wa"] + params["ba"]
    dr = dr.reshape(b_s, nq, h, d_v).transpose(0, 2, 1, 3)      # (b, h, nq, d_v)
    alpha = dr.sum(axis=(2, 3))                                 # (b, h)
    soft_alpha = jax.nn.softmax(alpha, axis=-1)
    out = (dyn * soft_alpha[:, :, None, None]).sum(axis=1)      # (b, nq, d_v)
    return out @ params["wo"] + params["bo"]


def xavier_uniform(key, out_dim, in_dim):
    bound = math.sqrt(6.0 / (in_dim + out_dim))
    return jax.random.uniform(key, (out_dim, in_dim), jnp.float32, -bound, bound)


if __name__ == "__main__":
    d_model, d_k, d_v, h = 32, 8, 8, 4
    arr = (1, 9, 16, 25)            # first h entries of the module's default arr
    b_s, nq, nk = 16, 8, 32         # nk >= arr[h-1] so top-k is well defined

    root = jax.random.PRNGKey(0)
    (k_q, k_k, k_v, k_o, k_a, k_ab,
     k_in1, k_in2, k_in3) = jax.random.split(root, 9)

    # Weights stored in (in, out) layout; biases as (1, out).
    # fc_q/fc_k/fc_v/fc_o: xavier weights + zero bias (as in init_weights);
    # fc_alpha keeps a deterministic non-trivial init (torch leaves it at default).
    params = {
        "wq": xavier_uniform(k_q, h * d_k, d_model).T,
        "bq": jnp.zeros((1, h * d_k), jnp.float32),
        "wk": xavier_uniform(k_k, h * d_k, d_model).T,
        "bk": jnp.zeros((1, h * d_k), jnp.float32),
        "wv": xavier_uniform(k_v, h * d_v, d_model).T,
        "bv": jnp.zeros((1, h * d_v), jnp.float32),
        "wa": xavier_uniform(k_a, h * d_k, h * d_k).T,
        "ba": jax.random.uniform(k_ab, (1, h * d_k), jnp.float32,
                                 -1.0 / math.sqrt(h * d_k), 1.0 / math.sqrt(h * d_k)),
        "wo": xavier_uniform(k_o, d_model, d_v).T,
        "bo": jnp.zeros((1, d_model), jnp.float32),
    }

    queries = jax.random.normal(k_in1, (b_s, nq, d_model), jnp.float32)
    keys = jax.random.normal(k_in2, (b_s, nk, d_model), jnp.float32)
    values = jax.random.normal(k_in3, (b_s, nk, d_model), jnp.float32)

    out = scaled_dot_product_attention_topk(queries, keys, values, params,
                                            h=h, d_k=d_k, d_v=d_v, arr=arr)
    out = jax.block_until_ready(out)

    ref = reference_jax(queries, keys, values, params, h=h, d_k=d_k, d_v=d_v, arr=arr)
    np.testing.assert_allclose(np.asarray(out), np.asarray(ref), rtol=1e-4, atol=1e-4)

    print("KERNEL_OK")
</pallas_src>

<mosaic_0001>
module attributes {stable_mosaic.version = 11 : i64} {
  func.func @sdpa_topk_kernel(%arg0: i32, %arg1: memref<8x8x32xf32, #tpu.memory_space<vmem>>, %arg2: memref<8x32x32xf32, #tpu.memory_space<vmem>>, %arg3: memref<8x32x32xf32, #tpu.memory_space<vmem>>, %arg4: memref<32x32xf32, #tpu.memory_space<vmem>>, %arg5: memref<1x32xf32, #tpu.memory_space<vmem>>, %arg6: memref<32x32xf32, #tpu.memory_space<vmem>>, %arg7: memref<1x32xf32, #tpu.memory_space<vmem>>, %arg8: memref<32x32xf32, #tpu.memory_space<vmem>>, %arg9: memref<1x32xf32, #tpu.memory_space<vmem>>, %arg10: memref<32x4xf32, #tpu.memory_space<vmem>>, %arg11: memref<1x4xf32, #tpu.memory_space<vmem>>, %arg12: memref<8x32xf32, #tpu.memory_space<vmem>>, %arg13: memref<1x32xf32, #tpu.memory_space<vmem>>, %arg14: memref<8x256xf32, #tpu.memory_space<vmem>>) attributes {dimension_semantics = [#tpu.dimension_semantics<parallel>], iteration_bounds = array<i64: 2>, scalar_prefetch = 0 : i64, scratch_operands = 0 : i64, tpu.core_type = #tpu.core_type<tc>, window_params = [{transform_indices = @transform_0, window_bounds = array<i64: 8, 8, 32>}, {transform_indices = @transform_1, window_bounds = array<i64: 8, 32, 32>}, {transform_indices = @transform_2, window_bounds = array<i64: 8, 32, 32>}, {pipeline_mode = #tpu.pipeline_mode<synchronous>, transform_indices = @transform_3, window_bounds = array<i64: 32, 32>}, {pipeline_mode = #tpu.pipeline_mode<synchronous>, transform_indices = @transform_4, window_bounds = array<i64: 1, 32>}, {pipeline_mode = #tpu.pipeline_mode<synchronous>, transform_indices = @transform_5, window_bounds = array<i64: 32, 32>}, {pipeline_mode = #tpu.pipeline_mode<synchronous>, transform_indices = @transform_6, window_bounds = array<i64: 1, 32>}, {pipeline_mode = #tpu.pipeline_mode<synchronous>, transform_indices = @transform_7, window_bounds = array<i64: 32, 32>}, {pipeline_mode = #tpu.pipeline_mode<synchronous>, transform_indices = @transform_8, window_bounds = array<i64: 1, 32>}, {pipeline_mode = #tpu.pipeline_mode<synchronous>, transform_indices = @transform_9, window_bounds = array<i64: 32, 4>}, {pipeline_mode = #tpu.pipeline_mode<synchronous>, transform_indices = @transform_10, window_bounds = array<i64: 1, 4>}, {pipeline_mode = #tpu.pipeline_mode<synchronous>, transform_indices = @transform_11, window_bounds = array<i64: 8, 32>}, {pipeline_mode = #tpu.pipeline_mode<synchronous>, transform_indices = @transform_12, window_bounds = array<i64: 1, 32>}, {transform_indices = @transform_13, window_bounds = array<i64: 8, 256>}]} {
    %c0 = arith.constant 0 : index
    %c0_0 = arith.constant 0 : index
    %c0_1 = arith.constant 0 : index
    %0 = vector.load %arg1[%c0, %c0_0, %c0_1] : memref<8x8x32xf32, #tpu.memory_space<vmem>>, vector<8x8x32xf32>
    %1 = vector.shape_cast %0 : vector<8x8x32xf32> to vector<64x32xf32>
    %c0_2 = arith.constant 0 : index
    %c0_3 = arith.constant 0 : index
    %c0_4 = arith.constant 0 : index
    %2 = vector.load %arg2[%c0_2, %c0_3, %c0_4] : memref<8x32x32xf32, #tpu.memory_space<vmem>>, vector<8x32x32xf32>
    %3 = vector.shape_cast %2 : vector<8x32x32xf32> to vector<256x32xf32>
    %c0_5 = arith.constant 0 : index
    %c0_6 = arith.constant 0 : index
    %c0_7 = arith.constant 0 : index
    %4 = vector.load %arg3[%c0_5, %c0_6, %c0_7] : memref<8x32x32xf32, #tpu.memory_space<vmem>>, vector<8x32x32xf32>
    %5 = vector.shape_cast %4 : vector<8x32x32xf32> to vector<256x32xf32>
    %c0_8 = arith.constant 0 : index
    %c0_9 = arith.constant 0 : index
    %6 = vector.load %arg4[%c0_8, %c0_9] : memref<32x32xf32, #tpu.memory_space<vmem>>, vector<32x32xf32>
    %cst = arith.constant dense<0.000000e+00> : vector<64x32xf32>
    %7 = tpu.matmul %1, %6, %cst {dimension_numbers = #tpu.dot_dimension_numbers<[1], [0], [0], [1], [0, 0, 1, 1], [], []>} : vector<64x32xf32>, vector<32x32xf32>, vector<64x32xf32> -> vector<64x32xf32>
    %c0_10 = arith.constant 0 : index
    %c0_11 = arith.constant 0 : index
    %8 = vector.load %arg5[%c0_10, %c0_11] : memref<1x32xf32, #tpu.memory_space<vmem>>, vector<1x32xf32>
    %9 = vector.broadcast %8 : vector<1x32xf32> to vector<64x32xf32>
    %10 = arith.addf %7, %9 : vector<64x32xf32>
    %11 = vector.shape_cast %10 : vector<64x32xf32> to vector<8x8x32xf32>
    %c0_12 = arith.constant 0 : index
    %c0_13 = arith.constant 0 : index
    %12 = vector.load %arg6[%c0_12, %c0_13] : memref<32x32xf32, #tpu.memory_space<vmem>>, vector<32x32xf32>
    %cst_14 = arith.constant dense<0.000000e+00> : vector<256x32xf32>
    %13 = tpu.matmul %3, %12, %cst_14 {dimension_numbers = #tpu.dot_dimension_numbers<[1], [0], [0], [1], [0, 0, 1, 1], [], []>} : vector<256x32xf32>, vector<32x32xf32>, vector<256x32xf32> -> vector<256x32xf32>
    %c0_15 = arith.constant 0 : index
    %c0_16 = arith.constant 0 : index
    %14 = vector.load %arg7[%c0_15, %c0_16] : memref<1x32xf32, #tpu.memory_space<vmem>>, vector<1x32xf32>
    %15 = vector.broadcast %14 : vector<1x32xf32> to vector<256x32xf32>
    %16 = arith.addf %13, %15 : vector<256x32xf32>
    %17 = vector.shape_cast %16 : vector<256x32xf32> to vector<8x32x32xf32>
    %c0_17 = arith.constant 0 : index
    %c0_18 = arith.constant 0 : index
    %18 = vector.load %arg8[%c0_17, %c0_18] : memref<32x32xf32, #tpu.memory_space<vmem>>, vector<32x32xf32>
    %cst_19 = arith.constant dense<0.000000e+00> : vector<256x32xf32>
    %19 = tpu.matmul %5, %18, %cst_19 {dimension_numbers = #tpu.dot_dimension_numbers<[1], [0], [0], [1], [0, 0, 1, 1], [], []>} : vector<256x32xf32>, vector<32x32xf32>, vector<256x32xf32> -> vector<256x32xf32>
    %c0_20 = arith.constant 0 : index
    %c0_21 = arith.constant 0 : index
    %20 = vector.load %arg9[%c0_20, %c0_21] : memref<1x32xf32, #tpu.memory_space<vmem>>, vector<1x32xf32>
    %21 = vector.broadcast %20 : vector<1x32xf32> to vector<256x32xf32>
    %22 = arith.addf %19, %21 : vector<256x32xf32>
    %23 = vector.shape_cast %22 : vector<256x32xf32> to vector<8x32x32xf32>
    %24 = vector.extract_strided_slice %11 {offsets = [0, 0, 0], sizes = [8, 8, 8], strides = [1, 1, 1]} : vector<8x8x32xf32> to vector<8x8x8xf32>
    %25 = vector.extract_strided_slice %17 {offsets = [0, 0, 0], sizes = [8, 32, 8], strides = [1, 1, 1]} : vector<8x32x32xf32> to vector<8x32x8xf32>
    "tpu.trace_start"() <{level = 10 : i32, message = "bqd,bkd->bqk"}> : () -> ()
    %cst_22 = arith.constant dense<0.000000e+00> : vector<8x8x32xf32>
    %26 = tpu.matmul %24, %25, %cst_22 {dimension_numbers = #tpu.dot_dimension_numbers<[2], [2], [1], [1], [0, 0, 0, 1, 1, 1], [0], [0]>} : vector<8x8x8xf32>, vector<8x32x8xf32>, vector<8x8x32xf32> -> vector<8x8x32xf32>
    "tpu.trace_stop"() : () -> ()
    %27 = vector.shape_cast %26 : vector<8x8x32xf32> to vector<64x32xf32>
    %28 = vector.extract_strided_slice %11 {offsets = [0, 0, 8], sizes = [8, 8, 8], strides = [1, 1, 1]} : vector<8x8x32xf32> to vector<8x8x8xf32>
    %29 = vector.extract_strided_slice %17 {offsets = [0, 0, 8], sizes = [8, 32, 8], strides = [1, 1, 1]} : vector<8x32x32xf32> to vector<8x32x8xf32>
    "tpu.trace_start"() <{level = 10 : i32, message = "bqd,bkd->bqk"}> : () -> ()
    %cst_23 = arith.constant dense<0.000000e+00> : vector<8x8x32xf32>
    %30 = tpu.matmul %28, %29, %cst_23 {dimension_numbers = #tpu.dot_dimension_numbers<[2], [2], [1], [1], [0, 0, 0, 1, 1, 1], [0], [0]>} : vector<8x8x8xf32>, vector<8x32x8xf32>, vector<8x8x32xf32> -> vector<8x8x32xf32>
    "tpu.trace_stop"() : () -> ()
    %31 = vector.shape_cast %30 : vector<8x8x32xf32> to vector<64x32xf32>
    %32 = vector.extract_strided_slice %11 {offsets = [0, 0, 16], sizes = [8, 8, 8], strides = [1, 1, 1]} : vector<8x8x32xf32> to vector<8x8x8xf32>
    %33 = vector.extract_strided_slice %17 {offsets = [0, 0, 16], sizes = [8, 32, 8], strides = [1, 1, 1]} : vector<8x32x32xf32> to vector<8x32x8xf32>
    "tpu.trace_start"() <{level = 10 : i32, message = "bqd,bkd->bqk"}> : () -> ()
    %cst_24 = arith.constant dense<0.000000e+00> : vector<8x8x32xf32>
    %34 = tpu.matmul %32, %33, %cst_24 {dimension_numbers = #tpu.dot_dimension_numbers<[2], [2], [1], [1], [0, 0, 0, 1, 1, 1], [0], [0]>} : vector<8x8x8xf32>, vector<8x32x8xf32>, vector<8x8x32xf32> -> vector<8x8x32xf32>
    "tpu.trace_stop"() : () -> ()
    %35 = vector.shape_cast %34 : vector<8x8x32xf32> to vector<64x32xf32>
    %36 = vector.extract_strided_slice %11 {offsets = [0, 0, 24], sizes = [8, 8, 8], strides = [1, 1, 1]} : vector<8x8x32xf32> to vector<8x8x8xf32>
    %37 = vector.extract_strided_slice %17 {offsets = [0, 0, 24], sizes = [8, 32, 8], strides = [1, 1, 1]} : vector<8x32x32xf32> to vector<8x32x8xf32>
    "tpu.trace_start"() <{level = 10 : i32, message = "bqd,bkd->bqk"}> : () -> ()
    %cst_25 = arith.constant dense<0.000000e+00> : vector<8x8x32xf32>
    %38 = tpu.matmul %36, %37, %cst_25 {dimension_numbers = #tpu.dot_dimension_numbers<[2], [2], [1], [1], [0, 0, 0, 1, 1, 1], [0], [0]>} : vector<8x8x8xf32>, vector<8x32x8xf32>, vector<8x8x32xf32> -> vector<8x8x32xf32>
    "tpu.trace_stop"() : () -> ()
    %39 = vector.shape_cast %38 : vector<8x8x32xf32> to vector<64x32xf32>
    %40 = tpu.concatenate %27, %31, %35, %39 in 0 : vector<64x32xf32>, vector<64x32xf32>, vector<64x32xf32>, vector<64x32xf32> -> vector<256x32xf32>
    %41 = tpu.transpose %40, [1, 0] : vector<256x32xf32> -> vector<32x256xf32>
    %42 = vector.shape_cast %41 : vector<32x256xf32> to vector<1x32x256xf32>
    %43 = vector.shape_cast %41 : vector<32x256xf32> to vector<32x1x256xf32>
    %44 = vector.broadcast %42 : vector<1x32x256xf32> to vector<32x32x256xf32>
    %45 = vector.broadcast %43 : vector<32x1x256xf32> to vector<32x32x256xf32>
    %46 = arith.cmpf ogt, %44, %45 : vector<32x32x256xf32>
    %47 = arith.extui %46 : vector<32x32x256xi1> to vector<32x32x256xi32>
    %cst_26 = arith.constant dense<0> : vector<32x256xi32>
    %48 = vector.multi_reduction <add>, %47, %cst_26 [1] : vector<32x32x256xi32> to vector<32x256xi32>
    %49 = tpu.iota {dimensions = array<i32: 1>} : vector<1x256xi32>
    %c25_i32 = arith.constant 25 : i32
    %50 = vector.broadcast %c25_i32 : i32 to vector<1x256xi32>
    %c192_i32 = arith.constant 192 : i32
    %51 = vector.broadcast %c192_i32 : i32 to vector<1x256xi32>
    %52 = arith.cmpi slt, %49, %51 : vector<1x256xi32>
    %c16_i32 = arith.constant 16 : i32
    %53 = vector.broadcast %c16_i32 : i32 to vector<1x256xi32>
    %54 = arith.select %52, %53, %50 : vector<1x256xi1>, vector<1x256xi32>
    %c128_i32 = arith.constant 128 : i32
    %55 = vector.broadcast %c128_i32 : i32 to vector<1x256xi32>
    %56 = arith.cmpi slt, %49, %55 : vector<1x256xi32>
    %c9_i32 = arith.constant 9 : i32
    %57 = vector.broadcast %c9_i32 : i32 to vector<1x256xi32>
    %58 = arith.select %56, %57, %54 : vector<1x256xi1>, vector<1x256xi32>
    %c64_i32 = arith.constant 64 : i32
    %59 = vector.broadcast %c64_i32 : i32 to vector<1x256xi32>
    %60 = arith.cmpi slt, %49, %59 : vector<1x256xi32>
    %c1_i32 = arith.constant 1 : i32
    %61 = vector.broadcast %c1_i32 : i32 to vector<1x256xi32>
    %62 = arith.select %60, %61, %58 : vector<1x256xi1>, vector<1x256xi32>
    %63 = vector.broadcast %62 : vector<1x256xi32> to vector<32x256xi32>
    %64 = arith.cmpi slt, %48, %63 : vector<32x256xi32>
    %cst_27 = arith.constant 0.000000e+00 : f32
    %65 = vector.broadcast %cst_27 : f32 to vector<32x256xf32>
    %66 = arith.select %64, %41, %65 : vector<32x256xi1>, vector<32x256xf32>
    %cst_28 = arith.constant dense<0xFF800000> : vector<256xf32>
    %67 = vector.multi_reduction <maximumf>, %66, %cst_28 [0] : vector<32x256xf32> to vector<256xf32>
    %68 = vector.shape_cast %67 : vector<256xf32> to vector<1x256xf32>
    %69 = vector.broadcast %68 : vector<1x256xf32> to vector<32x256xf32>
    %70 = arith.subf %66, %69 : vector<32x256xf32>
    %71 = math.exp %70 : vector<32x256xf32>
    %cst_29 = arith.constant dense<0.000000e+00> : vector<256xf32>
    %72 = vector.multi_reduction <add>, %71, %cst_29 [0] : vector<32x256xf32> to vector<256xf32>
    %73 = vector.shape_cast %72 : vector<256xf32> to vector<1x256xf32>
    %74 = tpu.reciprocal %73 : vector<1x256xf32> -> vector<1x256xf32>
    %75 = vector.broadcast %74 : vector<1x256xf32> to vector<32x256xf32>
    %76 = arith.mulf %71, %75 : vector<32x256xf32>
    %77 = tpu.transpose %76, [1, 0] : vector<32x256xf32> -> vector<256x32xf32>
    %78 = vector.extract_strided_slice %77 {offsets = [0, 0], sizes = [64, 32], strides = [1, 1]} : vector<256x32xf32> to vector<64x32xf32>
    %79 = vector.shape_cast %78 : vector<64x32xf32> to vector<8x8x32xf32>
    %80 = vector.extract_strided_slice %23 {offsets = [0, 0, 0], sizes = [8, 32, 8], strides = [1, 1, 1]} : vector<8x32x32xf32> to vector<8x32x8xf32>
    %cst_30 = arith.constant dense<0.000000e+00> : vector<8x32xf32>
    %81 = vector.multi_reduction <add>, %79, %cst_30 [1] : vector<8x8x32xf32> to vector<8x32xf32>
    %82 = vector.shape_cast %81 : vector<8x32xf32> to vector<8x32x1xf32>
    %83 = vector.broadcast %82 : vector<8x32x1xf32> to vector<8x32x8xf32>
    %84 = arith.mulf %83, %80 : vector<8x32x8xf32>
    %cst_31 = arith.constant dense<0.000000e+00> : vector<8x8xf32>
    %85 = vector.multi_reduction <add>, %84, %cst_31 [1] : vector<8x32x8xf32> to vector<8x8xf32>
    %86 = vector.extract_strided_slice %77 {offsets = [64, 0], sizes = [64, 32], strides = [1, 1]} : vector<256x32xf32> to vector<64x32xf32>
    %87 = vector.shape_cast %86 : vector<64x32xf32> to vector<8x8x32xf32>
    %88 = vector.extract_strided_slice %23 {offsets = [0, 0, 8], sizes = [8, 32, 8], strides = [1, 1, 1]} : vector<8x32x32xf32> to vector<8x32x8xf32>
    %cst_32 = arith.constant dense<0.000000e+00> : vector<8x32xf32>
    %89 = vector.multi_reduction <add>, %87, %cst_32 [1] : vector<8x8x32xf32> to vector<8x32xf32>
    %90 = vector.shape_cast %89 : vector<8x32xf32> to vector<8x32x1xf32>
    %91 = vector.broadcast %90 : vector<8x32x1xf32> to vector<8x32x8xf32>
    %92 = arith.mulf %91, %88 : vector<8x32x8xf32>
    %cst_33 = arith.constant dense<0.000000e+00> : vector<8x8xf32>
    %93 = vector.multi_reduction <add>, %92, %cst_33 [1] : vector<8x32x8xf32> to vector<8x8xf32>
    %94 = vector.extract_strided_slice %77 {offsets = [128, 0], sizes = [64, 32], strides = [1, 1]} : vector<256x32xf32> to vector<64x32xf32>
    %95 = vector.shape_cast %94 : vector<64x32xf32> to vector<8x8x32xf32>
    %96 = vector.extract_strided_slice %23 {offsets = [0, 0, 16], sizes = [8, 32, 8], strides = [1, 1, 1]} : vector<8x32x32xf32> to vector<8x32x8xf32>
    %cst_34 = arith.constant dense<0.000000e+00> : vector<8x32xf32>
    %97 = vector.multi_reduction <add>, %95, %cst_34 [1] : vector<8x8x32xf32> to vector<8x32xf32>
    %98 = vector.shape_cast %97 : vector<8x32xf32> to vector<8x32x1xf32>
    %99 = vector.broadcast %98 : vector<8x32x1xf32> to vector<8x32x8xf32>
    %100 = arith.mulf %99, %96 : vector<8x32x8xf32>
    %cst_35 = arith.constant dense<0.000000e+00> : vector<8x8xf32>
    %101 = vector.multi_reduction <add>, %100, %cst_35 [1] : vector<8x32x8xf32> to vector<8x8xf32>
    %102 = vector.extract_strided_slice %77 {offsets = [192, 0], sizes = [64, 32], strides = [1, 1]} : vector<256x32xf32> to vector<64x32xf32>
    %103 = vector.shape_cast %102 : vector<64x32xf32> to vector<8x8x32xf32>
    %104 = vector.extract_strided_slice %23 {offsets = [0, 0, 24], sizes = [8, 32, 8], strides = [1, 1, 1]} : vector<8x32x32xf32> to vector<8x32x8xf32>
    %cst_36 = arith.constant dense<0.000000e+00> : vector<8x32xf32>
    %105 = vector.multi_reduction <add>, %103, %cst_36 [1] : vector<8x8x32xf32> to vector<8x32xf32>
    %106 = vector.shape_cast %105 : vector<8x32xf32> to vector<8x32x1xf32>
    %107 = vector.broadcast %106 : vector<8x32x1xf32> to vector<8x32x8xf32>
    %108 = arith.mulf %107, %104 : vector<8x32x8xf32>
    %cst_37 = arith.constant dense<0.000000e+00> : vector<8x8xf32>
    %109 = vector.multi_reduction <add>, %108, %cst_37 [1] : vector<8x32x8xf32> to vector<8x8xf32>
    %110 = tpu.concatenate %85, %93, %101, %109 in 1 : vector<8x8xf32>, vector<8x8xf32>, vector<8x8xf32>, vector<8x8xf32> -> vector<8x32xf32>
    %c0_38 = arith.constant 0 : index
    %c0_39 = arith.constant 0 : index
    %111 = vector.load %arg10[%c0_38, %c0_39] : memref<32x4xf32, #tpu.memory_space<vmem>>, vector<32x4xf32>
    %cst_40 = arith.constant dense<0.000000e+00> : vector<8x4xf32>
    %112 = tpu.matmul %110, %111, %cst_40 {dimension_numbers = #tpu.dot_dimension_numbers<[1], [0], [0], [1], [0, 0, 1, 1], [], []>} : vector<8x32xf32>, vector<32x4xf32>, vector<8x4xf32> -> vector<8x4xf32>
    %c0_41 = arith.constant 0 : index
    %c0_42 = arith.constant 0 : index
    %113 = vector.load %arg11[%c0_41, %c0_42] : memref<1x4xf32, #tpu.memory_space<vmem>>, vector<1x4xf32>
    %114 = vector.broadcast %113 : vector<1x4xf32> to vector<8x4xf32>
    %115 = arith.addf %112, %114 : vector<8x4xf32>
    %cst_43 = arith.constant dense<0xFF800000> : vector<8xf32>
    %116 = vector.multi_reduction <maximumf>, %115, %cst_43 [1] : vector<8x4xf32> to vector<8xf32>
    %117 = vector.shape_cast %116 : vector<8xf32> to vector<8x1xf32>
    %118 = vector.broadcast %117 : vector<8x1xf32> to vector<8x4xf32>
    %119 = arith.subf %115, %118 : vector<8x4xf32>
    %120 = math.exp %119 : vector<8x4xf32>
    %cst_44 = arith.constant dense<0.000000e+00> : vector<8xf32>
    %121 = vector.multi_reduction <add>, %120, %cst_44 [1] : vector<8x4xf32> to vector<8xf32>
    %122 = vector.shape_cast %121 : vector<8xf32> to vector<8x1xf32>
    %123 = tpu.reciprocal %122 : vector<8x1xf32> -> vector<8x1xf32>
    %124 = vector.broadcast %123 : vector<8x1xf32> to vector<8x4xf32>
    %125 = arith.mulf %120, %124 : vector<8x4xf32>
    %126 = vector.extract_strided_slice %125 {offsets = [0, 0], sizes = [8, 1], strides = [1, 1]} : vector<8x4xf32> to vector<8x1xf32>
    %127 = vector.shape_cast %126 : vector<8x1xf32> to vector<8x1x1xf32>
    %128 = vector.broadcast %127 : vector<8x1x1xf32> to vector<8x8x32xf32>
    %129 = arith.mulf %79, %128 : vector<8x8x32xf32>
    %130 = vector.extract_strided_slice %125 {offsets = [0, 1], sizes = [8, 1], strides = [1, 1]} : vector<8x4xf32> to vector<8x1xf32>
    %131 = vector.shape_cast %130 : vector<8x1xf32> to vector<8x1x1xf32>
    %132 = vector.broadcast %131 : vector<8x1x1xf32> to vector<8x8x32xf32>
    %133 = arith.mulf %87, %132 : vector<8x8x32xf32>
    %134 = vector.extract_strided_slice %125 {offsets = [0, 2], sizes = [8, 1], strides = [1, 1]} : vector<8x4xf32> to vector<8x1xf32>
    %135 = vector.shape_cast %134 : vector<8x1xf32> to vector<8x1x1xf32>
    %136 = vector.broadcast %135 : vector<8x1x1xf32> to vector<8x8x32xf32>
    %137 = arith.mulf %95, %136 : vector<8x8x32xf32>
    %138 = vector.extract_strided_slice %125 {offsets = [0, 3], sizes = [8, 1], strides = [1, 1]} : vector<8x4xf32> to vector<8x1xf32>
    %139 = vector.shape_cast %138 : vector<8x1xf32> to vector<8x1x1xf32>
    %140 = vector.broadcast %139 : vector<8x1x1xf32> to vector<8x8x32xf32>
    %141 = arith.mulf %103, %140 : vector<8x8x32xf32>
    %142 = tpu.concatenate %129, %133, %137, %141 in 2 : vector<8x8x32xf32>, vector<8x8x32xf32>, vector<8x8x32xf32>, vector<8x8x32xf32> -> vector<8x8x128xf32>
    %143 = tpu.concatenate %80, %88, %96, %104 in 1 : vector<8x32x8xf32>, vector<8x32x8xf32>, vector<8x32x8xf32>, vector<8x32x8xf32> -> vector<8x128x8xf32>
    "tpu.trace_start"() <{level = 10 : i32, message = "bqm,bmd->bqd"}> : () -> ()
    %cst_45 = arith.constant dense<0.000000e+00> : vector<8x8x8xf32>
    %144 = tpu.matmul %142, %143, %cst_45 {dimension_numbers = #tpu.dot_dimension_numbers<[2], [1], [1], [2], [0, 0, 0, 1, 1, 2], [0], [0]>} : vector<8x8x128xf32>, vector<8x128x8xf32>, vector<8x8x8xf32> -> vector<8x8x8xf32>
    "tpu.trace_stop"() : () -> ()
    %145 = vector.shape_cast %144 : vector<8x8x8xf32> to vector<64x8xf32>
    %c0_46 = arith.constant 0 : index
    %c0_47 = arith.constant 0 : index
    %146 = vector.load %arg12[%c0_46, %c0_47] : memref<8x32xf32, #tpu.memory_space<vmem>>, vector<8x32xf32>
    %cst_48 = arith.constant dense<0.000000e+00> : vector<64x32xf32>
    %147 = tpu.matmul %145, %146, %cst_48 {dimension_numbers = #tpu.dot_dimension_numbers<[1], [0], [0], [1], [0, 0, 1, 1], [], []>} : vector<64x8xf32>, vector<8x32xf32>, vector<64x32xf32> -> vector<64x32xf32>
    %c0_49 = arith.constant 0 : index
    %c0_50 = arith.constant 0 : index
    %148 = vector.load %arg13[%c0_49, %c0_50] : memref<1x32xf32, #tpu.memory_space<vmem>>, vector<1x32xf32>
    %149 = vector.broadcast %148 : vector<1x32xf32> to vector<64x32xf32>
    %150 = arith.addf %147, %149 : vector<64x32xf32>
    %151 = vector.shape_cast %150 : vector<64x32xf32> to vector<8x8x32xf32>
    %152 = vector.extract_strided_slice %151 {offsets = [0, 0, 0], sizes = [8, 1, 32], strides = [1, 1, 1]} : vector<8x8x32xf32> to vector<8x1x32xf32>
    %153 = vector.shape_cast %152 : vector<8x1x32xf32> to vector<8x32xf32>
    %154 = vector.extract_strided_slice %151 {offsets = [0, 1, 0], sizes = [8, 1, 32], strides = [1, 1, 1]} : vector<8x8x32xf32> to vector<8x1x32xf32>
    %155 = vector.shape_cast %154 : vector<8x1x32xf32> to vector<8x32xf32>
    %156 = vector.extract_strided_slice %151 {offsets = [0, 2, 0], sizes = [8, 1, 32], strides = [1, 1, 1]} : vector<8x8x32xf32> to vector<8x1x32xf32>
    %157 = vector.shape_cast %156 : vector<8x1x32xf32> to vector<8x32xf32>
    %158 = vector.extract_strided_slice %151 {offsets = [0, 3, 0], sizes = [8, 1, 32], strides = [1, 1, 1]} : vector<8x8x32xf32> to vector<8x1x32xf32>
    %159 = vector.shape_cast %158 : vector<8x1x32xf32> to vector<8x32xf32>
    %160 = vector.extract_strided_slice %151 {offsets = [0, 4, 0], sizes = [8, 1, 32], strides = [1, 1, 1]} : vector<8x8x32xf32> to vector<8x1x32xf32>
    %161 = vector.shape_cast %160 : vector<8x1x32xf32> to vector<8x32xf32>
    %162 = vector.extract_strided_slice %151 {offsets = [0, 5, 0], sizes = [8, 1, 32], strides = [1, 1, 1]} : vector<8x8x32xf32> to vector<8x1x32xf32>
    %163 = vector.shape_cast %162 : vector<8x1x32xf32> to vector<8x32xf32>
    %164 = vector.extract_strided_slice %151 {offsets = [0, 6, 0], sizes = [8, 1, 32], strides = [1, 1, 1]} : vector<8x8x32xf32> to vector<8x1x32xf32>
    %165 = vector.shape_cast %164 : vector<8x1x32xf32> to vector<8x32xf32>
    %166 = vector.extract_strided_slice %151 {offsets = [0, 7, 0], sizes = [8, 1, 32], strides = [1, 1, 1]} : vector<8x8x32xf32> to vector<8x1x32xf32>
    %167 = vector.shape_cast %166 : vector<8x1x32xf32> to vector<8x32xf32>
    %168 = tpu.concatenate %153, %155, %157, %159, %161, %163, %165, %167 in 1 : vector<8x32xf32>, vector<8x32xf32>, vector<8x32xf32>, vector<8x32xf32>, vector<8x32xf32>, vector<8x32xf32>, vector<8x32xf32>, vector<8x32xf32> -> vector<8x256xf32>
    %c0_51 = arith.constant 0 : index
    %c0_52 = arith.constant 0 : index
    %169 = vector.load %arg14[%c0_51, %c0_52] : memref<8x256xf32, #tpu.memory_space<vmem>>, vector<8x256xf32>
    tpu.vector_store %arg14[%c0_51, %c0_52], %168 {strides = array<i32>} : memref<8x256xf32, #tpu.memory_space<vmem>>, vector<8x256xf32>,
    return
  }
  func.func @transform_0(%arg0: i32) -> (i32, i32, i32) {
    %c0_i32 = arith.constant 0 : i32
    %c0_i32_0 = arith.constant 0 : i32
    %c0_i32_1 = arith.constant 0 : i32
    return %arg0, %c0_i32, %c0_i32_0 : i32, i32, i32
  }
  func.func @transform_1(%arg0: i32) -> (i32, i32, i32) {
    %c0_i32 = arith.constant 0 : i32
    %c0_i32_0 = arith.constant 0 : i32
    %c0_i32_1 = arith.constant 0 : i32
    return %arg0, %c0_i32, %c0_i32_0 : i32, i32, i32
  }
  func.func @transform_2(%arg0: i32) -> (i32, i32, i32) {
    %c0_i32 = arith.constant 0 : i32
    %c0_i32_0 = arith.constant 0 : i32
    %c0_i32_1 = arith.constant 0 : i32
    return %arg0, %c0_i32, %c0_i32_0 : i32, i32, i32
  }
  func.func @transform_3(%arg0: i32) -> (i32, i32) {
    %c0_i32 = arith.constant 0 : i32
    %c0_i32_0 = arith.constant 0 : i32
    %c0_i32_1 = arith.constant 0 : i32
    return %c0_i32, %c0_i32_0 : i32, i32
  }
  func.func @transform_4(%arg0: i32) -> (i32, i32) {
    %c0_i32 = arith.constant 0 : i32
    %c0_i32_0 = arith.constant 0 : i32
    %c0_i32_1 = arith.constant 0 : i32
    return %c0_i32, %c0_i32_0 : i32, i32
  }
  func.func @transform_5(%arg0: i32) -> (i32, i32) {
    %c0_i32 = arith.constant 0 : i32
    %c0_i32_0 = arith.constant 0 : i32
    %c0_i32_1 = arith.constant 0 : i32
    return %c0_i32, %c0_i32_0 : i32, i32
  }
  func.func @transform_6(%arg0: i32) -> (i32, i32) {
    %c0_i32 = arith.constant 0 : i32
    %c0_i32_0 = arith.constant 0 : i32
    %c0_i32_1 = arith.constant 0 : i32
    return %c0_i32, %c0_i32_0 : i32, i32
  }
  func.func @transform_7(%arg0: i32) -> (i32, i32) {
    %c0_i32 = arith.constant 0 : i32
    %c0_i32_0 = arith.constant 0 : i32
    %c0_i32_1 = arith.constant 0 : i32
    return %c0_i32, %c0_i32_0 : i32, i32
  }
  func.func @transform_8(%arg0: i32) -> (i32, i32) {
    %c0_i32 = arith.constant 0 : i32
    %c0_i32_0 = arith.constant 0 : i32
    %c0_i32_1 = arith.constant 0 : i32
    return %c0_i32, %c0_i32_0 : i32, i32
  }
  func.func @transform_9(%arg0: i32) -> (i32, i32) {
    %c0_i32 = arith.constant 0 : i32
    %c0_i32_0 = arith.constant 0 : i32
    %c0_i32_1 = arith.constant 0 : i32
    return %c0_i32, %c0_i32_0 : i32, i32
  }
  func.func @transform_10(%arg0: i32) -> (i32, i32) {
    %c0_i32 = arith.constant 0 : i32
    %c0_i32_0 = arith.constant 0 : i32
    %c0_i32_1 = arith.constant 0 : i32
    return %c0_i32, %c0_i32_0 : i32, i32
  }
  func.func @transform_11(%arg0: i32) -> (i32, i32) {
    %c0_i32 = arith.constant 0 : i32
    %c0_i32_0 = arith.constant 0 : i32
    %c0_i32_1 = arith.constant 0 : i32
    return %c0_i32, %c0_i32_0 : i32, i32
  }
  func.func @transform_12(%arg0: i32) -> (i32, i32) {
    %c0_i32 = arith.constant 0 : i32
    %c0_i32_0 = arith.constant 0 : i32
    %c0_i32_1 = arith.constant 0 : i32
    return %c0_i32, %c0_i32_0 : i32, i32
  }
  func.func @transform_13(%arg0: i32) -> (i32, i32) {
    %c0_i32 = arith.constant 0 : i32
    %c0_i32_0 = arith.constant 0 : i32
    return %arg0, %c0_i32 : i32, i32
  }
}

</mosaic_0001>

<llo_original>
// kernel: tpu_custom_call.1
$region0: #{tpu_custom_call.1}
  #allocation0 [shape = 'u32[]', space=smem, size = 0x4, offset = 0x4, fixed_abs, tag = 'smem constant byte address 0x4 - core index']
  #allocation1 [shape = 'u32[144,128]{1,0:T(1,128)}', space=vmem, size = 0x12000, scoped, tag = 'internal scratch']
  %s0 = inlined_call_operand.hbm [shape: f32[16,8,32], index: 0, kind: input, shape index: {}]
  %s1 = inlined_call_operand.hbm [shape: f32[16,32,32], index: 1, kind: input, shape index: {}]
  %s2 = inlined_call_operand.hbm [shape: f32[16,32,32], index: 2, kind: input, shape index: {}]
  %s3 = inlined_call_operand.vmem [shape: f32[32,32], index: 3, kind: input, shape index: {}]
  %s4 = inlined_call_operand.vmem [shape: f32[1,32], index: 4, kind: input, shape index: {}]
  %s5 = inlined_call_operand.hbm [shape: f32[32,32], index: 5, kind: input, shape index: {}]
  %s6 = inlined_call_operand.vmem [shape: f32[1,32], index: 6, kind: input, shape index: {}]
  %s7 = inlined_call_operand.hbm [shape: f32[32,32], index: 7, kind: input, shape index: {}]
  %s8 = inlined_call_operand.vmem [shape: f32[1,32], index: 8, kind: input, shape index: {}]
  %s9 = inlined_call_operand.vmem [shape: f32[32,4], index: 9, kind: input, shape index: {}]
  %s10 = inlined_call_operand.vmem [shape: f32[1,4], index: 10, kind: input, shape index: {}]
  %s11 = inlined_call_operand.vmem [shape: f32[8,32], index: 11, kind: input, shape index: {}]
  %s12 = inlined_call_operand.vmem [shape: f32[1,32], index: 12, kind: input, shape index: {}]
  %s13 = inlined_call_operand.hbm [shape: f32[16,256], index: 13, kind: output, shape index: {}]
  %s14 = sld [smem:[#allocation0]]
  $region105: #{tpu_custom_call.1} parent=0
    _
  %s16 = ssub.s32 1, %s14
  %s17 = scalar_select 0, %s16, %s14
  $region1: #{tpu_custom_call.1} parent=0
    #allocation2 [shape = 'u8[65536]{0}', space=vmem, size = 0x10000, scoped, tag = 'input window, operand 0']
    #allocation3 [shape = 's32[2]{0}', space=sflag, size = 0x8, scoped, tag = 'scoped memory for tpu_custom_call.1']
    #allocation4 [shape = 's32[2]{0}', space=sflag, size = 0x8, scoped, tag = 'scoped memory for tpu_custom_call.1']
    #allocation5 [shape = 'u8[262144]{0}', space=vmem, size = 0x40000, scoped, tag = 'input window, operand 1']
    #allocation6 [shape = 's32[2]{0}', space=sflag, size = 0x8, scoped, tag = 'scoped memory for tpu_custom_call.1']
    #allocation7 [shape = 'u8[262144]{0}', space=vmem, size = 0x40000, scoped, tag = 'input window, operand 2']
    #allocation8 [shape = 'u8[16384]{0}', space=vmem, size = 0x4000, scoped, tag = 'input window, operand 5, single buffered']
    #allocation9 [shape = 's32[1]{0}', space=sflag, size = 0x4, scoped, tag = 'scoped memory for tpu_custom_call.1']
    #allocation10 [shape = 'u8[16384]{0}', space=vmem, size = 0x4000, scoped, tag = 'input window, operand 7, single buffered']
    #allocation11 [shape = 'u8[16384]{0}', space=vmem, size = 0x4000, scoped, tag = 'output window, operand 0']
    %18 = vsyncpa [#allocation3], 0
    %s19 = scalar_lea.sflag [#allocation3], 1
    %20 = vsyncpa %s19, 0
    %21 = vsyncpa [#allocation6], 0
    %s22 = scalar_lea.sflag [#allocation6], 1
    %23 = vsyncpa %s22, 0
    %24 = vsyncpa [#allocation9], 0
    %25 = vsyncpa [#allocation4], 0
    %s26 = scalar_lea.sflag [#allocation4], 1
    %27 = vsyncpa %s26, 0
    loop: start=0, step=1, limit=4
    $region2: #{tpu_custom_call.1} parent=1 // loop_pre_header
      _
    $region3: #{tpu_custom_call.1} parent=1 // loop_header
      %s29 = sphi 0, %s33
      %p30 = scmp.ge.s32.totalorder %s29, 4
      %s39 = sphi 0, %s41
      %s42 = sphi 0, %s39
      %s43 = sphi 0, %s42
      %s59 = sphi 0, %s43
      %s65 = sphi 0, %s67
      %s68 = sphi 0, %s65
      %s69 = sphi 0, %s68
      %s85 = sphi 0, %s69
      %s91 = sphi 0, %s93
      %s94 = sphi 0, %s91
      %s95 = sphi 0, %s94
      %s111 = sphi 0, %s95
      %s115 = sphi 0, %s115
      %s117 = sphi 0, %s115
      %s118 = sphi 0, %s117
      %s132 = sphi 0, %s118
      %s136 = sphi 0, %s136
      %s138 = sphi 0, %s136
      %s139 = sphi 0, %s138
      %s153 = sphi 0, %s139
      %s157 = sphi 0, %s157
      %s159 = sphi 0, %s157
      %s160 = sphi 0, %s159
      %s174 = sphi 0, %s160
      %s178 = sphi 0, %s178
      %s180 = sphi 0, %s178
      %s181 = sphi 0, %s180
      %s195 = sphi 0, %s181
      %s199 = sphi 0, %s199
      %s201 = sphi 0, %s199
      %s202 = sphi 0, %s201
      %s216 = sphi 0, %s202
      %s220 = sphi 0, %s220
      %s222 = sphi 0, %s220
      %s223 = sphi 0, %s222
      %s237 = sphi 0, %s223
      %s241 = sphi 0, %s241
      %s243 = sphi 0, %s241
      %s244 = sphi 0, %s243
      %s258 = sphi 0, %s244
      %s262 = sphi 0, %s262
      %s264 = sphi 0, %s262
      %s265 = sphi 0, %s264
      %s279 = sphi 0, %s265
      %s283 = sphi 0, %s283
      %s285 = sphi 0, %s283
      %s286 = sphi 0, %s285
      %s300 = sphi 0, %s286
      %s304 = sphi 0, %s304
      %s306 = sphi 0, %s304
      %s307 = sphi 0, %s306
      %s321 = sphi 0, %s307
      %s327 = sphi 0, %s329
      %s330 = sphi 0, %s327
      %s331 = sphi 0, %s330
      %s347 = sphi 0, %s331
    $region4: #{tpu_custom_call.1} parent=1 // loop_header_branch
      %32 = sbr.rel (%p30) target = $region8
    $region5: #{tpu_custom_call.1} parent=1 // loop_body
      %s34 = ssub.s32 %s29, 1
      %s35 = ssub.s32 %s29, 2
      %s36 = sadd.s32 %s29, 1
      %s37 = ssub.s32 %s29, %s36
      %p38 = scmp.eq.s32.totalorder %s37, 0
      %s40 = sadd.s32 %s39, 1
      %s41 = scalar_select %p38, %s39, %s40
      %p44 = pneg %p38
      %p45 = scmp.eq.s32.totalorder %s29, 1
      %p46 = por %p44, %p45
      %p47 = scmp.ne.s32.totalorder %s39, %s42
      %p48 = scmp.eq.s32.totalorder %s29, 0
      %p49 = por %p47, %p48
      %p50 = scmp.ne.s32.totalorder %s39, %s42
      %p51 = scmp.eq.s32.totalorder %s34, 1
      %p52 = por %p50, %p51
      %p53 = scmp.ne.s32.totalorder %s42, %s43
      %p54 = scmp.eq.s32.totalorder %s34, 0
      %p55 = por %p53, %p54
      %p56 = scmp.ne.s32.totalorder %s42, %s43
      %p57 = scmp.eq.s32.totalorder %s35, 1
      %p58 = por %p56, %p57
      %p60 = scmp.ne.s32.totalorder %s43, %s59
      %p61 = scmp.eq.s32.totalorder %s35, 0
      %p62 = por %p60, %p61
      %s63 = ssub.s32 %s29, %s36
      %p64 = scmp.eq.s32.totalorder %s63, 0
      %s66 = sadd.s32 %s65, 1
      %s67 = scalar_select %p64, %s65, %s66
      %p70 = pneg %p64
      %p71 = scmp.eq.s32.totalorder %s29, 1
      %p72 = por %p70, %p71
      %p73 = scmp.ne.s32.totalorder %s65, %s68
      %p74 = scmp.eq.s32.totalorder %s29, 0
      %p75 = por %p73, %p74
      %p76 = scmp.ne.s32.totalorder %s65, %s68
      %p77 = scmp.eq.s32.totalorder %s34, 1
      %p78 = por %p76, %p77
      %p79 = scmp.ne.s32.totalorder %s68, %s69
      %p80 = scmp.eq.s32.totalorder %s34, 0
      %p81 = por %p79, %p80
      %p82 = scmp.ne.s32.totalorder %s68, %s69
      %p83 = scmp.eq.s32.totalorder %s35, 1
      %p84 = por %p82, %p83
      %p86 = scmp.ne.s32.totalorder %s69, %s85
      %p87 = scmp.eq.s32.totalorder %s35, 0
      %p88 = por %p86, %p87
      %s89 = ssub.s32 %s29, %s36
      %p90 = scmp.eq.s32.totalorder %s89, 0
      %s92 = sadd.s32 %s91, 1
      %s93 = scalar_select %p90, %s91, %s92
      %p96 = pneg %p90
      %p97 = scmp.eq.s32.totalorder %s29, 1
      %p98 = por %p96, %p97
      %p99 = scmp.ne.s32.totalorder %s91, %s94
      %p100 = scmp.eq.s32.totalorder %s29, 0
      %p101 = por %p99, %p100
      %p102 = scmp.ne.s32.totalorder %s91, %s94
      %p103 = scmp.eq.s32.totalorder %s34, 1
      %p104 = por %p102, %p103
      %p105 = scmp.ne.s32.totalorder %s94, %s95
      %p106 = scmp.eq.s32.totalorder %s34, 0
      %p107 = por %p105, %p106
      %p108 = scmp.ne.s32.totalorder %s94, %s95
      %p109 = scmp.eq.s32.totalorder %s35, 1
      %p110 = por %p108, %p109
      %p112 = scmp.ne.s32.totalorder %s95, %s111
      %p113 = scmp.eq.s32.totalorder %s35, 0
      %p114 = por %p112, %p113
      %s116 = sadd.s32 %s115, 1
      %p119 = scmp.eq.s32.totalorder %s29, 1
      %p120 = scmp.ne.s32.totalorder %s115, %s117
      %p121 = scmp.eq.s32.totalorder %s29, 0
      %p122 = por %p120, %p121
      %p123 = scmp.ne.s32.totalorder %s115, %s117
      %p124 = scmp.eq.s32.totalorder %s34, 1
      %p125 = por %p123, %p124
      %p126 = scmp.ne.s32.totalorder %s117, %s118
      %p127 = scmp.eq.s32.totalorder %s34, 0
      %p128 = por %p126, %p127
      %p129 = scmp.ne.s32.totalorder %s117, %s118
      %p130 = scmp.eq.s32.totalorder %s35, 1
      %p131 = por %p129, %p130
      %p133 = scmp.ne.s32.totalorder %s118, %s132
      %p134 = scmp.eq.s32.totalorder %s35, 0
      %p135 = por %p133, %p134
      %s137 = sadd.s32 %s136, 1
      %p140 = scmp.eq.s32.totalorder %s29, 1
      %p141 = scmp.ne.s32.totalorder %s136, %s138
      %p142 = scmp.eq.s32.totalorder %s29, 0
      %p143 = por %p141, %p142
      %p144 = scmp.ne.s32.totalorder %s136, %s138
      %p145 = scmp.eq.s32.totalorder %s34, 1
      %p146 = por %p144, %p145
      %p147 = scmp.ne.s32.totalorder %s138, %s139
      %p148 = scmp.eq.s32.totalorder %s34, 0
      %p149 = por %p147, %p148
      %p150 = scmp.ne.s32.totalorder %s138, %s139
      %p151 = scmp.eq.s32.totalorder %s35, 1
      %p152 = por %p150, %p151
      %p154 = scmp.ne.s32.totalorder %s139, %s153
      %p155 = scmp.eq.s32.totalorder %s35, 0
      %p156 = por %p154, %p155
      %s158 = sadd.s32 %s157, 1
      %p161 = scmp.eq.s32.totalorder %s29, 1
      %p162 = scmp.ne.s32.totalorder %s157, %s159
      %p163 = scmp.eq.s32.totalorder %s29, 0
      %p164 = por %p162, %p163
      %p165 = scmp.ne.s32.totalorder %s157, %s159
      %p166 = scmp.eq.s32.totalorder %s34, 1
      %p167 = por %p165, %p166
      %p168 = scmp.ne.s32.totalorder %s159, %s160
      %p169 = scmp.eq.s32.totalorder %s34, 0
      %p170 = por %p168, %p169
      %p171 = scmp.ne.s32.totalorder %s159, %s160
      %p172 = scmp.eq.s32.totalorder %s35, 1
      %p173 = por %p171, %p172
      %p175 = scmp.ne.s32.totalorder %s160, %s174
      %p176 = scmp.eq.s32.totalorder %s35, 0
      %p177 = por %p175, %p176
      %s179 = sadd.s32 %s178, 1
      %p182 = scmp.eq.s32.totalorder %s29, 1
      %p183 = scmp.ne.s32.totalorder %s178, %s180
      %p184 = scmp.eq.s32.totalorder %s29, 0
      %p185 = por %p183, %p184
      %p186 = scmp.ne.s32.totalorder %s178, %s180
      %p187 = scmp.eq.s32.totalorder %s34, 1
      %p188 = por %p186, %p187
      %p189 = scmp.ne.s32.totalorder %s180, %s181
      %p190 = scmp.eq.s32.totalorder %s34, 0
      %p191 = por %p189, %p190
      %p192 = scmp.ne.s32.totalorder %s180, %s181
      %p193 = scmp.eq.s32.totalorder %s35, 1
      %p194 = por %p192, %p193
      %p196 = scmp.ne.s32.totalorder %s181, %s195
      %p197 = scmp.eq.s32.totalorder %s35, 0
      %p198 = por %p196, %p197
      %s200 = sadd.s32 %s199, 1
      %p203 = scmp.eq.s32.totalorder %s29, 1
      %p204 = scmp.ne.s32.totalorder %s199, %s201
      %p205 = scmp.eq.s32.totalorder %s29, 0
      %p206 = por %p204, %p205
      %p207 = scmp.ne.s32.totalorder %s199, %s201
      %p208 = scmp.eq.s32.totalorder %s34, 1
      %p209 = por %p207, %p208
      %p210 = scmp.ne.s32.totalorder %s201, %s202
      %p211 = scmp.eq.s32.totalorder %s34, 0
      %p212 = por %p210, %p211
      %p213 = scmp.ne.s32.totalorder %s201, %s202
      %p214 = scmp.eq.s32.totalorder %s35, 1
      %p215 = por %p213, %p214
      %p217 = scmp.ne.s32.totalorder %s202, %s216
      %p218 = scmp.eq.s32.totalorder %s35, 0
      %p219 = por %p217, %p218
      %s221 = sadd.s32 %s220, 1
      %p224 = scmp.eq.s32.totalorder %s29, 1
      %p225 = scmp.ne.s32.totalorder %s220, %s222
      %p226 = scmp.eq.s32.totalorder %s29, 0
      %p227 = por %p225, %p226
      %p228 = scmp.ne.s32.totalorder %s220, %s222
      %p229 = scmp.eq.s32.totalorder %s34, 1
      %p230 = por %p228, %p229
      %p231 = scmp.ne.s32.totalorder %s222, %s223
      %p232 = scmp.eq.s32.totalorder %s34, 0
      %p233 = por %p231, %p232
      %p234 = scmp.ne.s32.totalorder %s222, %s223
      %p235 = scmp.eq.s32.totalorder %s35, 1
      %p236 = por %p234, %p235
      %p238 = scmp.ne.s32.totalorder %s223, %s237
      %p239 = scmp.eq.s32.totalorder %s35, 0
      %p240 = por %p238, %p239
      %s242 = sadd.s32 %s241, 1
      %p245 = scmp.eq.s32.totalorder %s29, 1
      %p246 = scmp.ne.s32.totalorder %s241, %s243
      %p247 = scmp.eq.s32.totalorder %s29, 0
      %p248 = por %p246, %p247
      %p249 = scmp.ne.s32.totalorder %s241, %s243
      %p250 = scmp.eq.s32.totalorder %s34, 1
      %p251 = por %p249, %p250
      %p252 = scmp.ne.s32.totalorder %s243, %s244
      %p253 = scmp.eq.s32.totalorder %s34, 0
      %p254 = por %p252, %p253
      %p255 = scmp.ne.s32.totalorder %s243, %s244
      %p256 = scmp.eq.s32.totalorder %s35, 1
      %p257 = por %p255, %p256
      %p259 = scmp.ne.s32.totalorder %s244, %s258
      %p260 = scmp.eq.s32.totalorder %s35, 0
      %p261 = por %p259, %p260
      %s263 = sadd.s32 %s262, 1
      %p266 = scmp.eq.s32.totalorder %s29, 1
      %p267 = scmp.ne.s32.totalorder %s262, %s264
      %p268 = scmp.eq.s32.totalorder %s29, 0
      %p269 = por %p267, %p268
      %p270 = scmp.ne.s32.totalorder %s262, %s264
      %p271 = scmp.eq.s32.totalorder %s34, 1
      %p272 = por %p270, %p271
      %p273 = scmp.ne.s32.totalorder %s264, %s265
      %p274 = scmp.eq.s32.totalorder %s34, 0
      %p275 = por %p273, %p274
      %p276 = scmp.ne.s32.totalorder %s264, %s265
      %p277 = scmp.eq.s32.totalorder %s35, 1
      %p278 = por %p276, %p277
      %p280 = scmp.ne.s32.totalorder %s265, %s279
      %p281 = scmp.eq.s32.totalorder %s35, 0
      %p282 = por %p280, %p281
      %s284 = sadd.s32 %s283, 1
      %p287 = scmp.eq.s32.totalorder %s29, 1
      %p288 = scmp.ne.s32.totalorder %s283, %s285
      %p289 = scmp.eq.s32.totalorder %s29, 0
      %p290 = por %p288, %p289
      %p291 = scmp.ne.s32.totalorder %s283, %s285
      %p292 = scmp.eq.s32.totalorder %s34, 1
      %p293 = por %p291, %p292
      %p294 = scmp.ne.s32.totalorder %s285, %s286
      %p295 = scmp.eq.s32.totalorder %s34, 0
      %p296 = por %p294, %p295
      %p297 = scmp.ne.s32.totalorder %s285, %s286
      %p298 = scmp.eq.s32.totalorder %s35, 1
      %p299 = por %p297, %p298
      %p301 = scmp.ne.s32.totalorder %s286, %s300
      %p302 = scmp.eq.s32.totalorder %s35, 0
      %p303 = por %p301, %p302
      %s305 = sadd.s32 %s304, 1
      %p308 = scmp.eq.s32.totalorder %s29, 1
      %p309 = scmp.ne.s32.totalorder %s304, %s306
      %p310 = scmp.eq.s32.totalorder %s29, 0
      %p311 = por %p309, %p310
      %p312 = scmp.ne.s32.totalorder %s304, %s306
      %p313 = scmp.eq.s32.totalorder %s34, 1
      %p314 = por %p312, %p313
      %p315 = scmp.ne.s32.totalorder %s306, %s307
      %p316 = scmp.eq.s32.totalorder %s34, 0
      %p317 = por %p315, %p316
      %p318 = scmp.ne.s32.totalorder %s306, %s307
      %p319 = scmp.eq.s32.totalorder %s35, 1
      %p320 = por %p318, %p319
      %p322 = scmp.ne.s32.totalorder %s307, %s321
      %p323 = scmp.eq.s32.totalorder %s35, 0
      %p324 = por %p322, %p323
      %s325 = ssub.s32 %s29, %s36
      %p326 = scmp.eq.s32.totalorder %s325, 0
      %s328 = sadd.s32 %s327, 1
      %s329 = scalar_select %p326, %s327, %s328
      %p332 = pneg %p326
      %p333 = scmp.eq.s32.totalorder %s29, 1
      %p334 = por %p332, %p333
      %p335 = scmp.ne.s32.totalorder %s327, %s330
      %p336 = scmp.eq.s32.totalorder %s29, 0
      %p337 = por %p335, %p336
      %p338 = scmp.ne.s32.totalorder %s327, %s330
      %p339 = scmp.eq.s32.totalorder %s34, 1
      %p340 = por %p338, %p339
      %p341 = scmp.ne.s32.totalorder %s330, %s331
      %p342 = scmp.eq.s32.totalorder %s34, 0
      %p343 = por %p341, %p342
      %p344 = scmp.ne.s32.totalorder %s330, %s331
      %p345 = scmp.eq.s32.totalorder %s35, 1
      %p346 = por %p344, %p345
      %p348 = scmp.ne.s32.totalorder %s331, %s347
      %p349 = scmp.eq.s32.totalorder %s35, 0
      %p350 = por %p348, %p349
      %p351 = scmp.le.s32.totalorder 1, %s29
      %p352 = scmp.lt.s32.totalorder %s29, 3
      %p353 = pnand %p351, %p352
      %p354 = pneg %p353
      // Predicated region
      $region9: #{tpu_custom_call.1} parent=5 // pred_check
        _
      $region10: #{tpu_custom_call.1} parent=5 // pred_check_branch
        %356 = sbr.rel (%p353) target = $region12
      $region11: #{tpu_custom_call.1} parent=5 // pred_region
        %s357 = ssub.s32 %s29, 1
        // Predicated region
        $region13: #{tpu_custom_call.1} parent=11 // pred_check
          %p358 = pneg %p128
        $region14: #{tpu_custom_call.1} parent=11 // pred_check_branch
          %360 = sbr.rel (%p358) target = $region16
        $region15: #{tpu_custom_call.1} parent=11 // pred_region
          _
        $region16: #{tpu_custom_call.1} parent=11 // pred_fallthru
          _
        // Predicated region
        $region17: #{tpu_custom_call.1} parent=11 // pred_check
          %p361 = pneg %p149
        $region18: #{tpu_custom_call.1} parent=11 // pred_check_branch
          %363 = sbr.rel (%p361) target = $region20
        $region19: #{tpu_custom_call.1} parent=11 // pred_region
          _
        $region20: #{tpu_custom_call.1} parent=11 // pred_fallthru
          _
        // Predicated region
        $region21: #{tpu_custom_call.1} parent=11 // pred_check
          %p364 = pneg %p170
        $region22: #{tpu_custom_call.1} parent=11 // pred_check_branch
          %366 = sbr.rel (%p364) target = $region24
        $region23: #{tpu_custom_call.1} parent=11 // pred_region
          %s368 = ssub.s32 512, 512
          %369 = vsyncadd [#allocation9], %s368
          %s370 = sshll.u32 [#allocation8], 4
          %s371 = int_to_ptr.vmem [resolvable:$true] %s370
          %376 = dma.hbm_to_vmem [thread:$0]  %s5, 512, %s371, [#allocation9], 128, 128, 8
        $region24: #{tpu_custom_call.1} parent=11 // pred_fallthru
          _
        // Predicated region
        $region25: #{tpu_custom_call.1} parent=11 // pred_check
          %p377 = pneg %p191
        $region26: #{tpu_custom_call.1} parent=11 // pred_check_branch
          %379 = sbr.rel (%p377) target = $region28
        $region27: #{tpu_custom_call.1} parent=11 // pred_region
          _
        $region28: #{tpu_custom_call.1} parent=11 // pred_fallthru
          _
        // Predicated region
        $region29: #{tpu_custom_call.1} parent=11 // pred_check
          %p380 = pneg %p212
        $region30: #{tpu_custom_call.1} parent=11 // pred_check_branch
          %382 = sbr.rel (%p380) target = $region32
        $region31: #{tpu_custom_call.1} parent=11 // pred_region
          %s384 = ssub.s32 512, 512
          %385 = vsyncadd [#allocation9], %s384
          %s386 = sshll.u32 [#allocation10], 4
          %s387 = int_to_ptr.vmem [resolvable:$true] %s386
          %392 = dma.hbm_to_vmem [thread:$0]  %s7, 512, %s387, [#allocation9], 128, 128, 8
        $region32: #{tpu_custom_call.1} parent=11 // pred_fallthru
          _
        // Predicated region
        $region33: #{tpu_custom_call.1} parent=11 // pred_check
          %p393 = pneg %p233
        $region34: #{tpu_custom_call.1} parent=11 // pred_check_branch
          %395 = sbr.rel (%p393) target = $region36
        $region35: #{tpu_custom_call.1} parent=11 // pred_region
          _
        $region36: #{tpu_custom_call.1} parent=11 // pred_fallthru
          _
        // Predicated region
        $region37: #{tpu_custom_call.1} parent=11 // pred_check
          %p396 = pneg %p254
        $region38: #{tpu_custom_call.1} parent=11 // pred_check_branch
          %398 = sbr.rel (%p396) target = $region40
        $region39: #{tpu_custom_call.1} parent=11 // pred_region
          _
        $region40: #{tpu_custom_call.1} parent=11 // pred_fallthru
          _
        // Predicated region
        $region41: #{tpu_custom_call.1} parent=11 // pred_check
          %p399 = pneg %p275
        $region42: #{tpu_custom_call.1} parent=11 // pred_check_branch
          %401 = sbr.rel (%p399) target = $region44
        $region43: #{tpu_custom_call.1} parent=11 // pred_region
          _
        $region44: #{tpu_custom_call.1} parent=11 // pred_fallthru
          _
        // Predicated region
        $region45: #{tpu_custom_call.1} parent=11 // pred_check
          %p402 = pneg %p296
        $region46: #{tpu_custom_call.1} parent=11 // pred_check_branch
          %404 = sbr.rel (%p402) target = $region48
        $region47: #{tpu_custom_call.1} parent=11 // pred_region
          _
        $region48: #{tpu_custom_call.1} parent=11 // pred_fallthru
          _
        // Predicated region
        $region49: #{tpu_custom_call.1} parent=11 // pred_check
          %p405 = pneg %p317
        $region50: #{tpu_custom_call.1} parent=11 // pred_check_branch
          %407 = sbr.rel (%p405) target = $region52
        $region51: #{tpu_custom_call.1} parent=11 // pred_region
          _
        $region52: #{tpu_custom_call.1} parent=11 // pred_fallthru
          _
      $region12: #{tpu_custom_call.1} parent=5 // pred_fallthru
        _
      %p408 = scmp.lt.s32.totalorder %s29, 2
      // Predicated region
      $region53: #{tpu_custom_call.1} parent=5 // pred_check
        %p409 = pneg %p408
      $region54: #{tpu_custom_call.1} parent=5 // pred_check_branch
        %411 = sbr.rel (%p409) target = $region56
      $region55: #{tpu_custom_call.1} parent=5 // pred_region
        // Predicated region
        $region57: #{tpu_custom_call.1} parent=55 // pred_check
          %p412 = pneg %p49
        $region58: #{tpu_custom_call.1} parent=55 // pred_check_branch
          %414 = sbr.rel (%p412) target = $region60
        $region59: #{tpu_custom_call.1} parent=55 // pred_region
          %s415 = sand.u32 %s39, 1
          %s416 = scalar_lea.sflag [#allocation3], %s415
          %s417 = sand.u32 %s39, 1
          %s418 = smul.addr %s417, 64
          %s419 = scalar_lea.vmem [#allocation2], %s418
          %s420 = smul.u32 8, %s29
          %s422 = ssub.s32 1024, 1024
          %423 = vsyncadd %s416, %s422
          %s424 = smul.addr %s420, 128
          %s425 = scalar_lea.hbm %s0, %s424
          %s426 = sshll.u32 %s419, 4
          %s427 = int_to_ptr.vmem [resolvable:$true] %s426
          %432 = dma.hbm_to_vmem [thread:$0]  %s425, 1024, %s427, %s416, 128, 128, 8
        $region60: #{tpu_custom_call.1} parent=55 // pred_fallthru
          _
        // Predicated region
        $region61: #{tpu_custom_call.1} parent=55 // pred_check
          %p433 = pneg %p75
        $region62: #{tpu_custom_call.1} parent=55 // pred_check_branch
          %435 = sbr.rel (%p433) target = $region64
        $region63: #{tpu_custom_call.1} parent=55 // pred_region
          %s436 = sand.u32 %s29, 1
          %s437 = scalar_lea.sflag [#allocation6], %s436
          %s438 = sand.u32 %s65, 1
          %s439 = smul.addr %s438, 256
          %s440 = scalar_lea.vmem [#allocation5], %s439
          %s441 = smul.u32 8, %s29
          %s443 = ssub.s32 4096, 4096
          %444 = vsyncadd %s437, %s443
          %s445 = smul.addr %s441, 4
          %s446 = smul.addr %s445, 128
          %s447 = scalar_lea.hbm %s1, %s446
          %s448 = sshll.u32 %s440, 4
          %s449 = int_to_ptr.vmem [resolvable:$true] %s448
          %454 = dma.hbm_to_vmem [thread:$0]  %s447, 4096, %s449, %s437, 128, 128, 8
        $region64: #{tpu_custom_call.1} parent=55 // pred_fallthru
          _
        // Predicated region
        $region65: #{tpu_custom_call.1} parent=55 // pred_check
          %p455 = pneg %p101
        $region66: #{tpu_custom_call.1} parent=55 // pred_check_branch
          %457 = sbr.rel (%p455) target = $region68
        $region67: #{tpu_custom_call.1} parent=55 // pred_region
          %s458 = sand.u32 %s29, 1
          %s459 = scalar_lea.sflag [#allocation6], %s458
          %s460 = sand.u32 %s91, 1
          %s461 = smul.addr %s460, 256
          %s462 = scalar_lea.vmem [#allocation7], %s461
          %s463 = smul.u32 8, %s29
          %s465 = ssub.s32 4096, 4096
          %466 = vsyncadd %s459, %s465
          %s467 = smul.addr %s463, 4
          %s468 = smul.addr %s467, 128
          %s469 = scalar_lea.hbm %s2, %s468
          %s470 = sshll.u32 %s462, 4
          %s471 = int_to_ptr.vmem [resolvable:$true] %s470
          %476 = dma.hbm_to_vmem [thread:$0]  %s469, 4096, %s471, %s459, 128, 128, 8
        $region68: #{tpu_custom_call.1} parent=55 // pred_fallthru
          _
      $region56: #{tpu_custom_call.1} parent=5 // pred_fallthru
        _
      %p477 = scmp.le.s32.totalorder 1, %s29
      %p478 = scmp.lt.s32.totalorder %s29, 3
      %p479 = pnand %p477, %p478
      %p480 = pneg %p479
      // Predicated region
      $region69: #{tpu_custom_call.1} parent=5 // pred_check
        _
      $region70: #{tpu_custom_call.1} parent=5 // pred_check_branch
        %482 = sbr.rel (%p479) target = $region72
      $region71: #{tpu_custom_call.1} parent=5 // pred_region
        %s483 = ssub.s32 %s29, 1
        %s484 = sand.u32 %s42, 1
        %s485 = scalar_lea.sflag [#allocation3], %s484
        %s486 = sand.u32 %s42, 1
        %s487 = smul.addr %s486, 64
        %s488 = scalar_lea.vmem [#allocation2], %s487
        // Predicated region
        $region73: #{tpu_custom_call.1} parent=71 // pred_check
          %p489 = pneg %p55
        $region74: #{tpu_custom_call.1} parent=71 // pred_check_branch
          %491 = sbr.rel (%p489) target = $region76
        $region75: #{tpu_custom_call.1} parent=71 // pred_region
          %492 = dma.done %s485, 1024
        $region76: #{tpu_custom_call.1} parent=71 // pred_fallthru
          _
        %s493 = sand.u32 %s34, 1
        %s494 = scalar_lea.sflag [#allocation6], %s493
        %s495 = sand.u32 %s68, 1
        %s496 = smul.addr %s495, 256
        %s497 = scalar_lea.vmem [#allocation5], %s496
        // Predicated region
        $region77: #{tpu_custom_call.1} parent=71 // pred_check
          %p498 = pneg %p81
        $region78: #{tpu_custom_call.1} parent=71 // pred_check_branch
          %500 = sbr.rel (%p498) target = $region80
        $region79: #{tpu_custom_call.1} parent=71 // pred_region
          %501 = dma.done %s494, 4096
        $region80: #{tpu_custom_call.1} parent=71 // pred_fallthru
          _
        %s502 = sand.u32 %s34, 1
        %s503 = scalar_lea.sflag [#allocation6], %s502
        %s504 = sand.u32 %s94, 1
        %s505 = smul.addr %s504, 256
        %s506 = scalar_lea.vmem [#allocation7], %s505
        // Predicated region
        $region81: #{tpu_custom_call.1} parent=71 // pred_check
          %p507 = pneg %p107
        $region82: #{tpu_custom_call.1} parent=71 // pred_check_branch
          %509 = sbr.rel (%p507) target = $region84
        $region83: #{tpu_custom_call.1} parent=71 // pred_region
          %510 = dma.done %s503, 4096
        $region84: #{tpu_custom_call.1} parent=71 // pred_fallthru
          _
        // Predicated region
        $region85: #{tpu_custom_call.1} parent=71 // pred_check
          %p511 = pneg %p170
        $region86: #{tpu_custom_call.1} parent=71 // pred_check_branch
          %513 = sbr.rel (%p511) target = $region88
        $region87: #{tpu_custom_call.1} parent=71 // pred_region
          %514 = dma.done [#allocation9], 512
        $region88: #{tpu_custom_call.1} parent=71 // pred_fallthru
          _
        // Predicated region
        $region89: #{tpu_custom_call.1} parent=71 // pred_check
          %p515 = pneg %p212
        $region90: #{tpu_custom_call.1} parent=71 // pred_check_branch
          %517 = sbr.rel (%p515) target = $region92
        $region91: #{tpu_custom_call.1} parent=71 // pred_region
          %518 = dma.done [#allocation9], 512
        $region92: #{tpu_custom_call.1} parent=71 // pred_fallthru
          _
        %s519 = sand.u32 %s42, 1
        %s520 = scalar_lea.sflag [#allocation3], %s519
        %s521 = sand.u32 %s42, 1
        %s522 = smul.addr %s521, 64
        %s523 = scalar_lea.vmem [#allocation2], %s522
        %p524 = pneg %p55
        %p525 = pneg %p52
        %s526 = sand.u32 %s34, 1
        %s527 = scalar_lea.sflag [#allocation6], %s526
        %s528 = sand.u32 %s68, 1
        %s529 = smul.addr %s528, 256
        %s530 = scalar_lea.vmem [#allocation5], %s529
        %p531 = pneg %p81
        %p532 = pneg %p78
        %s533 = sand.u32 %s34, 1
        %s534 = scalar_lea.sflag [#allocation6], %s533
        %s535 = sand.u32 %s94, 1
        %s536 = smul.addr %s535, 256
        %s537 = scalar_lea.vmem [#allocation7], %s536
        %p538 = pneg %p107
        %p539 = pneg %p104
        %p540 = pneg %p128
        %p541 = pneg %p125
        %p542 = pneg %p149
        %p543 = pneg %p146
        %p544 = pneg %p170
        %p545 = pneg %p167
        %p546 = pneg %p191
        %p547 = pneg %p188
        %p548 = pneg %p212
        %p549 = pneg %p209
        %p550 = pneg %p233
        %p551 = pneg %p230
        %p552 = pneg %p254
        %p553 = pneg %p251
        %p554 = pneg %p275
        %p555 = pneg %p272
        %p556 = pneg %p296
        %p557 = pneg %p293
        %p558 = pneg %p317
        %p559 = pneg %p314
        %p560 = pneg %p343
        %p561 = pneg %p340
        %s562 = sand.u32 %s330, 1
        %s563 = scalar_lea.sflag [#allocation4], %s562
        %s564 = sand.u32 %s330, 1
        %s565 = smul.addr %s564, 16
        %s566 = scalar_lea.vmem [#allocation11], %s565
        %s567 = smul.u32 8, %s34
        %s568 = smul.u32 8, %s34
        %s569 = smul.u32 8, %s34
        %v570 = vld [vmem:[%s488] sm:$0xff]
        %v571 = vld [vmem:[%s488 + $0x8] sm:$0xff]
        %v572 = vld [vmem:[%s488 + $0x10] sm:$0xff]
        %v573 = vld [vmem:[%s488 + $0x18] sm:$0xff]
        %v574 = vld [vmem:[%s488 + $0x20] sm:$0xff]
        %v575 = vld [vmem:[%s488 + $0x28] sm:$0xff]
        %v576 = vld [vmem:[%s488 + $0x30] sm:$0xff]
        %v577 = vld [vmem:[%s488 + $0x38] sm:$0xff]
        %v578 = vld [vmem:[%s497] sm:$0xff]
        %v579 = vld [vmem:[%s497 + $0x8] sm:$0xff]
        %v580 = vld [vmem:[%s497 + $0x10] sm:$0xff]
        %v581 = vld [vmem:[%s497 + $0x18] sm:$0xff]
        %v582 = vld [vmem:[%s497 + $0x20] sm:$0xff]
        %v583 = vld [vmem:[%s497 + $0x28] sm:$0xff]
        %v584 = vld [vmem:[%s497 + $0x30] sm:$0xff]
        %v585 = vld [vmem:[%s497 + $0x38] sm:$0xff]
        %v586 = vld [vmem:[%s497 + $0x40] sm:$0xff]
        %v587 = vld [vmem:[%s497 + $0x48] sm:$0xff]
        %v588 = vld [vmem:[%s497 + $0x50] sm:$0xff]
        %v589 = vld [vmem:[%s497 + $0x58] sm:$0xff]
        %v590 = vld [vmem:[%s497 + $0x60] sm:$0xff]
        %v591 = vld [vmem:[%s497 + $0x68] sm:$0xff]
        %v592 = vld [vmem:[%s497 + $0x70] sm:$0xff]
        %v593 = vld [vmem:[%s497 + $0x78] sm:$0xff]
        %v594 = vld [vmem:[%s497 + $0x80] sm:$0xff]
        %v595 = vld [vmem:[%s497 + $0x88] sm:$0xff]
        %v596 = vld [vmem:[%s497 + $0x90] sm:$0xff]
        %v597 = vld [vmem:[%s497 + $0x98] sm:$0xff]
        %v598 = vld [vmem:[%s497 + $0xa0] sm:$0xff]
        %v599 = vld [vmem:[%s497 + $0xa8] sm:$0xff]
        %v600 = vld [vmem:[%s497 + $0xb0] sm:$0xff]
        %v601 = vld [vmem:[%s497 + $0xb8] sm:$0xff]
        %v602 = vld [vmem:[%s497 + $0xc0] sm:$0xff]
        %v603 = vld [vmem:[%s497 + $0xc8] sm:$0xff]
        %v604 = vld [vmem:[%s497 + $0xd0] sm:$0xff]
        %v605 = vld [vmem:[%s497 + $0xd8] sm:$0xff]
        %v606 = vld [vmem:[%s497 + $0xe0] sm:$0xff]
        %v607 = vld [vmem:[%s497 + $0xe8] sm:$0xff]
        %v608 = vld [vmem:[%s497 + $0xf0] sm:$0xff]
        %v609 = vld [vmem:[%s497 + $0xf8] sm:$0xff]
        %v610 = vld [vmem:[%s506] sm:$0xff]
        %v611 = vld [vmem:[%s506 + $0x8] sm:$0xff]
        %v612 = vld [vmem:[%s506 + $0x10] sm:$0xff]
        %v613 = vld [vmem:[%s506 + $0x18] sm:$0xff]
        %v614 = vld [vmem:[%s506 + $0x20] sm:$0xff]
        %v615 = vld [vmem:[%s506 + $0x28] sm:$0xff]
        %v616 = vld [vmem:[%s506 + $0x30] sm:$0xff]
        %v617 = vld [vmem:[%s506 + $0x38] sm:$0xff]
        %v618 = vld [vmem:[%s506 + $0x40] sm:$0xff]
        %v619 = vld [vmem:[%s506 + $0x48] sm:$0xff]
        %v620 = vld [vmem:[%s506 + $0x50] sm:$0xff]
        %v621 = vld [vmem:[%s506 + $0x58] sm:$0xff]
        %v622 = vld [vmem:[%s506 + $0x60] sm:$0xff]
        %v623 = vld [vmem:[%s506 + $0x68] sm:$0xff]
        %v624 = vld [vmem:[%s506 + $0x70] sm:$0xff]
        %v625 = vld [vmem:[%s506 + $0x78] sm:$0xff]
        %v626 = vld [vmem:[%s506 + $0x80] sm:$0xff]
        %v627 = vld [vmem:[%s506 + $0x88] sm:$0xff]
        %v628 = vld [vmem:[%s506 + $0x90] sm:$0xff]
        %v629 = vld [vmem:[%s506 + $0x98] sm:$0xff]
        %v630 = vld [vmem:[%s506 + $0xa0] sm:$0xff]
        %v631 = vld [vmem:[%s506 + $0xa8] sm:$0xff]
        %v632 = vld [vmem:[%s506 + $0xb0] sm:$0xff]
        %v633 = vld [vmem:[%s506 + $0xb8] sm:$0xff]
        %v634 = vld [vmem:[%s506 + $0xc0] sm:$0xff]
        %v635 = vld [vmem:[%s506 + $0xc8] sm:$0xff]
        %v636 = vld [vmem:[%s506 + $0xd0] sm:$0xff]
        %v637 = vld [vmem:[%s506 + $0xd8] sm:$0xff]
        %v638 = vld [vmem:[%s506 + $0xe0] sm:$0xff]
        %v639 = vld [vmem:[%s506 + $0xe8] sm:$0xff]
        %v640 = vld [vmem:[%s506 + $0xf0] sm:$0xff]
        %v641 = vld [vmem:[%s506 + $0xf8] sm:$0xff]
        %v642 = vld [vmem:[%s3] sm:$0xff]
        %v643 = vld [vmem:[%s3 + $0x8] sm:$0xff]
        %v644 = vld [vmem:[%s3 + $0x10] sm:$0xff]
        %v645 = vld [vmem:[%s3 + $0x18] sm:$0xff]
        %v646 = vld [vmem:[%s4] sm:$0x1]
        %v648 = vlaneseq
        %v649 = vshrl.u32 %v648, 7
        %v650 = vsub.s32 0, %v649
        %v651 = vrot.slane %v646, %v650
        %vm653 = vcmask 261120
        %v655 = vsel %vm653, %v570, 0
        %v658 = vsel %vm653, %v571, 0
        %v661 = vsel %vm653, %v572, 0
        %v664 = vsel %vm653, %v573, 0
        %v667 = vsel %vm653, %v574, 0
        %v670 = vsel %vm653, %v575, 0
        %v673 = vsel %vm653, %v576, 0
        %v676 = vsel %vm653, %v577, 0
        %678 = vmatprep.subr.mxu0 0.0
        %679 = vmatpush1.msra.mxu0 0.0
        %680 = vmatprep.subr.mxu0 0.0
        %681 = vmatpush1.msra.mxu0 0.0
        %682 = vmatprep.subr.mxu0 0.0
        %683 = vmatpush1.msra.mxu0 0.0
        %684 = vmatprep.subr.mxu0 0.0
        %685 = vmatpush1.msra.mxu0 0.0
        %686 = vmatprep.subr.mxu0 0.0
        %687 = vmatpush1.msra.mxu0 0.0
        %688 = vmatprep.subr.mxu0 0.0
        %689 = vmatpush1.msra.mxu0 0.0
        %690 = vmatprep.subr.mxu0 0.0
        %691 = vmatpush1.msra.mxu0 0.0
        %692 = vmatprep.subr.mxu0 0.0
        %693 = vmatpush1.msra.mxu0 0.0
        %694 = vmatprep.subr.mxu0 0.0
        %695 = vmatpush1.msra.mxu0 0.0
        %696 = vmatprep.subr.mxu0 0.0
        %697 = vmatpush1.msra.mxu0 0.0
        %698 = vmatprep.subr.mxu0 0.0
        %699 = vmatpush1.msra.mxu0 0.0
        %700 = vmatprep.subr.mxu0 0.0
        %701 = vmatpush1.msra.mxu0 0.0
        %702 = vmatprep.subr.mxu0 0.0
        %703 = vmatpush1.msra.mxu0 %v645
        %704 = vmatprep.subr.mxu0 0.0
        %705 = vmatpush1.msra.mxu0 %v644
        %706 = vmatprep.subr.mxu0 0.0
        %707 = vmatpush1.msra.mxu0 %v643
        %708 = vmatprep.subr.mxu0 0.0
        %709 = vmatpush1.msra.mxu0 %v642
        %710 = vmatprep.subr.mxu0 0.0
        %711 = vmatpush2.msra.mxu0 0.0
        %712 = vmatprep.subr.mxu0 0.0
        %713 = vmatpush2.msra.mxu0 0.0
        %714 = vmatprep.subr.mxu0 0.0
        %715 = vmatpush2.msra.mxu0 0.0
        %716 = vmatprep.subr.mxu0 0.0
        %717 = vmatpush2.msra.mxu0 0.0
        %718 = vmatprep.subr.mxu0 0.0
        %719 = vmatpush2.msra.mxu0 0.0
        %720 = vmatprep.subr.mxu0 0.0
        %721 = vmatpush2.msra.mxu0 0.0
        %722 = vmatprep.subr.mxu0 0.0
        %723 = vmatpush2.msra.mxu0 0.0
        %724 = vmatprep.subr.mxu0 0.0
        %725 = vmatpush2.msra.mxu0 0.0
        %726 = vmatprep.subr.mxu0 0.0
        %727 = vmatpush2.msra.mxu0 0.0
        %728 = vmatprep.subr.mxu0 0.0
        %729 = vmatpush2.msra.mxu0 0.0
        %730 = vmatprep.subr.mxu0 0.0
        %731 = vmatpush2.msra.mxu0 0.0
        %732 = vmatprep.subr.mxu0 0.0
        %733 = vmatpush2.msra.mxu0 0.0
        %734 = vmatprep.subr.mxu0 0.0
        %735 = vmatpush2.msra.mxu0 0.0
        %736 = vmatprep.subr.mxu0 0.0
        %737 = vmatpush2.msra.mxu0 0.0
        %738 = vmatprep.subr.mxu0 0.0
        %739 = vmatpush2.msra.mxu0 0.0
        %740 = vmatprep.subr.mxu0 0.0
        %741 = vmatpush2.msra.mxu0 0.0
        %742 = vmatprep.mubr.f32.mxu0 0.0
        %743 = vmatmul.mubr.f32.gmra.mxu0 %v655
        %v744 = vpop.f32.mrf.mxu0
        %v745 = vadd.f32 %v651, %v744
        %v746 = vpop.f32.mrf.mxu0
        %747 = vmatprep.mubr.f32.mxu0 0.0
        %748 = vmatmul.mubr.f32.gmra.mxu0 %v658
        %v749 = vpop.f32.mrf.mxu0
        %v750 = vadd.f32 %v651, %v749
        %v751 = vpop.f32.mrf.mxu0
        %752 = vmatprep.mubr.f32.mxu0 0.0
        %753 = vmatmul.mubr.f32.gmra.mxu0 %v661
        %v754 = vpop.f32.mrf.mxu0
        %v755 = vadd.f32 %v651, %v754
        %v756 = vpop.f32.mrf.mxu0
        %757 = vmatprep.mubr.f32.mxu0 0.0
        %758 = vmatmul.mubr.f32.gmra.mxu0 %v664
        %v759 = vpop.f32.mrf.mxu0
        %v760 = vadd.f32 %v651, %v759
        %v761 = vpop.f32.mrf.mxu0
        %762 = vmatprep.mubr.f32.mxu0 0.0
        %763 = vmatmul.mubr.f32.gmra.mxu0 %v667
        %v764 = vpop.f32.mrf.mxu0
        %v765 = vadd.f32 %v651, %v764
        %v766 = vpop.f32.mrf.mxu0
        %767 = vmatprep.mubr.f32.mxu0 0.0
        %768 = vmatmul.mubr.f32.gmra.mxu0 %v670
        %v769 = vpop.f32.mrf.mxu0
        %v770 = vadd.f32 %v651, %v769
        %v771 = vpop.f32.mrf.mxu0
        %772 = vmatprep.mubr.f32.mxu0 0.0
        %773 = vmatmul.mubr.f32.gmra.mxu0 %v673
        %v774 = vpop.f32.mrf.mxu0
        %v775 = vadd.f32 %v651, %v774
        %v776 = vpop.f32.mrf.mxu0
        %777 = vmatprep.mubr.f32.mxu0 0.0
        %778 = vmatmul.mubr.f32.gmra.mxu0 %v676
        %v779 = vpop.f32.mrf.mxu0
        %v780 = vadd.f32 %v651, %v779
        %v781 = vpop.f32.mrf.mxu0
        %782 = vdwg.mxu0
        %v783 = vld [vmem:[#allocation8] sm:$0xff]
        %v784 = vld [vmem:[#allocation8 + $0x8] sm:$0xff]
        %v785 = vld [vmem:[#allocation8 + $0x10] sm:$0xff]
        %v786 = vld [vmem:[#allocation8 + $0x18] sm:$0xff]
        %v787 = vld [vmem:[%s6] sm:$0x1]
        %v789 = vlaneseq
        %v790 = vshrl.u32 %v789, 7
        %v791 = vsub.s32 0, %v790
        %v792 = vrot.slane %v787, %v791
        %v795 = vsel %vm653, %v578, 0
        %v798 = vsel %vm653, %v579, 0
        %v801 = vsel %vm653, %v580, 0
        %v804 = vsel %vm653, %v581, 0
        %v807 = vsel %vm653, %v582, 0
        %v810 = vsel %vm653, %v583, 0
        %v813 = vsel %vm653, %v584, 0
        %v816 = vsel %vm653, %v585, 0
        %v819 = vsel %vm653, %v586, 0
        %v822 = vsel %vm653, %v587, 0
        %v825 = vsel %vm653, %v588, 0
        %v828 = vsel %vm653, %v589, 0
        %v831 = vsel %vm653, %v590, 0
        %v834 = vsel %vm653, %v591, 0
        %v837 = vsel %vm653, %v592, 0
        %v840 = vsel %vm653, %v593, 0
        %v843 = vsel %vm653, %v594, 0
        %v846 = vsel %vm653, %v595, 0
        %v849 = vsel %vm653, %v596, 0
        %v852 = vsel %vm653, %v597, 0
        %v855 = vsel %vm653, %v598, 0
        %v858 = vsel %vm653, %v599, 0
        %v861 = vsel %vm653, %v600, 0
        %v864 = vsel %vm653, %v601, 0
        %v867 = vsel %vm653, %v602, 0
        %v870 = vsel %vm653, %v603, 0
        %v873 = vsel %vm653, %v604, 0
        %v876 = vsel %vm653, %v605, 0
        %v879 = vsel %vm653, %v606, 0
        %v882 = vsel %vm653, %v607, 0
        %v885 = vsel %vm653, %v608, 0
        %v888 = vsel %vm653, %v609, 0
        %890 = vmatprep.subr.mxu0 0.0
        %891 = vmatpush1.msra.mxu0 0.0
        %892 = vmatprep.subr.mxu0 0.0
        %893 = vmatpush1.msra.mxu0 0.0
        %894 = vmatprep.subr.mxu0 0.0
        %895 = vmatpush1.msra.mxu0 0.0
        %896 = vmatprep.subr.mxu0 0.0
        %897 = vmatpush1.msra.mxu0 0.0
        %898 = vmatprep.subr.mxu0 0.0
        %899 = vmatpush1.msra.mxu0 0.0
        %900 = vmatprep.subr.mxu0 0.0
        %901 = vmatpush1.msra.mxu0 0.0
        %902 = vmatprep.subr.mxu0 0.0
        %903 = vmatpush1.msra.mxu0 0.0
        %904 = vmatprep.subr.mxu0 0.0
        %905 = vmatpush1.msra.mxu0 0.0
        %906 = vmatprep.subr.mxu0 0.0
        %907 = vmatpush1.msra.mxu0 0.0
        %908 = vmatprep.subr.mxu0 0.0
        %909 = vmatpush1.msra.mxu0 0.0
        %910 = vmatprep.subr.mxu0 0.0
        %911 = vmatpush1.msra.mxu0 0.0
        %912 = vmatprep.subr.mxu0 0.0
        %913 = vmatpush1.msra.mxu0 0.0
        %914 = vmatprep.subr.mxu0 0.0
        %915 = vmatpush1.msra.mxu0 %v786
        %916 = vmatprep.subr.mxu0 0.0
        %917 = vmatpush1.msra.mxu0 %v785
        %918 = vmatprep.subr.mxu0 0.0
        %919 = vmatpush1.msra.mxu0 %v784
        %920 = vmatprep.subr.mxu0 0.0
        %921 = vmatpush1.msra.mxu0 %v783
        %922 = vmatprep.subr.mxu0 0.0
        %923 = vmatpush2.msra.mxu0 0.0
        %924 = vmatprep.subr.mxu0 0.0
        %925 = vmatpush2.msra.mxu0 0.0
        %926 = vmatprep.subr.mxu0 0.0
        %927 = vmatpush2.msra.mxu0 0.0
        %928 = vmatprep.subr.mxu0 0.0
        %929 = vmatpush2.msra.mxu0 0.0
        %930 = vmatprep.subr.mxu0 0.0
        %931 = vmatpush2.msra.mxu0 0.0
        %932 = vmatprep.subr.mxu0 0.0
        %933 = vmatpush2.msra.mxu0 0.0
        %934 = vmatprep.subr.mxu0 0.0
        %935 = vmatpush2.msra.mxu0 0.0
        %936 = vmatprep.subr.mxu0 0.0
        %937 = vmatpush2.msra.mxu0 0.0
        %938 = vmatprep.subr.mxu0 0.0
        %939 = vmatpush2.msra.mxu0 0.0
        %940 = vmatprep.subr.mxu0 0.0
        %941 = vmatpush2.msra.mxu0 0.0
        %942 = vmatprep.subr.mxu0 0.0
        %943 = vmatpush2.msra.mxu0 0.0
        %944 = vmatprep.subr.mxu0 0.0
        %945 = vmatpush2.msra.mxu0 0.0
        %946 = vmatprep.subr.mxu0 0.0
        %947 = vmatpush2.msra.mxu0 0.0
        %948 = vmatprep.subr.mxu0 0.0
        %949 = vmatpush2.msra.mxu0 0.0
        %950 = vmatprep.subr.mxu0 0.0
        %951 = vmatpush2.msra.mxu0 0.0
        %952 = vmatprep.subr.mxu0 0.0
        %953 = vmatpush2.msra.mxu0 0.0
        %954 = vmatprep.mubr.f32.mxu0 0.0
        %955 = vmatmul.mubr.f32.gmra.mxu0 %v795
        %v956 = vpop.f32.mrf.mxu0
        %v957 = vadd.f32 %v792, %v956
        %v958 = vpop.f32.mrf.mxu0
        %959 = vmatprep.mubr.f32.mxu0 0.0
        %960 = vmatmul.mubr.f32.gmra.mxu0 %v798
        %v961 = vpop.f32.mrf.mxu0
        %v962 = vadd.f32 %v792, %v961
        %v963 = vpop.f32.mrf.mxu0
        %964 = vmatprep.mubr.f32.mxu0 0.0
        %965 = vmatmul.mubr.f32.gmra.mxu0 %v801
        %v966 = vpop.f32.mrf.mxu0
        %v967 = vadd.f32 %v792, %v966
        %v968 = vpop.f32.mrf.mxu0
        %969 = vmatprep.mubr.f32.mxu0 0.0
        %970 = vmatmul.mubr.f32.gmra.mxu0 %v804
        %v971 = vpop.f32.mrf.mxu0
        %v972 = vadd.f32 %v792, %v971
        %v973 = vpop.f32.mrf.mxu0
        %974 = vmatprep.mubr.f32.mxu0 0.0
        %975 = vmatmul.mubr.f32.gmra.mxu0 %v807
        %v976 = vpop.f32.mrf.mxu0
        %v977 = vadd.f32 %v792, %v976
        %v978 = vpop.f32.mrf.mxu0
        %979 = vmatprep.mubr.f32.mxu0 0.0
        %980 = vmatmul.mubr.f32.gmra.mxu0 %v810
        %v981 = vpop.f32.mrf.mxu0
        %v982 = vadd.f32 %v792, %v981
        %v983 = vpop.f32.mrf.mxu0
        %984 = vmatprep.mubr.f32.mxu0 0.0
        %985 = vmatmul.mubr.f32.gmra.mxu0 %v813
        %v986 = vpop.f32.mrf.mxu0
        %v987 = vadd.f32 %v792, %v986
        %v988 = vpop.f32.mrf.mxu0
        %989 = vmatprep.mubr.f32.mxu0 0.0
        %990 = vmatmul.mubr.f32.gmra.mxu0 %v816
        %v991 = vpop.f32.mrf.mxu0
        %v992 = vadd.f32 %v792, %v991
        %v993 = vpop.f32.mrf.mxu0
        %994 = vmatprep.mubr.f32.mxu0 0.0
        %995 = vmatmul.mubr.f32.gmra.mxu0 %v819
        %v996 = vpop.f32.mrf.mxu0
        %v997 = vadd.f32 %v792, %v996
        %v998 = vpop.f32.mrf.mxu0
        %999 = vmatprep.mubr.f32.mxu0 0.0
        %1000 = vmatmul.mubr.f32.gmra.mxu0 %v822
        %v1001 = vpop.f32.mrf.mxu0
        %v1002 = vadd.f32 %v792, %v1001
        %v1003 = vpop.f32.mrf.mxu0
        %1004 = vmatprep.mubr.f32.mxu0 0.0
        %1005 = vmatmul.mubr.f32.gmra.mxu0 %v825
        %v1006 = vpop.f32.mrf.mxu0
        %v1007 = vadd.f32 %v792, %v1006
        %v1008 = vpop.f32.mrf.mxu0
        %1009 = vmatprep.mubr.f32.mxu0 0.0
        %1010 = vmatmul.mubr.f32.gmra.mxu0 %v828
        %v1011 = vpop.f32.mrf.mxu0
        %v1012 = vadd.f32 %v792, %v1011
        %v1013 = vpop.f32.mrf.mxu0
        %1014 = vmatprep.mubr.f32.mxu0 0.0
        %1015 = vmatmul.mubr.f32.gmra.mxu0 %v831
        %v1016 = vpop.f32.mrf.mxu0
        %v1017 = vadd.f32 %v792, %v1016
        %v1018 = vpop.f32.mrf.mxu0
        %1019 = vmatprep.mubr.f32.mxu0 0.0
        %1020 = vmatmul.mubr.f32.gmra.mxu0 %v834
        %v1021 = vpop.f32.mrf.mxu0
        %v1022 = vadd.f32 %v792, %v1021
        %v1023 = vpop.f32.mrf.mxu0
        %1024 = vmatprep.mubr.f32.mxu0 0.0
        %1025 = vmatmul.mubr.f32.gmra.mxu0 %v837
        %v1026 = vpop.f32.mrf.mxu0
        %v1027 = vadd.f32 %v792, %v1026
        %v1028 = vpop.f32.mrf.mxu0
        %1029 = vmatprep.mubr.f32.mxu0 0.0
        %1030 = vmatmul.mubr.f32.gmra.mxu0 %v840
        %v1031 = vpop.f32.mrf.mxu0
        %v1032 = vadd.f32 %v792, %v1031
        %v1033 = vpop.f32.mrf.mxu0
        %1034 = vmatprep.mubr.f32.mxu0 0.0
        %1035 = vmatmul.mubr.f32.gmra.mxu0 %v843
        %v1036 = vpop.f32.mrf.mxu0
        %v1037 = vadd.f32 %v792, %v1036
        %v1038 = vpop.f32.mrf.mxu0
        %1039 = vmatprep.mubr.f32.mxu0 0.0
        %1040 = vmatmul.mubr.f32.gmra.mxu0 %v846
        %v1041 = vpop.f32.mrf.mxu0
        %v1042 = vadd.f32 %v792, %v1041
        %v1043 = vpop.f32.mrf.mxu0
        %1044 = vmatprep.mubr.f32.mxu0 0.0
        %1045 = vmatmul.mubr.f32.gmra.mxu0 %v849
        %v1046 = vpop.f32.mrf.mxu0
        %v1047 = vadd.f32 %v792, %v1046
        %v1048 = vpop.f32.mrf.mxu0
        %1049 = vmatprep.mubr.f32.mxu0 0.0
        %1050 = vmatmul.mubr.f32.gmra.mxu0 %v852
        %v1051 = vpop.f32.mrf.mxu0
        %v1052 = vadd.f32 %v792, %v1051
        %v1053 = vpop.f32.mrf.mxu0
        %1054 = vmatprep.mubr.f32.mxu0 0.0
        %1055 = vmatmul.mubr.f32.gmra.mxu0 %v855
        %v1056 = vpop.f32.mrf.mxu0
        %v1057 = vadd.f32 %v792, %v1056
        %v1058 = vpop.f32.mrf.mxu0
        %1059 = vmatprep.mubr.f32.mxu0 0.0
        %1060 = vmatmul.mubr.f32.gmra.mxu0 %v858
        %v1061 = vpop.f32.mrf.mxu0
        %v1062 = vadd.f32 %v792, %v1061
        %v1063 = vpop.f32.mrf.mxu0
        %1064 = vmatprep.mubr.f32.mxu0 0.0
        %1065 = vmatmul.mubr.f32.gmra.mxu0 %v861
        %v1066 = vpop.f32.mrf.mxu0
        %v1067 = vadd.f32 %v792, %v1066
        %v1068 = vpop.f32.mrf.mxu0
        %1069 = vmatprep.mubr.f32.mxu0 0.0
        %1070 = vmatmul.mubr.f32.gmra.mxu0 %v864
        %v1071 = vpop.f32.mrf.mxu0
        %v1072 = vadd.f32 %v792, %v1071
        %v1073 = vpop.f32.mrf.mxu0
        %1074 = vmatprep.mubr.f32.mxu0 0.0
        %1075 = vmatmul.mubr.f32.gmra.mxu0 %v867
        %v1076 = vpop.f32.mrf.mxu0
        %v1077 = vadd.f32 %v792, %v1076
        %v1078 = vpop.f32.mrf.mxu0
        %1079 = vmatprep.mubr.f32.mxu0 0.0
        %1080 = vmatmul.mubr.f32.gmra.mxu0 %v870
        %v1081 = vpop.f32.mrf.mxu0
        %v1082 = vadd.f32 %v792, %v1081
        %v1083 = vpop.f32.mrf.mxu0
        %1084 = vmatprep.mubr.f32.mxu0 0.0
        %1085 = vmatmul.mubr.f32.gmra.mxu0 %v873
        %v1086 = vpop.f32.mrf.mxu0
        %v1087 = vadd.f32 %v792, %v1086
        %v1088 = vpop.f32.mrf.mxu0
        %1089 = vmatprep.mubr.f32.mxu0 0.0
        %1090 = vmatmul.mubr.f32.gmra.mxu0 %v876
        %v1091 = vpop.f32.mrf.mxu0
        %v1092 = vadd.f32 %v792, %v1091
        %v1093 = vpop.f32.mrf.mxu0
        %1094 = vmatprep.mubr.f32.mxu0 0.0
        %1095 = vmatmul.mubr.f32.gmra.mxu0 %v879
        %v1096 = vpop.f32.mrf.mxu0
        %v1097 = vadd.f32 %v792, %v1096
        %v1098 = vpop.f32.mrf.mxu0
        %1099 = vmatprep.mubr.f32.mxu0 0.0
        %1100 = vmatmul.mubr.f32.gmra.mxu0 %v882
        %v1101 = vpop.f32.mrf.mxu0
        %v1102 = vadd.f32 %v792, %v1101
        %v1103 = vpop.f32.mrf.mxu0
        %1104 = vmatprep.mubr.f32.mxu0 0.0
        %1105 = vmatmul.mubr.f32.gmra.mxu0 %v885
        %v1106 = vpop.f32.mrf.mxu0
        %v1107 = vadd.f32 %v792, %v1106
        %v1108 = vpop.f32.mrf.mxu0
        %1109 = vmatprep.mubr.f32.mxu0 0.0
        %1110 = vmatmul.mubr.f32.gmra.mxu0 %v888
        %v1111 = vpop.f32.mrf.mxu0
        %v1112 = vadd.f32 %v792, %v1111
        %v1113 = vpop.f32.mrf.mxu0
        %1114 = vdwg.mxu0
        %v1115 = vld [vmem:[#allocation10] sm:$0xff]
        %v1116 = vld [vmem:[#allocation10 + $0x8] sm:$0xff]
        %v1117 = vld [vmem:[#allocation10 + $0x10] sm:$0xff]
        %v1118 = vld [vmem:[#allocation10 + $0x18] sm:$0xff]
        %v1119 = vld [vmem:[%s8] sm:$0x1]
        %v1121 = vlaneseq
        %v1122 = vshrl.u32 %v1121, 7
        %v1123 = vsub.s32 0, %v1122
        %v1124 = vrot.slane %v1119, %v1123
        %v1127 = vsel %vm653, %v610, 0
        %v1130 = vsel %vm653, %v611, 0
        %v1133 = vsel %vm653, %v612, 0
        %v1136 = vsel %vm653, %v613, 0
        %v1139 = vsel %vm653, %v614, 0
        %v1142 = vsel %vm653, %v615, 0
        %v1145 = vsel %vm653, %v616, 0
        %v1148 = vsel %vm653, %v617, 0
        %v1151 = vsel %vm653, %v618, 0
        %v1154 = vsel %vm653, %v619, 0
        %v1157 = vsel %vm653, %v620, 0
        %v1160 = vsel %vm653, %v621, 0
        %v1163 = vsel %vm653, %v622, 0
        %v1166 = vsel %vm653, %v623, 0
        %v1169 = vsel %vm653, %v624, 0
        %v1172 = vsel %vm653, %v625, 0
        %v1175 = vsel %vm653, %v626, 0
        %v1178 = vsel %vm653, %v627, 0
        %v1181 = vsel %vm653, %v628, 0
        %v1184 = vsel %vm653, %v629, 0
        %v1187 = vsel %vm653, %v630, 0
        %v1190 = vsel %vm653, %v631, 0
        %v1193 = vsel %vm653, %v632, 0
        %v1196 = vsel %vm653, %v633, 0
        %v1199 = vsel %vm653, %v634, 0
        %v1202 = vsel %vm653, %v635, 0
        %v1205 = vsel %vm653, %v636, 0
        %v1208 = vsel %vm653, %v637, 0
        %v1211 = vsel %vm653, %v638, 0
        %v1214 = vsel %vm653, %v639, 0
        %v1217 = vsel %vm653, %v640, 0
        %v1220 = vsel %vm653, %v641, 0
        %1222 = vmatprep.subr.mxu0 0.0
        %1223 = vmatpush1.msra.mxu0 0.0
        %1224 = vmatprep.subr.mxu0 0.0
        %1225 = vmatpush1.msra.mxu0 0.0
        %1226 = vmatprep.subr.mxu0 0.0
        %1227 = vmatpush1.msra.mxu0 0.0
        %1228 = vmatprep.subr.mxu0 0.0
        %1229 = vmatpush1.msra.mxu0 0.0
        %1230 = vmatprep.subr.mxu0 0.0
        %1231 = vmatpush1.msra.mxu0 0.0
        %1232 = vmatprep.subr.mxu0 0.0
        %1233 = vmatpush1.msra.mxu0 0.0
        %1234 = vmatprep.subr.mxu0 0.0
        %1235 = vmatpush1.msra.mxu0 0.0
        %1236 = vmatprep.subr.mxu0 0.0
        %1237 = vmatpush1.msra.mxu0 0.0
        %1238 = vmatprep.subr.mxu0 0.0
        %1239 = vmatpush1.msra.mxu0 0.0
        %1240 = vmatprep.subr.mxu0 0.0
        %1241 = vmatpush1.msra.mxu0 0.0
        %1242 = vmatprep.subr.mxu0 0.0
        %1243 = vmatpush1.msra.mxu0 0.0
        %1244 = vmatprep.subr.mxu0 0.0
        %1245 = vmatpush1.msra.mxu0 0.0
        %1246 = vmatprep.subr.mxu0 0.0
        %1247 = vmatpush1.msra.mxu0 %v1118
        %1248 = vmatprep.subr.mxu0 0.0
        %1249 = vmatpush1.msra.mxu0 %v1117
        %1250 = vmatprep.subr.mxu0 0.0
        %1251 = vmatpush1.msra.mxu0 %v1116
        %1252 = vmatprep.subr.mxu0 0.0
        %1253 = vmatpush1.msra.mxu0 %v1115
        %1254 = vmatprep.subr.mxu0 0.0
        %1255 = vmatpush2.msra.mxu0 0.0
        %1256 = vmatprep.subr.mxu0 0.0
        %1257 = vmatpush2.msra.mxu0 0.0
        %1258 = vmatprep.subr.mxu0 0.0
        %1259 = vmatpush2.msra.mxu0 0.0
        %1260 = vmatprep.subr.mxu0 0.0
        %1261 = vmatpush2.msra.mxu0 0.0
        %1262 = vmatprep.subr.mxu0 0.0
        %1263 = vmatpush2.msra.mxu0 0.0
        %1264 = vmatprep.subr.mxu0 0.0
        %1265 = vmatpush2.msra.mxu0 0.0
        %1266 = vmatprep.subr.mxu0 0.0
        %1267 = vmatpush2.msra.mxu0 0.0
        %1268 = vmatprep.subr.mxu0 0.0
        %1269 = vmatpush2.msra.mxu0 0.0
        %1270 = vmatprep.subr.mxu0 0.0
        %1271 = vmatpush2.msra.mxu0 0.0
        %1272 = vmatprep.subr.mxu0 0.0
        %1273 = vmatpush2.msra.mxu0 0.0
        %1274 = vmatprep.subr.mxu0 0.0
        %1275 = vmatpush2.msra.mxu0 0.0
        %1276 = vmatprep.subr.mxu0 0.0
        %1277 = vmatpush2.msra.mxu0 0.0
        %1278 = vmatprep.subr.mxu0 0.0
        %1279 = vmatpush2.msra.mxu0 0.0
        %1280 = vmatprep.subr.mxu0 0.0
        %1281 = vmatpush2.msra.mxu0 0.0
        %1282 = vmatprep.subr.mxu0 0.0
        %1283 = vmatpush2.msra.mxu0 0.0
        %1284 = vmatprep.subr.mxu0 0.0
        %1285 = vmatpush2.msra.mxu0 0.0
        %1286 = vmatprep.mubr.f32.mxu0 0.0
        %1287 = vmatmul.mubr.f32.gmra.mxu0 %v1127
        %v1288 = vpop.f32.mrf.mxu0
        %v1289 = vadd.f32 %v1124, %v1288
        %v1290 = vpop.f32.mrf.mxu0
        %1291 = vmatprep.mubr.f32.mxu0 0.0
        %1292 = vmatmul.mubr.f32.gmra.mxu0 %v1130
        %v1293 = vpop.f32.mrf.mxu0
        %v1294 = vadd.f32 %v1124, %v1293
        %v1295 = vpop.f32.mrf.mxu0
        %1296 = vmatprep.mubr.f32.mxu0 0.0
        %1297 = vmatmul.mubr.f32.gmra.mxu0 %v1133
        %v1298 = vpop.f32.mrf.mxu0
        %v1299 = vadd.f32 %v1124, %v1298
        %v1300 = vpop.f32.mrf.mxu0
        %1301 = vmatprep.mubr.f32.mxu0 0.0
        %1302 = vmatmul.mubr.f32.gmra.mxu0 %v1136
        %v1303 = vpop.f32.mrf.mxu0
        %v1304 = vadd.f32 %v1124, %v1303
        %v1305 = vpop.f32.mrf.mxu0
        %1306 = vmatprep.mubr.f32.mxu0 0.0
        %1307 = vmatmul.mubr.f32.gmra.mxu0 %v1139
        %v1308 = vpop.f32.mrf.mxu0
        %v1309 = vadd.f32 %v1124, %v1308
        %v1310 = vpop.f32.mrf.mxu0
        %1311 = vmatprep.mubr.f32.mxu0 0.0
        %1312 = vmatmul.mubr.f32.gmra.mxu0 %v1142
        %v1313 = vpop.f32.mrf.mxu0
        %v1314 = vadd.f32 %v1124, %v1313
        %v1315 = vpop.f32.mrf.mxu0
        %1316 = vmatprep.mubr.f32.mxu0 0.0
        %1317 = vmatmul.mubr.f32.gmra.mxu0 %v1145
        %v1318 = vpop.f32.mrf.mxu0
        %v1319 = vadd.f32 %v1124, %v1318
        %v1320 = vpop.f32.mrf.mxu0
        %1321 = vmatprep.mubr.f32.mxu0 0.0
        %1322 = vmatmul.mubr.f32.gmra.mxu0 %v1148
        %v1323 = vpop.f32.mrf.mxu0
        %v1324 = vadd.f32 %v1124, %v1323
        %v1325 = vpop.f32.mrf.mxu0
        %1326 = vmatprep.mubr.f32.mxu0 0.0
        %1327 = vmatmul.mubr.f32.gmra.mxu0 %v1151
        %v1328 = vpop.f32.mrf.mxu0
        %v1329 = vadd.f32 %v1124, %v1328
        %v1330 = vpop.f32.mrf.mxu0
        %1331 = vmatprep.mubr.f32.mxu0 0.0
        %1332 = vmatmul.mubr.f32.gmra.mxu0 %v1154
        %v1333 = vpop.f32.mrf.mxu0
        %v1334 = vadd.f32 %v1124, %v1333
        %v1335 = vpop.f32.mrf.mxu0
        %1336 = vmatprep.mubr.f32.mxu0 0.0
        %1337 = vmatmul.mubr.f32.gmra.mxu0 %v1157
        %v1338 = vpop.f32.mrf.mxu0
        %v1339 = vadd.f32 %v1124, %v1338
        %v1340 = vpop.f32.mrf.mxu0
        %1341 = vmatprep.mubr.f32.mxu0 0.0
        %1342 = vmatmul.mubr.f32.gmra.mxu0 %v1160
        %v1343 = vpop.f32.mrf.mxu0
        %v1344 = vadd.f32 %v1124, %v1343
        %v1345 = vpop.f32.mrf.mxu0
        %1346 = vmatprep.mubr.f32.mxu0 0.0
        %1347 = vmatmul.mubr.f32.gmra.mxu0 %v1163
        %v1348 = vpop.f32.mrf.mxu0
        %v1349 = vadd.f32 %v1124, %v1348
        %v1350 = vpop.f32.mrf.mxu0
        %1351 = vmatprep.mubr.f32.mxu0 0.0
        %1352 = vmatmul.mubr.f32.gmra.mxu0 %v1166
        %v1353 = vpop.f32.mrf.mxu0
        %v1354 = vadd.f32 %v1124, %v1353
        %v1355 = vpop.f32.mrf.mxu0
        %1356 = vmatprep.mubr.f32.mxu0 0.0
        %1357 = vmatmul.mubr.f32.gmra.mxu0 %v1169
        %v1358 = vpop.f32.mrf.mxu0
        %v1359 = vadd.f32 %v1124, %v1358
        %v1360 = vpop.f32.mrf.mxu0
        %1361 = vmatprep.mubr.f32.mxu0 0.0
        %1362 = vmatmul.mubr.f32.gmra.mxu0 %v1172
        %v1363 = vpop.f32.mrf.mxu0
        %v1364 = vadd.f32 %v1124, %v1363
        %v1365 = vpop.f32.mrf.mxu0
        %1366 = vmatprep.mubr.f32.mxu0 0.0
        %1367 = vmatmul.mubr.f32.gmra.mxu0 %v1175
        %v1368 = vpop.f32.mrf.mxu0
        %v1369 = vadd.f32 %v1124, %v1368
        %v1370 = vpop.f32.mrf.mxu0
        %1371 = vmatprep.mubr.f32.mxu0 0.0
        %1372 = vmatmul.mubr.f32.gmra.mxu0 %v1178
        %v1373 = vpop.f32.mrf.mxu0
        %v1374 = vadd.f32 %v1124, %v1373
        %v1375 = vpop.f32.mrf.mxu0
        %1376 = vmatprep.mubr.f32.mxu0 0.0
        %1377 = vmatmul.mubr.f32.gmra.mxu0 %v1181
        %v1378 = vpop.f32.mrf.mxu0
        %v1379 = vadd.f32 %v1124, %v1378
        %v1380 = vpop.f32.mrf.mxu0
        %1381 = vmatprep.mubr.f32.mxu0 0.0
        %1382 = vmatmul.mubr.f32.gmra.mxu0 %v1184
        %v1383 = vpop.f32.mrf.mxu0
        %v1384 = vadd.f32 %v1124, %v1383
        %v1385 = vpop.f32.mrf.mxu0
        %1386 = vmatprep.mubr.f32.mxu0 0.0
        %1387 = vmatmul.mubr.f32.gmra.mxu0 %v1187
        %v1388 = vpop.f32.mrf.mxu0
        %v1389 = vadd.f32 %v1124, %v1388
        %v1390 = vpop.f32.mrf.mxu0
        %1391 = vmatprep.mubr.f32.mxu0 0.0
        %1392 = vmatmul.mubr.f32.gmra.mxu0 %v1190
        %v1393 = vpop.f32.mrf.mxu0
        %v1394 = vadd.f32 %v1124, %v1393
        %v1395 = vpop.f32.mrf.mxu0
        %1396 = vmatprep.mubr.f32.mxu0 0.0
        %1397 = vmatmul.mubr.f32.gmra.mxu0 %v1193
        %v1398 = vpop.f32.mrf.mxu0
        %v1399 = vadd.f32 %v1124, %v1398
        %v1400 = vpop.f32.mrf.mxu0
        %1401 = vmatprep.mubr.f32.mxu0 0.0
        %1402 = vmatmul.mubr.f32.gmra.mxu0 %v1196
        %v1403 = vpop.f32.mrf.mxu0
        %v1404 = vadd.f32 %v1124, %v1403
        %v1405 = vpop.f32.mrf.mxu0
        %1406 = vmatprep.mubr.f32.mxu0 0.0
        %1407 = vmatmul.mubr.f32.gmra.mxu0 %v1199
        %v1408 = vpop.f32.mrf.mxu0
        %v1409 = vadd.f32 %v1124, %v1408
        %v1410 = vpop.f32.mrf.mxu0
        %1411 = vmatprep.mubr.f32.mxu0 0.0
        %1412 = vmatmul.mubr.f32.gmra.mxu0 %v1202
        %v1413 = vpop.f32.mrf.mxu0
        %v1414 = vadd.f32 %v1124, %v1413
        %v1415 = vpop.f32.mrf.mxu0
        %1416 = vmatprep.mubr.f32.mxu0 0.0
        %1417 = vmatmul.mubr.f32.gmra.mxu0 %v1205
        %v1418 = vpop.f32.mrf.mxu0
        %v1419 = vadd.f32 %v1124, %v1418
        %v1420 = vpop.f32.mrf.mxu0
        %1421 = vmatprep.mubr.f32.mxu0 0.0
        %1422 = vmatmul.mubr.f32.gmra.mxu0 %v1208
        %v1423 = vpop.f32.mrf.mxu0
        %v1424 = vadd.f32 %v1124, %v1423
        %v1425 = vpop.f32.mrf.mxu0
        %1426 = vmatprep.mubr.f32.mxu0 0.0
        %1427 = vmatmul.mubr.f32.gmra.mxu0 %v1211
        %v1428 = vpop.f32.mrf.mxu0
        %v1429 = vadd.f32 %v1124, %v1428
        %v1430 = vpop.f32.mrf.mxu0
        %1431 = vmatprep.mubr.f32.mxu0 0.0
        %1432 = vmatmul.mubr.f32.gmra.mxu0 %v1214
        %v1433 = vpop.f32.mrf.mxu0
        %v1434 = vadd.f32 %v1124, %v1433
        %v1435 = vpop.f32.mrf.mxu0
        %1436 = vmatprep.mubr.f32.mxu0 0.0
        %1437 = vmatmul.mubr.f32.gmra.mxu0 %v1217
        %v1438 = vpop.f32.mrf.mxu0
        %v1439 = vadd.f32 %v1124, %v1438
        %v1440 = vpop.f32.mrf.mxu0
        %1441 = vmatprep.mubr.f32.mxu0 0.0
        %1442 = vmatmul.mubr.f32.gmra.mxu0 %v1220
        %v1443 = vpop.f32.mrf.mxu0
        %v1444 = vadd.f32 %v1124, %v1443
        %v1445 = vpop.f32.mrf.mxu0
        %1446 = vdwg.mxu0
        %vm1447 = vcmask 64512
        %v1449 = vsel %vm1447, %v745, 0
        %v1452 = vsel %vm1447, %v957, 0
        %v1455 = vsel %vm1447, %v962, 0
        %v1458 = vsel %vm1447, %v967, 0
        %v1461 = vsel %vm1447, %v972, 0
        %1463 = vmatprep.subr.mxu0 0.0
        %1464 = vmatpush1.xpose.msra.mxu0 0.0
        %1465 = vmatprep.subr.mxu0 0.0
        %1466 = vmatpush1.xpose.msra.mxu0 0.0
        %1467 = vmatprep.subr.mxu0 0.0
        %1468 = vmatpush1.xpose.msra.mxu0 0.0
        %1469 = vmatprep.subr.mxu0 0.0
        %1470 = vmatpush1.xpose.msra.mxu0 0.0
        %1471 = vmatprep.subr.mxu0 0.0
        %1472 = vmatpush1.xpose.msra.mxu0 0.0
        %1473 = vmatprep.subr.mxu0 0.0
        %1474 = vmatpush1.xpose.msra.mxu0 0.0
        %1475 = vmatprep.subr.mxu0 0.0
        %1476 = vmatpush1.xpose.msra.mxu0 0.0
        %1477 = vmatprep.subr.mxu0 0.0
        %1478 = vmatpush1.xpose.msra.mxu0 0.0
        %1479 = vmatprep.subr.mxu0 0.0
        %1480 = vmatpush1.xpose.msra.mxu0 0.0
        %1481 = vmatprep.subr.mxu0 0.0
        %1482 = vmatpush1.xpose.msra.mxu0 0.0
        %1483 = vmatprep.subr.mxu0 0.0
        %1484 = vmatpush1.xpose.msra.mxu0 0.0
        %1485 = vmatprep.subr.mxu0 0.0
        %1486 = vmatpush1.xpose.msra.mxu0 0.0
        %1487 = vmatprep.subr.mxu0 0.0
        %1488 = vmatpush1.xpose.msra.mxu0 %v1461
        %1489 = vmatprep.subr.mxu0 0.0
        %1490 = vmatpush1.xpose.msra.mxu0 %v1458
        %1491 = vmatprep.subr.mxu0 0.0
        %1492 = vmatpush1.xpose.msra.mxu0 %v1455
        %1493 = vmatprep.subr.mxu0 0.0
        %1494 = vmatpush1.xpose.msra.mxu0 %v1452
        %1495 = vmatprep.subr.mxu0 0.0
        %1496 = vmatpush2.xpose.msra.mxu0 0.0
        %1497 = vmatprep.subr.mxu0 0.0
        %1498 = vmatpush2.xpose.msra.mxu0 0.0
        %1499 = vmatprep.subr.mxu0 0.0
        %1500 = vmatpush2.xpose.msra.mxu0 0.0
        %1501 = vmatprep.subr.mxu0 0.0
        %1502 = vmatpush2.xpose.msra.mxu0 0.0
        %1503 = vmatprep.subr.mxu0 0.0
        %1504 = vmatpush2.xpose.msra.mxu0 0.0
        %1505 = vmatprep.subr.mxu0 0.0
        %1506 = vmatpush2.xpose.msra.mxu0 0.0
        %1507 = vmatprep.subr.mxu0 0.0
        %1508 = vmatpush2.xpose.msra.mxu0 0.0
        %1509 = vmatprep.subr.mxu0 0.0
        %1510 = vmatpush2.xpose.msra.mxu0 0.0
        %1511 = vmatprep.subr.mxu0 0.0
        %1512 = vmatpush2.xpose.msra.mxu0 0.0
        %1513 = vmatprep.subr.mxu0 0.0
        %1514 = vmatpush2.xpose.msra.mxu0 0.0
        %1515 = vmatprep.subr.mxu0 0.0
        %1516 = vmatpush2.xpose.msra.mxu0 0.0
        %1517 = vmatprep.subr.mxu0 0.0
        %1518 = vmatpush2.xpose.msra.mxu0 0.0
        %1519 = vmatprep.subr.mxu0 0.0
        %1520 = vmatpush2.xpose.msra.mxu0 0.0
        %1521 = vmatprep.subr.mxu0 0.0
        %1522 = vmatpush2.xpose.msra.mxu0 0.0
        %1523 = vmatprep.subr.mxu0 0.0
        %1524 = vmatpush2.xpose.msra.mxu0 0.0
        %1525 = vmatprep.subr.mxu0 0.0
        %1526 = vmatpush2.xpose.msra.mxu0 0.0
        %1527 = vmatprep.mubr.f32.mxu0 0.0
        %1528 = vmatmul.mubr.f32.gmra.mxu0 %v1449
        %v1529 = vpop.f32.mrf.mxu0
        %v1530 = vadd.f32 0.0, %v1529
        %v1531 = vpop.f32.mrf.mxu0
        %1532 = vdwg.mxu0
        %v1534 = vsel %vm1447, %v750, 0
        %v1537 = vsel %vm1447, %v977, 0
        %v1540 = vsel %vm1447, %v982, 0
        %v1543 = vsel %vm1447, %v987, 0
        %v1546 = vsel %vm1447, %v992, 0
        %1548 = vmatprep.subr.mxu0 0.0
        %1549 = vmatpush1.xpose.msra.mxu0 0.0
        %1550 = vmatprep.subr.mxu0 0.0
        %1551 = vmatpush1.xpose.msra.mxu0 0.0
        %1552 = vmatprep.subr.mxu0 0.0
        %1553 = vmatpush1.xpose.msra.mxu0 0.0
        %1554 = vmatprep.subr.mxu0 0.0
        %1555 = vmatpush1.xpose.msra.mxu0 0.0
        %1556 = vmatprep.subr.mxu0 0.0
        %1557 = vmatpush1.xpose.msra.mxu0 0.0
        %1558 = vmatprep.subr.mxu0 0.0
        %1559 = vmatpush1.xpose.msra.mxu0 0.0
        %1560 = vmatprep.subr.mxu0 0.0
        %1561 = vmatpush1.xpose.msra.mxu0 0.0
        %1562 = vmatprep.subr.mxu0 0.0
        %1563 = vmatpush1.xpose.msra.mxu0 0.0
        %1564 = vmatprep.subr.mxu0 0.0
        %1565 = vmatpush1.xpose.msra.mxu0 0.0
        %1566 = vmatprep.subr.mxu0 0.0
        %1567 = vmatpush1.xpose.msra.mxu0 0.0
        %1568 = vmatprep.subr.mxu0 0.0
        %1569 = vmatpush1.xpose.msra.mxu0 0.0
        %1570 = vmatprep.subr.mxu0 0.0
        %1571 = vmatpush1.xpose.msra.mxu0 0.0
        %1572 = vmatprep.subr.mxu0 0.0
        %1573 = vmatpush1.xpose.msra.mxu0 %v1546
        %1574 = vmatprep.subr.mxu0 0.0
        %1575 = vmatpush1.xpose.msra.mxu0 %v1543
        %1576 = vmatprep.subr.mxu0 0.0
        %1577 = vmatpush1.xpose.msra.mxu0 %v1540
        %1578 = vmatprep.subr.mxu0 0.0
        %1579 = vmatpush1.xpose.msra.mxu0 %v1537
        %1580 = vmatprep.subr.mxu0 0.0
        %1581 = vmatpush2.xpose.msra.mxu0 0.0
        %1582 = vmatprep.subr.mxu0 0.0
        %1583 = vmatpush2.xpose.msra.mxu0 0.0
        %1584 = vmatprep.subr.mxu0 0.0
        %1585 = vmatpush2.xpose.msra.mxu0 0.0
        %1586 = vmatprep.subr.mxu0 0.0
        %1587 = vmatpush2.xpose.msra.mxu0 0.0
        %1588 = vmatprep.subr.mxu0 0.0
        %1589 = vmatpush2.xpose.msra.mxu0 0.0
        %1590 = vmatprep.subr.mxu0 0.0
        %1591 = vmatpush2.xpose.msra.mxu0 0.0
        %1592 = vmatprep.subr.mxu0 0.0
        %1593 = vmatpush2.xpose.msra.mxu0 0.0
        %1594 = vmatprep.subr.mxu0 0.0
        %1595 = vmatpush2.xpose.msra.mxu0 0.0
        %1596 = vmatprep.subr.mxu0 0.0
        %1597 = vmatpush2.xpose.msra.mxu0 0.0
        %1598 = vmatprep.subr.mxu0 0.0
        %1599 = vmatpush2.xpose.msra.mxu0 0.0
        %1600 = vmatprep.subr.mxu0 0.0
        %1601 = vmatpush2.xpose.msra.mxu0 0.0
        %1602 = vmatprep.subr.mxu0 0.0
        %1603 = vmatpush2.xpose.msra.mxu0 0.0
        %1604 = vmatprep.subr.mxu0 0.0
        %1605 = vmatpush2.xpose.msra.mxu0 0.0
        %1606 = vmatprep.subr.mxu0 0.0
        %1607 = vmatpush2.xpose.msra.mxu0 0.0
        %1608 = vmatprep.subr.mxu0 0.0
        %1609 = vmatpush2.xpose.msra.mxu0 0.0
        %1610 = vmatprep.subr.mxu0 0.0
        %1611 = vmatpush2.xpose.msra.mxu0 0.0
        %1612 = vmatprep.mubr.f32.mxu0 0.0
        %1613 = vmatmul.mubr.f32.gmra.mxu0 %v1534
        %v1614 = vpop.f32.mrf.mxu0
        %v1615 = vadd.f32 0.0, %v1614
        %v1616 = vpop.f32.mrf.mxu0
        %1617 = vdwg.mxu0
        %v1619 = vsel %vm1447, %v755, 0
        %v1622 = vsel %vm1447, %v997, 0
        %v1625 = vsel %vm1447, %v1002, 0
        %v1628 = vsel %vm1447, %v1007, 0
        %v1631 = vsel %vm1447, %v1012, 0
        %1633 = vmatprep.subr.mxu0 0.0
        %1634 = vmatpush1.xpose.msra.mxu0 0.0
        %1635 = vmatprep.subr.mxu0 0.0
        %1636 = vmatpush1.xpose.msra.mxu0 0.0
        %1637 = vmatprep.subr.mxu0 0.0
        %1638 = vmatpush1.xpose.msra.mxu0 0.0
        %1639 = vmatprep.subr.mxu0 0.0
        %1640 = vmatpush1.xpose.msra.mxu0 0.0
        %1641 = vmatprep.subr.mxu0 0.0
        %1642 = vmatpush1.xpose.msra.mxu0 0.0
        %1643 = vmatprep.subr.mxu0 0.0
        %1644 = vmatpush1.xpose.msra.mxu0 0.0
        %1645 = vmatprep.subr.mxu0 0.0
        %1646 = vmatpush1.xpose.msra.mxu0 0.0
        %1647 = vmatprep.subr.mxu0 0.0
        %1648 = vmatpush1.xpose.msra.mxu0 0.0
        %1649 = vmatprep.subr.mxu0 0.0
        %1650 = vmatpush1.xpose.msra.mxu0 0.0
        %1651 = vmatprep.subr.mxu0 0.0
        %1652 = vmatpush1.xpose.msra.mxu0 0.0
        %1653 = vmatprep.subr.mxu0 0.0
        %1654 = vmatpush1.xpose.msra.mxu0 0.0
        %1655 = vmatprep.subr.mxu0 0.0
        %1656 = vmatpush1.xpose.msra.mxu0 0.0
        %1657 = vmatprep.subr.mxu0 0.0
        %1658 = vmatpush1.xpose.msra.mxu0 %v1631
        %1659 = vmatprep.subr.mxu0 0.0
        %1660 = vmatpush1.xpose.msra.mxu0 %v1628
        %1661 = vmatprep.subr.mxu0 0.0
        %1662 = vmatpush1.xpose.msra.mxu0 %v1625
        %1663 = vmatprep.subr.mxu0 0.0
        %1664 = vmatpush1.xpose.msra.mxu0 %v1622
        %1665 = vmatprep.subr.mxu0 0.0
        %1666 = vmatpush2.xpose.msra.mxu0 0.0
        %1667 = vmatprep.subr.mxu0 0.0
        %1668 = vmatpush2.xpose.msra.mxu0 0.0
        %1669 = vmatprep.subr.mxu0 0.0
        %1670 = vmatpush2.xpose.msra.mxu0 0.0
        %1671 = vmatprep.subr.mxu0 0.0
        %1672 = vmatpush2.xpose.msra.mxu0 0.0
        %1673 = vmatprep.subr.mxu0 0.0
        %1674 = vmatpush2.xpose.msra.mxu0 0.0
        %1675 = vmatprep.subr.mxu0 0.0
        %1676 = vmatpush2.xpose.msra.mxu0 0.0
        %1677 = vmatprep.subr.mxu0 0.0
        %1678 = vmatpush2.xpose.msra.mxu0 0.0
        %1679 = vmatprep.subr.mxu0 0.0
        %1680 = vmatpush2.xpose.msra.mxu0 0.0
        %1681 = vmatprep.subr.mxu0 0.0
        %1682 = vmatpush2.xpose.msra.mxu0 0.0
        %1683 = vmatprep.subr.mxu0 0.0
        %1684 = vmatpush2.xpose.msra.mxu0 0.0
        %1685 = vmatprep.subr.mxu0 0.0
        %1686 = vmatpush2.xpose.msra.mxu0 0.0
        %1687 = vmatprep.subr.mxu0 0.0
        %1688 = vmatpush2.xpose.msra.mxu0 0.0
        %1689 = vmatprep.subr.mxu0 0.0
        %1690 = vmatpush2.xpose.msra.mxu0 0.0
        %1691 = vmatprep.subr.mxu0 0.0
        %1692 = vmatpush2.xpose.msra.mxu0 0.0
        %1693 = vmatprep.subr.mxu0 0.0
        %1694 = vmatpush2.xpose.msra.mxu0 0.0
        %1695 = vmatprep.subr.mxu0 0.0
        %1696 = vmatpush2.xpose.msra.mxu0 0.0
        %1697 = vmatprep.mubr.f32.mxu0 0.0
        %1698 = vmatmul.mubr.f32.gmra.mxu0 %v1619
        %v1699 = vpop.f32.mrf.mxu0
        %v1700 = vadd.f32 0.0, %v1699
        %v1701 = vpop.f32.mrf.mxu0
        %1702 = vdwg.mxu0
        %v1704 = vsel %vm1447, %v760, 0
        %v1707 = vsel %vm1447, %v1017, 0
        %v1710 = vsel %vm1447, %v1022, 0
        %v1713 = vsel %vm1447, %v1027, 0
        %v1716 = vsel %vm1447, %v1032, 0
        %1718 = vmatprep.subr.mxu0 0.0
        %1719 = vmatpush1.xpose.msra.mxu0 0.0
        %1720 = vmatprep.subr.mxu0 0.0
        %1721 = vmatpush1.xpose.msra.mxu0 0.0
        %1722 = vmatprep.subr.mxu0 0.0
        %1723 = vmatpush1.xpose.msra.mxu0 0.0
        %1724 = vmatprep.subr.mxu0 0.0
        %1725 = vmatpush1.xpose.msra.mxu0 0.0
        %1726 = vmatprep.subr.mxu0 0.0
        %1727 = vmatpush1.xpose.msra.mxu0 0.0
        %1728 = vmatprep.subr.mxu0 0.0
        %1729 = vmatpush1.xpose.msra.mxu0 0.0
        %1730 = vmatprep.subr.mxu0 0.0
        %1731 = vmatpush1.xpose.msra.mxu0 0.0
        %1732 = vmatprep.subr.mxu0 0.0
        %1733 = vmatpush1.xpose.msra.mxu0 0.0
        %1734 = vmatprep.subr.mxu0 0.0
        %1735 = vmatpush1.xpose.msra.mxu0 0.0
        %1736 = vmatprep.subr.mxu0 0.0
        %1737 = vmatpush1.xpose.msra.mxu0 0.0
        %1738 = vmatprep.subr.mxu0 0.0
        %1739 = vmatpush1.xpose.msra.mxu0 0.0
        %1740 = vmatprep.subr.mxu0 0.0
        %1741 = vmatpush1.xpose.msra.mxu0 0.0
        %1742 = vmatprep.subr.mxu0 0.0
        %1743 = vmatpush1.xpose.msra.mxu0 %v1716
        %1744 = vmatprep.subr.mxu0 0.0
        %1745 = vmatpush1.xpose.msra.mxu0 %v1713
        %1746 = vmatprep.subr.mxu0 0.0
        %1747 = vmatpush1.xpose.msra.mxu0 %v1710
        %1748 = vmatprep.subr.mxu0 0.0
        %1749 = vmatpush1.xpose.msra.mxu0 %v1707
        %1750 = vmatprep.subr.mxu0 0.0
        %1751 = vmatpush2.xpose.msra.mxu0 0.0
        %1752 = vmatprep.subr.mxu0 0.0
        %1753 = vmatpush2.xpose.msra.mxu0 0.0
        %1754 = vmatprep.subr.mxu0 0.0
        %1755 = vmatpush2.xpose.msra.mxu0 0.0
        %1756 = vmatprep.subr.mxu0 0.0
        %1757 = vmatpush2.xpose.msra.mxu0 0.0
        %1758 = vmatprep.subr.mxu0 0.0
        %1759 = vmatpush2.xpose.msra.mxu0 0.0
        %1760 = vmatprep.subr.mxu0 0.0
        %1761 = vmatpush2.xpose.msra.mxu0 0.0
        %1762 = vmatprep.subr.mxu0 0.0
        %1763 = vmatpush2.xpose.msra.mxu0 0.0
        %1764 = vmatprep.subr.mxu0 0.0
        %1765 = vmatpush2.xpose.msra.mxu0 0.0
        %1766 = vmatprep.subr.mxu0 0.0
        %1767 = vmatpush2.xpose.msra.mxu0 0.0
        %1768 = vmatprep.subr.mxu0 0.0
        %1769 = vmatpush2.xpose.msra.mxu0 0.0
        %1770 = vmatprep.subr.mxu0 0.0
        %1771 = vmatpush2.xpose.msra.mxu0 0.0
        %1772 = vmatprep.subr.mxu0 0.0
        %1773 = vmatpush2.xpose.msra.mxu0 0.0
        %1774 = vmatprep.subr.mxu0 0.0
        %1775 = vmatpush2.xpose.msra.mxu0 0.0
        %1776 = vmatprep.subr.mxu0 0.0
        %1777 = vmatpush2.xpose.msra.mxu0 0.0
        %1778 = vmatprep.subr.mxu0 0.0
        %1779 = vmatpush2.xpose.msra.mxu0 0.0
        %1780 = vmatprep.subr.mxu0 0.0
        %1781 = vmatpush2.xpose.msra.mxu0 0.0
        %1782 = vmatprep.mubr.f32.mxu0 0.0
        %1783 = vmatmul.mubr.f32.gmra.mxu0 %v1704
        %v1784 = vpop.f32.mrf.mxu0
        %v1785 = vadd.f32 0.0, %v1784
        %v1786 = vpop.f32.mrf.mxu0
        %1787 = vdwg.mxu0
        %v1789 = vsel %vm1447, %v765, 0
        %v1792 = vsel %vm1447, %v1037, 0
        %v1795 = vsel %vm1447, %v1042, 0
        %v1798 = vsel %vm1447, %v1047, 0
        %v1801 = vsel %vm1447, %v1052, 0
        %1803 = vmatprep.subr.mxu0 0.0
        %1804 = vmatpush1.xpose.msra.mxu0 0.0
        %1805 = vmatprep.subr.mxu0 0.0
        %1806 = vmatpush1.xpose.msra.mxu0 0.0
        %1807 = vmatprep.subr.mxu0 0.0
        %1808 = vmatpush1.xpose.msra.mxu0 0.0
        %1809 = vmatprep.subr.mxu0 0.0
        %1810 = vmatpush1.xpose.msra.mxu0 0.0
        %1811 = vmatprep.subr.mxu0 0.0
        %1812 = vmatpush1.xpose.msra.mxu0 0.0
        %1813 = vmatprep.subr.mxu0 0.0
        %1814 = vmatpush1.xpose.msra.mxu0 0.0
        %1815 = vmatprep.subr.mxu0 0.0
        %1816 = vmatpush1.xpose.msra.mxu0 0.0
        %1817 = vmatprep.subr.mxu0 0.0
        %1818 = vmatpush1.xpose.msra.mxu0 0.0
        %1819 = vmatprep.subr.mxu0 0.0
        %1820 = vmatpush1.xpose.msra.mxu0 0.0
        %1821 = vmatprep.subr.mxu0 0.0
        %1822 = vmatpush1.xpose.msra.mxu0 0.0
        %1823 = vmatprep.subr.mxu0 0.0
        %1824 = vmatpush1.xpose.msra.mxu0 0.0
        %1825 = vmatprep.subr.mxu0 0.0
        %1826 = vmatpush1.xpose.msra.mxu0 0.0
        %1827 = vmatprep.subr.mxu0 0.0
        %1828 = vmatpush1.xpose.msra.mxu0 %v1801
        %1829 = vmatprep.subr.mxu0 0.0
        %1830 = vmatpush1.xpose.msra.mxu0 %v1798
        %1831 = vmatprep.subr.mxu0 0.0
        %1832 = vmatpush1.xpose.msra.mxu0 %v1795
        %1833 = vmatprep.subr.mxu0 0.0
        %1834 = vmatpush1.xpose.msra.mxu0 %v1792
        %1835 = vmatprep.subr.mxu0 0.0
        %1836 = vmatpush2.xpose.msra.mxu0 0.0
        %1837 = vmatprep.subr.mxu0 0.0
        %1838 = vmatpush2.xpose.msra.mxu0 0.0
        %1839 = vmatprep.subr.mxu0 0.0
        %1840 = vmatpush2.xpose.msra.mxu0 0.0
        %1841 = vmatprep.subr.mxu0 0.0
        %1842 = vmatpush2.xpose.msra.mxu0 0.0
        %1843 = vmatprep.subr.mxu0 0.0
        %1844 = vmatpush2.xpose.msra.mxu0 0.0
        %1845 = vmatprep.subr.mxu0 0.0
        %1846 = vmatpush2.xpose.msra.mxu0 0.0
        %1847 = vmatprep.subr.mxu0 0.0
        %1848 = vmatpush2.xpose.msra.mxu0 0.0
        %1849 = vmatprep.subr.mxu0 0.0
        %1850 = vmatpush2.xpose.msra.mxu0 0.0
        %1851 = vmatprep.subr.mxu0 0.0
        %1852 = vmatpush2.xpose.msra.mxu0 0.0
        %1853 = vmatprep.subr.mxu0 0.0
        %1854 = vmatpush2.xpose.msra.mxu0 0.0
        %1855 = vmatprep.subr.mxu0 0.0
        %1856 = vmatpush2.xpose.msra.mxu0 0.0
        %1857 = vmatprep.subr.mxu0 0.0
        %1858 = vmatpush2.xpose.msra.mxu0 0.0
        %1859 = vmatprep.subr.mxu0 0.0
        %1860 = vmatpush2.xpose.msra.mxu0 0.0
        %1861 = vmatprep.subr.mxu0 0.0
        %1862 = vmatpush2.xpose.msra.mxu0 0.0
        %1863 = vmatprep.subr.mxu0 0.0
        %1864 = vmatpush2.xpose.msra.mxu0 0.0
        %1865 = vmatprep.subr.mxu0 0.0
        %1866 = vmatpush2.xpose.msra.mxu0 0.0
        %1867 = vmatprep.mubr.f32.mxu0 0.0
        %1868 = vmatmul.mubr.f32.gmra.mxu0 %v1789
        %v1869 = vpop.f32.mrf.mxu0
        %v1870 = vadd.f32 0.0, %v1869
        %v1871 = vpop.f32.mrf.mxu0
        %1872 = vdwg.mxu0
        %v1874 = vsel %vm1447, %v770, 0
        %v1877 = vsel %vm1447, %v1057, 0
        %v1880 = vsel %vm1447, %v1062, 0
        %v1883 = vsel %vm1447, %v1067, 0
        %v1886 = vsel %vm1447, %v1072, 0
        %1888 = vmatprep.subr.mxu0 0.0
        %1889 = vmatpush1.xpose.msra.mxu0 0.0
        %1890 = vmatprep.subr.mxu0 0.0
        %1891 = vmatpush1.xpose.msra.mxu0 0.0
        %1892 = vmatprep.subr.mxu0 0.0
        %1893 = vmatpush1.xpose.msra.mxu0 0.0
        %1894 = vmatprep.subr.mxu0 0.0
        %1895 = vmatpush1.xpose.msra.mxu0 0.0
        %1896 = vmatprep.subr.mxu0 0.0
        %1897 = vmatpush1.xpose.msra.mxu0 0.0
        %1898 = vmatprep.subr.mxu0 0.0
        %1899 = vmatpush1.xpose.msra.mxu0 0.0
        %1900 = vmatprep.subr.mxu0 0.0
        %1901 = vmatpush1.xpose.msra.mxu0 0.0
        %1902 = vmatprep.subr.mxu0 0.0
        %1903 = vmatpush1.xpose.msra.mxu0 0.0
        %1904 = vmatprep.subr.mxu0 0.0
        %1905 = vmatpush1.xpose.msra.mxu0 0.0
        %1906 = vmatprep.subr.mxu0 0.0
        %1907 = vmatpush1.xpose.msra.mxu0 0.0
        %1908 = vmatprep.subr.mxu0 0.0
        %1909 = vmatpush1.xpose.msra.mxu0 0.0
        %1910 = vmatprep.subr.mxu0 0.0
        %1911 = vmatpush1.xpose.msra.mxu0 0.0
        %1912 = vmatprep.subr.mxu0 0.0
        %1913 = vmatpush1.xpose.msra.mxu0 %v1886
        %1914 = vmatprep.subr.mxu0 0.0
        %1915 = vmatpush1.xpose.msra.mxu0 %v1883
        %1916 = vmatprep.subr.mxu0 0.0
        %1917 = vmatpush1.xpose.msra.mxu0 %v1880
        %1918 = vmatprep.subr.mxu0 0.0
        %1919 = vmatpush1.xpose.msra.mxu0 %v1877
        %1920 = vmatprep.subr.mxu0 0.0
        %1921 = vmatpush2.xpose.msra.mxu0 0.0
        %1922 = vmatprep.subr.mxu0 0.0
        %1923 = vmatpush2.xpose.msra.mxu0 0.0
        %1924 = vmatprep.subr.mxu0 0.0
        %1925 = vmatpush2.xpose.msra.mxu0 0.0
        %1926 = vmatprep.subr.mxu0 0.0
        %1927 = vmatpush2.xpose.msra.mxu0 0.0
        %1928 = vmatprep.subr.mxu0 0.0
        %1929 = vmatpush2.xpose.msra.mxu0 0.0
        %1930 = vmatprep.subr.mxu0 0.0
        %1931 = vmatpush2.xpose.msra.mxu0 0.0
        %1932 = vmatprep.subr.mxu0 0.0
        %1933 = vmatpush2.xpose.msra.mxu0 0.0
        %1934 = vmatprep.subr.mxu0 0.0
        %1935 = vmatpush2.xpose.msra.mxu0 0.0
        %1936 = vmatprep.subr.mxu0 0.0
        %1937 = vmatpush2.xpose.msra.mxu0 0.0
        %1938 = vmatprep.subr.mxu0 0.0
        %1939 = vmatpush2.xpose.msra.mxu0 0.0
        %1940 = vmatprep.subr.mxu0 0.0
        %1941 = vmatpush2.xpose.msra.mxu0 0.0
        %1942 = vmatprep.subr.mxu0 0.0
        %1943 = vmatpush2.xpose.msra.mxu0 0.0
        %1944 = vmatprep.subr.mxu0 0.0
        %1945 = vmatpush2.xpose.msra.mxu0 0.0
        %1946 = vmatprep.subr.mxu0 0.0
        %1947 = vmatpush2.xpose.msra.mxu0 0.0
        %1948 = vmatprep.subr.mxu0 0.0
        %1949 = vmatpush2.xpose.msra.mxu0 0.0
        %1950 = vmatprep.subr.mxu0 0.0
        %1951 = vmatpush2.xpose.msra.mxu0 0.0
        %1952 = vmatprep.mubr.f32.mxu0 0.0
        %1953 = vmatmul.mubr.f32.gmra.mxu0 %v1874
        %v1954 = vpop.f32.mrf.mxu0
        %v1955 = vadd.f32 0.0, %v1954
        %v1956 = vpop.f32.mrf.mxu0
        %1957 = vdwg.mxu0
        %v1959 = vsel %vm1447, %v775, 0
        %v1962 = vsel %vm1447, %v1077, 0
        %v1965 = vsel %vm1447, %v1082, 0
        %v1968 = vsel %vm1447, %v1087, 0
        %v1971 = vsel %vm1447, %v1092, 0
        %1973 = vmatprep.subr.mxu0 0.0
        %1974 = vmatpush1.xpose.msra.mxu0 0.0
        %1975 = vmatprep.subr.mxu0 0.0
        %1976 = vmatpush1.xpose.msra.mxu0 0.0
        %1977 = vmatprep.subr.mxu0 0.0
        %1978 = vmatpush1.xpose.msra.mxu0 0.0
        %1979 = vmatprep.subr.mxu0 0.0
        %1980 = vmatpush1.xpose.msra.mxu0 0.0
        %1981 = vmatprep.subr.mxu0 0.0
        %1982 = vmatpush1.xpose.msra.mxu0 0.0
        %1983 = vmatprep.subr.mxu0 0.0
        %1984 = vmatpush1.xpose.msra.mxu0 0.0
        %1985 = vmatprep.subr.mxu0 0.0
        %1986 = vmatpush1.xpose.msra.mxu0 0.0
        %1987 = vmatprep.subr.mxu0 0.0
        %1988 = vmatpush1.xpose.msra.mxu0 0.0
        %1989 = vmatprep.subr.mxu0 0.0
        %1990 = vmatpush1.xpose.msra.mxu0 0.0
        %1991 = vmatprep.subr.mxu0 0.0
        %1992 = vmatpush1.xpose.msra.mxu0 0.0
        %1993 = vmatprep.subr.mxu0 0.0
        %1994 = vmatpush1.xpose.msra.mxu0 0.0
        %1995 = vmatprep.subr.mxu0 0.0
        %1996 = vmatpush1.xpose.msra.mxu0 0.0
        %1997 = vmatprep.subr.mxu0 0.0
        %1998 = vmatpush1.xpose.msra.mxu0 %v1971
        %1999 = vmatprep.subr.mxu0 0.0
        %2000 = vmatpush1.xpose.msra.mxu0 %v1968
        %2001 = vmatprep.subr.mxu0 0.0
        %2002 = vmatpush1.xpose.msra.mxu0 %v1965
        %2003 = vmatprep.subr.mxu0 0.0
        %2004 = vmatpush1.xpose.msra.mxu0 %v1962
        %2005 = vmatprep.subr.mxu0 0.0
        %2006 = vmatpush2.xpose.msra.mxu0 0.0
        %2007 = vmatprep.subr.mxu0 0.0
        %2008 = vmatpush2.xpose.msra.mxu0 0.0
        %2009 = vmatprep.subr.mxu0 0.0
        %2010 = vmatpush2.xpose.msra.mxu0 0.0
        %2011 = vmatprep.subr.mxu0 0.0
        %2012 = vmatpush2.xpose.msra.mxu0 0.0
        %2013 = vmatprep.subr.mxu0 0.0
        %2014 = vmatpush2.xpose.msra.mxu0 0.0
        %2015 = vmatprep.subr.mxu0 0.0
        %2016 = vmatpush2.xpose.msra.mxu0 0.0
        %2017 = vmatprep.subr.mxu0 0.0
        %2018 = vmatpush2.xpose.msra.mxu0 0.0
        %2019 = vmatprep.subr.mxu0 0.0
        %2020 = vmatpush2.xpose.msra.mxu0 0.0
        %2021 = vmatprep.subr.mxu0 0.0
        %2022 = vmatpush2.xpose.msra.mxu0 0.0
        %2023 = vmatprep.subr.mxu0 0.0
        %2024 = vmatpush2.xpose.msra.mxu0 0.0
        %2025 = vmatprep.subr.mxu0 0.0
        %2026 = vmatpush2.xpose.msra.mxu0 0.0
        %2027 = vmatprep.subr.mxu0 0.0
        %2028 = vmatpush2.xpose.msra.mxu0 0.0
        %2029 = vmatprep.subr.mxu0 0.0
        %2030 = vmatpush2.xpose.msra.mxu0 0.0
        %2031 = vmatprep.subr.mxu0 0.0
        %2032 = vmatpush2.xpose.msra.mxu0 0.0
        %2033 = vmatprep.subr.mxu0 0.0
        %2034 = vmatpush2.xpose.msra.mxu0 0.0
        %2035 = vmatprep.subr.mxu0 0.0
        %2036 = vmatpush2.xpose.msra.mxu0 0.0
        %2037 = vmatprep.mubr.f32.mxu0 0.0
        %2038 = vmatmul.mubr.f32.gmra.mxu0 %v1959
        %v2039 = vpop.f32.mrf.mxu0
        %v2040 = vadd.f32 0.0, %v2039
        %v2041 = vpop.f32.mrf.mxu0
        %2042 = vdwg.mxu0
        %v2044 = vsel %vm1447, %v780, 0
        %v2047 = vsel %vm1447, %v1097, 0
        %v2050 = vsel %vm1447, %v1102, 0
        %v2053 = vsel %vm1447, %v1107, 0
        %v2056 = vsel %vm1447, %v1112, 0
        %2058 = vmatprep.subr.mxu0 0.0
        %2059 = vmatpush1.xpose.msra.mxu0 0.0
        %2060 = vmatprep.subr.mxu0 0.0
        %2061 = vmatpush1.xpose.msra.mxu0 0.0
        %2062 = vmatprep.subr.mxu0 0.0
        %2063 = vmatpush1.xpose.msra.mxu0 0.0
        %2064 = vmatprep.subr.mxu0 0.0
        %2065 = vmatpush1.xpose.msra.mxu0 0.0
        %2066 = vmatprep.subr.mxu0 0.0
        %2067 = vmatpush1.xpose.msra.mxu0 0.0
        %2068 = vmatprep.subr.mxu0 0.0
        %2069 = vmatpush1.xpose.msra.mxu0 0.0
        %2070 = vmatprep.subr.mxu0 0.0
        %2071 = vmatpush1.xpose.msra.mxu0 0.0
        %2072 = vmatprep.subr.mxu0 0.0
        %2073 = vmatpush1.xpose.msra.mxu0 0.0
        %2074 = vmatprep.subr.mxu0 0.0
        %2075 = vmatpush1.xpose.msra.mxu0 0.0
        %2076 = vmatprep.subr.mxu0 0.0
        %2077 = vmatpush1.xpose.msra.mxu0 0.0
        %2078 = vmatprep.subr.mxu0 0.0
        %2079 = vmatpush1.xpose.msra.mxu0 0.0
        %2080 = vmatprep.subr.mxu0 0.0
        %2081 = vmatpush1.xpose.msra.mxu0 0.0
        %2082 = vmatprep.subr.mxu0 0.0
        %2083 = vmatpush1.xpose.msra.mxu0 %v2056
        %2084 = vmatprep.subr.mxu0 0.0
        %2085 = vmatpush1.xpose.msra.mxu0 %v2053
        %2086 = vmatprep.subr.mxu0 0.0
        %2087 = vmatpush1.xpose.msra.mxu0 %v2050
        %2088 = vmatprep.subr.mxu0 0.0
        %2089 = vmatpush1.xpose.msra.mxu0 %v2047
        %2090 = vmatprep.subr.mxu0 0.0
        %2091 = vmatpush2.xpose.msra.mxu0 0.0
        %2092 = vmatprep.subr.mxu0 0.0
        %2093 = vmatpush2.xpose.msra.mxu0 0.0
        %2094 = vmatprep.subr.mxu0 0.0
        %2095 = vmatpush2.xpose.msra.mxu0 0.0
        %2096 = vmatprep.subr.mxu0 0.0
        %2097 = vmatpush2.xpose.msra.mxu0 0.0
        %2098 = vmatprep.subr.mxu0 0.0
        %2099 = vmatpush2.xpose.msra.mxu0 0.0
        %2100 = vmatprep.subr.mxu0 0.0
        %2101 = vmatpush2.xpose.msra.mxu0 0.0
        %2102 = vmatprep.subr.mxu0 0.0
        %2103 = vmatpush2.xpose.msra.mxu0 0.0
        %2104 = vmatprep.subr.mxu0 0.0
        %2105 = vmatpush2.xpose.msra.mxu0 0.0
        %2106 = vmatprep.subr.mxu0 0.0
        %2107 = vmatpush2.xpose.msra.mxu0 0.0
        %2108 = vmatprep.subr.mxu0 0.0
        %2109 = vmatpush2.xpose.msra.mxu0 0.0
        %2110 = vmatprep.subr.mxu0 0.0
        %2111 = vmatpush2.xpose.msra.mxu0 0.0
        %2112 = vmatprep.subr.mxu0 0.0
        %2113 = vmatpush2.xpose.msra.mxu0 0.0
        %2114 = vmatprep.subr.mxu0 0.0
        %2115 = vmatpush2.xpose.msra.mxu0 0.0
        %2116 = vmatprep.subr.mxu0 0.0
        %2117 = vmatpush2.xpose.msra.mxu0 0.0
        %2118 = vmatprep.subr.mxu0 0.0
        %2119 = vmatpush2.xpose.msra.mxu0 0.0
        %2120 = vmatprep.subr.mxu0 0.0
        %2121 = vmatpush2.xpose.msra.mxu0 0.0
        %2122 = vmatprep.mubr.f32.mxu0 0.0
        %2123 = vmatmul.mubr.f32.gmra.mxu0 %v2044
        %v2124 = vpop.f32.mrf.mxu0
        %v2125 = vadd.f32 0.0, %v2124
        %v2126 = vpop.f32.mrf.mxu0
        %2127 = vdwg.mxu0
        %2128 = vrot.lane.b32.xlu0 %v745, 120
        %v2129 = vpop.permute.xlu0 %2128
        %2130 = vrot.lane.b32.xlu0 %v957, 120
        %v2131 = vpop.permute.xlu0 %2130
        %2132 = vrot.lane.b32.xlu0 %v962, 120
        %v2133 = vpop.permute.xlu0 %2132
        %2134 = vrot.lane.b32.xlu0 %v967, 120
        %v2135 = vpop.permute.xlu0 %2134
        %2136 = vrot.lane.b32.xlu0 %v972, 120
        %v2137 = vpop.permute.xlu0 %2136
        %v2138 = vsel %vm1447, %v2129, 0
        %v2140 = vsel %vm1447, %v2131, 0
        %v2142 = vsel %vm1447, %v2133, 0
        %v2144 = vsel %vm1447, %v2135, 0
        %v2146 = vsel %vm1447, %v2137, 0
        %2148 = vmatprep.subr.mxu0 0.0
        %2149 = vmatpush1.xpose.msra.mxu0 0.0
        %2150 = vmatprep.subr.mxu0 0.0
        %2151 = vmatpush1.xpose.msra.mxu0 0.0
        %2152 = vmatprep.subr.mxu0 0.0
        %2153 = vmatpush1.xpose.msra.mxu0 0.0
        %2154 = vmatprep.subr.mxu0 0.0
        %2155 = vmatpush1.xpose.msra.mxu0 0.0
        %2156 = vmatprep.subr.mxu0 0.0
        %2157 = vmatpush1.xpose.msra.mxu0 0.0
        %2158 = vmatprep.subr.mxu0 0.0
        %2159 = vmatpush1.xpose.msra.mxu0 0.0
        %2160 = vmatprep.subr.mxu0 0.0
        %2161 = vmatpush1.xpose.msra.mxu0 0.0
        %2162 = vmatprep.subr.mxu0 0.0
        %2163 = vmatpush1.xpose.msra.mxu0 0.0
        %2164 = vmatprep.subr.mxu0 0.0
        %2165 = vmatpush1.xpose.msra.mxu0 0.0
        %2166 = vmatprep.subr.mxu0 0.0
        %2167 = vmatpush1.xpose.msra.mxu0 0.0
        %2168 = vmatprep.subr.mxu0 0.0
        %2169 = vmatpush1.xpose.msra.mxu0 0.0
        %2170 = vmatprep.subr.mxu0 0.0
        %2171 = vmatpush1.xpose.msra.mxu0 0.0
        %2172 = vmatprep.subr.mxu0 0.0
        %2173 = vmatpush1.xpose.msra.mxu0 %v2146
        %2174 = vmatprep.subr.mxu0 0.0
        %2175 = vmatpush1.xpose.msra.mxu0 %v2144
        %2176 = vmatprep.subr.mxu0 0.0
        %2177 = vmatpush1.xpose.msra.mxu0 %v2142
        %2178 = vmatprep.subr.mxu0 0.0
        %2179 = vmatpush1.xpose.msra.mxu0 %v2140
        %2180 = vmatprep.subr.mxu0 0.0
        %2181 = vmatpush2.xpose.msra.mxu0 0.0
        %2182 = vmatprep.subr.mxu0 0.0
        %2183 = vmatpush2.xpose.msra.mxu0 0.0
        %2184 = vmatprep.subr.mxu0 0.0
        %2185 = vmatpush2.xpose.msra.mxu0 0.0
        %2186 = vmatprep.subr.mxu0 0.0
        %2187 = vmatpush2.xpose.msra.mxu0 0.0
        %2188 = vmatprep.subr.mxu0 0.0
        %2189 = vmatpush2.xpose.msra.mxu0 0.0
        %2190 = vmatprep.subr.mxu0 0.0
        %2191 = vmatpush2.xpose.msra.mxu0 0.0
        %2192 = vmatprep.subr.mxu0 0.0
        %2193 = vmatpush2.xpose.msra.mxu0 0.0
        %2194 = vmatprep.subr.mxu0 0.0
        %2195 = vmatpush2.xpose.msra.mxu0 0.0
        %2196 = vmatprep.subr.mxu0 0.0
        %2197 = vmatpush2.xpose.msra.mxu0 0.0
        %2198 = vmatprep.subr.mxu0 0.0
        %2199 = vmatpush2.xpose.msra.mxu0 0.0
        %2200 = vmatprep.subr.mxu0 0.0
        %2201 = vmatpush2.xpose.msra.mxu0 0.0
        %2202 = vmatprep.subr.mxu0 0.0
        %2203 = vmatpush2.xpose.msra.mxu0 0.0
        %2204 = vmatprep.subr.mxu0 0.0
        %2205 = vmatpush2.xpose.msra.mxu0 0.0
        %2206 = vmatprep.subr.mxu0 0.0
        %2207 = vmatpush2.xpose.msra.mxu0 0.0
        %2208 = vmatprep.subr.mxu0 0.0
        %2209 = vmatpush2.xpose.msra.mxu0 0.0
        %2210 = vmatprep.subr.mxu0 0.0
        %2211 = vmatpush2.xpose.msra.mxu0 0.0
        %2212 = vmatprep.mubr.f32.mxu0 0.0
        %2213 = vmatmul.mubr.f32.gmra.mxu0 %v2138
        %v2214 = vpop.f32.mrf.mxu0
        %v2215 = vadd.f32 0.0, %v2214
        %v2216 = vpop.f32.mrf.mxu0
        %2217 = vdwg.mxu0
        %2218 = vrot.lane.b32.xlu0 %v750, 120
        %v2219 = vpop.permute.xlu0 %2218
        %2220 = vrot.lane.b32.xlu0 %v977, 120
        %v2221 = vpop.permute.xlu0 %2220
        %2222 = vrot.lane.b32.xlu0 %v982, 120
        %v2223 = vpop.permute.xlu0 %2222
        %2224 = vrot.lane.b32.xlu0 %v987, 120
        %v2225 = vpop.permute.xlu0 %2224
        %2226 = vrot.lane.b32.xlu0 %v992, 120
        %v2227 = vpop.permute.xlu0 %2226
        %v2228 = vsel %vm1447, %v2219, 0
        %v2230 = vsel %vm1447, %v2221, 0
        %v2232 = vsel %vm1447, %v2223, 0
        %v2234 = vsel %vm1447, %v2225, 0
        %v2236 = vsel %vm1447, %v2227, 0
        %2238 = vmatprep.subr.mxu0 0.0
        %2239 = vmatpush1.xpose.msra.mxu0 0.0
        %2240 = vmatprep.subr.mxu0 0.0
        %2241 = vmatpush1.xpose.msra.mxu0 0.0
        %2242 = vmatprep.subr.mxu0 0.0
        %2243 = vmatpush1.xpose.msra.mxu0 0.0
        %2244 = vmatprep.subr.mxu0 0.0
        %2245 = vmatpush1.xpose.msra.mxu0 0.0
        %2246 = vmatprep.subr.mxu0 0.0
        %2247 = vmatpush1.xpose.msra.mxu0 0.0
        %2248 = vmatprep.subr.mxu0 0.0
        %2249 = vmatpush1.xpose.msra.mxu0 0.0
        %2250 = vmatprep.subr.mxu0 0.0
        %2251 = vmatpush1.xpose.msra.mxu0 0.0
        %2252 = vmatprep.subr.mxu0 0.0
        %2253 = vmatpush1.xpose.msra.mxu0 0.0
        %2254 = vmatprep.subr.mxu0 0.0
        %2255 = vmatpush1.xpose.msra.mxu0 0.0
        %2256 = vmatprep.subr.mxu0 0.0
        %2257 = vmatpush1.xpose.msra.mxu0 0.0
        %2258 = vmatprep.subr.mxu0 0.0
        %2259 = vmatpush1.xpose.msra.mxu0 0.0
        %2260 = vmatprep.subr.mxu0 0.0
        %2261 = vmatpush1.xpose.msra.mxu0 0.0
        %2262 = vmatprep.subr.mxu0 0.0
        %2263 = vmatpush1.xpose.msra.mxu0 %v2236
        %2264 = vmatprep.subr.mxu0 0.0
        %2265 = vmatpush1.xpose.msra.mxu0 %v2234
        %2266 = vmatprep.subr.mxu0 0.0
        %2267 = vmatpush1.xpose.msra.mxu0 %v2232
        %2268 = vmatprep.subr.mxu0 0.0
        %2269 = vmatpush1.xpose.msra.mxu0 %v2230
        %2270 = vmatprep.subr.mxu0 0.0
        %2271 = vmatpush2.xpose.msra.mxu0 0.0
        %2272 = vmatprep.subr.mxu0 0.0
        %2273 = vmatpush2.xpose.msra.mxu0 0.0
        %2274 = vmatprep.subr.mxu0 0.0
        %2275 = vmatpush2.xpose.msra.mxu0 0.0
        %2276 = vmatprep.subr.mxu0 0.0
        %2277 = vmatpush2.xpose.msra.mxu0 0.0
        %2278 = vmatprep.subr.mxu0 0.0
        %2279 = vmatpush2.xpose.msra.mxu0 0.0
        %2280 = vmatprep.subr.mxu0 0.0
        %2281 = vmatpush2.xpose.msra.mxu0 0.0
        %2282 = vmatprep.subr.mxu0 0.0
        %2283 = vmatpush2.xpose.msra.mxu0 0.0
        %2284 = vmatprep.subr.mxu0 0.0
        %2285 = vmatpush2.xpose.msra.mxu0 0.0
        %2286 = vmatprep.subr.mxu0 0.0
        %2287 = vmatpush2.xpose.msra.mxu0 0.0
        %2288 = vmatprep.subr.mxu0 0.0
        %2289 = vmatpush2.xpose.msra.mxu0 0.0
        %2290 = vmatprep.subr.mxu0 0.0
        %2291 = vmatpush2.xpose.msra.mxu0 0.0
        %2292 = vmatprep.subr.mxu0 0.0
        %2293 = vmatpush2.xpose.msra.mxu0 0.0
        %2294 = vmatprep.subr.mxu0 0.0
        %2295 = vmatpush2.xpose.msra.mxu0 0.0
        %2296 = vmatprep.subr.mxu0 0.0
        %2297 = vmatpush2.xpose.msra.mxu0 0.0
        %2298 = vmatprep.subr.mxu0 0.0
        %2299 = vmatpush2.xpose.msra.mxu0 0.0
        %2300 = vmatprep.subr.mxu0 0.0
        %2301 = vmatpush2.xpose.msra.mxu0 0.0
        %2302 = vmatprep.mubr.f32.mxu0 0.0
        %2303 = vmatmul.mubr.f32.gmra.mxu0 %v2228
        %v2304 = vpop.f32.mrf.mxu0
        %v2305 = vadd.f32 0.0, %v2304
        %v2306 = vpop.f32.mrf.mxu0
        %2307 = vdwg.mxu0
        %2308 = vrot.lane.b32.xlu0 %v755, 120
        %v2309 = vpop.permute.xlu0 %2308
        %2310 = vrot.lane.b32.xlu0 %v997, 120
        %v2311 = vpop.permute.xlu0 %2310
        %2312 = vrot.lane.b32.xlu0 %v1002, 120
        %v2313 = vpop.permute.xlu0 %2312
        %2314 = vrot.lane.b32.xlu0 %v1007, 120
        %v2315 = vpop.permute.xlu0 %2314
        %2316 = vrot.lane.b32.xlu0 %v1012, 120
        %v2317 = vpop.permute.xlu0 %2316
        %v2318 = vsel %vm1447, %v2309, 0
        %v2320 = vsel %vm1447, %v2311, 0
        %v2322 = vsel %vm1447, %v2313, 0
        %v2324 = vsel %vm1447, %v2315, 0
        %v2326 = vsel %vm1447, %v2317, 0
        %2328 = vmatprep.subr.mxu0 0.0
        %2329 = vmatpush1.xpose.msra.mxu0 0.0
        %2330 = vmatprep.subr.mxu0 0.0
        %2331 = vmatpush1.xpose.msra.mxu0 0.0
        %2332 = vmatprep.subr.mxu0 0.0
        %2333 = vmatpush1.xpose.msra.mxu0 0.0
        %2334 = vmatprep.subr.mxu0 0.0
        %2335 = vmatpush1.xpose.msra.mxu0 0.0
        %2336 = vmatprep.subr.mxu0 0.0
        %2337 = vmatpush1.xpose.msra.mxu0 0.0
        %2338 = vmatprep.subr.mxu0 0.0
        %2339 = vmatpush1.xpose.msra.mxu0 0.0
        %2340 = vmatprep.subr.mxu0 0.0
        %2341 = vmatpush1.xpose.msra.mxu0 0.0
        %2342 = vmatprep.subr.mxu0 0.0
        %2343 = vmatpush1.xpose.msra.mxu0 0.0
        %2344 = vmatprep.subr.mxu0 0.0
        %2345 = vmatpush1.xpose.msra.mxu0 0.0
        %2346 = vmatprep.subr.mxu0 0.0
        %2347 = vmatpush1.xpose.msra.mxu0 0.0
        %2348 = vmatprep.subr.mxu0 0.0
        %2349 = vmatpush1.xpose.msra.mxu0 0.0
        %2350 = vmatprep.subr.mxu0 0.0
        %2351 = vmatpush1.xpose.msra.mxu0 0.0
        %2352 = vmatprep.subr.mxu0 0.0
        %2353 = vmatpush1.xpose.msra.mxu0 %v2326
        %2354 = vmatprep.subr.mxu0 0.0
        %2355 = vmatpush1.xpose.msra.mxu0 %v2324
        %2356 = vmatprep.subr.mxu0 0.0
        %2357 = vmatpush1.xpose.msra.mxu0 %v2322
        %2358 = vmatprep.subr.mxu0 0.0
        %2359 = vmatpush1.xpose.msra.mxu0 %v2320
        %2360 = vmatprep.subr.mxu0 0.0
        %2361 = vmatpush2.xpose.msra.mxu0 0.0
        %2362 = vmatprep.subr.mxu0 0.0
        %2363 = vmatpush2.xpose.msra.mxu0 0.0
        %2364 = vmatprep.subr.mxu0 0.0
        %2365 = vmatpush2.xpose.msra.mxu0 0.0
        %2366 = vmatprep.subr.mxu0 0.0
        %2367 = vmatpush2.xpose.msra.mxu0 0.0
        %2368 = vmatprep.subr.mxu0 0.0
        %2369 = vmatpush2.xpose.msra.mxu0 0.0
        %2370 = vmatprep.subr.mxu0 0.0
        %2371 = vmatpush2.xpose.msra.mxu0 0.0
        %2372 = vmatprep.subr.mxu0 0.0
        %2373 = vmatpush2.xpose.msra.mxu0 0.0
        %2374 = vmatprep.subr.mxu0 0.0
        %2375 = vmatpush2.xpose.msra.mxu0 0.0
        %2376 = vmatprep.subr.mxu0 0.0
        %2377 = vmatpush2.xpose.msra.mxu0 0.0
        %2378 = vmatprep.subr.mxu0 0.0
        %2379 = vmatpush2.xpose.msra.mxu0 0.0
        %2380 = vmatprep.subr.mxu0 0.0
        %2381 = vmatpush2.xpose.msra.mxu0 0.0
        %2382 = vmatprep.subr.mxu0 0.0
        %2383 = vmatpush2.xpose.msra.mxu0 0.0
        %2384 = vmatprep.subr.mxu0 0.0
        %2385 = vmatpush2.xpose.msra.mxu0 0.0
        %2386 = vmatprep.subr.mxu0 0.0
        %2387 = vmatpush2.xpose.msra.mxu0 0.0
        %2388 = vmatprep.subr.mxu0 0.0
        %2389 = vmatpush2.xpose.msra.mxu0 0.0
        %2390 = vmatprep.subr.mxu0 0.0
        %2391 = vmatpush2.xpose.msra.mxu0 0.0
        %2392 = vmatprep.mubr.f32.mxu0 0.0
        %2393 = vmatmul.mubr.f32.gmra.mxu0 %v2318
        %v2394 = vpop.f32.mrf.mxu0
        %v2395 = vadd.f32 0.0, %v2394
        %v2396 = vpop.f32.mrf.mxu0
        %2397 = vdwg.mxu0
        %2398 = vrot.lane.b32.xlu0 %v760, 120
        %v2399 = vpop.permute.xlu0 %2398
        %2400 = vrot.lane.b32.xlu0 %v1017, 120
        %v2401 = vpop.permute.xlu0 %2400
        %2402 = vrot.lane.b32.xlu0 %v1022, 120
        %v2403 = vpop.permute.xlu0 %2402
        %2404 = vrot.lane.b32.xlu0 %v1027, 120
        %v2405 = vpop.permute.xlu0 %2404
        %2406 = vrot.lane.b32.xlu0 %v1032, 120
        %v2407 = vpop.permute.xlu0 %2406
        %v2408 = vsel %vm1447, %v2399, 0
        %v2410 = vsel %vm1447, %v2401, 0
        %v2412 = vsel %vm1447, %v2403, 0
        %v2414 = vsel %vm1447, %v2405, 0
        %v2416 = vsel %vm1447, %v2407, 0
        %2418 = vmatprep.subr.mxu0 0.0
        %2419 = vmatpush1.xpose.msra.mxu0 0.0
        %2420 = vmatprep.subr.mxu0 0.0
        %2421 = vmatpush1.xpose.msra.mxu0 0.0
        %2422 = vmatprep.subr.mxu0 0.0
        %2423 = vmatpush1.xpose.msra.mxu0 0.0
        %2424 = vmatprep.subr.mxu0 0.0
        %2425 = vmatpush1.xpose.msra.mxu0 0.0
        %2426 = vmatprep.subr.mxu0 0.0
        %2427 = vmatpush1.xpose.msra.mxu0 0.0
        %2428 = vmatprep.subr.mxu0 0.0
        %2429 = vmatpush1.xpose.msra.mxu0 0.0
        %2430 = vmatprep.subr.mxu0 0.0
        %2431 = vmatpush1.xpose.msra.mxu0 0.0
        %2432 = vmatprep.subr.mxu0 0.0
        %2433 = vmatpush1.xpose.msra.mxu0 0.0
        %2434 = vmatprep.subr.mxu0 0.0
        %2435 = vmatpush1.xpose.msra.mxu0 0.0
        %2436 = vmatprep.subr.mxu0 0.0
        %2437 = vmatpush1.xpose.msra.mxu0 0.0
        %2438 = vmatprep.subr.mxu0 0.0
        %2439 = vmatpush1.xpose.msra.mxu0 0.0
        %2440 = vmatprep.subr.mxu0 0.0
        %2441 = vmatpush1.xpose.msra.mxu0 0.0
        %2442 = vmatprep.subr.mxu0 0.0
        %2443 = vmatpush1.xpose.msra.mxu0 %v2416
        %2444 = vmatprep.subr.mxu0 0.0
        %2445 = vmatpush1.xpose.msra.mxu0 %v2414
        %2446 = vmatprep.subr.mxu0 0.0
        %2447 = vmatpush1.xpose.msra.mxu0 %v2412
        %2448 = vmatprep.subr.mxu0 0.0
        %2449 = vmatpush1.xpose.msra.mxu0 %v2410
        %2450 = vmatprep.subr.mxu0 0.0
        %2451 = vmatpush2.xpose.msra.mxu0 0.0
        %2452 = vmatprep.subr.mxu0 0.0
        %2453 = vmatpush2.xpose.msra.mxu0 0.0
        %2454 = vmatprep.subr.mxu0 0.0
        %2455 = vmatpush2.xpose.msra.mxu0 0.0
        %2456 = vmatprep.subr.mxu0 0.0
        %2457 = vmatpush2.xpose.msra.mxu0 0.0
        %2458 = vmatprep.subr.mxu0 0.0
        %2459 = vmatpush2.xpose.msra.mxu0 0.0
        %2460 = vmatprep.subr.mxu0 0.0
        %2461 = vmatpush2.xpose.msra.mxu0 0.0
        %2462 = vmatprep.subr.mxu0 0.0
        %2463 = vmatpush2.xpose.msra.mxu0 0.0
        %2464 = vmatprep.subr.mxu0 0.0
        %2465 = vmatpush2.xpose.msra.mxu0 0.0
        %2466 = vmatprep.subr.mxu0 0.0
        %2467 = vmatpush2.xpose.msra.mxu0 0.0
        %2468 = vmatprep.subr.mxu0 0.0
        %2469 = vmatpush2.xpose.msra.mxu0 0.0
        %2470 = vmatprep.subr.mxu0 0.0
        %2471 = vmatpush2.xpose.msra.mxu0 0.0
        %2472 = vmatprep.subr.mxu0 0.0
        %2473 = vmatpush2.xpose.msra.mxu0 0.0
        %2474 = vmatprep.subr.mxu0 0.0
        %2475 = vmatpush2.xpose.msra.mxu0 0.0
        %2476 = vmatprep.subr.mxu0 0.0
        %2477 = vmatpush2.xpose.msra.mxu0 0.0
        %2478 = vmatprep.subr.mxu0 0.0
        %2479 = vmatpush2.xpose.msra.mxu0 0.0
        %2480 = vmatprep.subr.mxu0 0.0
        %2481 = vmatpush2.xpose.msra.mxu0 0.0
        %2482 = vmatprep.mubr.f32.mxu0 0.0
        %2483 = vmatmul.mubr.f32.gmra.mxu0 %v2408
        %v2484 = vpop.f32.mrf.mxu0
        %v2485 = vadd.f32 0.0, %v2484
        %v2486 = vpop.f32.mrf.mxu0
        %2487 = vdwg.mxu0
        %2488 = vrot.lane.b32.xlu0 %v765, 120
        %v2489 = vpop.permute.xlu0 %2488
        %2490 = vrot.lane.b32.xlu0 %v1037, 120
        %v2491 = vpop.permute.xlu0 %2490
        %2492 = vrot.lane.b32.xlu0 %v1042, 120
        %v2493 = vpop.permute.xlu0 %2492
        %2494 = vrot.lane.b32.xlu0 %v1047, 120
        %v2495 = vpop.permute.xlu0 %2494
        %2496 = vrot.lane.b32.xlu0 %v1052, 120
        %v2497 = vpop.permute.xlu0 %2496
        %v2498 = vsel %vm1447, %v2489, 0
        %v2500 = vsel %vm1447, %v2491, 0
        %v2502 = vsel %vm1447, %v2493, 0
        %v2504 = vsel %vm1447, %v2495, 0
        %v2506 = vsel %vm1447, %v2497, 0
        %2508 = vmatprep.subr.mxu0 0.0
        %2509 = vmatpush1.xpose.msra.mxu0 0.0
        %2510 = vmatprep.subr.mxu0 0.0
        %2511 = vmatpush1.xpose.msra.mxu0 0.0
        %2512 = vmatprep.subr.mxu0 0.0
        %2513 = vmatpush1.xpose.msra.mxu0 0.0
        %2514 = vmatprep.subr.mxu0 0.0
        %2515 = vmatpush1.xpose.msra.mxu0 0.0
        %2516 = vmatprep.subr.mxu0 0.0
        %2517 = vmatpush1.xpose.msra.mxu0 0.0
        %2518 = vmatprep.subr.mxu0 0.0
        %2519 = vmatpush1.xpose.msra.mxu0 0.0
        %2520 = vmatprep.subr.mxu0 0.0
        %2521 = vmatpush1.xpose.msra.mxu0 0.0
        %2522 = vmatprep.subr.mxu0 0.0
        %2523 = vmatpush1.xpose.msra.mxu0 0.0
        %2524 = vmatprep.subr.mxu0 0.0
        %2525 = vmatpush1.xpose.msra.mxu0 0.0
        %2526 = vmatprep.subr.mxu0 0.0
        %2527 = vmatpush1.xpose.msra.mxu0 0.0
        %2528 = vmatprep.subr.mxu0 0.0
        %2529 = vmatpush1.xpose.msra.mxu0 0.0
        %2530 = vmatprep.subr.mxu0 0.0
        %2531 = vmatpush1.xpose.msra.mxu0 0.0
        %2532 = vmatprep.subr.mxu0 0.0
        %2533 = vmatpush1.xpose.msra.mxu0 %v2506
        %2534 = vmatprep.subr.mxu0 0.0
        %2535 = vmatpush1.xpose.msra.mxu0 %v2504
        %2536 = vmatprep.subr.mxu0 0.0
        %2537 = vmatpush1.xpose.msra.mxu0 %v2502
        %2538 = vmatprep.subr.mxu0 0.0
        %2539 = vmatpush1.xpose.msra.mxu0 %v2500
        %2540 = vmatprep.subr.mxu0 0.0
        %2541 = vmatpush2.xpose.msra.mxu0 0.0
        %2542 = vmatprep.subr.mxu0 0.0
        %2543 = vmatpush2.xpose.msra.mxu0 0.0
        %2544 = vmatprep.subr.mxu0 0.0
        %2545 = vmatpush2.xpose.msra.mxu0 0.0
        %2546 = vmatprep.subr.mxu0 0.0
        %2547 = vmatpush2.xpose.msra.mxu0 0.0
        %2548 = vmatprep.subr.mxu0 0.0
        %2549 = vmatpush2.xpose.msra.mxu0 0.0
        %2550 = vmatprep.subr.mxu0 0.0
        %2551 = vmatpush2.xpose.msra.mxu0 0.0
        %2552 = vmatprep.subr.mxu0 0.0
        %2553 = vmatpush2.xpose.msra.mxu0 0.0
        %2554 = vmatprep.subr.mxu0 0.0
        %2555 = vmatpush2.xpose.msra.mxu0 0.0
        %2556 = vmatprep.subr.mxu0 0.0
        %2557 = vmatpush2.xpose.msra.mxu0 0.0
        %2558 = vmatprep.subr.mxu0 0.0
        %2559 = vmatpush2.xpose.msra.mxu0 0.0
        %2560 = vmatprep.subr.mxu0 0.0
        %2561 = vmatpush2.xpose.msra.mxu0 0.0
        %2562 = vmatprep.subr.mxu0 0.0
        %2563 = vmatpush2.xpose.msra.mxu0 0.0
        %2564 = vmatprep.subr.mxu0 0.0
        %2565 = vmatpush2.xpose.msra.mxu0 0.0
        %2566 = vmatprep.subr.mxu0 0.0
        %2567 = vmatpush2.xpose.msra.mxu0 0.0
        %2568 = vmatprep.subr.mxu0 0.0
        %2569 = vmatpush2.xpose.msra.mxu0 0.0
        %2570 = vmatprep.subr.mxu0 0.0
        %2571 = vmatpush2.xpose.msra.mxu0 0.0
        %2572 = vmatprep.mubr.f32.mxu0 0.0
        %2573 = vmatmul.mubr.f32.gmra.mxu0 %v2498
        %v2574 = vpop.f32.mrf.mxu0
        %v2575 = vadd.f32 0.0, %v2574
        %v2576 = vpop.f32.mrf.mxu0
        %2577 = vdwg.mxu0
        %2578 = vrot.lane.b32.xlu0 %v770, 120
        %v2579 = vpop.permute.xlu0 %2578
        %2580 = vrot.lane.b32.xlu0 %v1057, 120
        %v2581 = vpop.permute.xlu0 %2580
        %2582 = vrot.lane.b32.xlu0 %v1062, 120
        %v2583 = vpop.permute.xlu0 %2582
        %2584 = vrot.lane.b32.xlu0 %v1067, 120
        %v2585 = vpop.permute.xlu0 %2584
        %2586 = vrot.lane.b32.xlu0 %v1072, 120
        %v2587 = vpop.permute.xlu0 %2586
        %v2588 = vsel %vm1447, %v2579, 0
        %v2590 = vsel %vm1447, %v2581, 0
        %v2592 = vsel %vm1447, %v2583, 0
        %v2594 = vsel %vm1447, %v2585, 0
        %v2596 = vsel %vm1447, %v2587, 0
        %2598 = vmatprep.subr.mxu0 0.0
        %2599 = vmatpush1.xpose.msra.mxu0 0.0
        %2600 = vmatprep.subr.mxu0 0.0
        %2601 = vmatpush1.xpose.msra.mxu0 0.0
        %2602 = vmatprep.subr.mxu0 0.0
        %2603 = vmatpush1.xpose.msra.mxu0 0.0
        %2604 = vmatprep.subr.mxu0 0.0
        %2605 = vmatpush1.xpose.msra.mxu0 0.0
        %2606 = vmatprep.subr.mxu0 0.0
        %2607 = vmatpush1.xpose.msra.mxu0 0.0
        %2608 = vmatprep.subr.mxu0 0.0
        %2609 = vmatpush1.xpose.msra.mxu0 0.0
        %2610 = vmatprep.subr.mxu0 0.0
        %2611 = vmatpush1.xpose.msra.mxu0 0.0
        %2612 = vmatprep.subr.mxu0 0.0
        %2613 = vmatpush1.xpose.msra.mxu0 0.0
        %2614 = vmatprep.subr.mxu0 0.0
        %2615 = vmatpush1.xpose.msra.mxu0 0.0
        %2616 = vmatprep.subr.mxu0 0.0
        %2617 = vmatpush1.xpose.msra.mxu0 0.0
        %2618 = vmatprep.subr.mxu0 0.0
        %2619 = vmatpush1.xpose.msra.mxu0 0.0
        %2620 = vmatprep.subr.mxu0 0.0
        %2621 = vmatpush1.xpose.msra.mxu0 0.0
        %2622 = vmatprep.subr.mxu0 0.0
        %2623 = vmatpush1.xpose.msra.mxu0 %v2596
        %2624 = vmatprep.subr.mxu0 0.0
        %2625 = vmatpush1.xpose.msra.mxu0 %v2594
        %2626 = vmatprep.subr.mxu0 0.0
        %2627 = vmatpush1.xpose.msra.mxu0 %v2592
        %2628 = vmatprep.subr.mxu0 0.0
        %2629 = vmatpush1.xpose.msra.mxu0 %v2590
        %2630 = vmatprep.subr.mxu0 0.0
        %2631 = vmatpush2.xpose.msra.mxu0 0.0
        %2632 = vmatprep.subr.mxu0 0.0
        %2633 = vmatpush2.xpose.msra.mxu0 0.0
        %2634 = vmatprep.subr.mxu0 0.0
        %2635 = vmatpush2.xpose.msra.mxu0 0.0
        %2636 = vmatprep.subr.mxu0 0.0
        %2637 = vmatpush2.xpose.msra.mxu0 0.0
        %2638 = vmatprep.subr.mxu0 0.0
        %2639 = vmatpush2.xpose.msra.mxu0 0.0
        %2640 = vmatprep.subr.mxu0 0.0
        %2641 = vmatpush2.xpose.msra.mxu0 0.0
        %2642 = vmatprep.subr.mxu0 0.0
        %2643 = vmatpush2.xpose.msra.mxu0 0.0
        %2644 = vmatprep.subr.mxu0 0.0
        %2645 = vmatpush2.xpose.msra.mxu0 0.0
        %2646 = vmatprep.subr.mxu0 0.0
        %2647 = vmatpush2.xpose.msra.mxu0 0.0
        %2648 = vmatprep.subr.mxu0 0.0
        %2649 = vmatpush2.xpose.msra.mxu0 0.0
        %2650 = vmatprep.subr.mxu0 0.0
        %2651 = vmatpush2.xpose.msra.mxu0 0.0
        %2652 = vmatprep.subr.mxu0 0.0
        %2653 = vmatpush2.xpose.msra.mxu0 0.0
        %2654 = vmatprep.subr.mxu0 0.0
        %2655 = vmatpush2.xpose.msra.mxu0 0.0
        %2656 = vmatprep.subr.mxu0 0.0
        %2657 = vmatpush2.xpose.msra.mxu0 0.0
        %2658 = vmatprep.subr.mxu0 0.0
        %2659 = vmatpush2.xpose.msra.mxu0 0.0
        %2660 = vmatprep.subr.mxu0 0.0
        %2661 = vmatpush2.xpose.msra.mxu0 0.0
        %2662 = vmatprep.mubr.f32.mxu0 0.0
        %2663 = vmatmul.mubr.f32.gmra.mxu0 %v2588
        %v2664 = vpop.f32.mrf.mxu0
        %v2665 = vadd.f32 0.0, %v2664
        %v2666 = vpop.f32.mrf.mxu0
        %2667 = vdwg.mxu0
        %2668 = vrot.lane.b32.xlu0 %v775, 120
        %v2669 = vpop.permute.xlu0 %2668
        %2670 = vrot.lane.b32.xlu0 %v1077, 120
        %v2671 = vpop.permute.xlu0 %2670
        %2672 = vrot.lane.b32.xlu0 %v1082, 120
        %v2673 = vpop.permute.xlu0 %2672
        %2674 = vrot.lane.b32.xlu0 %v1087, 120
        %v2675 = vpop.permute.xlu0 %2674
        %2676 = vrot.lane.b32.xlu0 %v1092, 120
        %v2677 = vpop.permute.xlu0 %2676
        %v2678 = vsel %vm1447, %v2669, 0
        %v2680 = vsel %vm1447, %v2671, 0
        %v2682 = vsel %vm1447, %v2673, 0
        %v2684 = vsel %vm1447, %v2675, 0
        %v2686 = vsel %vm1447, %v2677, 0
        %2688 = vmatprep.subr.mxu0 0.0
        %2689 = vmatpush1.xpose.msra.mxu0 0.0
        %2690 = vmatprep.subr.mxu0 0.0
        %2691 = vmatpush1.xpose.msra.mxu0 0.0
        %2692 = vmatprep.subr.mxu0 0.0
        %2693 = vmatpush1.xpose.msra.mxu0 0.0
        %2694 = vmatprep.subr.mxu0 0.0
        %2695 = vmatpush1.xpose.msra.mxu0 0.0
        %2696 = vmatprep.subr.mxu0 0.0
        %2697 = vmatpush1.xpose.msra.mxu0 0.0
        %2698 = vmatprep.subr.mxu0 0.0
        %2699 = vmatpush1.xpose.msra.mxu0 0.0
        %2700 = vmatprep.subr.mxu0 0.0
        %2701 = vmatpush1.xpose.msra.mxu0 0.0
        %2702 = vmatprep.subr.mxu0 0.0
        %2703 = vmatpush1.xpose.msra.mxu0 0.0
        %2704 = vmatprep.subr.mxu0 0.0
        %2705 = vmatpush1.xpose.msra.mxu0 0.0
        %2706 = vmatprep.subr.mxu0 0.0
        %2707 = vmatpush1.xpose.msra.mxu0 0.0
        %2708 = vmatprep.subr.mxu0 0.0
        %2709 = vmatpush1.xpose.msra.mxu0 0.0
        %2710 = vmatprep.subr.mxu0 0.0
        %2711 = vmatpush1.xpose.msra.mxu0 0.0
        %2712 = vmatprep.subr.mxu0 0.0
        %2713 = vmatpush1.xpose.msra.mxu0 %v2686
        %2714 = vmatprep.subr.mxu0 0.0
        %2715 = vmatpush1.xpose.msra.mxu0 %v2684
        %2716 = vmatprep.subr.mxu0 0.0
        %2717 = vmatpush1.xpose.msra.mxu0 %v2682
        %2718 = vmatprep.subr.mxu0 0.0
        %2719 = vmatpush1.xpose.msra.mxu0 %v2680
        %2720 = vmatprep.subr.mxu0 0.0
        %2721 = vmatpush2.xpose.msra.mxu0 0.0
        %2722 = vmatprep.subr.mxu0 0.0
        %2723 = vmatpush2.xpose.msra.mxu0 0.0
        %2724 = vmatprep.subr.mxu0 0.0
        %2725 = vmatpush2.xpose.msra.mxu0 0.0
        %2726 = vmatprep.subr.mxu0 0.0
        %2727 = vmatpush2.xpose.msra.mxu0 0.0
        %2728 = vmatprep.subr.mxu0 0.0
        %2729 = vmatpush2.xpose.msra.mxu0 0.0
        %2730 = vmatprep.subr.mxu0 0.0
        %2731 = vmatpush2.xpose.msra.mxu0 0.0
        %2732 = vmatprep.subr.mxu0 0.0
        %2733 = vmatpush2.xpose.msra.mxu0 0.0
        %2734 = vmatprep.subr.mxu0 0.0
        %2735 = vmatpush2.xpose.msra.mxu0 0.0
        %2736 = vmatprep.subr.mxu0 0.0
        %2737 = vmatpush2.xpose.msra.mxu0 0.0
        %2738 = vmatprep.subr.mxu0 0.0
        %2739 = vmatpush2.xpose.msra.mxu0 0.0
        %2740 = vmatprep.subr.mxu0 0.0
        %2741 = vmatpush2.xpose.msra.mxu0 0.0
        %2742 = vmatprep.subr.mxu0 0.0
        %2743 = vmatpush2.xpose.msra.mxu0 0.0
        %2744 = vmatprep.subr.mxu0 0.0
        %2745 = vmatpush2.xpose.msra.mxu0 0.0
        %2746 = vmatprep.subr.mxu0 0.0
        %2747 = vmatpush2.xpose.msra.mxu0 0.0
        %2748 = vmatprep.subr.mxu0 0.0
        %2749 = vmatpush2.xpose.msra.mxu0 0.0
        %2750 = vmatprep.subr.mxu0 0.0
        %2751 = vmatpush2.xpose.msra.mxu0 0.0
        %2752 = vmatprep.mubr.f32.mxu0 0.0
        %2753 = vmatmul.mubr.f32.gmra.mxu0 %v2678
        %v2754 = vpop.f32.mrf.mxu0
        %v2755 = vadd.f32 0.0, %v2754
        %v2756 = vpop.f32.mrf.mxu0
        %2757 = vdwg.mxu0
        %2758 = vrot.lane.b32.xlu0 %v780, 120
        %v2759 = vpop.permute.xlu0 %2758
        %2760 = vrot.lane.b32.xlu0 %v1097, 120
        %v2761 = vpop.permute.xlu0 %2760
        %2762 = vrot.lane.b32.xlu0 %v1102, 120
        %v2763 = vpop.permute.xlu0 %2762
        %2764 = vrot.lane.b32.xlu0 %v1107, 120
        %v2765 = vpop.permute.xlu0 %2764
        %2766 = vrot.lane.b32.xlu0 %v1112, 120
        %v2767 = vpop.permute.xlu0 %2766
        %v2768 = vsel %vm1447, %v2759, 0
        %v2770 = vsel %vm1447, %v2761, 0
        %v2772 = vsel %vm1447, %v2763, 0
        %v2774 = vsel %vm1447, %v2765, 0
        %v2776 = vsel %vm1447, %v2767, 0
        %2778 = vmatprep.subr.mxu0 0.0
        %2779 = vmatpush1.xpose.msra.mxu0 0.0
        %2780 = vmatprep.subr.mxu0 0.0
        %2781 = vmatpush1.xpose.msra.mxu0 0.0
        %2782 = vmatprep.subr.mxu0 0.0
        %2783 = vmatpush1.xpose.msra.mxu0 0.0
        %2784 = vmatprep.subr.mxu0 0.0
        %2785 = vmatpush1.xpose.msra.mxu0 0.0
        %2786 = vmatprep.subr.mxu0 0.0
        %2787 = vmatpush1.xpose.msra.mxu0 0.0
        %2788 = vmatprep.subr.mxu0 0.0
        %2789 = vmatpush1.xpose.msra.mxu0 0.0
        %2790 = vmatprep.subr.mxu0 0.0
        %2791 = vmatpush1.xpose.msra.mxu0 0.0
        %2792 = vmatprep.subr.mxu0 0.0
        %2793 = vmatpush1.xpose.msra.mxu0 0.0
        %2794 = vmatprep.subr.mxu0 0.0
        %2795 = vmatpush1.xpose.msra.mxu0 0.0
        %2796 = vmatprep.subr.mxu0 0.0
        %2797 = vmatpush1.xpose.msra.mxu0 0.0
        %2798 = vmatprep.subr.mxu0 0.0
        %2799 = vmatpush1.xpose.msra.mxu0 0.0
        %2800 = vmatprep.subr.mxu0 0.0
        %2801 = vmatpush1.xpose.msra.mxu0 0.0
        %2802 = vmatprep.subr.mxu0 0.0
        %2803 = vmatpush1.xpose.msra.mxu0 %v2776
        %2804 = vmatprep.subr.mxu0 0.0
        %2805 = vmatpush1.xpose.msra.mxu0 %v2774
        %2806 = vmatprep.subr.mxu0 0.0
        %2807 = vmatpush1.xpose.msra.mxu0 %v2772
        %2808 = vmatprep.subr.mxu0 0.0
        %2809 = vmatpush1.xpose.msra.mxu0 %v2770
        %2810 = vmatprep.subr.mxu0 0.0
        %2811 = vmatpush2.xpose.msra.mxu0 0.0
        %2812 = vmatprep.subr.mxu0 0.0
        %2813 = vmatpush2.xpose.msra.mxu0 0.0
        %2814 = vmatprep.subr.mxu0 0.0
        %2815 = vmatpush2.xpose.msra.mxu0 0.0
        %2816 = vmatprep.subr.mxu0 0.0
        %2817 = vmatpush2.xpose.msra.mxu0 0.0
        %2818 = vmatprep.subr.mxu0 0.0
        %2819 = vmatpush2.xpose.msra.mxu0 0.0
        %2820 = vmatprep.subr.mxu0 0.0
        %2821 = vmatpush2.xpose.msra.mxu0 0.0
        %2822 = vmatprep.subr.mxu0 0.0
        %2823 = vmatpush2.xpose.msra.mxu0 0.0
        %2824 = vmatprep.subr.mxu0 0.0
        %2825 = vmatpush2.xpose.msra.mxu0 0.0
        %2826 = vmatprep.subr.mxu0 0.0
        %2827 = vmatpush2.xpose.msra.mxu0 0.0
        %2828 = vmatprep.subr.mxu0 0.0
        %2829 = vmatpush2.xpose.msra.mxu0 0.0
        %2830 = vmatprep.subr.mxu0 0.0
        %2831 = vmatpush2.xpose.msra.mxu0 0.0
        %2832 = vmatprep.subr.mxu0 0.0
        %2833 = vmatpush2.xpose.msra.mxu0 0.0
        %2834 = vmatprep.subr.mxu0 0.0
        %2835 = vmatpush2.xpose.msra.mxu0 0.0
        %2836 = vmatprep.subr.mxu0 0.0
        %2837 = vmatpush2.xpose.msra.mxu0 0.0
        %2838 = vmatprep.subr.mxu0 0.0
        %2839 = vmatpush2.xpose.msra.mxu0 0.0
        %2840 = vmatprep.subr.mxu0 0.0
        %2841 = vmatpush2.xpose.msra.mxu0 0.0
        %2842 = vmatprep.mubr.f32.mxu0 0.0
        %2843 = vmatmul.mubr.f32.gmra.mxu0 %v2768
        %v2844 = vpop.f32.mrf.mxu0
        %v2845 = vadd.f32 0.0, %v2844
        %v2846 = vpop.f32.mrf.mxu0
        %2847 = vdwg.mxu0
        %2848 = vrot.lane.b32.xlu0 %v745, 112
        %v2849 = vpop.permute.xlu0 %2848
        %2850 = vrot.lane.b32.xlu0 %v957, 112
        %v2851 = vpop.permute.xlu0 %2850
        %2852 = vrot.lane.b32.xlu0 %v962, 112
        %v2853 = vpop.permute.xlu0 %2852
        %2854 = vrot.lane.b32.xlu0 %v967, 112
        %v2855 = vpop.permute.xlu0 %2854
        %2856 = vrot.lane.b32.xlu0 %v972, 112
        %v2857 = vpop.permute.xlu0 %2856
        %v2858 = vsel %vm1447, %v2849, 0
        %v2860 = vsel %vm1447, %v2851, 0
        %v2862 = vsel %vm1447, %v2853, 0
        %v2864 = vsel %vm1447, %v2855, 0
        %v2866 = vsel %vm1447, %v2857, 0
        %2868 = vmatprep.subr.mxu0 0.0
        %2869 = vmatpush1.xpose.msra.mxu0 0.0
        %2870 = vmatprep.subr.mxu0 0.0
        %2871 = vmatpush1.xpose.msra.mxu0 0.0
        %2872 = vmatprep.subr.mxu0 0.0
        %2873 = vmatpush1.xpose.msra.mxu0 0.0
        %2874 = vmatprep.subr.mxu0 0.0
        %2875 = vmatpush1.xpose.msra.mxu0 0.0
        %2876 = vmatprep.subr.mxu0 0.0
        %2877 = vmatpush1.xpose.msra.mxu0 0.0
        %2878 = vmatprep.subr.mxu0 0.0
        %2879 = vmatpush1.xpose.msra.mxu0 0.0
        %2880 = vmatprep.subr.mxu0 0.0
        %2881 = vmatpush1.xpose.msra.mxu0 0.0
        %2882 = vmatprep.subr.mxu0 0.0
        %2883 = vmatpush1.xpose.msra.mxu0 0.0
        %2884 = vmatprep.subr.mxu0 0.0
        %2885 = vmatpush1.xpose.msra.mxu0 0.0
        %2886 = vmatprep.subr.mxu0 0.0
        %2887 = vmatpush1.xpose.msra.mxu0 0.0
        %2888 = vmatprep.subr.mxu0 0.0
        %2889 = vmatpush1.xpose.msra.mxu0 0.0
        %2890 = vmatprep.subr.mxu0 0.0
        %2891 = vmatpush1.xpose.msra.mxu0 0.0
        %2892 = vmatprep.subr.mxu0 0.0
        %2893 = vmatpush1.xpose.msra.mxu0 %v2866
        %2894 = vmatprep.subr.mxu0 0.0
        %2895 = vmatpush1.xpose.msra.mxu0 %v2864
        %2896 = vmatprep.subr.mxu0 0.0
        %2897 = vmatpush1.xpose.msra.mxu0 %v2862
        %2898 = vmatprep.subr.mxu0 0.0
        %2899 = vmatpush1.xpose.msra.mxu0 %v2860
        %2900 = vmatprep.subr.mxu0 0.0
        %2901 = vmatpush2.xpose.msra.mxu0 0.0
        %2902 = vmatprep.subr.mxu0 0.0
        %2903 = vmatpush2.xpose.msra.mxu0 0.0
        %2904 = vmatprep.subr.mxu0 0.0
        %2905 = vmatpush2.xpose.msra.mxu0 0.0
        %2906 = vmatprep.subr.mxu0 0.0
        %2907 = vmatpush2.xpose.msra.mxu0 0.0
        %2908 = vmatprep.subr.mxu0 0.0
        %2909 = vmatpush2.xpose.msra.mxu0 0.0
        %2910 = vmatprep.subr.mxu0 0.0
        %2911 = vmatpush2.xpose.msra.mxu0 0.0
        %2912 = vmatprep.subr.mxu0 0.0
        %2913 = vmatpush2.xpose.msra.mxu0 0.0
        %2914 = vmatprep.subr.mxu0 0.0
        %2915 = vmatpush2.xpose.msra.mxu0 0.0
        %2916 = vmatprep.subr.mxu0 0.0
        %2917 = vmatpush2.xpose.msra.mxu0 0.0
        %2918 = vmatprep.subr.mxu0 0.0
        %2919 = vmatpush2.xpose.msra.mxu0 0.0
        %2920 = vmatprep.subr.mxu0 0.0
        %2921 = vmatpush2.xpose.msra.mxu0 0.0
        %2922 = vmatprep.subr.mxu0 0.0
        %2923 = vmatpush2.xpose.msra.mxu0 0.0
        %2924 = vmatprep.subr.mxu0 0.0
        %2925 = vmatpush2.xpose.msra.mxu0 0.0
        %2926 = vmatprep.subr.mxu0 0.0
        %2927 = vmatpush2.xpose.msra.mxu0 0.0
        %2928 = vmatprep.subr.mxu0 0.0
        %2929 = vmatpush2.xpose.msra.mxu0 0.0
        %2930 = vmatprep.subr.mxu0 0.0
        %2931 = vmatpush2.xpose.msra.mxu0 0.0
        %2932 = vmatprep.mubr.f32.mxu0 0.0
        %2933 = vmatmul.mubr.f32.gmra.mxu0 %v2858
        %v2934 = vpop.f32.mrf.mxu0
        %v2935 = vadd.f32 0.0, %v2934
        %v2936 = vpop.f32.mrf.mxu0
        %2937 = vdwg.mxu0
        %2938 = vrot.lane.b32.xlu0 %v750, 112
        %v2939 = vpop.permute.xlu0 %2938
        %2940 = vrot.lane.b32.xlu0 %v977, 112
        %v2941 = vpop.permute.xlu0 %2940
        %2942 = vrot.lane.b32.xlu0 %v982, 112
        %v2943 = vpop.permute.xlu0 %2942
        %2944 = vrot.lane.b32.xlu0 %v987, 112
        %v2945 = vpop.permute.xlu0 %2944
        %2946 = vrot.lane.b32.xlu0 %v992, 112
        %v2947 = vpop.permute.xlu0 %2946
        %v2948 = vsel %vm1447, %v2939, 0
        %v2950 = vsel %vm1447, %v2941, 0
        %v2952 = vsel %vm1447, %v2943, 0
        %v2954 = vsel %vm1447, %v2945, 0
        %v2956 = vsel %vm1447, %v2947, 0
        %2958 = vmatprep.subr.mxu0 0.0
        %2959 = vmatpush1.xpose.msra.mxu0 0.0
        %2960 = vmatprep.subr.mxu0 0.0
        %2961 = vmatpush1.xpose.msra.mxu0 0.0
        %2962 = vmatprep.subr.mxu0 0.0
        %2963 = vmatpush1.xpose.msra.mxu0 0.0
        %2964 = vmatprep.subr.mxu0 0.0
        %2965 = vmatpush1.xpose.msra.mxu0 0.0
        %2966 = vmatprep.subr.mxu0 0.0
        %2967 = vmatpush1.xpose.msra.mxu0 0.0
        %2968 = vmatprep.subr.mxu0 0.0
        %2969 = vmatpush1.xpose.msra.mxu0 0.0
        %2970 = vmatprep.subr.mxu0 0.0
        %2971 = vmatpush1.xpose.msra.mxu0 0.0
        %2972 = vmatprep.subr.mxu0 0.0
        %2973 = vmatpush1.xpose.msra.mxu0 0.0
        %2974 = vmatprep.subr.mxu0 0.0
        %2975 = vmatpush1.xpose.msra.mxu0 0.0
        %2976 = vmatprep.subr.mxu0 0.0
        %2977 = vmatpush1.xpose.msra.mxu0 0.0
        %2978 = vmatprep.subr.mxu0 0.0
        %2979 = vmatpush1.xpose.msra.mxu0 0.0
        %2980 = vmatprep.subr.mxu0 0.0
        %2981 = vmatpush1.xpose.msra.mxu0 0.0
        %2982 = vmatprep.subr.mxu0 0.0
        %2983 = vmatpush1.xpose.msra.mxu0 %v2956
        %2984 = vmatprep.subr.mxu0 0.0
        %2985 = vmatpush1.xpose.msra.mxu0 %v2954
        %2986 = vmatprep.subr.mxu0 0.0
        %2987 = vmatpush1.xpose.msra.mxu0 %v2952
        %2988 = vmatprep.subr.mxu0 0.0
        %2989 = vmatpush1.xpose.msra.mxu0 %v2950
        %2990 = vmatprep.subr.mxu0 0.0
        %2991 = vmatpush2.xpose.msra.mxu0 0.0
        %2992 = vmatprep.subr.mxu0 0.0
        %2993 = vmatpush2.xpose.msra.mxu0 0.0
        %2994 = vmatprep.subr.mxu0 0.0
        %2995 = vmatpush2.xpose.msra.mxu0 0.0
        %2996 = vmatprep.subr.mxu0 0.0
        %2997 = vmatpush2.xpose.msra.mxu0 0.0
        %2998 = vmatprep.subr.mxu0 0.0
        %2999 = vmatpush2.xpose.msra.mxu0 0.0
        %3000 = vmatprep.subr.mxu0 0.0
        %3001 = vmatpush2.xpose.msra.mxu0 0.0
        %3002 = vmatprep.subr.mxu0 0.0
        %3003 = vmatpush2.xpose.msra.mxu0 0.0
        %3004 = vmatprep.subr.mxu0 0.0
        %3005 = vmatpush2.xpose.msra.mxu0 0.0
        %3006 = vmatprep.subr.mxu0 0.0
        %3007 = vmatpush2.xpose.msra.mxu0 0.0
        %3008 = vmatprep.subr.mxu0 0.0
        %3009 = vmatpush2.xpose.msra.mxu0 0.0
        %3010 = vmatprep.subr.mxu0 0.0
        %3011 = vmatpush2.xpose.msra.mxu0 0.0
        %3012 = vmatprep.subr.mxu0 0.0
        %3013 = vmatpush2.xpose.msra.mxu0 0.0
        %3014 = vmatprep.subr.mxu0 0.0
        %3015 = vmatpush2.xpose.msra.mxu0 0.0
        %3016 = vmatprep.subr.mxu0 0.0
        %3017 = vmatpush2.xpose.msra.mxu0 0.0
        %3018 = vmatprep.subr.mxu0 0.0
        %3019 = vmatpush2.xpose.msra.mxu0 0.0
        %3020 = vmatprep.subr.mxu0 0.0
        %3021 = vmatpush2.xpose.msra.mxu0 0.0
        %3022 = vmatprep.mubr.f32.mxu0 0.0
        %3023 = vmatmul.mubr.f32.gmra.mxu0 %v2948
        %v3024 = vpop.f32.mrf.mxu0
        %v3025 = vadd.f32 0.0, %v3024
        %v3026 = vpop.f32.mrf.mxu0
        %3027 = vdwg.mxu0
        %3028 = vrot.lane.b32.xlu0 %v755, 112
        %v3029 = vpop.permute.xlu0 %3028
        %3030 = vrot.lane.b32.xlu0 %v997, 112
        %v3031 = vpop.permute.xlu0 %3030
        %3032 = vrot.lane.b32.xlu0 %v1002, 112
        %v3033 = vpop.permute.xlu0 %3032
        %3034 = vrot.lane.b32.xlu0 %v1007, 112
        %v3035 = vpop.permute.xlu0 %3034
        %3036 = vrot.lane.b32.xlu0 %v1012, 112
        %v3037 = vpop.permute.xlu0 %3036
        %v3038 = vsel %vm1447, %v3029, 0
        %v3040 = vsel %vm1447, %v3031, 0
        %v3042 = vsel %vm1447, %v3033, 0
        %v3044 = vsel %vm1447, %v3035, 0
        %v3046 = vsel %vm1447, %v3037, 0
        %3048 = vmatprep.subr.mxu0 0.0
        %3049 = vmatpush1.xpose.msra.mxu0 0.0
        %3050 = vmatprep.subr.mxu0 0.0
        %3051 = vmatpush1.xpose.msra.mxu0 0.0
        %3052 = vmatprep.subr.mxu0 0.0
        %3053 = vmatpush1.xpose.msra.mxu0 0.0
        %3054 = vmatprep.subr.mxu0 0.0
        %3055 = vmatpush1.xpose.msra.mxu0 0.0
        %3056 = vmatprep.subr.mxu0 0.0
        %3057 = vmatpush1.xpose.msra.mxu0 0.0
        %3058 = vmatprep.subr.mxu0 0.0
        %3059 = vmatpush1.xpose.msra.mxu0 0.0
        %3060 = vmatprep.subr.mxu0 0.0
        %3061 = vmatpush1.xpose.msra.mxu0 0.0
        %3062 = vmatprep.subr.mxu0 0.0
        %3063 = vmatpush1.xpose.msra.mxu0 0.0
        %3064 = vmatprep.subr.mxu0 0.0
        %3065 = vmatpush1.xpose.msra.mxu0 0.0
        %3066 = vmatprep.subr.mxu0 0.0
        %3067 = vmatpush1.xpose.msra.mxu0 0.0
        %3068 = vmatprep.subr.mxu0 0.0
        %3069 = vmatpush1.xpose.msra.mxu0 0.0
        %3070 = vmatprep.subr.mxu0 0.0
        %3071 = vmatpush1.xpose.msra.mxu0 0.0
        %3072 = vmatprep.subr.mxu0 0.0
        %3073 = vmatpush1.xpose.msra.mxu0 %v3046
        %3074 = vmatprep.subr.mxu0 0.0
        %3075 = vmatpush1.xpose.msra.mxu0 %v3044
        %3076 = vmatprep.subr.mxu0 0.0
        %3077 = vmatpush1.xpose.msra.mxu0 %v3042
        %3078 = vmatprep.subr.mxu0 0.0
        %3079 = vmatpush1.xpose.msra.mxu0 %v3040
        %3080 = vmatprep.subr.mxu0 0.0
        %3081 = vmatpush2.xpose.msra.mxu0 0.0
        %3082 = vmatprep.subr.mxu0 0.0
        %3083 = vmatpush2.xpose.msra.mxu0 0.0
        %3084 = vmatprep.subr.mxu0 0.0
        %3085 = vmatpush2.xpose.msra.mxu0 0.0
        %3086 = vmatprep.subr.mxu0 0.0
        %3087 = vmatpush2.xpose.msra.mxu0 0.0
        %3088 = vmatprep.subr.mxu0 0.0
        %3089 = vmatpush2.xpose.msra.mxu0 0.0
        %3090 = vmatprep.subr.mxu0 0.0
        %3091 = vmatpush2.xpose.msra.mxu0 0.0
        %3092 = vmatprep.subr.mxu0 0.0
        %3093 = vmatpush2.xpose.msra.mxu0 0.0
        %3094 = vmatprep.subr.mxu0 0.0
        %3095 = vmatpush2.xpose.msra.mxu0 0.0
        %3096 = vmatprep.subr.mxu0 0.0
        %3097 = vmatpush2.xpose.msra.mxu0 0.0
        %3098 = vmatprep.subr.mxu0 0.0
        %3099 = vmatpush2.xpose.msra.mxu0 0.0
        %3100 = vmatprep.subr.mxu0 0.0
        %3101 = vmatpush2.xpose.msra.mxu0 0.0
        %3102 = vmatprep.subr.mxu0 0.0
        %3103 = vmatpush2.xpose.msra.mxu0 0.0
        %3104 = vmatprep.subr.mxu0 0.0
        %3105 = vmatpush2.xpose.msra.mxu0 0.0
        %3106 = vmatprep.subr.mxu0 0.0
        %3107 = vmatpush2.xpose.msra.mxu0 0.0
        %3108 = vmatprep.subr.mxu0 0.0
        %3109 = vmatpush2.xpose.msra.mxu0 0.0
        %3110 = vmatprep.subr.mxu0 0.0
        %3111 = vmatpush2.xpose.msra.mxu0 0.0
        %3112 = vmatprep.mubr.f32.mxu0 0.0
        %3113 = vmatmul.mubr.f32.gmra.mxu0 %v3038
        %v3114 = vpop.f32.mrf.mxu0
        %v3115 = vadd.f32 0.0, %v3114
        %v3116 = vpop.f32.mrf.mxu0
        %3117 = vdwg.mxu0
        %3118 = vrot.lane.b32.xlu0 %v760, 112
        %v3119 = vpop.permute.xlu0 %3118
        %3120 = vrot.lane.b32.xlu0 %v1017, 112
        %v3121 = vpop.permute.xlu0 %3120
        %3122 = vrot.lane.b32.xlu0 %v1022, 112
        %v3123 = vpop.permute.xlu0 %3122
        %3124 = vrot.lane.b32.xlu0 %v1027, 112
        %v3125 = vpop.permute.xlu0 %3124
        %3126 = vrot.lane.b32.xlu0 %v1032, 112
        %v3127 = vpop.permute.xlu0 %3126
        %v3128 = vsel %vm1447, %v3119, 0
        %v3130 = vsel %vm1447, %v3121, 0
        %v3132 = vsel %vm1447, %v3123, 0
        %v3134 = vsel %vm1447, %v3125, 0
        %v3136 = vsel %vm1447, %v3127, 0
        %3138 = vmatprep.subr.mxu0 0.0
        %3139 = vmatpush1.xpose.msra.mxu0 0.0
        %3140 = vmatprep.subr.mxu0 0.0
        %3141 = vmatpush1.xpose.msra.mxu0 0.0
        %3142 = vmatprep.subr.mxu0 0.0
        %3143 = vmatpush1.xpose.msra.mxu0 0.0
        %3144 = vmatprep.subr.mxu0 0.0
        %3145 = vmatpush1.xpose.msra.mxu0 0.0
        %3146 = vmatprep.subr.mxu0 0.0
        %3147 = vmatpush1.xpose.msra.mxu0 0.0
        %3148 = vmatprep.subr.mxu0 0.0
        %3149 = vmatpush1.xpose.msra.mxu0 0.0
        %3150 = vmatprep.subr.mxu0 0.0
        %3151 = vmatpush1.xpose.msra.mxu0 0.0
        %3152 = vmatprep.subr.mxu0 0.0
        %3153 = vmatpush1.xpose.msra.mxu0 0.0
        %3154 = vmatprep.subr.mxu0 0.0
        %3155 = vmatpush1.xpose.msra.mxu0 0.0
        %3156 = vmatprep.subr.mxu0 0.0
        %3157 = vmatpush1.xpose.msra.mxu0 0.0
        %3158 = vmatprep.subr.mxu0 0.0
        %3159 = vmatpush1.xpose.msra.mxu0 0.0
        %3160 = vmatprep.subr.mxu0 0.0
        %3161 = vmatpush1.xpose.msra.mxu0 0.0
        %3162 = vmatprep.subr.mxu0 0.0
        %3163 = vmatpush1.xpose.msra.mxu0 %v3136
        %3164 = vmatprep.subr.mxu0 0.0
        %3165 = vmatpush1.xpose.msra.mxu0 %v3134
        %3166 = vmatprep.subr.mxu0 0.0
        %3167 = vmatpush1.xpose.msra.mxu0 %v3132
        %3168 = vmatprep.subr.mxu0 0.0
        %3169 = vmatpush1.xpose.msra.mxu0 %v3130
        %3170 = vmatprep.subr.mxu0 0.0
        %3171 = vmatpush2.xpose.msra.mxu0 0.0
        %3172 = vmatprep.subr.mxu0 0.0
        %3173 = vmatpush2.xpose.msra.mxu0 0.0
        %3174 = vmatprep.subr.mxu0 0.0
        %3175 = vmatpush2.xpose.msra.mxu0 0.0
        %3176 = vmatprep.subr.mxu0 0.0
        %3177 = vmatpush2.xpose.msra.mxu0 0.0
        %3178 = vmatprep.subr.mxu0 0.0
        %3179 = vmatpush2.xpose.msra.mxu0 0.0
        %3180 = vmatprep.subr.mxu0 0.0
        %3181 = vmatpush2.xpose.msra.mxu0 0.0
        %3182 = vmatprep.subr.mxu0 0.0
        %3183 = vmatpush2.xpose.msra.mxu0 0.0
        %3184 = vmatprep.subr.mxu0 0.0
        %3185 = vmatpush2.xpose.msra.mxu0 0.0
        %3186 = vmatprep.subr.mxu0 0.0
        %3187 = vmatpush2.xpose.msra.mxu0 0.0
        %3188 = vmatprep.subr.mxu0 0.0
        %3189 = vmatpush2.xpose.msra.mxu0 0.0
        %3190 = vmatprep.subr.mxu0 0.0
        %3191 = vmatpush2.xpose.msra.mxu0 0.0
        %3192 = vmatprep.subr.mxu0 0.0
        %3193 = vmatpush2.xpose.msra.mxu0 0.0
        %3194 = vmatprep.subr.mxu0 0.0
        %3195 = vmatpush2.xpose.msra.mxu0 0.0
        %3196 = vmatprep.subr.mxu0 0.0
        %3197 = vmatpush2.xpose.msra.mxu0 0.0
        %3198 = vmatprep.subr.mxu0 0.0
        %3199 = vmatpush2.xpose.msra.mxu0 0.0
        %3200 = vmatprep.subr.mxu0 0.0
        %3201 = vmatpush2.xpose.msra.mxu0 0.0
        %3202 = vmatprep.mubr.f32.mxu0 0.0
        %3203 = vmatmul.mubr.f32.gmra.mxu0 %v3128
        %v3204 = vpop.f32.mrf.mxu0
        %v3205 = vadd.f32 0.0, %v3204
        %v3206 = vpop.f32.mrf.mxu0
        %3207 = vdwg.mxu0
        %3208 = vrot.lane.b32.xlu0 %v765, 112
        %v3209 = vpop.permute.xlu0 %3208
        %3210 = vrot.lane.b32.xlu0 %v1037, 112
        %v3211 = vpop.permute.xlu0 %3210
        %3212 = vrot.lane.b32.xlu0 %v1042, 112
        %v3213 = vpop.permute.xlu0 %3212
        %3214 = vrot.lane.b32.xlu0 %v1047, 112
        %v3215 = vpop.permute.xlu0 %3214
        %3216 = vrot.lane.b32.xlu0 %v1052, 112
        %v3217 = vpop.permute.xlu0 %3216
        %v3218 = vsel %vm1447, %v3209, 0
        %v3220 = vsel %vm1447, %v3211, 0
        %v3222 = vsel %vm1447, %v3213, 0
        %v3224 = vsel %vm1447, %v3215, 0
        %v3226 = vsel %vm1447, %v3217, 0
        %3228 = vmatprep.subr.mxu0 0.0
        %3229 = vmatpush1.xpose.msra.mxu0 0.0
        %3230 = vmatprep.subr.mxu0 0.0
        %3231 = vmatpush1.xpose.msra.mxu0 0.0
        %3232 = vmatprep.subr.mxu0 0.0
        %3233 = vmatpush1.xpose.msra.mxu0 0.0
        %3234 = vmatprep.subr.mxu0 0.0
        %3235 = vmatpush1.xpose.msra.mxu0 0.0
        %3236 = vmatprep.subr.mxu0 0.0
        %3237 = vmatpush1.xpose.msra.mxu0 0.0
        %3238 = vmatprep.subr.mxu0 0.0
        %3239 = vmatpush1.xpose.msra.mxu0 0.0
        %3240 = vmatprep.subr.mxu0 0.0
        %3241 = vmatpush1.xpose.msra.mxu0 0.0
        %3242 = vmatprep.subr.mxu0 0.0
        %3243 = vmatpush1.xpose.msra.mxu0 0.0
        %3244 = vmatprep.subr.mxu0 0.0
        %3245 = vmatpush1.xpose.msra.mxu0 0.0
        %3246 = vmatprep.subr.mxu0 0.0
        %3247 = vmatpush1.xpose.msra.mxu0 0.0
        %3248 = vmatprep.subr.mxu0 0.0
        %3249 = vmatpush1.xpose.msra.mxu0 0.0
        %3250 = vmatprep.subr.mxu0 0.0
        %3251 = vmatpush1.xpose.msra.mxu0 0.0
        %3252 = vmatprep.subr.mxu0 0.0
        %3253 = vmatpush1.xpose.msra.mxu0 %v3226
        %3254 = vmatprep.subr.mxu0 0.0
        %3255 = vmatpush1.xpose.msra.mxu0 %v3224
        %3256 = vmatprep.subr.mxu0 0.0
        %3257 = vmatpush1.xpose.msra.mxu0 %v3222
        %3258 = vmatprep.subr.mxu0 0.0
        %3259 = vmatpush1.xpose.msra.mxu0 %v3220
        %3260 = vmatprep.subr.mxu0 0.0
        %3261 = vmatpush2.xpose.msra.mxu0 0.0
        %3262 = vmatprep.subr.mxu0 0.0
        %3263 = vmatpush2.xpose.msra.mxu0 0.0
        %3264 = vmatprep.subr.mxu0 0.0
        %3265 = vmatpush2.xpose.msra.mxu0 0.0
        %3266 = vmatprep.subr.mxu0 0.0
        %3267 = vmatpush2.xpose.msra.mxu0 0.0
        %3268 = vmatprep.subr.mxu0 0.0
        %3269 = vmatpush2.xpose.msra.mxu0 0.0
        %3270 = vmatprep.subr.mxu0 0.0
        %3271 = vmatpush2.xpose.msra.mxu0 0.0
        %3272 = vmatprep.subr.mxu0 0.0
        %3273 = vmatpush2.xpose.msra.mxu0 0.0
        %3274 = vmatprep.subr.mxu0 0.0
        %3275 = vmatpush2.xpose.msra.mxu0 0.0
        %3276 = vmatprep.subr.mxu0 0.0
        %3277 = vmatpush2.xpose.msra.mxu0 0.0
        %3278 = vmatprep.subr.mxu0 0.0
        %3279 = vmatpush2.xpose.msra.mxu0 0.0
        %3280 = vmatprep.subr.mxu0 0.0
        %3281 = vmatpush2.xpose.msra.mxu0 0.0
        %3282 = vmatprep.subr.mxu0 0.0
        %3283 = vmatpush2.xpose.msra.mxu0 0.0
        %3284 = vmatprep.subr.mxu0 0.0
        %3285 = vmatpush2.xpose.msra.mxu0 0.0
        %3286 = vmatprep.subr.mxu0 0.0
        %3287 = vmatpush2.xpose.msra.mxu0 0.0
        %3288 = vmatprep.subr.mxu0 0.0
        %3289 = vmatpush2.xpose.msra.mxu0 0.0
        %3290 = vmatprep.subr.mxu0 0.0
        %3291 = vmatpush2.xpose.msra.mxu0 0.0
        %3292 = vmatprep.mubr.f32.mxu0 0.0
        %3293 = vmatmul.mubr.f32.gmra.mxu0 %v3218
        %v3294 = vpop.f32.mrf.mxu0
        %v3295 = vadd.f32 0.0, %v3294
        %v3296 = vpop.f32.mrf.mxu0
        %3297 = vdwg.mxu0
        %3298 = vrot.lane.b32.xlu0 %v770, 112
        %v3299 = vpop.permute.xlu0 %3298
        %3300 = vrot.lane.b32.xlu0 %v1057, 112
        %v3301 = vpop.permute.xlu0 %3300
        %3302 = vrot.lane.b32.xlu0 %v1062, 112
        %v3303 = vpop.permute.xlu0 %3302
        %3304 = vrot.lane.b32.xlu0 %v1067, 112
        %v3305 = vpop.permute.xlu0 %3304
        %3306 = vrot.lane.b32.xlu0 %v1072, 112
        %v3307 = vpop.permute.xlu0 %3306
        %v3308 = vsel %vm1447, %v3299, 0
        %v3310 = vsel %vm1447, %v3301, 0
        %v3312 = vsel %vm1447, %v3303, 0
        %v3314 = vsel %vm1447, %v3305, 0
        %v3316 = vsel %vm1447, %v3307, 0
        %3318 = vmatprep.subr.mxu0 0.0
        %3319 = vmatpush1.xpose.msra.mxu0 0.0
        %3320 = vmatprep.subr.mxu0 0.0
        %3321 = vmatpush1.xpose.msra.mxu0 0.0
        %3322 = vmatprep.subr.mxu0 0.0
        %3323 = vmatpush1.xpose.msra.mxu0 0.0
        %3324 = vmatprep.subr.mxu0 0.0
        %3325 = vmatpush1.xpose.msra.mxu0 0.0
        %3326 = vmatprep.subr.mxu0 0.0
        %3327 = vmatpush1.xpose.msra.mxu0 0.0
        %3328 = vmatprep.subr.mxu0 0.0
        %3329 = vmatpush1.xpose.msra.mxu0 0.0
        %3330 = vmatprep.subr.mxu0 0.0
        %3331 = vmatpush1.xpose.msra.mxu0 0.0
        %3332 = vmatprep.subr.mxu0 0.0
        %3333 = vmatpush1.xpose.msra.mxu0 0.0
        %3334 = vmatprep.subr.mxu0 0.0
        %3335 = vmatpush1.xpose.msra.mxu0 0.0
        %3336 = vmatprep.subr.mxu0 0.0
        %3337 = vmatpush1.xpose.msra.mxu0 0.0
        %3338 = vmatprep.subr.mxu0 0.0
        %3339 = vmatpush1.xpose.msra.mxu0 0.0
        %3340 = vmatprep.subr.mxu0 0.0
        %3341 = vmatpush1.xpose.msra.mxu0 0.0
        %3342 = vmatprep.subr.mxu0 0.0
        %3343 = vmatpush1.xpose.msra.mxu0 %v3316
        %3344 = vmatprep.subr.mxu0 0.0
        %3345 = vmatpush1.xpose.msra.mxu0 %v3314
        %3346 = vmatprep.subr.mxu0 0.0
        %3347 = vmatpush1.xpose.msra.mxu0 %v3312
        %3348 = vmatprep.subr.mxu0 0.0
        %3349 = vmatpush1.xpose.msra.mxu0 %v3310
        %3350 = vmatprep.subr.mxu0 0.0
        %3351 = vmatpush2.xpose.msra.mxu0 0.0
        %3352 = vmatprep.subr.mxu0 0.0
        %3353 = vmatpush2.xpose.msra.mxu0 0.0
        %3354 = vmatprep.subr.mxu0 0.0
        %3355 = vmatpush2.xpose.msra.mxu0 0.0
        %3356 = vmatprep.subr.mxu0 0.0
        %3357 = vmatpush2.xpose.msra.mxu0 0.0
        %3358 = vmatprep.subr.mxu0 0.0
        %3359 = vmatpush2.xpose.msra.mxu0 0.0
        %3360 = vmatprep.subr.mxu0 0.0
        %3361 = vmatpush2.xpose.msra.mxu0 0.0
        %3362 = vmatprep.subr.mxu0 0.0
        %3363 = vmatpush2.xpose.msra.mxu0 0.0
        %3364 = vmatprep.subr.mxu0 0.0
        %3365 = vmatpush2.xpose.msra.mxu0 0.0
        %3366 = vmatprep.subr.mxu0 0.0
        %3367 = vmatpush2.xpose.msra.mxu0 0.0
        %3368 = vmatprep.subr.mxu0 0.0
        %3369 = vmatpush2.xpose.msra.mxu0 0.0
        %3370 = vmatprep.subr.mxu0 0.0
        %3371 = vmatpush2.xpose.msra.mxu0 0.0
        %3372 = vmatprep.subr.mxu0 0.0
        %3373 = vmatpush2.xpose.msra.mxu0 0.0
        %3374 = vmatprep.subr.mxu0 0.0
        %3375 = vmatpush2.xpose.msra.mxu0 0.0
        %3376 = vmatprep.subr.mxu0 0.0
        %3377 = vmatpush2.xpose.msra.mxu0 0.0
        %3378 = vmatprep.subr.mxu0 0.0
        %3379 = vmatpush2.xpose.msra.mxu0 0.0
        %3380 = vmatprep.subr.mxu0 0.0
        %3381 = vmatpush2.xpose.msra.mxu0 0.0
        %3382 = vmatprep.mubr.f32.mxu0 0.0
        %3383 = vmatmul.mubr.f32.gmra.mxu0 %v3308
        %v3384 = vpop.f32.mrf.mxu0
        %v3385 = vadd.f32 0.0, %v3384
        %v3386 = vpop.f32.mrf.mxu0
        %3387 = vdwg.mxu0
        %3388 = vrot.lane.b32.xlu0 %v775, 112
        %v3389 = vpop.permute.xlu0 %3388
        %3390 = vrot.lane.b32.xlu0 %v1077, 112
        %v3391 = vpop.permute.xlu0 %3390
        %3392 = vrot.lane.b32.xlu0 %v1082, 112
        %v3393 = vpop.permute.xlu0 %3392
        %3394 = vrot.lane.b32.xlu0 %v1087, 112
        %v3395 = vpop.permute.xlu0 %3394
        %3396 = vrot.lane.b32.xlu0 %v1092, 112
        %v3397 = vpop.permute.xlu0 %3396
        %v3398 = vsel %vm1447, %v3389, 0
        %v3400 = vsel %vm1447, %v3391, 0
        %v3402 = vsel %vm1447, %v3393, 0
        %v3404 = vsel %vm1447, %v3395, 0
        %v3406 = vsel %vm1447, %v3397, 0
        %3408 = vmatprep.subr.mxu0 0.0
        %3409 = vmatpush1.xpose.msra.mxu0 0.0
        %3410 = vmatprep.subr.mxu0 0.0
        %3411 = vmatpush1.xpose.msra.mxu0 0.0
        %3412 = vmatprep.subr.mxu0 0.0
        %3413 = vmatpush1.xpose.msra.mxu0 0.0
        %3414 = vmatprep.subr.mxu0 0.0
        %3415 = vmatpush1.xpose.msra.mxu0 0.0
        %3416 = vmatprep.subr.mxu0 0.0
        %3417 = vmatpush1.xpose.msra.mxu0 0.0
        %3418 = vmatprep.subr.mxu0 0.0
        %3419 = vmatpush1.xpose.msra.mxu0 0.0
        %3420 = vmatprep.subr.mxu0 0.0
        %3421 = vmatpush1.xpose.msra.mxu0 0.0
        %3422 = vmatprep.subr.mxu0 0.0
        %3423 = vmatpush1.xpose.msra.mxu0 0.0
        %3424 = vmatprep.subr.mxu0 0.0
        %3425 = vmatpush1.xpose.msra.mxu0 0.0
        %3426 = vmatprep.subr.mxu0 0.0
        %3427 = vmatpush1.xpose.msra.mxu0 0.0
        %3428 = vmatprep.subr.mxu0 0.0
        %3429 = vmatpush1.xpose.msra.mxu0 0.0
        %3430 = vmatprep.subr.mxu0 0.0
        %3431 = vmatpush1.xpose.msra.mxu0 0.0
        %3432 = vmatprep.subr.mxu0 0.0
        %3433 = vmatpush1.xpose.msra.mxu0 %v3406
        %3434 = vmatprep.subr.mxu0 0.0
        %3435 = vmatpush1.xpose.msra.mxu0 %v3404
        %3436 = vmatprep.subr.mxu0 0.0
        %3437 = vmatpush1.xpose.msra.mxu0 %v3402
        %3438 = vmatprep.subr.mxu0 0.0
        %3439 = vmatpush1.xpose.msra.mxu0 %v3400
        %3440 = vmatprep.subr.mxu0 0.0
        %3441 = vmatpush2.xpose.msra.mxu0 0.0
        %3442 = vmatprep.subr.mxu0 0.0
        %3443 = vmatpush2.xpose.msra.mxu0 0.0
        %3444 = vmatprep.subr.mxu0 0.0
        %3445 = vmatpush2.xpose.msra.mxu0 0.0
        %3446 = vmatprep.subr.mxu0 0.0
        %3447 = vmatpush2.xpose.msra.mxu0 0.0
        %3448 = vmatprep.subr.mxu0 0.0
        %3449 = vmatpush2.xpose.msra.mxu0 0.0
        %3450 = vmatprep.subr.mxu0 0.0
        %3451 = vmatpush2.xpose.msra.mxu0 0.0
        %3452 = vmatprep.subr.mxu0 0.0
        %3453 = vmatpush2.xpose.msra.mxu0 0.0
        %3454 = vmatprep.subr.mxu0 0.0
        %3455 = vmatpush2.xpose.msra.mxu0 0.0
        %3456 = vmatprep.subr.mxu0 0.0
        %3457 = vmatpush2.xpose.msra.mxu0 0.0
        %3458 = vmatprep.subr.mxu0 0.0
        %3459 = vmatpush2.xpose.msra.mxu0 0.0
        %3460 = vmatprep.subr.mxu0 0.0
        %3461 = vmatpush2.xpose.msra.mxu0 0.0
        %3462 = vmatprep.subr.mxu0 0.0
        %3463 = vmatpush2.xpose.msra.mxu0 0.0
        %3464 = vmatprep.subr.mxu0 0.0
        %3465 = vmatpush2.xpose.msra.mxu0 0.0
        %3466 = vmatprep.subr.mxu0 0.0
        %3467 = vmatpush2.xpose.msra.mxu0 0.0
        %3468 = vmatprep.subr.mxu0 0.0
        %3469 = vmatpush2.xpose.msra.mxu0 0.0
        %3470 = vmatprep.subr.mxu0 0.0
        %3471 = vmatpush2.xpose.msra.mxu0 0.0
        %3472 = vmatprep.mubr.f32.mxu0 0.0
        %3473 = vmatmul.mubr.f32.gmra.mxu0 %v3398
        %v3474 = vpop.f32.mrf.mxu0
        %v3475 = vadd.f32 0.0, %v3474
        %v3476 = vpop.f32.mrf.mxu0
        %3477 = vdwg.mxu0
        %3478 = vrot.lane.b32.xlu0 %v780, 112
        %v3479 = vpop.permute.xlu0 %3478
        %3480 = vrot.lane.b32.xlu0 %v1097, 112
        %v3481 = vpop.permute.xlu0 %3480
        %3482 = vrot.lane.b32.xlu0 %v1102, 112
        %v3483 = vpop.permute.xlu0 %3482
        %3484 = vrot.lane.b32.xlu0 %v1107, 112
        %v3485 = vpop.permute.xlu0 %3484
        %3486 = vrot.lane.b32.xlu0 %v1112, 112
        %v3487 = vpop.permute.xlu0 %3486
        %v3488 = vsel %vm1447, %v3479, 0
        %v3490 = vsel %vm1447, %v3481, 0
        %v3492 = vsel %vm1447, %v3483, 0
        %v3494 = vsel %vm1447, %v3485, 0
        %v3496 = vsel %vm1447, %v3487, 0
        %3498 = vmatprep.subr.mxu0 0.0
        %3499 = vmatpush1.xpose.msra.mxu0 0.0
        %3500 = vmatprep.subr.mxu0 0.0
        %3501 = vmatpush1.xpose.msra.mxu0 0.0
        %3502 = vmatprep.subr.mxu0 0.0
        %3503 = vmatpush1.xpose.msra.mxu0 0.0
        %3504 = vmatprep.subr.mxu0 0.0
        %3505 = vmatpush1.xpose.msra.mxu0 0.0
        %3506 = vmatprep.subr.mxu0 0.0
        %3507 = vmatpush1.xpose.msra.mxu0 0.0
        %3508 = vmatprep.subr.mxu0 0.0
        %3509 = vmatpush1.xpose.msra.mxu0 0.0
        %3510 = vmatprep.subr.mxu0 0.0
        %3511 = vmatpush1.xpose.msra.mxu0 0.0
        %3512 = vmatprep.subr.mxu0 0.0
        %3513 = vmatpush1.xpose.msra.mxu0 0.0
        %3514 = vmatprep.subr.mxu0 0.0
        %3515 = vmatpush1.xpose.msra.mxu0 0.0
        %3516 = vmatprep.subr.mxu0 0.0
        %3517 = vmatpush1.xpose.msra.mxu0 0.0
        %3518 = vmatprep.subr.mxu0 0.0
        %3519 = vmatpush1.xpose.msra.mxu0 0.0
        %3520 = vmatprep.subr.mxu0 0.0
        %3521 = vmatpush1.xpose.msra.mxu0 0.0
        %3522 = vmatprep.subr.mxu0 0.0
        %3523 = vmatpush1.xpose.msra.mxu0 %v3496
        %3524 = vmatprep.subr.mxu0 0.0
        %3525 = vmatpush1.xpose.msra.mxu0 %v3494
        %3526 = vmatprep.subr.mxu0 0.0
        %3527 = vmatpush1.xpose.msra.mxu0 %v3492
        %3528 = vmatprep.subr.mxu0 0.0
        %3529 = vmatpush1.xpose.msra.mxu0 %v3490
        %3530 = vmatprep.subr.mxu0 0.0
        %3531 = vmatpush2.xpose.msra.mxu0 0.0
        %3532 = vmatprep.subr.mxu0 0.0
        %3533 = vmatpush2.xpose.msra.mxu0 0.0
        %3534 = vmatprep.subr.mxu0 0.0
        %3535 = vmatpush2.xpose.msra.mxu0 0.0
        %3536 = vmatprep.subr.mxu0 0.0
        %3537 = vmatpush2.xpose.msra.mxu0 0.0
        %3538 = vmatprep.subr.mxu0 0.0
        %3539 = vmatpush2.xpose.msra.mxu0 0.0
        %3540 = vmatprep.subr.mxu0 0.0
        %3541 = vmatpush2.xpose.msra.mxu0 0.0
        %3542 = vmatprep.subr.mxu0 0.0
        %3543 = vmatpush2.xpose.msra.mxu0 0.0
        %3544 = vmatprep.subr.mxu0 0.0
        %3545 = vmatpush2.xpose.msra.mxu0 0.0
        %3546 = vmatprep.subr.mxu0 0.0
        %3547 = vmatpush2.xpose.msra.mxu0 0.0
        %3548 = vmatprep.subr.mxu0 0.0
        %3549 = vmatpush2.xpose.msra.mxu0 0.0
        %3550 = vmatprep.subr.mxu0 0.0
        %3551 = vmatpush2.xpose.msra.mxu0 0.0
        %3552 = vmatprep.subr.mxu0 0.0
        %3553 = vmatpush2.xpose.msra.mxu0 0.0
        %3554 = vmatprep.subr.mxu0 0.0
        %3555 = vmatpush2.xpose.msra.mxu0 0.0
        %3556 = vmatprep.subr.mxu0 0.0
        %3557 = vmatpush2.xpose.msra.mxu0 0.0
        %3558 = vmatprep.subr.mxu0 0.0
        %3559 = vmatpush2.xpose.msra.mxu0 0.0
        %3560 = vmatprep.subr.mxu0 0.0
        %3561 = vmatpush2.xpose.msra.mxu0 0.0
        %3562 = vmatprep.mubr.f32.mxu0 0.0
        %3563 = vmatmul.mubr.f32.gmra.mxu0 %v3488
        %v3564 = vpop.f32.mrf.mxu0
        %v3565 = vadd.f32 0.0, %v3564
        %v3566 = vpop.f32.mrf.mxu0
        %3567 = vdwg.mxu0
        %3568 = vrot.lane.b32.xlu0 %v745, 104
        %v3569 = vpop.permute.xlu0 %3568
        %3570 = vrot.lane.b32.xlu0 %v957, 104
        %v3571 = vpop.permute.xlu0 %3570
        %3572 = vrot.lane.b32.xlu0 %v962, 104
        %v3573 = vpop.permute.xlu0 %3572
        %3574 = vrot.lane.b32.xlu0 %v967, 104
        %v3575 = vpop.permute.xlu0 %3574
        %3576 = vrot.lane.b32.xlu0 %v972, 104
        %v3577 = vpop.permute.xlu0 %3576
        %v3578 = vsel %vm1447, %v3569, 0
        %v3580 = vsel %vm1447, %v3571, 0
        %v3582 = vsel %vm1447, %v3573, 0
        %v3584 = vsel %vm1447, %v3575, 0
        %v3586 = vsel %vm1447, %v3577, 0
        %3588 = vmatprep.subr.mxu0 0.0
        %3589 = vmatpush1.xpose.msra.mxu0 0.0
        %3590 = vmatprep.subr.mxu0 0.0
        %3591 = vmatpush1.xpose.msra.mxu0 0.0
        %3592 = vmatprep.subr.mxu0 0.0
        %3593 = vmatpush1.xpose.msra.mxu0 0.0
        %3594 = vmatprep.subr.mxu0 0.0
        %3595 = vmatpush1.xpose.msra.mxu0 0.0
        %3596 = vmatprep.subr.mxu0 0.0
        %3597 = vmatpush1.xpose.msra.mxu0 0.0
        %3598 = vmatprep.subr.mxu0 0.0
        %3599 = vmatpush1.xpose.msra.mxu0 0.0
        %3600 = vmatprep.subr.mxu0 0.0
        %3601 = vmatpush1.xpose.msra.mxu0 0.0
        %3602 = vmatprep.subr.mxu0 0.0
        %3603 = vmatpush1.xpose.msra.mxu0 0.0
        %3604 = vmatprep.subr.mxu0 0.0
        %3605 = vmatpush1.xpose.msra.mxu0 0.0
        %3606 = vmatprep.subr.mxu0 0.0
        %3607 = vmatpush1.xpose.msra.mxu0 0.0
        %3608 = vmatprep.subr.mxu0 0.0
        %3609 = vmatpush1.xpose.msra.mxu0 0.0
        %3610 = vmatprep.subr.mxu0 0.0
        %3611 = vmatpush1.xpose.msra.mxu0 0.0
        %3612 = vmatprep.subr.mxu0 0.0
        %3613 = vmatpush1.xpose.msra.mxu0 %v3586
        %3614 = vmatprep.subr.mxu0 0.0
        %3615 = vmatpush1.xpose.msra.mxu0 %v3584
        %3616 = vmatprep.subr.mxu0 0.0
        %3617 = vmatpush1.xpose.msra.mxu0 %v3582
        %3618 = vmatprep.subr.mxu0 0.0
        %3619 = vmatpush1.xpose.msra.mxu0 %v3580
        %3620 = vmatprep.subr.mxu0 0.0
        %3621 = vmatpush2.xpose.msra.mxu0 0.0
        %3622 = vmatprep.subr.mxu0 0.0
        %3623 = vmatpush2.xpose.msra.mxu0 0.0
        %3624 = vmatprep.subr.mxu0 0.0
        %3625 = vmatpush2.xpose.msra.mxu0 0.0
        %3626 = vmatprep.subr.mxu0 0.0
        %3627 = vmatpush2.xpose.msra.mxu0 0.0
        %3628 = vmatprep.subr.mxu0 0.0
        %3629 = vmatpush2.xpose.msra.mxu0 0.0
        %3630 = vmatprep.subr.mxu0 0.0
        %3631 = vmatpush2.xpose.msra.mxu0 0.0
        %3632 = vmatprep.subr.mxu0 0.0
        %3633 = vmatpush2.xpose.msra.mxu0 0.0
        %3634 = vmatprep.subr.mxu0 0.0
        %3635 = vmatpush2.xpose.msra.mxu0 0.0
        %3636 = vmatprep.subr.mxu0 0.0
        %3637 = vmatpush2.xpose.msra.mxu0 0.0
        %3638 = vmatprep.subr.mxu0 0.0
        %3639 = vmatpush2.xpose.msra.mxu0 0.0
        %3640 = vmatprep.subr.mxu0 0.0
        %3641 = vmatpush2.xpose.msra.mxu0 0.0
        %3642 = vmatprep.subr.mxu0 0.0
        %3643 = vmatpush2.xpose.msra.mxu0 0.0
        %3644 = vmatprep.subr.mxu0 0.0
        %3645 = vmatpush2.xpose.msra.mxu0 0.0
        %3646 = vmatprep.subr.mxu0 0.0
        %3647 = vmatpush2.xpose.msra.mxu0 0.0
        %3648 = vmatprep.subr.mxu0 0.0
        %3649 = vmatpush2.xpose.msra.mxu0 0.0
        %3650 = vmatprep.subr.mxu0 0.0
        %3651 = vmatpush2.xpose.msra.mxu0 0.0
        %3652 = vmatprep.mubr.f32.mxu0 0.0
        %3653 = vmatmul.mubr.f32.gmra.mxu0 %v3578
        %v3654 = vpop.f32.mrf.mxu0
        %v3655 = vadd.f32 0.0, %v3654
        %v3656 = vpop.f32.mrf.mxu0
        %3657 = vdwg.mxu0
        %3658 = vrot.lane.b32.xlu0 %v750, 104
        %v3659 = vpop.permute.xlu0 %3658
        %3660 = vrot.lane.b32.xlu0 %v977, 104
        %v3661 = vpop.permute.xlu0 %3660
        %3662 = vrot.lane.b32.xlu0 %v982, 104
        %v3663 = vpop.permute.xlu0 %3662
        %3664 = vrot.lane.b32.xlu0 %v987, 104
        %v3665 = vpop.permute.xlu0 %3664
        %3666 = vrot.lane.b32.xlu0 %v992, 104
        %v3667 = vpop.permute.xlu0 %3666
        %v3668 = vsel %vm1447, %v3659, 0
        %v3670 = vsel %vm1447, %v3661, 0
        %v3672 = vsel %vm1447, %v3663, 0
        %v3674 = vsel %vm1447, %v3665, 0
        %v3676 = vsel %vm1447, %v3667, 0
        %3678 = vmatprep.subr.mxu0 0.0
        %3679 = vmatpush1.xpose.msra.mxu0 0.0
        %3680 = vmatprep.subr.mxu0 0.0
        %3681 = vmatpush1.xpose.msra.mxu0 0.0
        %3682 = vmatprep.subr.mxu0 0.0
        %3683 = vmatpush1.xpose.msra.mxu0 0.0
        %3684 = vmatprep.subr.mxu0 0.0
        %3685 = vmatpush1.xpose.msra.mxu0 0.0
        %3686 = vmatprep.subr.mxu0 0.0
        %3687 = vmatpush1.xpose.msra.mxu0 0.0
        %3688 = vmatprep.subr.mxu0 0.0
        %3689 = vmatpush1.xpose.msra.mxu0 0.0
        %3690 = vmatprep.subr.mxu0 0.0
        %3691 = vmatpush1.xpose.msra.mxu0 0.0
        %3692 = vmatprep.subr.mxu0 0.0
        %3693 = vmatpush1.xpose.msra.mxu0 0.0
        %3694 = vmatprep.subr.mxu0 0.0
        %3695 = vmatpush1.xpose.msra.mxu0 0.0
        %3696 = vmatprep.subr.mxu0 0.0
        %3697 = vmatpush1.xpose.msra.mxu0 0.0
        %3698 = vmatprep.subr.mxu0 0.0
        %3699 = vmatpush1.xpose.msra.mxu0 0.0
        %3700 = vmatprep.subr.mxu0 0.0
        %3701 = vmatpush1.xpose.msra.mxu0 0.0
        %3702 = vmatprep.subr.mxu0 0.0
        %3703 = vmatpush1.xpose.msra.mxu0 %v3676
        %3704 = vmatprep.subr.mxu0 0.0
        %3705 = vmatpush1.xpose.msra.mxu0 %v3674
        %3706 = vmatprep.subr.mxu0 0.0
        %3707 = vmatpush1.xpose.msra.mxu0 %v3672
        %3708 = vmatprep.subr.mxu0 0.0
        %3709 = vmatpush1.xpose.msra.mxu0 %v3670
        %3710 = vmatprep.subr.mxu0 0.0
        %3711 = vmatpush2.xpose.msra.mxu0 0.0
        %3712 = vmatprep.subr.mxu0 0.0
        %3713 = vmatpush2.xpose.msra.mxu0 0.0
        %3714 = vmatprep.subr.mxu0 0.0
        %3715 = vmatpush2.xpose.msra.mxu0 0.0
        %3716 = vmatprep.subr.mxu0 0.0
        %3717 = vmatpush2.xpose.msra.mxu0 0.0
        %3718 = vmatprep.subr.mxu0 0.0
        %3719 = vmatpush2.xpose.msra.mxu0 0.0
        %3720 = vmatprep.subr.mxu0 0.0
        %3721 = vmatpush2.xpose.msra.mxu0 0.0
        %3722 = vmatprep.subr.mxu0 0.0
        %3723 = vmatpush2.xpose.msra.mxu0 0.0
        %3724 = vmatprep.subr.mxu0 0.0
        %3725 = vmatpush2.xpose.msra.mxu0 0.0
        %3726 = vmatprep.subr.mxu0 0.0
        %3727 = vmatpush2.xpose.msra.mxu0 0.0
        %3728 = vmatprep.subr.mxu0 0.0
        %3729 = vmatpush2.xpose.msra.mxu0 0.0
        %3730 = vmatprep.subr.mxu0 0.0
        %3731 = vmatpush2.xpose.msra.mxu0 0.0
        %3732 = vmatprep.subr.mxu0 0.0
        %3733 = vmatpush2.xpose.msra.mxu0 0.0
        %3734 = vmatprep.subr.mxu0 0.0
        %3735 = vmatpush2.xpose.msra.mxu0 0.0
        %3736 = vmatprep.subr.mxu0 0.0
        %3737 = vmatpush2.xpose.msra.mxu0 0.0
        %3738 = vmatprep.subr.mxu0 0.0
        %3739 = vmatpush2.xpose.msra.mxu0 0.0
        %3740 = vmatprep.subr.mxu0 0.0
        %3741 = vmatpush2.xpose.msra.mxu0 0.0
        %3742 = vmatprep.mubr.f32.mxu0 0.0
        %3743 = vmatmul.mubr.f32.gmra.mxu0 %v3668
        %v3744 = vpop.f32.mrf.mxu0
        %v3745 = vadd.f32 0.0, %v3744
        %v3746 = vpop.f32.mrf.mxu0
        %3747 = vdwg.mxu0
        %3748 = vrot.lane.b32.xlu0 %v755, 104
        %v3749 = vpop.permute.xlu0 %3748
        %3750 = vrot.lane.b32.xlu0 %v997, 104
        %v3751 = vpop.permute.xlu0 %3750
        %3752 = vrot.lane.b32.xlu0 %v1002, 104
        %v3753 = vpop.permute.xlu0 %3752
        %3754 = vrot.lane.b32.xlu0 %v1007, 104
        %v3755 = vpop.permute.xlu0 %3754
        %3756 = vrot.lane.b32.xlu0 %v1012, 104
        %v3757 = vpop.permute.xlu0 %3756
        %v3758 = vsel %vm1447, %v3749, 0
        %v3760 = vsel %vm1447, %v3751, 0
        %v3762 = vsel %vm1447, %v3753, 0
        %v3764 = vsel %vm1447, %v3755, 0
        %v3766 = vsel %vm1447, %v3757, 0
        %3768 = vmatprep.subr.mxu0 0.0
        %3769 = vmatpush1.xpose.msra.mxu0 0.0
        %3770 = vmatprep.subr.mxu0 0.0
        %3771 = vmatpush1.xpose.msra.mxu0 0.0
        %3772 = vmatprep.subr.mxu0 0.0
        %3773 = vmatpush1.xpose.msra.mxu0 0.0
        %3774 = vmatprep.subr.mxu0 0.0
        %3775 = vmatpush1.xpose.msra.mxu0 0.0
        %3776 = vmatprep.subr.mxu0 0.0
        %3777 = vmatpush1.xpose.msra.mxu0 0.0
        %3778 = vmatprep.subr.mxu0 0.0
        %3779 = vmatpush1.xpose.msra.mxu0 0.0
        %3780 = vmatprep.subr.mxu0 0.0
        %3781 = vmatpush1.xpose.msra.mxu0 0.0
        %3782 = vmatprep.subr.mxu0 0.0
        %3783 = vmatpush1.xpose.msra.mxu0 0.0
        %3784 = vmatprep.subr.mxu0 0.0
        %3785 = vmatpush1.xpose.msra.mxu0 0.0
        %3786 = vmatprep.subr.mxu0 0.0
        %3787 = vmatpush1.xpose.msra.mxu0 0.0
        %3788 = vmatprep.subr.mxu0 0.0
        %3789 = vmatpush1.xpose.msra.mxu0 0.0
        %3790 = vmatprep.subr.mxu0 0.0
        %3791 = vmatpush1.xpose.msra.mxu0 0.0
        %3792 = vmatprep.subr.mxu0 0.0
        %3793 = vmatpush1.xpose.msra.mxu0 %v3766
        %3794 = vmatprep.subr.mxu0 0.0
        %3795 = vmatpush1.xpose.msra.mxu0 %v3764
        %3796 = vmatprep.subr.mxu0 0.0
        %3797 = vmatpush1.xpose.msra.mxu0 %v3762
        %3798 = vmatprep.subr.mxu0 0.0
        %3799 = vmatpush1.xpose.msra.mxu0 %v3760
        %3800 = vmatprep.subr.mxu0 0.0
        %3801 = vmatpush2.xpose.msra.mxu0 0.0
        %3802 = vmatprep.subr.mxu0 0.0
        %3803 = vmatpush2.xpose.msra.mxu0 0.0
        %3804 = vmatprep.subr.mxu0 0.0
        %3805 = vmatpush2.xpose.msra.mxu0 0.0
        %3806 = vmatprep.subr.mxu0 0.0
        %3807 = vmatpush2.xpose.msra.mxu0 0.0
        %3808 = vmatprep.subr.mxu0 0.0
        %3809 = vmatpush2.xpose.msra.mxu0 0.0
        %3810 = vmatprep.subr.mxu0 0.0
        %3811 = vmatpush2.xpose.msra.mxu0 0.0
        %3812 = vmatprep.subr.mxu0 0.0
        %3813 = vmatpush2.xpose.msra.mxu0 0.0
        %3814 = vmatprep.subr.mxu0 0.0
        %3815 = vmatpush2.xpose.msra.mxu0 0.0
        %3816 = vmatprep.subr.mxu0 0.0
        %3817 = vmatpush2.xpose.msra.mxu0 0.0
        %3818 = vmatprep.subr.mxu0 0.0
        %3819 = vmatpush2.xpose.msra.mxu0 0.0
        %3820 = vmatprep.subr.mxu0 0.0
        %3821 = vmatpush2.xpose.msra.mxu0 0.0
        %3822 = vmatprep.subr.mxu0 0.0
        %3823 = vmatpush2.xpose.msra.mxu0 0.0
        %3824 = vmatprep.subr.mxu0 0.0
        %3825 = vmatpush2.xpose.msra.mxu0 0.0
        %3826 = vmatprep.subr.mxu0 0.0
        %3827 = vmatpush2.xpose.msra.mxu0 0.0
        %3828 = vmatprep.subr.mxu0 0.0
        %3829 = vmatpush2.xpose.msra.mxu0 0.0
        %3830 = vmatprep.subr.mxu0 0.0
        %3831 = vmatpush2.xpose.msra.mxu0 0.0
        %3832 = vmatprep.mubr.f32.mxu0 0.0
        %3833 = vmatmul.mubr.f32.gmra.mxu0 %v3758
        %v3834 = vpop.f32.mrf.mxu0
        %v3835 = vadd.f32 0.0, %v3834
        %v3836 = vpop.f32.mrf.mxu0
        %3837 = vdwg.mxu0
        %3838 = vrot.lane.b32.xlu0 %v760, 104
        %v3839 = vpop.permute.xlu0 %3838
        %3840 = vrot.lane.b32.xlu0 %v1017, 104
        %v3841 = vpop.permute.xlu0 %3840
        %3842 = vrot.lane.b32.xlu0 %v1022, 104
        %v3843 = vpop.permute.xlu0 %3842
        %3844 = vrot.lane.b32.xlu0 %v1027, 104
        %v3845 = vpop.permute.xlu0 %3844
        %3846 = vrot.lane.b32.xlu0 %v1032, 104
        %v3847 = vpop.permute.xlu0 %3846
        %v3848 = vsel %vm1447, %v3839, 0
        %v3850 = vsel %vm1447, %v3841, 0
        %v3852 = vsel %vm1447, %v3843, 0
        %v3854 = vsel %vm1447, %v3845, 0
        %v3856 = vsel %vm1447, %v3847, 0
        %3858 = vmatprep.subr.mxu0 0.0
        %3859 = vmatpush1.xpose.msra.mxu0 0.0
        %3860 = vmatprep.subr.mxu0 0.0
        %3861 = vmatpush1.xpose.msra.mxu0 0.0
        %3862 = vmatprep.subr.mxu0 0.0
        %3863 = vmatpush1.xpose.msra.mxu0 0.0
        %3864 = vmatprep.subr.mxu0 0.0
        %3865 = vmatpush1.xpose.msra.mxu0 0.0
        %3866 = vmatprep.subr.mxu0 0.0
        %3867 = vmatpush1.xpose.msra.mxu0 0.0
        %3868 = vmatprep.subr.mxu0 0.0
        %3869 = vmatpush1.xpose.msra.mxu0 0.0
        %3870 = vmatprep.subr.mxu0 0.0
        %3871 = vmatpush1.xpose.msra.mxu0 0.0
        %3872 = vmatprep.subr.mxu0 0.0
        %3873 = vmatpush1.xpose.msra.mxu0 0.0
        %3874 = vmatprep.subr.mxu0 0.0
        %3875 = vmatpush1.xpose.msra.mxu0 0.0
        %3876 = vmatprep.subr.mxu0 0.0
        %3877 = vmatpush1.xpose.msra.mxu0 0.0
        %3878 = vmatprep.subr.mxu0 0.0
        %3879 = vmatpush1.xpose.msra.mxu0 0.0
        %3880 = vmatprep.subr.mxu0 0.0
        %3881 = vmatpush1.xpose.msra.mxu0 0.0
        %3882 = vmatprep.subr.mxu0 0.0
        %3883 = vmatpush1.xpose.msra.mxu0 %v3856
        %3884 = vmatprep.subr.mxu0 0.0
        %3885 = vmatpush1.xpose.msra.mxu0 %v3854
        %3886 = vmatprep.subr.mxu0 0.0
        %3887 = vmatpush1.xpose.msra.mxu0 %v3852
        %3888 = vmatprep.subr.mxu0 0.0
        %3889 = vmatpush1.xpose.msra.mxu0 %v3850
        %3890 = vmatprep.subr.mxu0 0.0
        %3891 = vmatpush2.xpose.msra.mxu0 0.0
        %3892 = vmatprep.subr.mxu0 0.0
        %3893 = vmatpush2.xpose.msra.mxu0 0.0
        %3894 = vmatprep.subr.mxu0 0.0
        %3895 = vmatpush2.xpose.msra.mxu0 0.0
        %3896 = vmatprep.subr.mxu0 0.0
        %3897 = vmatpush2.xpose.msra.mxu0 0.0
        %3898 = vmatprep.subr.mxu0 0.0
        %3899 = vmatpush2.xpose.msra.mxu0 0.0
        %3900 = vmatprep.subr.mxu0 0.0
        %3901 = vmatpush2.xpose.msra.mxu0 0.0
        %3902 = vmatprep.subr.mxu0 0.0
        %3903 = vmatpush2.xpose.msra.mxu0 0.0
        %3904 = vmatprep.subr.mxu0 0.0
        %3905 = vmatpush2.xpose.msra.mxu0 0.0
        %3906 = vmatprep.subr.mxu0 0.0
        %3907 = vmatpush2.xpose.msra.mxu0 0.0
        %3908 = vmatprep.subr.mxu0 0.0
        %3909 = vmatpush2.xpose.msra.mxu0 0.0
        %3910 = vmatprep.subr.mxu0 0.0
        %3911 = vmatpush2.xpose.msra.mxu0 0.0
        %3912 = vmatprep.subr.mxu0 0.0
        %3913 = vmatpush2.xpose.msra.mxu0 0.0
        %3914 = vmatprep.subr.mxu0 0.0
        %3915 = vmatpush2.xpose.msra.mxu0 0.0
        %3916 = vmatprep.subr.mxu0 0.0
        %3917 = vmatpush2.xpose.msra.mxu0 0.0
        %3918 = vmatprep.subr.mxu0 0.0
        %3919 = vmatpush2.xpose.msra.mxu0 0.0
        %3920 = vmatprep.subr.mxu0 0.0
        %3921 = vmatpush2.xpose.msra.mxu0 0.0
        %3922 = vmatprep.mubr.f32.mxu0 0.0
        %3923 = vmatmul.mubr.f32.gmra.mxu0 %v3848
        %v3924 = vpop.f32.mrf.mxu0
        %v3925 = vadd.f32 0.0, %v3924
        %v3926 = vpop.f32.mrf.mxu0
        %3927 = vdwg.mxu0
        %3928 = vrot.lane.b32.xlu0 %v765, 104
        %v3929 = vpop.permute.xlu0 %3928
        %3930 = vrot.lane.b32.xlu0 %v1037, 104
        %v3931 = vpop.permute.xlu0 %3930
        %3932 = vrot.lane.b32.xlu0 %v1042, 104
        %v3933 = vpop.permute.xlu0 %3932
        %3934 = vrot.lane.b32.xlu0 %v1047, 104
        %v3935 = vpop.permute.xlu0 %3934
        %3936 = vrot.lane.b32.xlu0 %v1052, 104
        %v3937 = vpop.permute.xlu0 %3936
        %v3938 = vsel %vm1447, %v3929, 0
        %v3940 = vsel %vm1447, %v3931, 0
        %v3942 = vsel %vm1447, %v3933, 0
        %v3944 = vsel %vm1447, %v3935, 0
        %v3946 = vsel %vm1447, %v3937, 0
        %3948 = vmatprep.subr.mxu0 0.0
        %3949 = vmatpush1.xpose.msra.mxu0 0.0
        %3950 = vmatprep.subr.mxu0 0.0
        %3951 = vmatpush1.xpose.msra.mxu0 0.0
        %3952 = vmatprep.subr.mxu0 0.0
        %3953 = vmatpush1.xpose.msra.mxu0 0.0
        %3954 = vmatprep.subr.mxu0 0.0
        %3955 = vmatpush1.xpose.msra.mxu0 0.0
        %3956 = vmatprep.subr.mxu0 0.0
        %3957 = vmatpush1.xpose.msra.mxu0 0.0
        %3958 = vmatprep.subr.mxu0 0.0
        %3959 = vmatpush1.xpose.msra.mxu0 0.0
        %3960 = vmatprep.subr.mxu0 0.0
        %3961 = vmatpush1.xpose.msra.mxu0 0.0
        %3962 = vmatprep.subr.mxu0 0.0
        %3963 = vmatpush1.xpose.msra.mxu0 0.0
        %3964 = vmatprep.subr.mxu0 0.0
        %3965 = vmatpush1.xpose.msra.mxu0 0.0
        %3966 = vmatprep.subr.mxu0 0.0
        %3967 = vmatpush1.xpose.msra.mxu0 0.0
        %3968 = vmatprep.subr.mxu0 0.0
        %3969 = vmatpush1.xpose.msra.mxu0 0.0
        %3970 = vmatprep.subr.mxu0 0.0
        %3971 = vmatpush1.xpose.msra.mxu0 0.0
        %3972 = vmatprep.subr.mxu0 0.0
        %3973 = vmatpush1.xpose.msra.mxu0 %v3946
        %3974 = vmatprep.subr.mxu0 0.0
        %3975 = vmatpush1.xpose.msra.mxu0 %v3944
        %3976 = vmatprep.subr.mxu0 0.0
        %3977 = vmatpush1.xpose.msra.mxu0 %v3942
        %3978 = vmatprep.subr.mxu0 0.0
        %3979 = vmatpush1.xpose.msra.mxu0 %v3940
        %3980 = vmatprep.subr.mxu0 0.0
        %3981 = vmatpush2.xpose.msra.mxu0 0.0
        %3982 = vmatprep.subr.mxu0 0.0
        %3983 = vmatpush2.xpose.msra.mxu0 0.0
        %3984 = vmatprep.subr.mxu0 0.0
        %3985 = vmatpush2.xpose.msra.mxu0 0.0
        %3986 = vmatprep.subr.mxu0 0.0
        %3987 = vmatpush2.xpose.msra.mxu0 0.0
        %3988 = vmatprep.subr.mxu0 0.0
        %3989 = vmatpush2.xpose.msra.mxu0 0.0
        %3990 = vmatprep.subr.mxu0 0.0
        %3991 = vmatpush2.xpose.msra.mxu0 0.0
        %3992 = vmatprep.subr.mxu0 0.0
        %3993 = vmatpush2.xpose.msra.mxu0 0.0
        %3994 = vmatprep.subr.mxu0 0.0
        %3995 = vmatpush2.xpose.msra.mxu0 0.0
        %3996 = vmatprep.subr.mxu0 0.0
        %3997 = vmatpush2.xpose.msra.mxu0 0.0
        %3998 = vmatprep.subr.mxu0 0.0
        %3999 = vmatpush2.xpose.msra.mxu0 0.0
        %4000 = vmatprep.subr.mxu0 0.0
        %4001 = vmatpush2.xpose.msra.mxu0 0.0
        %4002 = vmatprep.subr.mxu0 0.0
        %4003 = vmatpush2.xpose.msra.mxu0 0.0
        %4004 = vmatprep.subr.mxu0 0.0
        %4005 = vmatpush2.xpose.msra.mxu0 0.0
        %4006 = vmatprep.subr.mxu0 0.0
        %4007 = vmatpush2.xpose.msra.mxu0 0.0
        %4008 = vmatprep.subr.mxu0 0.0
        %4009 = vmatpush2.xpose.msra.mxu0 0.0
        %4010 = vmatprep.subr.mxu0 0.0
        %4011 = vmatpush2.xpose.msra.mxu0 0.0
        %4012 = vmatprep.mubr.f32.mxu0 0.0
        %4013 = vmatmul.mubr.f32.gmra.mxu0 %v3938
        %v4014 = vpop.f32.mrf.mxu0
        %v4015 = vadd.f32 0.0, %v4014
        %v4016 = vpop.f32.mrf.mxu0
        %4017 = vdwg.mxu0
        %4018 = vrot.lane.b32.xlu0 %v770, 104
        %v4019 = vpop.permute.xlu0 %4018
        %4020 = vrot.lane.b32.xlu0 %v1057, 104
        %v4021 = vpop.permute.xlu0 %4020
        %4022 = vrot.lane.b32.xlu0 %v1062, 104
        %v4023 = vpop.permute.xlu0 %4022
        %4024 = vrot.lane.b32.xlu0 %v1067, 104
        %v4025 = vpop.permute.xlu0 %4024
        %4026 = vrot.lane.b32.xlu0 %v1072, 104
        %v4027 = vpop.permute.xlu0 %4026
        %v4028 = vsel %vm1447, %v4019, 0
        %v4030 = vsel %vm1447, %v4021, 0
        %v4032 = vsel %vm1447, %v4023, 0
        %v4034 = vsel %vm1447, %v4025, 0
        %v4036 = vsel %vm1447, %v4027, 0
        %4038 = vmatprep.subr.mxu0 0.0
        %4039 = vmatpush1.xpose.msra.mxu0 0.0
        %4040 = vmatprep.subr.mxu0 0.0
        %4041 = vmatpush1.xpose.msra.mxu0 0.0
        %4042 = vmatprep.subr.mxu0 0.0
        %4043 = vmatpush1.xpose.msra.mxu0 0.0
        %4044 = vmatprep.subr.mxu0 0.0
        %4045 = vmatpush1.xpose.msra.mxu0 0.0
        %4046 = vmatprep.subr.mxu0 0.0
        %4047 = vmatpush1.xpose.msra.mxu0 0.0
        %4048 = vmatprep.subr.mxu0 0.0
        %4049 = vmatpush1.xpose.msra.mxu0 0.0
        %4050 = vmatprep.subr.mxu0 0.0
        %4051 = vmatpush1.xpose.msra.mxu0 0.0
        %4052 = vmatprep.subr.mxu0 0.0
        %4053 = vmatpush1.xpose.msra.mxu0 0.0
        %4054 = vmatprep.subr.mxu0 0.0
        %4055 = vmatpush1.xpose.msra.mxu0 0.0
        %4056 = vmatprep.subr.mxu0 0.0
        %4057 = vmatpush1.xpose.msra.mxu0 0.0
        %4058 = vmatprep.subr.mxu0 0.0
        %4059 = vmatpush1.xpose.msra.mxu0 0.0
        %4060 = vmatprep.subr.mxu0 0.0
        %4061 = vmatpush1.xpose.msra.mxu0 0.0
        %4062 = vmatprep.subr.mxu0 0.0
        %4063 = vmatpush1.xpose.msra.mxu0 %v4036
        %4064 = vmatprep.subr.mxu0 0.0
        %4065 = vmatpush1.xpose.msra.mxu0 %v4034
        %4066 = vmatprep.subr.mxu0 0.0
        %4067 = vmatpush1.xpose.msra.mxu0 %v4032
        %4068 = vmatprep.subr.mxu0 0.0
        %4069 = vmatpush1.xpose.msra.mxu0 %v4030
        %4070 = vmatprep.subr.mxu0 0.0
        %4071 = vmatpush2.xpose.msra.mxu0 0.0
        %4072 = vmatprep.subr.mxu0 0.0
        %4073 = vmatpush2.xpose.msra.mxu0 0.0
        %4074 = vmatprep.subr.mxu0 0.0
        %4075 = vmatpush2.xpose.msra.mxu0 0.0
        %4076 = vmatprep.subr.mxu0 0.0
        %4077 = vmatpush2.xpose.msra.mxu0 0.0
        %4078 = vmatprep.subr.mxu0 0.0
        %4079 = vmatpush2.xpose.msra.mxu0 0.0
        %4080 = vmatprep.subr.mxu0 0.0
        %4081 = vmatpush2.xpose.msra.mxu0 0.0
        %4082 = vmatprep.subr.mxu0 0.0
        %4083 = vmatpush2.xpose.msra.mxu0 0.0
        %4084 = vmatprep.subr.mxu0 0.0
        %4085 = vmatpush2.xpose.msra.mxu0 0.0
        %4086 = vmatprep.subr.mxu0 0.0
        %4087 = vmatpush2.xpose.msra.mxu0 0.0
        %4088 = vmatprep.subr.mxu0 0.0
        %4089 = vmatpush2.xpose.msra.mxu0 0.0
        %4090 = vmatprep.subr.mxu0 0.0
        %4091 = vmatpush2.xpose.msra.mxu0 0.0
        %4092 = vmatprep.subr.mxu0 0.0
        %4093 = vmatpush2.xpose.msra.mxu0 0.0
        %4094 = vmatprep.subr.mxu0 0.0
        %4095 = vmatpush2.xpose.msra.mxu0 0.0
        %4096 = vmatprep.subr.mxu0 0.0
        %4097 = vmatpush2.xpose.msra.mxu0 0.0
        %4098 = vmatprep.subr.mxu0 0.0
        %4099 = vmatpush2.xpose.msra.mxu0 0.0
        %4100 = vmatprep.subr.mxu0 0.0
        %4101 = vmatpush2.xpose.msra.mxu0 0.0
        %4102 = vmatprep.mubr.f32.mxu0 0.0
        %4103 = vmatmul.mubr.f32.gmra.mxu0 %v4028
        %v4104 = vpop.f32.mrf.mxu0
        %v4105 = vadd.f32 0.0, %v4104
        %v4106 = vpop.f32.mrf.mxu0
        %4107 = vdwg.mxu0
        %4108 = vrot.lane.b32.xlu0 %v775, 104
        %v4109 = vpop.permute.xlu0 %4108
        %4110 = vrot.lane.b32.xlu0 %v1077, 104
        %v4111 = vpop.permute.xlu0 %4110
        %4112 = vrot.lane.b32.xlu0 %v1082, 104
        %v4113 = vpop.permute.xlu0 %4112
        %4114 = vrot.lane.b32.xlu0 %v1087, 104
        %v4115 = vpop.permute.xlu0 %4114
        %4116 = vrot.lane.b32.xlu0 %v1092, 104
        %v4117 = vpop.permute.xlu0 %4116
        %v4118 = vsel %vm1447, %v4109, 0
        %v4120 = vsel %vm1447, %v4111, 0
        %v4122 = vsel %vm1447, %v4113, 0
        %v4124 = vsel %vm1447, %v4115, 0
        %v4126 = vsel %vm1447, %v4117, 0
        %4128 = vmatprep.subr.mxu0 0.0
        %4129 = vmatpush1.xpose.msra.mxu0 0.0
        %4130 = vmatprep.subr.mxu0 0.0
        %4131 = vmatpush1.xpose.msra.mxu0 0.0
        %4132 = vmatprep.subr.mxu0 0.0
        %4133 = vmatpush1.xpose.msra.mxu0 0.0
        %4134 = vmatprep.subr.mxu0 0.0
        %4135 = vmatpush1.xpose.msra.mxu0 0.0
        %4136 = vmatprep.subr.mxu0 0.0
        %4137 = vmatpush1.xpose.msra.mxu0 0.0
        %4138 = vmatprep.subr.mxu0 0.0
        %4139 = vmatpush1.xpose.msra.mxu0 0.0
        %4140 = vmatprep.subr.mxu0 0.0
        %4141 = vmatpush1.xpose.msra.mxu0 0.0
        %4142 = vmatprep.subr.mxu0 0.0
        %4143 = vmatpush1.xpose.msra.mxu0 0.0
        %4144 = vmatprep.subr.mxu0 0.0
        %4145 = vmatpush1.xpose.msra.mxu0 0.0
        %4146 = vmatprep.subr.mxu0 0.0
        %4147 = vmatpush1.xpose.msra.mxu0 0.0
        %4148 = vmatprep.subr.mxu0 0.0
        %4149 = vmatpush1.xpose.msra.mxu0 0.0
        %4150 = vmatprep.subr.mxu0 0.0
        %4151 = vmatpush1.xpose.msra.mxu0 0.0
        %4152 = vmatprep.subr.mxu0 0.0
        %4153 = vmatpush1.xpose.msra.mxu0 %v4126
        %4154 = vmatprep.subr.mxu0 0.0
        %4155 = vmatpush1.xpose.msra.mxu0 %v4124
        %4156 = vmatprep.subr.mxu0 0.0
        %4157 = vmatpush1.xpose.msra.mxu0 %v4122
        %4158 = vmatprep.subr.mxu0 0.0
        %4159 = vmatpush1.xpose.msra.mxu0 %v4120
        %4160 = vmatprep.subr.mxu0 0.0
        %4161 = vmatpush2.xpose.msra.mxu0 0.0
        %4162 = vmatprep.subr.mxu0 0.0
        %4163 = vmatpush2.xpose.msra.mxu0 0.0
        %4164 = vmatprep.subr.mxu0 0.0
        %4165 = vmatpush2.xpose.msra.mxu0 0.0
        %4166 = vmatprep.subr.mxu0 0.0
        %4167 = vmatpush2.xpose.msra.mxu0 0.0
        %4168 = vmatprep.subr.mxu0 0.0
        %4169 = vmatpush2.xpose.msra.mxu0 0.0
        %4170 = vmatprep.subr.mxu0 0.0
        %4171 = vmatpush2.xpose.msra.mxu0 0.0
        %4172 = vmatprep.subr.mxu0 0.0
        %4173 = vmatpush2.xpose.msra.mxu0 0.0
        %4174 = vmatprep.subr.mxu0 0.0
        %4175 = vmatpush2.xpose.msra.mxu0 0.0
        %4176 = vmatprep.subr.mxu0 0.0
        %4177 = vmatpush2.xpose.msra.mxu0 0.0
        %4178 = vmatprep.subr.mxu0 0.0
        %4179 = vmatpush2.xpose.msra.mxu0 0.0
        %4180 = vmatprep.subr.mxu0 0.0
        %4181 = vmatpush2.xpose.msra.mxu0 0.0
        %4182 = vmatprep.subr.mxu0 0.0
        %4183 = vmatpush2.xpose.msra.mxu0 0.0
        %4184 = vmatprep.subr.mxu0 0.0
        %4185 = vmatpush2.xpose.msra.mxu0 0.0
        %4186 = vmatprep.subr.mxu0 0.0
        %4187 = vmatpush2.xpose.msra.mxu0 0.0
        %4188 = vmatprep.subr.mxu0 0.0
        %4189 = vmatpush2.xpose.msra.mxu0 0.0
        %4190 = vmatprep.subr.mxu0 0.0
        %4191 = vmatpush2.xpose.msra.mxu0 0.0
        %4192 = vmatprep.mubr.f32.mxu0 0.0
        %4193 = vmatmul.mubr.f32.gmra.mxu0 %v4118
        %v4194 = vpop.f32.mrf.mxu0
        %v4195 = vadd.f32 0.0, %v4194
        %v4196 = vpop.f32.mrf.mxu0
        %4197 = vdwg.mxu0
        %4198 = vrot.lane.b32.xlu0 %v780, 104
        %v4199 = vpop.permute.xlu0 %4198
        %4200 = vrot.lane.b32.xlu0 %v1097, 104
        %v4201 = vpop.permute.xlu0 %4200
        %4202 = vrot.lane.b32.xlu0 %v1102, 104
        %v4203 = vpop.permute.xlu0 %4202
        %4204 = vrot.lane.b32.xlu0 %v1107, 104
        %v4205 = vpop.permute.xlu0 %4204
        %4206 = vrot.lane.b32.xlu0 %v1112, 104
        %v4207 = vpop.permute.xlu0 %4206
        %v4208 = vsel %vm1447, %v4199, 0
        %v4210 = vsel %vm1447, %v4201, 0
        %v4212 = vsel %vm1447, %v4203, 0
        %v4214 = vsel %vm1447, %v4205, 0
        %v4216 = vsel %vm1447, %v4207, 0
        %4218 = vmatprep.subr.mxu0 0.0
        %4219 = vmatpush1.xpose.msra.mxu0 0.0
        %4220 = vmatprep.subr.mxu0 0.0
        %4221 = vmatpush1.xpose.msra.mxu0 0.0
        %4222 = vmatprep.subr.mxu0 0.0
        %4223 = vmatpush1.xpose.msra.mxu0 0.0
        %4224 = vmatprep.subr.mxu0 0.0
        %4225 = vmatpush1.xpose.msra.mxu0 0.0
        %4226 = vmatprep.subr.mxu0 0.0
        %4227 = vmatpush1.xpose.msra.mxu0 0.0
        %4228 = vmatprep.subr.mxu0 0.0
        %4229 = vmatpush1.xpose.msra.mxu0 0.0
        %4230 = vmatprep.subr.mxu0 0.0
        %4231 = vmatpush1.xpose.msra.mxu0 0.0
        %4232 = vmatprep.subr.mxu0 0.0
        %4233 = vmatpush1.xpose.msra.mxu0 0.0
        %4234 = vmatprep.subr.mxu0 0.0
        %4235 = vmatpush1.xpose.msra.mxu0 0.0
        %4236 = vmatprep.subr.mxu0 0.0
        %4237 = vmatpush1.xpose.msra.mxu0 0.0
        %4238 = vmatprep.subr.mxu0 0.0
        %4239 = vmatpush1.xpose.msra.mxu0 0.0
        %4240 = vmatprep.subr.mxu0 0.0
        %4241 = vmatpush1.xpose.msra.mxu0 0.0
        %4242 = vmatprep.subr.mxu0 0.0
        %4243 = vmatpush1.xpose.msra.mxu0 %v4216
        %4244 = vmatprep.subr.mxu0 0.0
        %4245 = vmatpush1.xpose.msra.mxu0 %v4214
        %4246 = vmatprep.subr.mxu0 0.0
        %4247 = vmatpush1.xpose.msra.mxu0 %v4212
        %4248 = vmatprep.subr.mxu0 0.0
        %4249 = vmatpush1.xpose.msra.mxu0 %v4210
        %4250 = vmatprep.subr.mxu0 0.0
        %4251 = vmatpush2.xpose.msra.mxu0 0.0
        %4252 = vmatprep.subr.mxu0 0.0
        %4253 = vmatpush2.xpose.msra.mxu0 0.0
        %4254 = vmatprep.subr.mxu0 0.0
        %4255 = vmatpush2.xpose.msra.mxu0 0.0
        %4256 = vmatprep.subr.mxu0 0.0
        %4257 = vmatpush2.xpose.msra.mxu0 0.0
        %4258 = vmatprep.subr.mxu0 0.0
        %4259 = vmatpush2.xpose.msra.mxu0 0.0
        %4260 = vmatprep.subr.mxu0 0.0
        %4261 = vmatpush2.xpose.msra.mxu0 0.0
        %4262 = vmatprep.subr.mxu0 0.0
        %4263 = vmatpush2.xpose.msra.mxu0 0.0
        %4264 = vmatprep.subr.mxu0 0.0
        %4265 = vmatpush2.xpose.msra.mxu0 0.0
        %4266 = vmatprep.subr.mxu0 0.0
        %4267 = vmatpush2.xpose.msra.mxu0 0.0
        %4268 = vmatprep.subr.mxu0 0.0
        %4269 = vmatpush2.xpose.msra.mxu0 0.0
        %4270 = vmatprep.subr.mxu0 0.0
        %4271 = vmatpush2.xpose.msra.mxu0 0.0
        %4272 = vmatprep.subr.mxu0 0.0
        %4273 = vmatpush2.xpose.msra.mxu0 0.0
        %4274 = vmatprep.subr.mxu0 0.0
        %4275 = vmatpush2.xpose.msra.mxu0 0.0
        %4276 = vmatprep.subr.mxu0 0.0
        %4277 = vmatpush2.xpose.msra.mxu0 0.0
        %4278 = vmatprep.subr.mxu0 0.0
        %4279 = vmatpush2.xpose.msra.mxu0 0.0
        %4280 = vmatprep.subr.mxu0 0.0
        %4281 = vmatpush2.xpose.msra.mxu0 0.0
        %4282 = vmatprep.mubr.f32.mxu0 0.0
        %4283 = vmatmul.mubr.f32.gmra.mxu0 %v4208
        %v4284 = vpop.f32.mrf.mxu0
        %v4285 = vadd.f32 0.0, %v4284
        %v4286 = vpop.f32.mrf.mxu0
        %4287 = vdwg.mxu0
        %4288 = vxpose.xlu0.b32.start [1/16] %v1530, 128
        %4289 = vxpose.xlu0.b32.cont [2/16] %v1615, 128
        %4290 = vxpose.xlu0.b32.cont [3/16] %v1700, 128
        %4291 = vxpose.xlu0.b32.cont [4/16] %v1785, 128
        %4292 = vxpose.xlu0.b32.cont [5/16] %v1870, 128
        %4293 = vxpose.xlu0.b32.cont [6/16] %v1955, 128
        %4294 = vxpose.xlu0.b32.cont [7/16] %v2040, 128
        %4295 = vxpose.xlu0.b32.cont [8/16] %v2125, 128
        %4296 = vxpose.xlu0.b32.cont [9/16] %v2215, 128
        %4297 = vxpose.xlu0.b32.cont [10/16] %v2305, 128
        %4298 = vxpose.xlu0.b32.cont [11/16] %v2395, 128
        %4299 = vxpose.xlu0.b32.cont [12/16] %v2485, 128
        %4300 = vxpose.xlu0.b32.cont [13/16] %v2575, 128
        %4301 = vxpose.xlu0.b32.cont [14/16] %v2665, 128
        %4302 = vxpose.xlu0.b32.cont [15/16] %v2755, 128
        %4303 = vxpose.xlu0.b32.end [16/16] %v2845, 128
        %v4304 = vpop.trf.xlu0
        %v4305 = vpop.trf.xlu0
        %v4306 = vpop.trf.xlu0
        %v4307 = vpop.trf.xlu0
        %v4308 = vpop.trf.xlu0
        %v4309 = vpop.trf.xlu0
        %v4310 = vpop.trf.xlu0
        %v4311 = vpop.trf.xlu0
        %v4312 = vpop.trf.xlu0
        %v4313 = vpop.trf.xlu0
        %v4314 = vpop.trf.xlu0
        %v4315 = vpop.trf.xlu0
        %v4316 = vpop.trf.xlu0
        %v4317 = vpop.trf.xlu0
        %v4318 = vpop.trf.xlu0
        %v4319 = vpop.trf.xlu0
        %4320 = vxpose.xlu0.b32.start [1/16] %v2935, 128
        %4321 = vxpose.xlu0.b32.cont [2/16] %v3025, 128
        %4322 = vxpose.xlu0.b32.cont [3/16] %v3115, 128
        %4323 = vxpose.xlu0.b32.cont [4/16] %v3205, 128
        %4324 = vxpose.xlu0.b32.cont [5/16] %v3295, 128
        %4325 = vxpose.xlu0.b32.cont [6/16] %v3385, 128
        %4326 = vxpose.xlu0.b32.cont [7/16] %v3475, 128
        %4327 = vxpose.xlu0.b32.cont [8/16] %v3565, 128
        %4328 = vxpose.xlu0.b32.cont [9/16] %v3655, 128
        %4329 = vxpose.xlu0.b32.cont [10/16] %v3745, 128
        %4330 = vxpose.xlu0.b32.cont [11/16] %v3835, 128
        %4331 = vxpose.xlu0.b32.cont [12/16] %v3925, 128
        %4332 = vxpose.xlu0.b32.cont [13/16] %v4015, 128
        %4333 = vxpose.xlu0.b32.cont [14/16] %v4105, 128
        %4334 = vxpose.xlu0.b32.cont [15/16] %v4195, 128
        %4335 = vxpose.xlu0.b32.end [16/16] %v4285, 128
        %v4336 = vpop.trf.xlu0
        %v4337 = vpop.trf.xlu0
        %v4338 = vpop.trf.xlu0
        %v4339 = vpop.trf.xlu0
        %v4340 = vpop.trf.xlu0
        %v4341 = vpop.trf.xlu0
        %v4342 = vpop.trf.xlu0
        %v4343 = vpop.trf.xlu0
        %v4344 = vpop.trf.xlu0
        %v4345 = vpop.trf.xlu0
        %v4346 = vpop.trf.xlu0
        %v4347 = vpop.trf.xlu0
        %v4348 = vpop.trf.xlu0
        %v4349 = vpop.trf.xlu0
        %v4350 = vpop.trf.xlu0
        %v4351 = vpop.trf.xlu0
        %v4360 = vcombine.low %v4304, %v4336
        %v4361 = vcombine.high %v4304, %v4336
        %v4363 = vunpack.c.l.s4 1966171168
        %v4364 = vunpack.c.0.s8 %v4363
        %v4365 = vlaneseq
        %v4366 = vshrl.u32 %v4365, 7
        %v4367 = vsub.s32 %v4364, %v4366
        %v4368 = vrot.slane %v4360, %v4367
        %v4370 = vunpack.c.l.s4 1966171168
        %v4371 = vunpack.c.0.s8 %v4370
        %v4372 = vlaneseq
        %v4373 = vshrl.u32 %v4372, 7
        %v4374 = vsub.s32 %v4371, %v4373
        %v4375 = vrot.slane %v4361, %v4374
        %v4376 = vcombine.high %v4368, %v4368
        %v4377 = vcombine.high %v4375, %v4375
        %v4379 = vunpack.c.l.s4 1966171168
        %v4380 = vunpack.c.0.s8 %v4379
        %v4381 = vlaneseq
        %v4382 = vshrl.u32 %v4381, 7
        %v4383 = vsub.s32 %v4380, %v4382
        %v4384 = vrot.slane %v4368, %v4383
        %v4386 = vunpack.c.l.s4 1966171168
        %v4387 = vunpack.c.0.s8 %v4386
        %v4388 = vlaneseq
        %v4389 = vshrl.u32 %v4388, 7
        %v4390 = vsub.s32 %v4387, %v4389
        %v4391 = vrot.slane %v4375, %v4390
        %v4393 = vunpack.c.l.s4 1966171168
        %v4394 = vunpack.c.0.s8 %v4393
        %v4395 = vlaneseq
        %v4396 = vshrl.u32 %v4395, 7
        %v4397 = vsub.s32 %v4394, %v4396
        %v4398 = vrot.slane %v4376, %v4397
        %v4400 = vunpack.c.l.s4 1966171168
        %v4401 = vunpack.c.0.s8 %v4400
        %v4402 = vlaneseq
        %v4403 = vshrl.u32 %v4402, 7
        %v4404 = vsub.s32 %v4401, %v4403
        %v4405 = vrot.slane %v4377, %v4404
        %v4406 = vcombine.high %v4384, %v4384
        %v4407 = vcombine.high %v4391, %v4391
        %v4408 = vcombine.high %v4398, %v4398
        %v4409 = vcombine.high %v4405, %v4405
        %v4410 = vcombine.low %v4305, %v4337
        %v4411 = vcombine.high %v4305, %v4337
        %v4413 = vunpack.c.l.s4 1966171168
        %v4414 = vunpack.c.0.s8 %v4413
        %v4415 = vlaneseq
        %v4416 = vshrl.u32 %v4415, 7
        %v4417 = vsub.s32 %v4414, %v4416
        %v4418 = vrot.slane %v4410, %v4417
        %v4420 = vunpack.c.l.s4 1966171168
        %v4421 = vunpack.c.0.s8 %v4420
        %v4422 = vlaneseq
        %v4423 = vshrl.u32 %v4422, 7
        %v4424 = vsub.s32 %v4421, %v4423
        %v4425 = vrot.slane %v4411, %v4424
        %v4426 = vcombine.high %v4418, %v4418
        %v4427 = vcombine.high %v4425, %v4425
        %v4429 = vunpack.c.l.s4 1966171168
        %v4430 = vunpack.c.0.s8 %v4429
        %v4431 = vlaneseq
        %v4432 = vshrl.u32 %v4431, 7
        %v4433 = vsub.s32 %v4430, %v4432
        %v4434 = vrot.slane %v4418, %v4433
        %v4436 = vunpack.c.l.s4 1966171168
        %v4437 = vunpack.c.0.s8 %v4436
        %v4438 = vlaneseq
        %v4439 = vshrl.u32 %v4438, 7
        %v4440 = vsub.s32 %v4437, %v4439
        %v4441 = vrot.slane %v4425, %v4440
        %v4443 = vunpack.c.l.s4 1966171168
        %v4444 = vunpack.c.0.s8 %v4443
        %v4445 = vlaneseq
        %v4446 = vshrl.u32 %v4445, 7
        %v4447 = vsub.s32 %v4444, %v4446
        %v4448 = vrot.slane %v4426, %v4447
        %v4450 = vunpack.c.l.s4 1966171168
        %v4451 = vunpack.c.0.s8 %v4450
        %v4452 = vlaneseq
        %v4453 = vshrl.u32 %v4452, 7
        %v4454 = vsub.s32 %v4451, %v4453
        %v4455 = vrot.slane %v4427, %v4454
        %v4456 = vcombine.high %v4434, %v4434
        %v4457 = vcombine.high %v4441, %v4441
        %v4458 = vcombine.high %v4448, %v4448
        %v4459 = vcombine.high %v4455, %v4455
        %v4460 = vcombine.low %v4306, %v4338
        %v4461 = vcombine.high %v4306, %v4338
        %v4463 = vunpack.c.l.s4 1966171168
        %v4464 = vunpack.c.0.s8 %v4463
        %v4465 = vlaneseq
        %v4466 = vshrl.u32 %v4465, 7
        %v4467 = vsub.s32 %v4464, %v4466
        %v4468 = vrot.slane %v4460, %v4467
        %v4470 = vunpack.c.l.s4 1966171168
        %v4471 = vunpack.c.0.s8 %v4470
        %v4472 = vlaneseq
        %v4473 = vshrl.u32 %v4472, 7
        %v4474 = vsub.s32 %v4471, %v4473
        %v4475 = vrot.slane %v4461, %v4474
        %v4476 = vcombine.high %v4468, %v4468
        %v4477 = vcombine.high %v4475, %v4475
        %v4479 = vunpack.c.l.s4 1966171168
        %v4480 = vunpack.c.0.s8 %v4479
        %v4481 = vlaneseq
        %v4482 = vshrl.u32 %v4481, 7
        %v4483 = vsub.s32 %v4480, %v4482
        %v4484 = vrot.slane %v4468, %v4483
        %v4486 = vunpack.c.l.s4 1966171168
        %v4487 = vunpack.c.0.s8 %v4486
        %v4488 = vlaneseq
        %v4489 = vshrl.u32 %v4488, 7
        %v4490 = vsub.s32 %v4487, %v4489
        %v4491 = vrot.slane %v4475, %v4490
        %v4493 = vunpack.c.l.s4 1966171168
        %v4494 = vunpack.c.0.s8 %v4493
        %v4495 = vlaneseq
        %v4496 = vshrl.u32 %v4495, 7
        %v4497 = vsub.s32 %v4494, %v4496
        %v4498 = vrot.slane %v4476, %v4497
        %v4500 = vunpack.c.l.s4 1966171168
        %v4501 = vunpack.c.0.s8 %v4500
        %v4502 = vlaneseq
        %v4503 = vshrl.u32 %v4502, 7
        %v4504 = vsub.s32 %v4501, %v4503
        %v4505 = vrot.slane %v4477, %v4504
        %v4506 = vcombine.high %v4484, %v4484
        %v4507 = vcombine.high %v4491, %v4491
        %v4508 = vcombine.high %v4498, %v4498
        %v4509 = vcombine.high %v4505, %v4505
        %v4510 = vcombine.low %v4307, %v4339
        %v4511 = vcombine.high %v4307, %v4339
        %v4513 = vunpack.c.l.s4 1966171168
        %v4514 = vunpack.c.0.s8 %v4513
        %v4515 = vlaneseq
        %v4516 = vshrl.u32 %v4515, 7
        %v4517 = vsub.s32 %v4514, %v4516
        %v4518 = vrot.slane %v4510, %v4517
        %v4520 = vunpack.c.l.s4 1966171168
        %v4521 = vunpack.c.0.s8 %v4520
        %v4522 = vlaneseq
        %v4523 = vshrl.u32 %v4522, 7
        %v4524 = vsub.s32 %v4521, %v4523
        %v4525 = vrot.slane %v4511, %v4524
        %v4526 = vcombine.high %v4518, %v4518
        %v4527 = vcombine.high %v4525, %v4525
        %v4529 = vunpack.c.l.s4 1966171168
        %v4530 = vunpack.c.0.s8 %v4529
        %v4531 = vlaneseq
        %v4532 = vshrl.u32 %v4531, 7
        %v4533 = vsub.s32 %v4530, %v4532
        %v4534 = vrot.slane %v4518, %v4533
        %v4536 = vunpack.c.l.s4 1966171168
        %v4537 = vunpack.c.0.s8 %v4536
        %v4538 = vlaneseq
        %v4539 = vshrl.u32 %v4538, 7
        %v4540 = vsub.s32 %v4537, %v4539
        %v4541 = vrot.slane %v4525, %v4540
        %v4543 = vunpack.c.l.s4 1966171168
        %v4544 = vunpack.c.0.s8 %v4543
        %v4545 = vlaneseq
        %v4546 = vshrl.u32 %v4545, 7
        %v4547 = vsub.s32 %v4544, %v4546
        %v4548 = vrot.slane %v4526, %v4547
        %v4550 = vunpack.c.l.s4 1966171168
        %v4551 = vunpack.c.0.s8 %v4550
        %v4552 = vlaneseq
        %v4553 = vshrl.u32 %v4552, 7
        %v4554 = vsub.s32 %v4551, %v4553
        %v4555 = vrot.slane %v4527, %v4554
        %v4556 = vcombine.high %v4534, %v4534
        %v4557 = vcombine.high %v4541, %v4541
        %v4558 = vcombine.high %v4548, %v4548
        %v4559 = vcombine.high %v4555, %v4555
        %v4560 = vlaneseq
        %v4561 = vshrl.u32 %v4560, 7
        %v4562 = vsub.s32 0, %v4561
        %v4563 = vrot.slane %v4384, %v4562
        %v4564 = vlaneseq
        %v4565 = vshrl.u32 %v4564, 7
        %v4566 = vsub.s32 1, %v4565
        %v4567 = vrot.slane %v4384, %v4566
        %v4568 = vlaneseq
        %v4569 = vshrl.u32 %v4568, 7
        %v4570 = vsub.s32 0, %v4569
        %v4571 = vrot.slane %v4398, %v4570
        %v4572 = vlaneseq
        %v4573 = vshrl.u32 %v4572, 7
        %v4574 = vsub.s32 1, %v4573
        %v4575 = vrot.slane %v4398, %v4574
        %v4576 = vlaneseq
        %v4577 = vshrl.u32 %v4576, 7
        %v4578 = vsub.s32 0, %v4577
        %v4579 = vrot.slane %v4406, %v4578
        %v4580 = vlaneseq
        %v4581 = vshrl.u32 %v4580, 7
        %v4582 = vsub.s32 1, %v4581
        %v4583 = vrot.slane %v4406, %v4582
        %v4584 = vlaneseq
        %v4585 = vshrl.u32 %v4584, 7
        %v4586 = vsub.s32 0, %v4585
        %v4587 = vrot.slane %v4408, %v4586
        %v4588 = vlaneseq
        %v4589 = vshrl.u32 %v4588, 7
        %v4590 = vsub.s32 1, %v4589
        %v4591 = vrot.slane %v4408, %v4590
        %v4592 = vlaneseq
        %v4593 = vshrl.u32 %v4592, 7
        %v4594 = vsub.s32 0, %v4593
        %v4595 = vrot.slane %v4391, %v4594
        %v4596 = vlaneseq
        %v4597 = vshrl.u32 %v4596, 7
        %v4598 = vsub.s32 1, %v4597
        %v4599 = vrot.slane %v4391, %v4598
        %v4600 = vlaneseq
        %v4601 = vshrl.u32 %v4600, 7
        %v4602 = vsub.s32 0, %v4601
        %v4603 = vrot.slane %v4405, %v4602
        %v4604 = vlaneseq
        %v4605 = vshrl.u32 %v4604, 7
        %v4606 = vsub.s32 1, %v4605
        %v4607 = vrot.slane %v4405, %v4606
        %v4608 = vlaneseq
        %v4609 = vshrl.u32 %v4608, 7
        %v4610 = vsub.s32 0, %v4609
        %v4611 = vrot.slane %v4407, %v4610
        %v4612 = vlaneseq
        %v4613 = vshrl.u32 %v4612, 7
        %v4614 = vsub.s32 1, %v4613
        %v4615 = vrot.slane %v4407, %v4614
        %v4616 = vlaneseq
        %v4617 = vshrl.u32 %v4616, 7
        %v4618 = vsub.s32 0, %v4617
        %v4619 = vrot.slane %v4409, %v4618
        %v4620 = vlaneseq
        %v4621 = vshrl.u32 %v4620, 7
        %v4622 = vsub.s32 1, %v4621
        %v4623 = vrot.slane %v4409, %v4622
        %v4624 = vlaneseq
        %v4625 = vshrl.u32 %v4624, 7
        %v4626 = vsub.s32 0, %v4625
        %v4627 = vrot.slane %v4434, %v4626
        %v4628 = vlaneseq
        %v4629 = vshrl.u32 %v4628, 7
        %v4630 = vsub.s32 1, %v4629
        %v4631 = vrot.slane %v4434, %v4630
        %v4632 = vlaneseq
        %v4633 = vshrl.u32 %v4632, 7
        %v4634 = vsub.s32 0, %v4633
        %v4635 = vrot.slane %v4448, %v4634
        %v4636 = vlaneseq
        %v4637 = vshrl.u32 %v4636, 7
        %v4638 = vsub.s32 1, %v4637
        %v4639 = vrot.slane %v4448, %v4638
        %v4640 = vlaneseq
        %v4641 = vshrl.u32 %v4640, 7
        %v4642 = vsub.s32 0, %v4641
        %v4643 = vrot.slane %v4456, %v4642
        %v4644 = vlaneseq
        %v4645 = vshrl.u32 %v4644, 7
        %v4646 = vsub.s32 1, %v4645
        %v4647 = vrot.slane %v4456, %v4646
        %v4648 = vlaneseq
        %v4649 = vshrl.u32 %v4648, 7
        %v4650 = vsub.s32 0, %v4649
        %v4651 = vrot.slane %v4458, %v4650
        %v4652 = vlaneseq
        %v4653 = vshrl.u32 %v4652, 7
        %v4654 = vsub.s32 1, %v4653
        %v4655 = vrot.slane %v4458, %v4654
        %v4656 = vlaneseq
        %v4657 = vshrl.u32 %v4656, 7
        %v4658 = vsub.s32 0, %v4657
        %v4659 = vrot.slane %v4441, %v4658
        %v4660 = vlaneseq
        %v4661 = vshrl.u32 %v4660, 7
        %v4662 = vsub.s32 1, %v4661
        %v4663 = vrot.slane %v4441, %v4662
        %v4664 = vlaneseq
        %v4665 = vshrl.u32 %v4664, 7
        %v4666 = vsub.s32 0, %v4665
        %v4667 = vrot.slane %v4455, %v4666
        %v4668 = vlaneseq
        %v4669 = vshrl.u32 %v4668, 7
        %v4670 = vsub.s32 1, %v4669
        %v4671 = vrot.slane %v4455, %v4670
        %v4672 = vlaneseq
        %v4673 = vshrl.u32 %v4672, 7
        %v4674 = vsub.s32 0, %v4673
        %v4675 = vrot.slane %v4457, %v4674
        %v4676 = vlaneseq
        %v4677 = vshrl.u32 %v4676, 7
        %v4678 = vsub.s32 1, %v4677
        %v4679 = vrot.slane %v4457, %v4678
        %v4680 = vlaneseq
        %v4681 = vshrl.u32 %v4680, 7
        %v4682 = vsub.s32 0, %v4681
        %v4683 = vrot.slane %v4459, %v4682
        %v4684 = vlaneseq
        %v4685 = vshrl.u32 %v4684, 7
        %v4686 = vsub.s32 1, %v4685
        %v4687 = vrot.slane %v4459, %v4686
        %v4688 = vlaneseq
        %v4689 = vshrl.u32 %v4688, 7
        %v4690 = vsub.s32 0, %v4689
        %v4691 = vrot.slane %v4484, %v4690
        %v4692 = vlaneseq
        %v4693 = vshrl.u32 %v4692, 7
        %v4694 = vsub.s32 1, %v4693
        %v4695 = vrot.slane %v4484, %v4694
        %v4696 = vlaneseq
        %v4697 = vshrl.u32 %v4696, 7
        %v4698 = vsub.s32 0, %v4697
        %v4699 = vrot.slane %v4498, %v4698
        %v4700 = vlaneseq
        %v4701 = vshrl.u32 %v4700, 7
        %v4702 = vsub.s32 1, %v4701
        %v4703 = vrot.slane %v4498, %v4702
        %v4704 = vlaneseq
        %v4705 = vshrl.u32 %v4704, 7
        %v4706 = vsub.s32 0, %v4705
        %v4707 = vrot.slane %v4506, %v4706
        %v4708 = vlaneseq
        %v4709 = vshrl.u32 %v4708, 7
        %v4710 = vsub.s32 1, %v4709
        %v4711 = vrot.slane %v4506, %v4710
        %v4712 = vlaneseq
        %v4713 = vshrl.u32 %v4712, 7
        %v4714 = vsub.s32 0, %v4713
        %v4715 = vrot.slane %v4508, %v4714
        %v4716 = vlaneseq
        %v4717 = vshrl.u32 %v4716, 7
        %v4718 = vsub.s32 1, %v4717
        %v4719 = vrot.slane %v4508, %v4718
        %v4720 = vlaneseq
        %v4721 = vshrl.u32 %v4720, 7
        %v4722 = vsub.s32 0, %v4721
        %v4723 = vrot.slane %v4491, %v4722
        %v4724 = vlaneseq
        %v4725 = vshrl.u32 %v4724, 7
        %v4726 = vsub.s32 1, %v4725
        %v4727 = vrot.slane %v4491, %v4726
        %v4728 = vlaneseq
        %v4729 = vshrl.u32 %v4728, 7
        %v4730 = vsub.s32 0, %v4729
        %v4731 = vrot.slane %v4505, %v4730
        %v4732 = vlaneseq
        %v4733 = vshrl.u32 %v4732, 7
        %v4734 = vsub.s32 1, %v4733
        %v4735 = vrot.slane %v4505, %v4734
        %v4736 = vlaneseq
        %v4737 = vshrl.u32 %v4736, 7
        %v4738 = vsub.s32 0, %v4737
        %v4739 = vrot.slane %v4507, %v4738
        %v4740 = vlaneseq
        %v4741 = vshrl.u32 %v4740, 7
        %v4742 = vsub.s32 1, %v4741
        %v4743 = vrot.slane %v4507, %v4742
        %v4744 = vlaneseq
        %v4745 = vshrl.u32 %v4744, 7
        %v4746 = vsub.s32 0, %v4745
        %v4747 = vrot.slane %v4509, %v4746
        %v4748 = vlaneseq
        %v4749 = vshrl.u32 %v4748, 7
        %v4750 = vsub.s32 1, %v4749
        %v4751 = vrot.slane %v4509, %v4750
        %v4752 = vlaneseq
        %v4753 = vshrl.u32 %v4752, 7
        %v4754 = vsub.s32 0, %v4753
        %v4755 = vrot.slane %v4534, %v4754
        %v4756 = vlaneseq
        %v4757 = vshrl.u32 %v4756, 7
        %v4758 = vsub.s32 1, %v4757
        %v4759 = vrot.slane %v4534, %v4758
        %v4760 = vlaneseq
        %v4761 = vshrl.u32 %v4760, 7
        %v4762 = vsub.s32 0, %v4761
        %v4763 = vrot.slane %v4548, %v4762
        %v4764 = vlaneseq
        %v4765 = vshrl.u32 %v4764, 7
        %v4766 = vsub.s32 1, %v4765
        %v4767 = vrot.slane %v4548, %v4766
        %v4768 = vlaneseq
        %v4769 = vshrl.u32 %v4768, 7
        %v4770 = vsub.s32 0, %v4769
        %v4771 = vrot.slane %v4556, %v4770
        %v4772 = vlaneseq
        %v4773 = vshrl.u32 %v4772, 7
        %v4774 = vsub.s32 1, %v4773
        %v4775 = vrot.slane %v4556, %v4774
        %v4776 = vlaneseq
        %v4777 = vshrl.u32 %v4776, 7
        %v4778 = vsub.s32 0, %v4777
        %v4779 = vrot.slane %v4558, %v4778
        %v4780 = vlaneseq
        %v4781 = vshrl.u32 %v4780, 7
        %v4782 = vsub.s32 1, %v4781
        %v4783 = vrot.slane %v4558, %v4782
        %v4784 = vlaneseq
        %v4785 = vshrl.u32 %v4784, 7
        %v4786 = vsub.s32 0, %v4785
        %v4787 = vrot.slane %v4541, %v4786
        %v4788 = vlaneseq
        %v4789 = vshrl.u32 %v4788, 7
        %v4790 = vsub.s32 1, %v4789
        %v4791 = vrot.slane %v4541, %v4790
        %v4792 = vlaneseq
        %v4793 = vshrl.u32 %v4792, 7
        %v4794 = vsub.s32 0, %v4793
        %v4795 = vrot.slane %v4555, %v4794
        %v4796 = vlaneseq
        %v4797 = vshrl.u32 %v4796, 7
        %v4798 = vsub.s32 1, %v4797
        %v4799 = vrot.slane %v4555, %v4798
        %v4800 = vlaneseq
        %v4801 = vshrl.u32 %v4800, 7
        %v4802 = vsub.s32 0, %v4801
        %v4803 = vrot.slane %v4557, %v4802
        %v4804 = vlaneseq
        %v4805 = vshrl.u32 %v4804, 7
        %v4806 = vsub.s32 1, %v4805
        %v4807 = vrot.slane %v4557, %v4806
        %v4808 = vlaneseq
        %v4809 = vshrl.u32 %v4808, 7
        %v4810 = vsub.s32 0, %v4809
        %v4811 = vrot.slane %v4559, %v4810
        %v4812 = vlaneseq
        %v4813 = vshrl.u32 %v4812, 7
        %v4814 = vsub.s32 1, %v4813
        %v4815 = vrot.slane %v4559, %v4814
        %vm4880 = vcmp.gt.f32.partialorder %v4304, %v4563
        %vm4881 = vcmp.gt.f32.partialorder %v4336, %v4567
        %vm4882 = vcmp.gt.f32.partialorder %v4305, %v4563
        %vm4883 = vcmp.gt.f32.partialorder %v4337, %v4567
        %vm4884 = vcmp.gt.f32.partialorder %v4306, %v4563
        %vm4885 = vcmp.gt.f32.partialorder %v4338, %v4567
        %vm4886 = vcmp.gt.f32.partialorder %v4307, %v4563
        %vm4887 = vcmp.gt.f32.partialorder %v4339, %v4567
        %vm4888 = vcmp.gt.f32.partialorder %v4304, %v4571
        %vm4889 = vcmp.gt.f32.partialorder %v4336, %v4575
        %vm4890 = vcmp.gt.f32.partialorder %v4305, %v4571
        %vm4891 = vcmp.gt.f32.partialorder %v4337, %v4575
        %vm4892 = vcmp.gt.f32.partialorder %v4306, %v4571
        %vm4893 = vcmp.gt.f32.partialorder %v4338, %v4575
        %vm4894 = vcmp.gt.f32.partialorder %v4307, %v4571
        %vm4895 = vcmp.gt.f32.partialorder %v4339, %v4575
        %vm4896 = vcmp.gt.f32.partialorder %v4304, %v4579
        %vm4897 = vcmp.gt.f32.partialorder %v4336, %v4583
        %vm4898 = vcmp.gt.f32.partialorder %v4305, %v4579
        %vm4899 = vcmp.gt.f32.partialorder %v4337, %v4583
        %vm4900 = vcmp.gt.f32.partialorder %v4306, %v4579
        %vm4901 = vcmp.gt.f32.partialorder %v4338, %v4583
        %vm4902 = vcmp.gt.f32.partialorder %v4307, %v4579
        %vm4903 = vcmp.gt.f32.partialorder %v4339, %v4583
        %vm4904 = vcmp.gt.f32.partialorder %v4304, %v4587
        %vm4905 = vcmp.gt.f32.partialorder %v4336, %v4591
        %vm4906 = vcmp.gt.f32.partialorder %v4305, %v4587
        %vm4907 = vcmp.gt.f32.partialorder %v4337, %v4591
        %vm4908 = vcmp.gt.f32.partialorder %v4306, %v4587
        %vm4909 = vcmp.gt.f32.partialorder %v4338, %v4591
        %vm4910 = vcmp.gt.f32.partialorder %v4307, %v4587
        %vm4911 = vcmp.gt.f32.partialorder %v4339, %v4591
        %vm4912 = vcmp.gt.f32.partialorder %v4304, %v4595
        %vm4913 = vcmp.gt.f32.partialorder %v4336, %v4599
        %vm4914 = vcmp.gt.f32.partialorder %v4305, %v4595
        %vm4915 = vcmp.gt.f32.partialorder %v4337, %v4599
        %vm4916 = vcmp.gt.f32.partialorder %v4306, %v4595
        %vm4917 = vcmp.gt.f32.partialorder %v4338, %v4599
        %vm4918 = vcmp.gt.f32.partialorder %v4307, %v4595
        %vm4919 = vcmp.gt.f32.partialorder %v4339, %v4599
        %vm4920 = vcmp.gt.f32.partialorder %v4304, %v4603
        %vm4921 = vcmp.gt.f32.partialorder %v4336, %v4607
        %vm4922 = vcmp.gt.f32.partialorder %v4305, %v4603
        %vm4923 = vcmp.gt.f32.partialorder %v4337, %v4607
        %vm4924 = vcmp.gt.f32.partialorder %v4306, %v4603
        %vm4925 = vcmp.gt.f32.partialorder %v4338, %v4607
        %vm4926 = vcmp.gt.f32.partialorder %v4307, %v4603
        %vm4927 = vcmp.gt.f32.partialorder %v4339, %v4607
        %vm4928 = vcmp.gt.f32.partialorder %v4304, %v4611
        %vm4929 = vcmp.gt.f32.partialorder %v4336, %v4615
        %vm4930 = vcmp.gt.f32.partialorder %v4305, %v4611
        %vm4931 = vcmp.gt.f32.partialorder %v4337, %v4615
        %vm4932 = vcmp.gt.f32.partialorder %v4306, %v4611
        %vm4933 = vcmp.gt.f32.partialorder %v4338, %v4615
        %vm4934 = vcmp.gt.f32.partialorder %v4307, %v4611
        %vm4935 = vcmp.gt.f32.partialorder %v4339, %v4615
        %vm4936 = vcmp.gt.f32.partialorder %v4304, %v4619
        %vm4937 = vcmp.gt.f32.partialorder %v4336, %v4623
        %vm4938 = vcmp.gt.f32.partialorder %v4305, %v4619
        %vm4939 = vcmp.gt.f32.partialorder %v4337, %v4623
        %vm4940 = vcmp.gt.f32.partialorder %v4306, %v4619
        %vm4941 = vcmp.gt.f32.partialorder %v4338, %v4623
        %vm4942 = vcmp.gt.f32.partialorder %v4307, %v4619
        %vm4943 = vcmp.gt.f32.partialorder %v4339, %v4623
        %vm4944 = vcmp.gt.f32.partialorder %v4304, %v4627
        %vm4945 = vcmp.gt.f32.partialorder %v4336, %v4631
        %vm4946 = vcmp.gt.f32.partialorder %v4305, %v4627
        %vm4947 = vcmp.gt.f32.partialorder %v4337, %v4631
        %vm4948 = vcmp.gt.f32.partialorder %v4306, %v4627
        %vm4949 = vcmp.gt.f32.partialorder %v4338, %v4631
        %vm4950 = vcmp.gt.f32.partialorder %v4307, %v4627
        %vm4951 = vcmp.gt.f32.partialorder %v4339, %v4631
        %vm4952 = vcmp.gt.f32.partialorder %v4304, %v4635
        %vm4953 = vcmp.gt.f32.partialorder %v4336, %v4639
        %vm4954 = vcmp.gt.f32.partialorder %v4305, %v4635
        %vm4955 = vcmp.gt.f32.partialorder %v4337, %v4639
        %vm4956 = vcmp.gt.f32.partialorder %v4306, %v4635
        %vm4957 = vcmp.gt.f32.partialorder %v4338, %v4639
        %vm4958 = vcmp.gt.f32.partialorder %v4307, %v4635
        %vm4959 = vcmp.gt.f32.partialorder %v4339, %v4639
        %vm4960 = vcmp.gt.f32.partialorder %v4304, %v4643
        %vm4961 = vcmp.gt.f32.partialorder %v4336, %v4647
        %vm4962 = vcmp.gt.f32.partialorder %v4305, %v4643
        %vm4963 = vcmp.gt.f32.partialorder %v4337, %v4647
        %vm4964 = vcmp.gt.f32.partialorder %v4306, %v4643
        %vm4965 = vcmp.gt.f32.partialorder %v4338, %v4647
        %vm4966 = vcmp.gt.f32.partialorder %v4307, %v4643
        %vm4967 = vcmp.gt.f32.partialorder %v4339, %v4647
        %vm4968 = vcmp.gt.f32.partialorder %v4304, %v4651
        %vm4969 = vcmp.gt.f32.partialorder %v4336, %v4655
        %vm4970 = vcmp.gt.f32.partialorder %v4305, %v4651
        %vm4971 = vcmp.gt.f32.partialorder %v4337, %v4655
        %vm4972 = vcmp.gt.f32.partialorder %v4306, %v4651
        %vm4973 = vcmp.gt.f32.partialorder %v4338, %v4655
        %vm4974 = vcmp.gt.f32.partialorder %v4307, %v4651
        %vm4975 = vcmp.gt.f32.partialorder %v4339, %v4655
        %vm4976 = vcmp.gt.f32.partialorder %v4304, %v4659
        %vm4977 = vcmp.gt.f32.partialorder %v4336, %v4663
        %vm4978 = vcmp.gt.f32.partialorder %v4305, %v4659
        %vm4979 = vcmp.gt.f32.partialorder %v4337, %v4663
        %vm4980 = vcmp.gt.f32.partialorder %v4306, %v4659
        %vm4981 = vcmp.gt.f32.partialorder %v4338, %v4663
        %vm4982 = vcmp.gt.f32.partialorder %v4307, %v4659
        %vm4983 = vcmp.gt.f32.partialorder %v4339, %v4663
        %vm4984 = vcmp.gt.f32.partialorder %v4304, %v4667
        %vm4985 = vcmp.gt.f32.partialorder %v4336, %v4671
        %vm4986 = vcmp.gt.f32.partialorder %v4305, %v4667
        %vm4987 = vcmp.gt.f32.partialorder %v4337, %v4671
        %vm4988 = vcmp.gt.f32.partialorder %v4306, %v4667
        %vm4989 = vcmp.gt.f32.partialorder %v4338, %v4671
        %vm4990 = vcmp.gt.f32.partialorder %v4307, %v4667
        %vm4991 = vcmp.gt.f32.partialorder %v4339, %v4671
        %vm4992 = vcmp.gt.f32.partialorder %v4304, %v4675
        %vm4993 = vcmp.gt.f32.partialorder %v4336, %v4679
        %vm4994 = vcmp.gt.f32.partialorder %v4305, %v4675
        %vm4995 = vcmp.gt.f32.partialorder %v4337, %v4679
        %vm4996 = vcmp.gt.f32.partialorder %v4306, %v4675
        %vm4997 = vcmp.gt.f32.partialorder %v4338, %v4679
        %vm4998 = vcmp.gt.f32.partialorder %v4307, %v4675
        %vm4999 = vcmp.gt.f32.partialorder %v4339, %v4679
        %vm5000 = vcmp.gt.f32.partialorder %v4304, %v4683
        %vm5001 = vcmp.gt.f32.partialorder %v4336, %v4687
        %vm5002 = vcmp.gt.f32.partialorder %v4305, %v4683
        %vm5003 = vcmp.gt.f32.partialorder %v4337, %v4687
        %vm5004 = vcmp.gt.f32.partialorder %v4306, %v4683
        %vm5005 = vcmp.gt.f32.partialorder %v4338, %v4687
        %vm5006 = vcmp.gt.f32.partialorder %v4307, %v4683
        %vm5007 = vcmp.gt.f32.partialorder %v4339, %v4687
        %vm5008 = vcmp.gt.f32.partialorder %v4304, %v4691
        %vm5009 = vcmp.gt.f32.partialorder %v4336, %v4695
        %vm5010 = vcmp.gt.f32.partialorder %v4305, %v4691
        %vm5011 = vcmp.gt.f32.partialorder %v4337, %v4695
        %vm5012 = vcmp.gt.f32.partialorder %v4306, %v4691
        %vm5013 = vcmp.gt.f32.partialorder %v4338, %v4695
        %vm5014 = vcmp.gt.f32.partialorder %v4307, %v4691
        %vm5015 = vcmp.gt.f32.partialorder %v4339, %v4695
        %vm5016 = vcmp.gt.f32.partialorder %v4304, %v4699
        %vm5017 = vcmp.gt.f32.partialorder %v4336, %v4703
        %vm5018 = vcmp.gt.f32.partialorder %v4305, %v4699
        %vm5019 = vcmp.gt.f32.partialorder %v4337, %v4703
        %vm5020 = vcmp.gt.f32.partialorder %v4306, %v4699
        %vm5021 = vcmp.gt.f32.partialorder %v4338, %v4703
        %vm5022 = vcmp.gt.f32.partialorder %v4307, %v4699
        %vm5023 = vcmp.gt.f32.partialorder %v4339, %v4703
        %vm5024 = vcmp.gt.f32.partialorder %v4304, %v4707
        %vm5025 = vcmp.gt.f32.partialorder %v4336, %v4711
        %vm5026 = vcmp.gt.f32.partialorder %v4305, %v4707
        %vm5027 = vcmp.gt.f32.partialorder %v4337, %v4711
        %vm5028 = vcmp.gt.f32.partialorder %v4306, %v4707
        %vm5029 = vcmp.gt.f32.partialorder %v4338, %v4711
        %vm5030 = vcmp.gt.f32.partialorder %v4307, %v4707
        %vm5031 = vcmp.gt.f32.partialorder %v4339, %v4711
        %vm5032 = vcmp.gt.f32.partialorder %v4304, %v4715
        %vm5033 = vcmp.gt.f32.partialorder %v4336, %v4719
        %vm5034 = vcmp.gt.f32.partialorder %v4305, %v4715
        %vm5035 = vcmp.gt.f32.partialorder %v4337, %v4719
        %vm5036 = vcmp.gt.f32.partialorder %v4306, %v4715
        %vm5037 = vcmp.gt.f32.partialorder %v4338, %v4719
        %vm5038 = vcmp.gt.f32.partialorder %v4307, %v4715
        %vm5039 = vcmp.gt.f32.partialorder %v4339, %v4719
        %vm5040 = vcmp.gt.f32.partialorder %v4304, %v4723
        %vm5041 = vcmp.gt.f32.partialorder %v4336, %v4727
        %vm5042 = vcmp.gt.f32.partialorder %v4305, %v4723
        %vm5043 = vcmp.gt.f32.partialorder %v4337, %v4727
        %vm5044 = vcmp.gt.f32.partialorder %v4306, %v4723
        %vm5045 = vcmp.gt.f32.partialorder %v4338, %v4727
        %vm5046 = vcmp.gt.f32.partialorder %v4307, %v4723
        %vm5047 = vcmp.gt.f32.partialorder %v4339, %v4727
        %vm5048 = vcmp.gt.f32.partialorder %v4304, %v4731
        %vm5049 = vcmp.gt.f32.partialorder %v4336, %v4735
        %vm5050 = vcmp.gt.f32.partialorder %v4305, %v4731
        %vm5051 = vcmp.gt.f32.partialorder %v4337, %v4735
        %vm5052 = vcmp.gt.f32.partialorder %v4306, %v4731
        %vm5053 = vcmp.gt.f32.partialorder %v4338, %v4735
        %vm5054 = vcmp.gt.f32.partialorder %v4307, %v4731
        %vm5055 = vcmp.gt.f32.partialorder %v4339, %v4735
        %vm5056 = vcmp.gt.f32.partialorder %v4304, %v4739
        %vm5057 = vcmp.gt.f32.partialorder %v4336, %v4743
        %vm5058 = vcmp.gt.f32.partialorder %v4305, %v4739
        %vm5059 = vcmp.gt.f32.partialorder %v4337, %v4743
        %vm5060 = vcmp.gt.f32.partialorder %v4306, %v4739
        %vm5061 = vcmp.gt.f32.partialorder %v4338, %v4743
        %vm5062 = vcmp.gt.f32.partialorder %v4307, %v4739
        %vm5063 = vcmp.gt.f32.partialorder %v4339, %v4743
        %vm5064 = vcmp.gt.f32.partialorder %v4304, %v4747
        %vm5065 = vcmp.gt.f32.partialorder %v4336, %v4751
        %vm5066 = vcmp.gt.f32.partialorder %v4305, %v4747
        %vm5067 = vcmp.gt.f32.partialorder %v4337, %v4751
        %vm5068 = vcmp.gt.f32.partialorder %v4306, %v4747
        %vm5069 = vcmp.gt.f32.partialorder %v4338, %v4751
        %vm5070 = vcmp.gt.f32.partialorder %v4307, %v4747
        %vm5071 = vcmp.gt.f32.partialorder %v4339, %v4751
        %vm5072 = vcmp.gt.f32.partialorder %v4304, %v4755
        %vm5073 = vcmp.gt.f32.partialorder %v4336, %v4759
        %vm5074 = vcmp.gt.f32.partialorder %v4305, %v4755
        %vm5075 = vcmp.gt.f32.partialorder %v4337, %v4759
        %vm5076 = vcmp.gt.f32.partialorder %v4306, %v4755
        %vm5077 = vcmp.gt.f32.partialorder %v4338, %v4759
        %vm5078 = vcmp.gt.f32.partialorder %v4307, %v4755
        %vm5079 = vcmp.gt.f32.partialorder %v4339, %v4759
        %vm5080 = vcmp.gt.f32.partialorder %v4304, %v4763
        %vm5081 = vcmp.gt.f32.partialorder %v4336, %v4767
        %vm5082 = vcmp.gt.f32.partialorder %v4305, %v4763
        %vm5083 = vcmp.gt.f32.partialorder %v4337, %v4767
        %vm5084 = vcmp.gt.f32.partialorder %v4306, %v4763
        %vm5085 = vcmp.gt.f32.partialorder %v4338, %v4767
        %vm5086 = vcmp.gt.f32.partialorder %v4307, %v4763
        %vm5087 = vcmp.gt.f32.partialorder %v4339, %v4767
        %vm5088 = vcmp.gt.f32.partialorder %v4304, %v4771
        %vm5089 = vcmp.gt.f32.partialorder %v4336, %v4775
        %vm5090 = vcmp.gt.f32.partialorder %v4305, %v4771
        %vm5091 = vcmp.gt.f32.partialorder %v4337, %v4775
        %vm5092 = vcmp.gt.f32.partialorder %v4306, %v4771
        %vm5093 = vcmp.gt.f32.partialorder %v4338, %v4775
        %vm5094 = vcmp.gt.f32.partialorder %v4307, %v4771
        %vm5095 = vcmp.gt.f32.partialorder %v4339, %v4775
        %vm5096 = vcmp.gt.f32.partialorder %v4304, %v4779
        %vm5097 = vcmp.gt.f32.partialorder %v4336, %v4783
        %vm5098 = vcmp.gt.f32.partialorder %v4305, %v4779
        %vm5099 = vcmp.gt.f32.partialorder %v4337, %v4783
        %vm5100 = vcmp.gt.f32.partialorder %v4306, %v4779
        %vm5101 = vcmp.gt.f32.partialorder %v4338, %v4783
        %vm5102 = vcmp.gt.f32.partialorder %v4307, %v4779
        %vm5103 = vcmp.gt.f32.partialorder %v4339, %v4783
        %vm5104 = vcmp.gt.f32.partialorder %v4304, %v4787
        %vm5105 = vcmp.gt.f32.partialorder %v4336, %v4791
        %vm5106 = vcmp.gt.f32.partialorder %v4305, %v4787
        %vm5107 = vcmp.gt.f32.partialorder %v4337, %v4791
        %vm5108 = vcmp.gt.f32.partialorder %v4306, %v4787
        %vm5109 = vcmp.gt.f32.partialorder %v4338, %v4791
        %vm5110 = vcmp.gt.f32.partialorder %v4307, %v4787
        %vm5111 = vcmp.gt.f32.partialorder %v4339, %v4791
        %vm5112 = vcmp.gt.f32.partialorder %v4304, %v4795
        %vm5113 = vcmp.gt.f32.partialorder %v4336, %v4799
        %vm5114 = vcmp.gt.f32.partialorder %v4305, %v4795
        %vm5115 = vcmp.gt.f32.partialorder %v4337, %v4799
        %vm5116 = vcmp.gt.f32.partialorder %v4306, %v4795
        %vm5117 = vcmp.gt.f32.partialorder %v4338, %v4799
        %vm5118 = vcmp.gt.f32.partialorder %v4307, %v4795
        %vm5119 = vcmp.gt.f32.partialorder %v4339, %v4799
        %vm5120 = vcmp.gt.f32.partialorder %v4304, %v4803
        %vm5121 = vcmp.gt.f32.partialorder %v4336, %v4807
        %vm5122 = vcmp.gt.f32.partialorder %v4305, %v4803
        %vm5123 = vcmp.gt.f32.partialorder %v4337, %v4807
        %vm5124 = vcmp.gt.f32.partialorder %v4306, %v4803
        %vm5125 = vcmp.gt.f32.partialorder %v4338, %v4807
        %vm5126 = vcmp.gt.f32.partialorder %v4307, %v4803
        %vm5127 = vcmp.gt.f32.partialorder %v4339, %v4807
        %vm5128 = vcmp.gt.f32.partialorder %v4304, %v4811
        %vm5129 = vcmp.gt.f32.partialorder %v4336, %v4815
        %vm5130 = vcmp.gt.f32.partialorder %v4305, %v4811
        %vm5131 = vcmp.gt.f32.partialorder %v4337, %v4815
        %vm5132 = vcmp.gt.f32.partialorder %v4306, %v4811
        %vm5133 = vcmp.gt.f32.partialorder %v4338, %v4815
        %vm5134 = vcmp.gt.f32.partialorder %v4307, %v4811
        %vm5135 = vcmp.gt.f32.partialorder %v4339, %v4815
        %v5136 = vsel %vm4880, 1, 0
        %v5137 = vsel %vm4881, 1, 0
        %v5138 = vsel %vm4882, 1, 0
        %v5139 = vsel %vm4883, 1, 0
        %v5140 = vsel %vm4884, 1, 0
        %v5141 = vsel %vm4885, 1, 0
        %v5142 = vsel %vm4886, 1, 0
        %v5143 = vsel %vm4887, 1, 0
        %v5144 = vsel %vm4888, 1, 0
        %v5145 = vsel %vm4889, 1, 0
        %v5146 = vsel %vm4890, 1, 0
        %v5147 = vsel %vm4891, 1, 0
        %v5148 = vsel %vm4892, 1, 0
        %v5149 = vsel %vm4893, 1, 0
        %v5150 = vsel %vm4894, 1, 0
        %v5151 = vsel %vm4895, 1, 0
        %v5152 = vsel %vm4896, 1, 0
        %v5153 = vsel %vm4897, 1, 0
        %v5154 = vsel %vm4898, 1, 0
        %v5155 = vsel %vm4899, 1, 0
        %v5156 = vsel %vm4900, 1, 0
        %v5157 = vsel %vm4901, 1, 0
        %v5158 = vsel %vm4902, 1, 0
        %v5159 = vsel %vm4903, 1, 0
        %v5160 = vsel %vm4904, 1, 0
        %v5161 = vsel %vm4905, 1, 0
        %v5162 = vsel %vm4906, 1, 0
        %v5163 = vsel %vm4907, 1, 0
        %v5164 = vsel %vm4908, 1, 0
        %v5165 = vsel %vm4909, 1, 0
        %v5166 = vsel %vm4910, 1, 0
        %v5167 = vsel %vm4911, 1, 0
        %v5168 = vsel %vm4912, 1, 0
        %v5169 = vsel %vm4913, 1, 0
        %v5170 = vsel %vm4914, 1, 0
        %v5171 = vsel %vm4915, 1, 0
        %v5172 = vsel %vm4916, 1, 0
        %v5173 = vsel %vm4917, 1, 0
        %v5174 = vsel %vm4918, 1, 0
        %v5175 = vsel %vm4919, 1, 0
        %v5176 = vsel %vm4920, 1, 0
        %v5177 = vsel %vm4921, 1, 0
        %v5178 = vsel %vm4922, 1, 0
        %v5179 = vsel %vm4923, 1, 0
        %v5180 = vsel %vm4924, 1, 0
        %v5181 = vsel %vm4925, 1, 0
        %v5182 = vsel %vm4926, 1, 0
        %v5183 = vsel %vm4927, 1, 0
        %v5184 = vsel %vm4928, 1, 0
        %v5185 = vsel %vm4929, 1, 0
        %v5186 = vsel %vm4930, 1, 0
        %v5187 = vsel %vm4931, 1, 0
        %v5188 = vsel %vm4932, 1, 0
        %v5189 = vsel %vm4933, 1, 0
        %v5190 = vsel %vm4934, 1, 0
        %v5191 = vsel %vm4935, 1, 0
        %v5192 = vsel %vm4936, 1, 0
        %v5193 = vsel %vm4937, 1, 0
        %v5194 = vsel %vm4938, 1, 0
        %v5195 = vsel %vm4939, 1, 0
        %v5196 = vsel %vm4940, 1, 0
        %v5197 = vsel %vm4941, 1, 0
        %v5198 = vsel %vm4942, 1, 0
        %v5199 = vsel %vm4943, 1, 0
        %v5200 = vsel %vm4944, 1, 0
        %v5201 = vsel %vm4945, 1, 0
        %v5202 = vsel %vm4946, 1, 0
        %v5203 = vsel %vm4947, 1, 0
        %v5204 = vsel %vm4948, 1, 0
        %v5205 = vsel %vm4949, 1, 0
        %v5206 = vsel %vm4950, 1, 0
        %v5207 = vsel %vm4951, 1, 0
        %v5208 = vsel %vm4952, 1, 0
        %v5209 = vsel %vm4953, 1, 0
        %v5210 = vsel %vm4954, 1, 0
        %v5211 = vsel %vm4955, 1, 0
        %v5212 = vsel %vm4956, 1, 0
        %v5213 = vsel %vm4957, 1, 0
        %v5214 = vsel %vm4958, 1, 0
        %v5215 = vsel %vm4959, 1, 0
        %v5216 = vsel %vm4960, 1, 0
        %v5217 = vsel %vm4961, 1, 0
        %v5218 = vsel %vm4962, 1, 0
        %v5219 = vsel %vm4963, 1, 0
        %v5220 = vsel %vm4964, 1, 0
        %v5221 = vsel %vm4965, 1, 0
        %v5222 = vsel %vm4966, 1, 0
        %v5223 = vsel %vm4967, 1, 0
        %v5224 = vsel %vm4968, 1, 0
        %v5225 = vsel %vm4969, 1, 0
        %v5226 = vsel %vm4970, 1, 0
        %v5227 = vsel %vm4971, 1, 0
        %v5228 = vsel %vm4972, 1, 0
        %v5229 = vsel %vm4973, 1, 0
        %v5230 = vsel %vm4974, 1, 0
        %v5231 = vsel %vm4975, 1, 0
        %v5232 = vsel %vm4976, 1, 0
        %v5233 = vsel %vm4977, 1, 0
        %v5234 = vsel %vm4978, 1, 0
        %v5235 = vsel %vm4979, 1, 0
        %v5236 = vsel %vm4980, 1, 0
        %v5237 = vsel %vm4981, 1, 0
        %v5238 = vsel %vm4982, 1, 0
        %v5239 = vsel %vm4983, 1, 0
        %v5240 = vsel %vm4984, 1, 0
        %v5241 = vsel %vm4985, 1, 0
        %v5242 = vsel %vm4986, 1, 0
        %v5243 = vsel %vm4987, 1, 0
        %v5244 = vsel %vm4988, 1, 0
        %v5245 = vsel %vm4989, 1, 0
        %v5246 = vsel %vm4990, 1, 0
        %v5247 = vsel %vm4991, 1, 0
        %v5248 = vsel %vm4992, 1, 0
        %v5249 = vsel %vm4993, 1, 0
        %v5250 = vsel %vm4994, 1, 0
        %v5251 = vsel %vm4995, 1, 0
        %v5252 = vsel %vm4996, 1, 0
        %v5253 = vsel %vm4997, 1, 0
        %v5254 = vsel %vm4998, 1, 0
        %v5255 = vsel %vm4999, 1, 0
        %v5256 = vsel %vm5000, 1, 0
        %v5257 = vsel %vm5001, 1, 0
        %v5258 = vsel %vm5002, 1, 0
        %v5259 = vsel %vm5003, 1, 0
        %v5260 = vsel %vm5004, 1, 0
        %v5261 = vsel %vm5005, 1, 0
        %v5262 = vsel %vm5006, 1, 0
        %v5263 = vsel %vm5007, 1, 0
        %v5264 = vsel %vm5008, 1, 0
        %v5265 = vsel %vm5009, 1, 0
        %v5266 = vsel %vm5010, 1, 0
        %v5267 = vsel %vm5011, 1, 0
        %v5268 = vsel %vm5012, 1, 0
        %v5269 = vsel %vm5013, 1, 0
        %v5270 = vsel %vm5014, 1, 0
        %v5271 = vsel %vm5015, 1, 0
        %v5272 = vsel %vm5016, 1, 0
        %v5273 = vsel %vm5017, 1, 0
        %v5274 = vsel %vm5018, 1, 0
        %v5275 = vsel %vm5019, 1, 0
        %v5276 = vsel %vm5020, 1, 0
        %v5277 = vsel %vm5021, 1, 0
        %v5278 = vsel %vm5022, 1, 0
        %v5279 = vsel %vm5023, 1, 0
        %v5280 = vsel %vm5024, 1, 0
        %v5281 = vsel %vm5025, 1, 0
        %v5282 = vsel %vm5026, 1, 0
        %v5283 = vsel %vm5027, 1, 0
        %v5284 = vsel %vm5028, 1, 0
        %v5285 = vsel %vm5029, 1, 0
        %v5286 = vsel %vm5030, 1, 0
        %v5287 = vsel %vm5031, 1, 0
        %v5288 = vsel %vm5032, 1, 0
        %v5289 = vsel %vm5033, 1, 0
        %v5290 = vsel %vm5034, 1, 0
        %v5291 = vsel %vm5035, 1, 0
        %v5292 = vsel %vm5036, 1, 0
        %v5293 = vsel %vm5037, 1, 0
        %v5294 = vsel %vm5038, 1, 0
        %v5295 = vsel %vm5039, 1, 0
        %v5296 = vsel %vm5040, 1, 0
        %v5297 = vsel %vm5041, 1, 0
        %v5298 = vsel %vm5042, 1, 0
        %v5299 = vsel %vm5043, 1, 0
        %v5300 = vsel %vm5044, 1, 0
        %v5301 = vsel %vm5045, 1, 0
        %v5302 = vsel %vm5046, 1, 0
        %v5303 = vsel %vm5047, 1, 0
        %v5304 = vsel %vm5048, 1, 0
        %v5305 = vsel %vm5049, 1, 0
        %v5306 = vsel %vm5050, 1, 0
        %v5307 = vsel %vm5051, 1, 0
        %v5308 = vsel %vm5052, 1, 0
        %v5309 = vsel %vm5053, 1, 0
        %v5310 = vsel %vm5054, 1, 0
        %v5311 = vsel %vm5055, 1, 0
        %v5312 = vsel %vm5056, 1, 0
        %v5313 = vsel %vm5057, 1, 0
        %v5314 = vsel %vm5058, 1, 0
        %v5315 = vsel %vm5059, 1, 0
        %v5316 = vsel %vm5060, 1, 0
        %v5317 = vsel %vm5061, 1, 0
        %v5318 = vsel %vm5062, 1, 0
        %v5319 = vsel %vm5063, 1, 0
        %v5320 = vsel %vm5064, 1, 0
        %v5321 = vsel %vm5065, 1, 0
        %v5322 = vsel %vm5066, 1, 0
        %v5323 = vsel %vm5067, 1, 0
        %v5324 = vsel %vm5068, 1, 0
        %v5325 = vsel %vm5069, 1, 0
        %v5326 = vsel %vm5070, 1, 0
        %v5327 = vsel %vm5071, 1, 0
        %v5328 = vsel %vm5072, 1, 0
        %v5329 = vsel %vm5073, 1, 0
        %v5330 = vsel %vm5074, 1, 0
        %v5331 = vsel %vm5075, 1, 0
        %v5332 = vsel %vm5076, 1, 0
        %v5333 = vsel %vm5077, 1, 0
        %v5334 = vsel %vm5078, 1, 0
        %v5335 = vsel %vm5079, 1, 0
        %v5336 = vsel %vm5080, 1, 0
        %v5337 = vsel %vm5081, 1, 0
        %v5338 = vsel %vm5082, 1, 0
        %v5339 = vsel %vm5083, 1, 0
        %v5340 = vsel %vm5084, 1, 0
        %v5341 = vsel %vm5085, 1, 0
        %v5342 = vsel %vm5086, 1, 0
        %v5343 = vsel %vm5087, 1, 0
        %v5344 = vsel %vm5088, 1, 0
        %v5345 = vsel %vm5089, 1, 0
        %v5346 = vsel %vm5090, 1, 0
        %v5347 = vsel %vm5091, 1, 0
        %v5348 = vsel %vm5092, 1, 0
        %v5349 = vsel %vm5093, 1, 0
        %v5350 = vsel %vm5094, 1, 0
        %v5351 = vsel %vm5095, 1, 0
        %v5352 = vsel %vm5096, 1, 0
        %v5353 = vsel %vm5097, 1, 0
        %v5354 = vsel %vm5098, 1, 0
        %v5355 = vsel %vm5099, 1, 0
        %v5356 = vsel %vm5100, 1, 0
        %v5357 = vsel %vm5101, 1, 0
        %v5358 = vsel %vm5102, 1, 0
        %v5359 = vsel %vm5103, 1, 0
        %v5360 = vsel %vm5104, 1, 0
        %v5361 = vsel %vm5105, 1, 0
        %v5362 = vsel %vm5106, 1, 0
        %v5363 = vsel %vm5107, 1, 0
        %v5364 = vsel %vm5108, 1, 0
        %v5365 = vsel %vm5109, 1, 0
        %v5366 = vsel %vm5110, 1, 0
        %v5367 = vsel %vm5111, 1, 0
        %v5368 = vsel %vm5112, 1, 0
        %v5369 = vsel %vm5113, 1, 0
        %v5370 = vsel %vm5114, 1, 0
        %v5371 = vsel %vm5115, 1, 0
        %v5372 = vsel %vm5116, 1, 0
        %v5373 = vsel %vm5117, 1, 0
        %v5374 = vsel %vm5118, 1, 0
        %v5375 = vsel %vm5119, 1, 0
        %v5376 = vsel %vm5120, 1, 0
        %v5377 = vsel %vm5121, 1, 0
        %v5378 = vsel %vm5122, 1, 0
        %v5379 = vsel %vm5123, 1, 0
        %v5380 = vsel %vm5124, 1, 0
        %v5381 = vsel %vm5125, 1, 0
        %v5382 = vsel %vm5126, 1, 0
        %v5383 = vsel %vm5127, 1, 0
        %v5384 = vsel %vm5128, 1, 0
        %v5385 = vsel %vm5129, 1, 0
        %v5386 = vsel %vm5130, 1, 0
        %v5387 = vsel %vm5131, 1, 0
        %v5388 = vsel %vm5132, 1, 0
        %v5389 = vsel %vm5133, 1, 0
        %v5390 = vsel %vm5134, 1, 0
        %v5391 = vsel %vm5135, 1, 0
        %v5392 = vadd.s32 %v5136, %v5138
        %v5393 = vadd.s32 %v5392, %v5140
        %v5394 = vadd.s32 %v5393, %v5142
        %v5395 = vrot.slane %v5394, 4
        %v5396 = vadd.s32 %v5394, %v5395
        %v5397 = vrot.slane %v5396, 2
        %v5398 = vadd.s32 %v5396, %v5397
        %v5399 = vrot.slane %v5398, 1
        %v5400 = vadd.s32 %v5398, %v5399
        %v5401 = vadd.s32 %v5137, %v5139
        %v5402 = vadd.s32 %v5401, %v5141
        %v5403 = vadd.s32 %v5402, %v5143
        %v5404 = vrot.slane %v5403, 4
        %v5405 = vadd.s32 %v5403, %v5404
        %v5406 = vrot.slane %v5405, 2
        %v5407 = vadd.s32 %v5405, %v5406
        %v5408 = vrot.slane %v5407, 1
        %v5409 = vadd.s32 %v5407, %v5408
        %v5410 = vadd.s32 %v5144, %v5146
        %v5411 = vadd.s32 %v5410, %v5148
        %v5412 = vadd.s32 %v5411, %v5150
        %v5413 = vrot.slane %v5412, 4
        %v5414 = vadd.s32 %v5412, %v5413
        %v5415 = vrot.slane %v5414, 2
        %v5416 = vadd.s32 %v5414, %v5415
        %v5417 = vrot.slane %v5416, 1
        %v5418 = vadd.s32 %v5416, %v5417
        %v5419 = vadd.s32 %v5145, %v5147
        %v5420 = vadd.s32 %v5419, %v5149
        %v5421 = vadd.s32 %v5420, %v5151
        %v5422 = vrot.slane %v5421, 4
        %v5423 = vadd.s32 %v5421, %v5422
        %v5424 = vrot.slane %v5423, 2
        %v5425 = vadd.s32 %v5423, %v5424
        %v5426 = vrot.slane %v5425, 1
        %v5427 = vadd.s32 %v5425, %v5426
        %v5428 = vadd.s32 %v5152, %v5154
        %v5429 = vadd.s32 %v5428, %v5156
        %v5430 = vadd.s32 %v5429, %v5158
        %v5431 = vrot.slane %v5430, 4
        %v5432 = vadd.s32 %v5430, %v5431
        %v5433 = vrot.slane %v5432, 2
        %v5434 = vadd.s32 %v5432, %v5433
        %v5435 = vrot.slane %v5434, 1
        %v5436 = vadd.s32 %v5434, %v5435
        %v5437 = vadd.s32 %v5153, %v5155
        %v5438 = vadd.s32 %v5437, %v5157
        %v5439 = vadd.s32 %v5438, %v5159
        %v5440 = vrot.slane %v5439, 4
        %v5441 = vadd.s32 %v5439, %v5440
        %v5442 = vrot.slane %v5441, 2
        %v5443 = vadd.s32 %v5441, %v5442
        %v5444 = vrot.slane %v5443, 1
        %v5445 = vadd.s32 %v5443, %v5444
        %v5446 = vadd.s32 %v5160, %v5162
        %v5447 = vadd.s32 %v5446, %v5164
        %v5448 = vadd.s32 %v5447, %v5166
        %v5449 = vrot.slane %v5448, 4
        %v5450 = vadd.s32 %v5448, %v5449
        %v5451 = vrot.slane %v5450, 2
        %v5452 = vadd.s32 %v5450, %v5451
        %v5453 = vrot.slane %v5452, 1
        %v5454 = vadd.s32 %v5452, %v5453
        %v5455 = vadd.s32 %v5161, %v5163
        %v5456 = vadd.s32 %v5455, %v5165
        %v5457 = vadd.s32 %v5456, %v5167
        %v5458 = vrot.slane %v5457, 4
        %v5459 = vadd.s32 %v5457, %v5458
        %v5460 = vrot.slane %v5459, 2
        %v5461 = vadd.s32 %v5459, %v5460
        %v5462 = vrot.slane %v5461, 1
        %v5463 = vadd.s32 %v5461, %v5462
        %v5464 = vadd.s32 %v5168, %v5170
        %v5465 = vadd.s32 %v5464, %v5172
        %v5466 = vadd.s32 %v5465, %v5174
        %v5467 = vrot.slane %v5466, 4
        %v5468 = vadd.s32 %v5466, %v5467
        %v5469 = vrot.slane %v5468, 2
        %v5470 = vadd.s32 %v5468, %v5469
        %v5471 = vrot.slane %v5470, 1
        %v5472 = vadd.s32 %v5470, %v5471
        %v5473 = vadd.s32 %v5169, %v5171
        %v5474 = vadd.s32 %v5473, %v5173
        %v5475 = vadd.s32 %v5474, %v5175
        %v5476 = vrot.slane %v5475, 4
        %v5477 = vadd.s32 %v5475, %v5476
        %v5478 = vrot.slane %v5477, 2
        %v5479 = vadd.s32 %v5477, %v5478
        %v5480 = vrot.slane %v5479, 1
        %v5481 = vadd.s32 %v5479, %v5480
        %v5482 = vadd.s32 %v5176, %v5178
        %v5483 = vadd.s32 %v5482, %v5180
        %v5484 = vadd.s32 %v5483, %v5182
        %v5485 = vrot.slane %v5484, 4
        %v5486 = vadd.s32 %v5484, %v5485
        %v5487 = vrot.slane %v5486, 2
        %v5488 = vadd.s32 %v5486, %v5487
        %v5489 = vrot.slane %v5488, 1
        %v5490 = vadd.s32 %v5488, %v5489
        %v5491 = vadd.s32 %v5177, %v5179
        %v5492 = vadd.s32 %v5491, %v5181
        %v5493 = vadd.s32 %v5492, %v5183
        %v5494 = vrot.slane %v5493, 4
        %v5495 = vadd.s32 %v5493, %v5494
        %v5496 = vrot.slane %v5495, 2
        %v5497 = vadd.s32 %v5495, %v5496
        %v5498 = vrot.slane %v5497, 1
        %v5499 = vadd.s32 %v5497, %v5498
        %v5500 = vadd.s32 %v5184, %v5186
        %v5501 = vadd.s32 %v5500, %v5188
        %v5502 = vadd.s32 %v5501, %v5190
        %v5503 = vrot.slane %v5502, 4
        %v5504 = vadd.s32 %v5502, %v5503
        %v5505 = vrot.slane %v5504, 2
        %v5506 = vadd.s32 %v5504, %v5505
        %v5507 = vrot.slane %v5506, 1
        %v5508 = vadd.s32 %v5506, %v5507
        %v5509 = vadd.s32 %v5185, %v5187
        %v5510 = vadd.s32 %v5509, %v5189
        %v5511 = vadd.s32 %v5510, %v5191
        %v5512 = vrot.slane %v5511, 4
        %v5513 = vadd.s32 %v5511, %v5512
        %v5514 = vrot.slane %v5513, 2
        %v5515 = vadd.s32 %v5513, %v5514
        %v5516 = vrot.slane %v5515, 1
        %v5517 = vadd.s32 %v5515, %v5516
        %v5518 = vadd.s32 %v5192, %v5194
        %v5519 = vadd.s32 %v5518, %v5196
        %v5520 = vadd.s32 %v5519, %v5198
        %v5521 = vrot.slane %v5520, 4
        %v5522 = vadd.s32 %v5520, %v5521
        %v5523 = vrot.slane %v5522, 2
        %v5524 = vadd.s32 %v5522, %v5523
        %v5525 = vrot.slane %v5524, 1
        %v5526 = vadd.s32 %v5524, %v5525
        %v5527 = vadd.s32 %v5193, %v5195
        %v5528 = vadd.s32 %v5527, %v5197
        %v5529 = vadd.s32 %v5528, %v5199
        %v5530 = vrot.slane %v5529, 4
        %v5531 = vadd.s32 %v5529, %v5530
        %v5532 = vrot.slane %v5531, 2
        %v5533 = vadd.s32 %v5531, %v5532
        %v5534 = vrot.slane %v5533, 1
        %v5535 = vadd.s32 %v5533, %v5534
        %v5536 = vadd.s32 %v5200, %v5202
        %v5537 = vadd.s32 %v5536, %v5204
        %v5538 = vadd.s32 %v5537, %v5206
        %v5539 = vrot.slane %v5538, 4
        %v5540 = vadd.s32 %v5538, %v5539
        %v5541 = vrot.slane %v5540, 2
        %v5542 = vadd.s32 %v5540, %v5541
        %v5543 = vrot.slane %v5542, 1
        %v5544 = vadd.s32 %v5542, %v5543
        %v5545 = vadd.s32 %v5201, %v5203
        %v5546 = vadd.s32 %v5545, %v5205
        %v5547 = vadd.s32 %v5546, %v5207
        %v5548 = vrot.slane %v5547, 4
        %v5549 = vadd.s32 %v5547, %v5548
        %v5550 = vrot.slane %v5549, 2
        %v5551 = vadd.s32 %v5549, %v5550
        %v5552 = vrot.slane %v5551, 1
        %v5553 = vadd.s32 %v5551, %v5552
        %v5554 = vadd.s32 %v5208, %v5210
        %v5555 = vadd.s32 %v5554, %v5212
        %v5556 = vadd.s32 %v5555, %v5214
        %v5557 = vrot.slane %v5556, 4
        %v5558 = vadd.s32 %v5556, %v5557
        %v5559 = vrot.slane %v5558, 2
        %v5560 = vadd.s32 %v5558, %v5559
        %v5561 = vrot.slane %v5560, 1
        %v5562 = vadd.s32 %v5560, %v5561
        %v5563 = vadd.s32 %v5209, %v5211
        %v5564 = vadd.s32 %v5563, %v5213
        %v5565 = vadd.s32 %v5564, %v5215
        %v5566 = vrot.slane %v5565, 4
        %v5567 = vadd.s32 %v5565, %v5566
        %v5568 = vrot.slane %v5567, 2
        %v5569 = vadd.s32 %v5567, %v5568
        %v5570 = vrot.slane %v5569, 1
        %v5571 = vadd.s32 %v5569, %v5570
        %v5572 = vadd.s32 %v5216, %v5218
        %v5573 = vadd.s32 %v5572, %v5220
        %v5574 = vadd.s32 %v5573, %v5222
        %v5575 = vrot.slane %v5574, 4
        %v5576 = vadd.s32 %v5574, %v5575
        %v5577 = vrot.slane %v5576, 2
        %v5578 = vadd.s32 %v5576, %v5577
        %v5579 = vrot.slane %v5578, 1
        %v5580 = vadd.s32 %v5578, %v5579
        %v5581 = vadd.s32 %v5217, %v5219
        %v5582 = vadd.s32 %v5581, %v5221
        %v5583 = vadd.s32 %v5582, %v5223
        %v5584 = vrot.slane %v5583, 4
        %v5585 = vadd.s32 %v5583, %v5584
        %v5586 = vrot.slane %v5585, 2
        %v5587 = vadd.s32 %v5585, %v5586
        %v5588 = vrot.slane %v5587, 1
        %v5589 = vadd.s32 %v5587, %v5588
        %v5590 = vadd.s32 %v5224, %v5226
        %v5591 = vadd.s32 %v5590, %v5228
        %v5592 = vadd.s32 %v5591, %v5230
        %v5593 = vrot.slane %v5592, 4
        %v5594 = vadd.s32 %v5592, %v5593
        %v5595 = vrot.slane %v5594, 2
        %v5596 = vadd.s32 %v5594, %v5595
        %v5597 = vrot.slane %v5596, 1
        %v5598 = vadd.s32 %v5596, %v5597
        %v5599 = vadd.s32 %v5225, %v5227
        %v5600 = vadd.s32 %v5599, %v5229
        %v5601 = vadd.s32 %v5600, %v5231
        %v5602 = vrot.slane %v5601, 4
        %v5603 = vadd.s32 %v5601, %v5602
        %v5604 = vrot.slane %v5603, 2
        %v5605 = vadd.s32 %v5603, %v5604
        %v5606 = vrot.slane %v5605, 1
        %v5607 = vadd.s32 %v5605, %v5606
        %v5608 = vadd.s32 %v5232, %v5234
        %v5609 = vadd.s32 %v5608, %v5236
        %v5610 = vadd.s32 %v5609, %v5238
        %v5611 = vrot.slane %v5610, 4
        %v5612 = vadd.s32 %v5610, %v5611
        %v5613 = vrot.slane %v5612, 2
        %v5614 = vadd.s32 %v5612, %v5613
        %v5615 = vrot.slane %v5614, 1
        %v5616 = vadd.s32 %v5614, %v5615
        %v5617 = vadd.s32 %v5233, %v5235
        %v5618 = vadd.s32 %v5617, %v5237
        %v5619 = vadd.s32 %v5618, %v5239
        %v5620 = vrot.slane %v5619, 4
        %v5621 = vadd.s32 %v5619, %v5620
        %v5622 = vrot.slane %v5621, 2
        %v5623 = vadd.s32 %v5621, %v5622
        %v5624 = vrot.slane %v5623, 1
        %v5625 = vadd.s32 %v5623, %v5624
        %v5626 = vadd.s32 %v5240, %v5242
        %v5627 = vadd.s32 %v5626, %v5244
        %v5628 = vadd.s32 %v5627, %v5246
        %v5629 = vrot.slane %v5628, 4
        %v5630 = vadd.s32 %v5628, %v5629
        %v5631 = vrot.slane %v5630, 2
        %v5632 = vadd.s32 %v5630, %v5631
        %v5633 = vrot.slane %v5632, 1
        %v5634 = vadd.s32 %v5632, %v5633
        %v5635 = vadd.s32 %v5241, %v5243
        %v5636 = vadd.s32 %v5635, %v5245
        %v5637 = vadd.s32 %v5636, %v5247
        %v5638 = vrot.slane %v5637, 4
        %v5639 = vadd.s32 %v5637, %v5638
        %v5640 = vrot.slane %v5639, 2
        %v5641 = vadd.s32 %v5639, %v5640
        %v5642 = vrot.slane %v5641, 1
        %v5643 = vadd.s32 %v5641, %v5642
        %v5644 = vadd.s32 %v5248, %v5250
        %v5645 = vadd.s32 %v5644, %v5252
        %v5646 = vadd.s32 %v5645, %v5254
        %v5647 = vrot.slane %v5646, 4
        %v5648 = vadd.s32 %v5646, %v5647
        %v5649 = vrot.slane %v5648, 2
        %v5650 = vadd.s32 %v5648, %v5649
        %v5651 = vrot.slane %v5650, 1
        %v5652 = vadd.s32 %v5650, %v5651
        %v5653 = vadd.s32 %v5249, %v5251
        %v5654 = vadd.s32 %v5653, %v5253
        %v5655 = vadd.s32 %v5654, %v5255
        %v5656 = vrot.slane %v5655, 4
        %v5657 = vadd.s32 %v5655, %v5656
        %v5658 = vrot.slane %v5657, 2
        %v5659 = vadd.s32 %v5657, %v5658
        %v5660 = vrot.slane %v5659, 1
        %v5661 = vadd.s32 %v5659, %v5660
        %v5662 = vadd.s32 %v5256, %v5258
        %v5663 = vadd.s32 %v5662, %v5260
        %v5664 = vadd.s32 %v5663, %v5262
        %v5665 = vrot.slane %v5664, 4
        %v5666 = vadd.s32 %v5664, %v5665
        %v5667 = vrot.slane %v5666, 2
        %v5668 = vadd.s32 %v5666, %v5667
        %v5669 = vrot.slane %v5668, 1
        %v5670 = vadd.s32 %v5668, %v5669
        %v5671 = vadd.s32 %v5257, %v5259
        %v5672 = vadd.s32 %v5671, %v5261
        %v5673 = vadd.s32 %v5672, %v5263
        %v5674 = vrot.slane %v5673, 4
        %v5675 = vadd.s32 %v5673, %v5674
        %v5676 = vrot.slane %v5675, 2
        %v5677 = vadd.s32 %v5675, %v5676
        %v5678 = vrot.slane %v5677, 1
        %v5679 = vadd.s32 %v5677, %v5678
        %v5680 = vadd.s32 %v5264, %v5266
        %v5681 = vadd.s32 %v5680, %v5268
        %v5682 = vadd.s32 %v5681, %v5270
        %v5683 = vrot.slane %v5682, 4
        %v5684 = vadd.s32 %v5682, %v5683
        %v5685 = vrot.slane %v5684, 2
        %v5686 = vadd.s32 %v5684, %v5685
        %v5687 = vrot.slane %v5686, 1
        %v5688 = vadd.s32 %v5686, %v5687
        %v5689 = vadd.s32 %v5265, %v5267
        %v5690 = vadd.s32 %v5689, %v5269
        %v5691 = vadd.s32 %v5690, %v5271
        %v5692 = vrot.slane %v5691, 4
        %v5693 = vadd.s32 %v5691, %v5692
        %v5694 = vrot.slane %v5693, 2
        %v5695 = vadd.s32 %v5693, %v5694
        %v5696 = vrot.slane %v5695, 1
        %v5697 = vadd.s32 %v5695, %v5696
        %v5698 = vadd.s32 %v5272, %v5274
        %v5699 = vadd.s32 %v5698, %v5276
        %v5700 = vadd.s32 %v5699, %v5278
        %v5701 = vrot.slane %v5700, 4
        %v5702 = vadd.s32 %v5700, %v5701
        %v5703 = vrot.slane %v5702, 2
        %v5704 = vadd.s32 %v5702, %v5703
        %v5705 = vrot.slane %v5704, 1
        %v5706 = vadd.s32 %v5704, %v5705
        %v5707 = vadd.s32 %v5273, %v5275
        %v5708 = vadd.s32 %v5707, %v5277
        %v5709 = vadd.s32 %v5708, %v5279
        %v5710 = vrot.slane %v5709, 4
        %v5711 = vadd.s32 %v5709, %v5710
        %v5712 = vrot.slane %v5711, 2
        %v5713 = vadd.s32 %v5711, %v5712
        %v5714 = vrot.slane %v5713, 1
        %v5715 = vadd.s32 %v5713, %v5714
        %v5716 = vadd.s32 %v5280, %v5282
        %v5717 = vadd.s32 %v5716, %v5284
        %v5718 = vadd.s32 %v5717, %v5286
        %v5719 = vrot.slane %v5718, 4
        %v5720 = vadd.s32 %v5718, %v5719
        %v5721 = vrot.slane %v5720, 2
        %v5722 = vadd.s32 %v5720, %v5721
        %v5723 = vrot.slane %v5722, 1
        %v5724 = vadd.s32 %v5722, %v5723
        %v5725 = vadd.s32 %v5281, %v5283
        %v5726 = vadd.s32 %v5725, %v5285
        %v5727 = vadd.s32 %v5726, %v5287
        %v5728 = vrot.slane %v5727, 4
        %v5729 = vadd.s32 %v5727, %v5728
        %v5730 = vrot.slane %v5729, 2
        %v5731 = vadd.s32 %v5729, %v5730
        %v5732 = vrot.slane %v5731, 1
        %v5733 = vadd.s32 %v5731, %v5732
        %v5734 = vadd.s32 %v5288, %v5290
        %v5735 = vadd.s32 %v5734, %v5292
        %v5736 = vadd.s32 %v5735, %v5294
        %v5737 = vrot.slane %v5736, 4
        %v5738 = vadd.s32 %v5736, %v5737
        %v5739 = vrot.slane %v5738, 2
        %v5740 = vadd.s32 %v5738, %v5739
        %v5741 = vrot.slane %v5740, 1
        %v5742 = vadd.s32 %v5740, %v5741
        %v5743 = vadd.s32 %v5289, %v5291
        %v5744 = vadd.s32 %v5743, %v5293
        %v5745 = vadd.s32 %v5744, %v5295
        %v5746 = vrot.slane %v5745, 4
        %v5747 = vadd.s32 %v5745, %v5746
        %v5748 = vrot.slane %v5747, 2
        %v5749 = vadd.s32 %v5747, %v5748
        %v5750 = vrot.slane %v5749, 1
        %v5751 = vadd.s32 %v5749, %v5750
        %v5752 = vadd.s32 %v5296, %v5298
        %v5753 = vadd.s32 %v5752, %v5300
        %v5754 = vadd.s32 %v5753, %v5302
        %v5755 = vrot.slane %v5754, 4
        %v5756 = vadd.s32 %v5754, %v5755
        %v5757 = vrot.slane %v5756, 2
        %v5758 = vadd.s32 %v5756, %v5757
        %v5759 = vrot.slane %v5758, 1
        %v5760 = vadd.s32 %v5758, %v5759
        %v5761 = vadd.s32 %v5297, %v5299
        %v5762 = vadd.s32 %v5761, %v5301
        %v5763 = vadd.s32 %v5762, %v5303
        %v5764 = vrot.slane %v5763, 4
        %v5765 = vadd.s32 %v5763, %v5764
        %v5766 = vrot.slane %v5765, 2
        %v5767 = vadd.s32 %v5765, %v5766
        %v5768 = vrot.slane %v5767, 1
        %v5769 = vadd.s32 %v5767, %v5768
        %v5770 = vadd.s32 %v5304, %v5306
        %v5771 = vadd.s32 %v5770, %v5308
        %v5772 = vadd.s32 %v5771, %v5310
        %v5773 = vrot.slane %v5772, 4
        %v5774 = vadd.s32 %v5772, %v5773
        %v5775 = vrot.slane %v5774, 2
        %v5776 = vadd.s32 %v5774, %v5775
        %v5777 = vrot.slane %v5776, 1
        %v5778 = vadd.s32 %v5776, %v5777
        %v5779 = vadd.s32 %v5305, %v5307
        %v5780 = vadd.s32 %v5779, %v5309
        %v5781 = vadd.s32 %v5780, %v5311
        %v5782 = vrot.slane %v5781, 4
        %v5783 = vadd.s32 %v5781, %v5782
        %v5784 = vrot.slane %v5783, 2
        %v5785 = vadd.s32 %v5783, %v5784
        %v5786 = vrot.slane %v5785, 1
        %v5787 = vadd.s32 %v5785, %v5786
        %v5788 = vadd.s32 %v5312, %v5314
        %v5789 = vadd.s32 %v5788, %v5316
        %v5790 = vadd.s32 %v5789, %v5318
        %v5791 = vrot.slane %v5790, 4
        %v5792 = vadd.s32 %v5790, %v5791
        %v5793 = vrot.slane %v5792, 2
        %v5794 = vadd.s32 %v5792, %v5793
        %v5795 = vrot.slane %v5794, 1
        %v5796 = vadd.s32 %v5794, %v5795
        %v5797 = vadd.s32 %v5313, %v5315
        %v5798 = vadd.s32 %v5797, %v5317
        %v5799 = vadd.s32 %v5798, %v5319
        %v5800 = vrot.slane %v5799, 4
        %v5801 = vadd.s32 %v5799, %v5800
        %v5802 = vrot.slane %v5801, 2
        %v5803 = vadd.s32 %v5801, %v5802
        %v5804 = vrot.slane %v5803, 1
        %v5805 = vadd.s32 %v5803, %v5804
        %v5806 = vadd.s32 %v5320, %v5322
        %v5807 = vadd.s32 %v5806, %v5324
        %v5808 = vadd.s32 %v5807, %v5326
        %v5809 = vrot.slane %v5808, 4
        %v5810 = vadd.s32 %v5808, %v5809
        %v5811 = vrot.slane %v5810, 2
        %v5812 = vadd.s32 %v5810, %v5811
        %v5813 = vrot.slane %v5812, 1
        %v5814 = vadd.s32 %v5812, %v5813
        %v5815 = vadd.s32 %v5321, %v5323
        %v5816 = vadd.s32 %v5815, %v5325
        %v5817 = vadd.s32 %v5816, %v5327
        %v5818 = vrot.slane %v5817, 4
        %v5819 = vadd.s32 %v5817, %v5818
        %v5820 = vrot.slane %v5819, 2
        %v5821 = vadd.s32 %v5819, %v5820
        %v5822 = vrot.slane %v5821, 1
        %v5823 = vadd.s32 %v5821, %v5822
        %v5824 = vadd.s32 %v5328, %v5330
        %v5825 = vadd.s32 %v5824, %v5332
        %v5826 = vadd.s32 %v5825, %v5334
        %v5827 = vrot.slane %v5826, 4
        %v5828 = vadd.s32 %v5826, %v5827
        %v5829 = vrot.slane %v5828, 2
        %v5830 = vadd.s32 %v5828, %v5829
        %v5831 = vrot.slane %v5830, 1
        %v5832 = vadd.s32 %v5830, %v5831
        %v5833 = vadd.s32 %v5329, %v5331
        %v5834 = vadd.s32 %v5833, %v5333
        %v5835 = vadd.s32 %v5834, %v5335
        %v5836 = vrot.slane %v5835, 4
        %v5837 = vadd.s32 %v5835, %v5836
        %v5838 = vrot.slane %v5837, 2
        %v5839 = vadd.s32 %v5837, %v5838
        %v5840 = vrot.slane %v5839, 1
        %v5841 = vadd.s32 %v5839, %v5840
        %v5842 = vadd.s32 %v5336, %v5338
        %v5843 = vadd.s32 %v5842, %v5340
        %v5844 = vadd.s32 %v5843, %v5342
        %v5845 = vrot.slane %v5844, 4
        %v5846 = vadd.s32 %v5844, %v5845
        %v5847 = vrot.slane %v5846, 2
        %v5848 = vadd.s32 %v5846, %v5847
        %v5849 = vrot.slane %v5848, 1
        %v5850 = vadd.s32 %v5848, %v5849
        %v5851 = vadd.s32 %v5337, %v5339
        %v5852 = vadd.s32 %v5851, %v5341
        %v5853 = vadd.s32 %v5852, %v5343
        %v5854 = vrot.slane %v5853, 4
        %v5855 = vadd.s32 %v5853, %v5854
        %v5856 = vrot.slane %v5855, 2
        %v5857 = vadd.s32 %v5855, %v5856
        %v5858 = vrot.slane %v5857, 1
        %v5859 = vadd.s32 %v5857, %v5858
        %v5860 = vadd.s32 %v5344, %v5346
        %v5861 = vadd.s32 %v5860, %v5348
        %v5862 = vadd.s32 %v5861, %v5350
        %v5863 = vrot.slane %v5862, 4
        %v5864 = vadd.s32 %v5862, %v5863
        %v5865 = vrot.slane %v5864, 2
        %v5866 = vadd.s32 %v5864, %v5865
        %v5867 = vrot.slane %v5866, 1
        %v5868 = vadd.s32 %v5866, %v5867
        %v5869 = vadd.s32 %v5345, %v5347
        %v5870 = vadd.s32 %v5869, %v5349
        %v5871 = vadd.s32 %v5870, %v5351
        %v5872 = vrot.slane %v5871, 4
        %v5873 = vadd.s32 %v5871, %v5872
        %v5874 = vrot.slane %v5873, 2
        %v5875 = vadd.s32 %v5873, %v5874
        %v5876 = vrot.slane %v5875, 1
        %v5877 = vadd.s32 %v5875, %v5876
        %v5878 = vadd.s32 %v5352, %v5354
        %v5879 = vadd.s32 %v5878, %v5356
        %v5880 = vadd.s32 %v5879, %v5358
        %v5881 = vrot.slane %v5880, 4
        %v5882 = vadd.s32 %v5880, %v5881
        %v5883 = vrot.slane %v5882, 2
        %v5884 = vadd.s32 %v5882, %v5883
        %v5885 = vrot.slane %v5884, 1
        %v5886 = vadd.s32 %v5884, %v5885
        %v5887 = vadd.s32 %v5353, %v5355
        %v5888 = vadd.s32 %v5887, %v5357
        %v5889 = vadd.s32 %v5888, %v5359
        %v5890 = vrot.slane %v5889, 4
        %v5891 = vadd.s32 %v5889, %v5890
        %v5892 = vrot.slane %v5891, 2
        %v5893 = vadd.s32 %v5891, %v5892
        %v5894 = vrot.slane %v5893, 1
        %v5895 = vadd.s32 %v5893, %v5894
        %v5896 = vadd.s32 %v5360, %v5362
        %v5897 = vadd.s32 %v5896, %v5364
        %v5898 = vadd.s32 %v5897, %v5366
        %v5899 = vrot.slane %v5898, 4
        %v5900 = vadd.s32 %v5898, %v5899
        %v5901 = vrot.slane %v5900, 2
        %v5902 = vadd.s32 %v5900, %v5901
        %v5903 = vrot.slane %v5902, 1
        %v5904 = vadd.s32 %v5902, %v5903
        %v5905 = vadd.s32 %v5361, %v5363
        %v5906 = vadd.s32 %v5905, %v5365
        %v5907 = vadd.s32 %v5906, %v5367
        %v5908 = vrot.slane %v5907, 4
        %v5909 = vadd.s32 %v5907, %v5908
        %v5910 = vrot.slane %v5909, 2
        %v5911 = vadd.s32 %v5909, %v5910
        %v5912 = vrot.slane %v5911, 1
        %v5913 = vadd.s32 %v5911, %v5912
        %v5914 = vadd.s32 %v5368, %v5370
        %v5915 = vadd.s32 %v5914, %v5372
        %v5916 = vadd.s32 %v5915, %v5374
        %v5917 = vrot.slane %v5916, 4
        %v5918 = vadd.s32 %v5916, %v5917
        %v5919 = vrot.slane %v5918, 2
        %v5920 = vadd.s32 %v5918, %v5919
        %v5921 = vrot.slane %v5920, 1
        %v5922 = vadd.s32 %v5920, %v5921
        %v5923 = vadd.s32 %v5369, %v5371
        %v5924 = vadd.s32 %v5923, %v5373
        %v5925 = vadd.s32 %v5924, %v5375
        %v5926 = vrot.slane %v5925, 4
        %v5927 = vadd.s32 %v5925, %v5926
        %v5928 = vrot.slane %v5927, 2
        %v5929 = vadd.s32 %v5927, %v5928
        %v5930 = vrot.slane %v5929, 1
        %v5931 = vadd.s32 %v5929, %v5930
        %v5932 = vadd.s32 %v5376, %v5378
        %v5933 = vadd.s32 %v5932, %v5380
        %v5934 = vadd.s32 %v5933, %v5382
        %v5935 = vrot.slane %v5934, 4
        %v5936 = vadd.s32 %v5934, %v5935
        %v5937 = vrot.slane %v5936, 2
        %v5938 = vadd.s32 %v5936, %v5937
        %v5939 = vrot.slane %v5938, 1
        %v5940 = vadd.s32 %v5938, %v5939
        %v5941 = vadd.s32 %v5377, %v5379
        %v5942 = vadd.s32 %v5941, %v5381
        %v5943 = vadd.s32 %v5942, %v5383
        %v5944 = vrot.slane %v5943, 4
        %v5945 = vadd.s32 %v5943, %v5944
        %v5946 = vrot.slane %v5945, 2
        %v5947 = vadd.s32 %v5945, %v5946
        %v5948 = vrot.slane %v5947, 1
        %v5949 = vadd.s32 %v5947, %v5948
        %v5950 = vadd.s32 %v5384, %v5386
        %v5951 = vadd.s32 %v5950, %v5388
        %v5952 = vadd.s32 %v5951, %v5390
        %v5953 = vrot.slane %v5952, 4
        %v5954 = vadd.s32 %v5952, %v5953
        %v5955 = vrot.slane %v5954, 2
        %v5956 = vadd.s32 %v5954, %v5955
        %v5957 = vrot.slane %v5956, 1
        %v5958 = vadd.s32 %v5956, %v5957
        %v5959 = vadd.s32 %v5385, %v5387
        %v5960 = vadd.s32 %v5959, %v5389
        %v5961 = vadd.s32 %v5960, %v5391
        %v5962 = vrot.slane %v5961, 4
        %v5963 = vadd.s32 %v5961, %v5962
        %v5964 = vrot.slane %v5963, 2
        %v5965 = vadd.s32 %v5963, %v5964
        %v5966 = vrot.slane %v5965, 1
        %v5967 = vadd.s32 %v5965, %v5966
        %v5968 = vlaneseq
        %v5969 = vand.u32 %v5968, 127
        %v5970 = vadd.s32 %v5969, 128
        %vm5971 = vcmp.lt.s32.totalorder %v5969, 192
        %vm5972 = vcmp.lt.s32.totalorder %v5970, 192
        %v5973 = vsel %vm5971, 16, 25
        %v5974 = vsel %vm5972, 16, 25
        %vm5975 = vcmp.lt.s32.totalorder %v5969, 128
        %vm5976 = vcmp.lt.s32.totalorder %v5970, 128
        %v5977 = vsel %vm5975, 9, %v5973
        %v5978 = vsel %vm5976, 9, %v5974
        %vm5979 = vcmp.lt.s32.totalorder %v5969, 64
        %vm5980 = vcmp.lt.s32.totalorder %v5970, 64
        %v5981 = vsel %vm5979, 1, %v5977
        %v5982 = vsel %vm5980, 1, %v5978
        %vm5983 = vcmp.lt.s32.totalorder %v5400, %v5981
        %vm5984 = vcmp.lt.s32.totalorder %v5409, %v5982
        %vm5985 = vcmp.lt.s32.totalorder %v5418, %v5981
        %vm5986 = vcmp.lt.s32.totalorder %v5427, %v5982
        %vm5987 = vcmp.lt.s32.totalorder %v5436, %v5981
        %vm5988 = vcmp.lt.s32.totalorder %v5445, %v5982
        %vm5989 = vcmp.lt.s32.totalorder %v5454, %v5981
        %vm5990 = vcmp.lt.s32.totalorder %v5463, %v5982
        %vm5991 = vcmp.lt.s32.totalorder %v5472, %v5981
        %vm5992 = vcmp.lt.s32.totalorder %v5481, %v5982
        %vm5993 = vcmp.lt.s32.totalorder %v5490, %v5981
        %vm5994 = vcmp.lt.s32.totalorder %v5499, %v5982
        %vm5995 = vcmp.lt.s32.totalorder %v5508, %v5981
        %vm5996 = vcmp.lt.s32.totalorder %v5517, %v5982
        %vm5997 = vcmp.lt.s32.totalorder %v5526, %v5981
        %vm5998 = vcmp.lt.s32.totalorder %v5535, %v5982
        %vm5999 = vcmp.lt.s32.totalorder %v5544, %v5981
        %vm6000 = vcmp.lt.s32.totalorder %v5553, %v5982
        %vm6001 = vcmp.lt.s32.totalorder %v5562, %v5981
        %vm6002 = vcmp.lt.s32.totalorder %v5571, %v5982
        %vm6003 = vcmp.lt.s32.totalorder %v5580, %v5981
        %vm6004 = vcmp.lt.s32.totalorder %v5589, %v5982
        %vm6005 = vcmp.lt.s32.totalorder %v5598, %v5981
        %vm6006 = vcmp.lt.s32.totalorder %v5607, %v5982
        %vm6007 = vcmp.lt.s32.totalorder %v5616, %v5981
        %vm6008 = vcmp.lt.s32.totalorder %v5625, %v5982
        %vm6009 = vcmp.lt.s32.totalorder %v5634, %v5981
        %vm6010 = vcmp.lt.s32.totalorder %v5643, %v5982
        %vm6011 = vcmp.lt.s32.totalorder %v5652, %v5981
        %vm6012 = vcmp.lt.s32.totalorder %v5661, %v5982
        %vm6013 = vcmp.lt.s32.totalorder %v5670, %v5981
        %vm6014 = vcmp.lt.s32.totalorder %v5679, %v5982
        %vm6015 = vcmp.lt.s32.totalorder %v5688, %v5981
        %vm6016 = vcmp.lt.s32.totalorder %v5697, %v5982
        %vm6017 = vcmp.lt.s32.totalorder %v5706, %v5981
        %vm6018 = vcmp.lt.s32.totalorder %v5715, %v5982
        %vm6019 = vcmp.lt.s32.totalorder %v5724, %v5981
        %vm6020 = vcmp.lt.s32.totalorder %v5733, %v5982
        %vm6021 = vcmp.lt.s32.totalorder %v5742, %v5981
        %vm6022 = vcmp.lt.s32.totalorder %v5751, %v5982
        %vm6023 = vcmp.lt.s32.totalorder %v5760, %v5981
        %vm6024 = vcmp.lt.s32.totalorder %v5769, %v5982
        %vm6025 = vcmp.lt.s32.totalorder %v5778, %v5981
        %vm6026 = vcmp.lt.s32.totalorder %v5787, %v5982
        %vm6027 = vcmp.lt.s32.totalorder %v5796, %v5981
        %vm6028 = vcmp.lt.s32.totalorder %v5805, %v5982
        %vm6029 = vcmp.lt.s32.totalorder %v5814, %v5981
        %vm6030 = vcmp.lt.s32.totalorder %v5823, %v5982
        %vm6031 = vcmp.lt.s32.totalorder %v5832, %v5981
        %vm6032 = vcmp.lt.s32.totalorder %v5841, %v5982
        %vm6033 = vcmp.lt.s32.totalorder %v5850, %v5981
        %vm6034 = vcmp.lt.s32.totalorder %v5859, %v5982
        %vm6035 = vcmp.lt.s32.totalorder %v5868, %v5981
        %vm6036 = vcmp.lt.s32.totalorder %v5877, %v5982
        %vm6037 = vcmp.lt.s32.totalorder %v5886, %v5981
        %vm6038 = vcmp.lt.s32.totalorder %v5895, %v5982
        %vm6039 = vcmp.lt.s32.totalorder %v5904, %v5981
        %vm6040 = vcmp.lt.s32.totalorder %v5913, %v5982
        %vm6041 = vcmp.lt.s32.totalorder %v5922, %v5981
        %vm6042 = vcmp.lt.s32.totalorder %v5931, %v5982
        %vm6043 = vcmp.lt.s32.totalorder %v5940, %v5981
        %vm6044 = vcmp.lt.s32.totalorder %v5949, %v5982
        %vm6045 = vcmp.lt.s32.totalorder %v5958, %v5981
        %vm6046 = vcmp.lt.s32.totalorder %v5967, %v5982
        %v6047 = vrot.slane %v4304, 1
        %v6048 = vrot.slane %v4336, 1
        %v6049 = vrot.slane %v4304, 2
        %v6050 = vrot.slane %v4336, 2
        %v6051 = vrot.slane %v4304, 3
        %v6052 = vrot.slane %v4336, 3
        %v6053 = vrot.slane %v4304, 4
        %v6054 = vrot.slane %v4336, 4
        %v6055 = vrot.slane %v4304, 5
        %v6056 = vrot.slane %v4336, 5
        %v6057 = vrot.slane %v4304, 6
        %v6058 = vrot.slane %v4336, 6
        %v6059 = vrot.slane %v4304, 7
        %v6060 = vrot.slane %v4336, 7
        %v6061 = vrot.slane %v4305, 1
        %v6062 = vrot.slane %v4337, 1
        %v6063 = vrot.slane %v4305, 2
        %v6064 = vrot.slane %v4337, 2
        %v6065 = vrot.slane %v4305, 3
        %v6066 = vrot.slane %v4337, 3
        %v6067 = vrot.slane %v4305, 4
        %v6068 = vrot.slane %v4337, 4
        %v6069 = vrot.slane %v4305, 5
        %v6070 = vrot.slane %v4337, 5
        %v6071 = vrot.slane %v4305, 6
        %v6072 = vrot.slane %v4337, 6
        %v6073 = vrot.slane %v4305, 7
        %v6074 = vrot.slane %v4337, 7
        %v6075 = vrot.slane %v4306, 1
        %v6076 = vrot.slane %v4338, 1
        %v6077 = vrot.slane %v4306, 2
        %v6078 = vrot.slane %v4338, 2
        %v6079 = vrot.slane %v4306, 3
        %v6080 = vrot.slane %v4338, 3
        %v6081 = vrot.slane %v4306, 4
        %v6082 = vrot.slane %v4338, 4
        %v6083 = vrot.slane %v4306, 5
        %v6084 = vrot.slane %v4338, 5
        %v6085 = vrot.slane %v4306, 6
        %v6086 = vrot.slane %v4338, 6
        %v6087 = vrot.slane %v4306, 7
        %v6088 = vrot.slane %v4338, 7
        %v6089 = vrot.slane %v4307, 1
        %v6090 = vrot.slane %v4339, 1
        %v6091 = vrot.slane %v4307, 2
        %v6092 = vrot.slane %v4339, 2
        %v6093 = vrot.slane %v4307, 3
        %v6094 = vrot.slane %v4339, 3
        %v6095 = vrot.slane %v4307, 4
        %v6096 = vrot.slane %v4339, 4
        %v6097 = vrot.slane %v4307, 5
        %v6098 = vrot.slane %v4339, 5
        %v6099 = vrot.slane %v4307, 6
        %v6100 = vrot.slane %v4339, 6
        %v6101 = vrot.slane %v4307, 7
        %v6102 = vrot.slane %v4339, 7
        %v6167 = vsel %vm5983, %v4304, 0.0
        %v6168 = vsel %vm5984, %v4336, 0.0
        %v6169 = vsel %vm5985, %v6047, 0.0
        %v6170 = vsel %vm5986, %v6048, 0.0
        %v6171 = vsel %vm5987, %v6049, 0.0
        %v6172 = vsel %vm5988, %v6050, 0.0
        %v6173 = vsel %vm5989, %v6051, 0.0
        %v6174 = vsel %vm5990, %v6052, 0.0
        %v6175 = vsel %vm5991, %v6053, 0.0
        %v6176 = vsel %vm5992, %v6054, 0.0
        %v6177 = vsel %vm5993, %v6055, 0.0
        %v6178 = vsel %vm5994, %v6056, 0.0
        %v6179 = vsel %vm5995, %v6057, 0.0
        %v6180 = vsel %vm5996, %v6058, 0.0
        %v6181 = vsel %vm5997, %v6059, 0.0
        %v6182 = vsel %vm5998, %v6060, 0.0
        %v6183 = vsel %vm5999, %v4305, 0.0
        %v6184 = vsel %vm6000, %v4337, 0.0
        %v6185 = vsel %vm6001, %v6061, 0.0
        %v6186 = vsel %vm6002, %v6062, 0.0
        %v6187 = vsel %vm6003, %v6063, 0.0
        %v6188 = vsel %vm6004, %v6064, 0.0
        %v6189 = vsel %vm6005, %v6065, 0.0
        %v6190 = vsel %vm6006, %v6066, 0.0
        %v6191 = vsel %vm6007, %v6067, 0.0
        %v6192 = vsel %vm6008, %v6068, 0.0
        %v6193 = vsel %vm6009, %v6069, 0.0
        %v6194 = vsel %vm6010, %v6070, 0.0
        %v6195 = vsel %vm6011, %v6071, 0.0
        %v6196 = vsel %vm6012, %v6072, 0.0
        %v6197 = vsel %vm6013, %v6073, 0.0
        %v6198 = vsel %vm6014, %v6074, 0.0
        %v6199 = vsel %vm6015, %v4306, 0.0
        %v6200 = vsel %vm6016, %v4338, 0.0
        %v6201 = vsel %vm6017, %v6075, 0.0
        %v6202 = vsel %vm6018, %v6076, 0.0
        %v6203 = vsel %vm6019, %v6077, 0.0
        %v6204 = vsel %vm6020, %v6078, 0.0
        %v6205 = vsel %vm6021, %v6079, 0.0
        %v6206 = vsel %vm6022, %v6080, 0.0
        %v6207 = vsel %vm6023, %v6081, 0.0
        %v6208 = vsel %vm6024, %v6082, 0.0
        %v6209 = vsel %vm6025, %v6083, 0.0
        %v6210 = vsel %vm6026, %v6084, 0.0
        %v6211 = vsel %vm6027, %v6085, 0.0
        %v6212 = vsel %vm6028, %v6086, 0.0
        %v6213 = vsel %vm6029, %v6087, 0.0
        %v6214 = vsel %vm6030, %v6088, 0.0
        %v6215 = vsel %vm6031, %v4307, 0.0
        %v6216 = vsel %vm6032, %v4339, 0.0
        %v6217 = vsel %vm6033, %v6089, 0.0
        %v6218 = vsel %vm6034, %v6090, 0.0
        %v6219 = vsel %vm6035, %v6091, 0.0
        %v6220 = vsel %vm6036, %v6092, 0.0
        %v6221 = vsel %vm6037, %v6093, 0.0
        %v6222 = vsel %vm6038, %v6094, 0.0
        %v6223 = vsel %vm6039, %v6095, 0.0
        %v6224 = vsel %vm6040, %v6096, 0.0
        %v6225 = vsel %vm6041, %v6097, 0.0
        %v6226 = vsel %vm6042, %v6098, 0.0
        %v6227 = vsel %vm6043, %v6099, 0.0
        %v6228 = vsel %vm6044, %v6100, 0.0
        %v6229 = vsel %vm6045, %v6101, 0.0
        %v6230 = vsel %vm6046, %v6102, 0.0
        %vm6231 = vcmask 1040384
        %v6232 = vsel %vm6231, %v6167, -inf
        %v6233 = vsel %vm6231, %v6169, -inf
        %v6234 = vsel %vm6231, %v6171, -inf
        %v6235 = vmax.f32 %v6232, %v6234
        %v6236 = vsel %vm6231, %v6173, -inf
        %v6237 = vmax.f32 %v6233, %v6236
        %v6238 = vsel %vm6231, %v6175, -inf
        %v6239 = vmax.f32 %v6235, %v6238
        %v6240 = vsel %vm6231, %v6177, -inf
        %v6241 = vmax.f32 %v6237, %v6240
        %v6242 = vsel %vm6231, %v6179, -inf
        %v6243 = vmax.f32 %v6239, %v6242
        %v6244 = vsel %vm6231, %v6181, -inf
        %v6245 = vmax.f32 %v6241, %v6244
        %v6246 = vsel %vm6231, %v6183, -inf
        %v6247 = vmax.f32 %v6243, %v6246
        %v6248 = vsel %vm6231, %v6185, -inf
        %v6249 = vmax.f32 %v6245, %v6248
        %v6250 = vsel %vm6231, %v6187, -inf
        %v6251 = vmax.f32 %v6247, %v6250
        %v6252 = vsel %vm6231, %v6189, -inf
        %v6253 = vmax.f32 %v6249, %v6252
        %v6254 = vsel %vm6231, %v6191, -inf
        %v6255 = vmax.f32 %v6251, %v6254
        %v6256 = vsel %vm6231, %v6193, -inf
        %v6257 = vmax.f32 %v6253, %v6256
        %v6258 = vsel %vm6231, %v6195, -inf
        %v6259 = vmax.f32 %v6255, %v6258
        %v6260 = vsel %vm6231, %v6197, -inf
        %v6261 = vmax.f32 %v6257, %v6260
        %v6262 = vsel %vm6231, %v6199, -inf
        %v6263 = vmax.f32 %v6259, %v6262
        %v6264 = vsel %vm6231, %v6201, -inf
        %v6265 = vmax.f32 %v6261, %v6264
        %v6266 = vsel %vm6231, %v6203, -inf
        %v6267 = vmax.f32 %v6263, %v6266
        %v6268 = vsel %vm6231, %v6205, -inf
        %v6269 = vmax.f32 %v6265, %v6268
        %v6270 = vsel %vm6231, %v6207, -inf
        %v6271 = vmax.f32 %v6267, %v6270
        %v6272 = vsel %vm6231, %v6209, -inf
        %v6273 = vmax.f32 %v6269, %v6272
        %v6274 = vsel %vm6231, %v6211, -inf
        %v6275 = vmax.f32 %v6271, %v6274
        %v6276 = vsel %vm6231, %v6213, -inf
        %v6277 = vmax.f32 %v6273, %v6276
        %v6278 = vsel %vm6231, %v6215, -inf
        %v6279 = vmax.f32 %v6275, %v6278
        %v6280 = vsel %vm6231, %v6217, -inf
        %v6281 = vmax.f32 %v6277, %v6280
        %v6282 = vsel %vm6231, %v6219, -inf
        %v6283 = vmax.f32 %v6279, %v6282
        %v6284 = vsel %vm6231, %v6221, -inf
        %v6285 = vmax.f32 %v6281, %v6284
        %v6286 = vsel %vm6231, %v6223, -inf
        %v6287 = vmax.f32 %v6283, %v6286
        %v6288 = vsel %vm6231, %v6225, -inf
        %v6289 = vmax.f32 %v6285, %v6288
        %v6290 = vsel %vm6231, %v6227, -inf
        %v6291 = vmax.f32 %v6287, %v6290
        %v6292 = vsel %vm6231, %v6229, -inf
        %v6293 = vmax.f32 %v6289, %v6292
        %v6294 = vmax.f32 %v6291, %v6293
        %v6295 = vsel %vm6231, %v6168, -inf
        %v6296 = vsel %vm6231, %v6170, -inf
        %v6297 = vsel %vm6231, %v6172, -inf
        %v6298 = vmax.f32 %v6295, %v6297
        %v6299 = vsel %vm6231, %v6174, -inf
        %v6300 = vmax.f32 %v6296, %v6299
        %v6301 = vsel %vm6231, %v6176, -inf
        %v6302 = vmax.f32 %v6298, %v6301
        %v6303 = vsel %vm6231, %v6178, -inf
        %v6304 = vmax.f32 %v6300, %v6303
        %v6305 = vsel %vm6231, %v6180, -inf
        %v6306 = vmax.f32 %v6302, %v6305
        %v6307 = vsel %vm6231, %v6182, -inf
        %v6308 = vmax.f32 %v6304, %v6307
        %v6309 = vsel %vm6231, %v6184, -inf
        %v6310 = vmax.f32 %v6306, %v6309
        %v6311 = vsel %vm6231, %v6186, -inf
        %v6312 = vmax.f32 %v6308, %v6311
        %v6313 = vsel %vm6231, %v6188, -inf
        %v6314 = vmax.f32 %v6310, %v6313
        %v6315 = vsel %vm6231, %v6190, -inf
        %v6316 = vmax.f32 %v6312, %v6315
        %v6317 = vsel %vm6231, %v6192, -inf
        %v6318 = vmax.f32 %v6314, %v6317
        %v6319 = vsel %vm6231, %v6194, -inf
        %v6320 = vmax.f32 %v6316, %v6319
        %v6321 = vsel %vm6231, %v6196, -inf
        %v6322 = vmax.f32 %v6318, %v6321
        %v6323 = vsel %vm6231, %v6198, -inf
        %v6324 = vmax.f32 %v6320, %v6323
        %v6325 = vsel %vm6231, %v6200, -inf
        %v6326 = vmax.f32 %v6322, %v6325
        %v6327 = vsel %vm6231, %v6202, -inf
        %v6328 = vmax.f32 %v6324, %v6327
        %v6329 = vsel %vm6231, %v6204, -inf
        %v6330 = vmax.f32 %v6326, %v6329
        %v6331 = vsel %vm6231, %v6206, -inf
        %v6332 = vmax.f32 %v6328, %v6331
        %v6333 = vsel %vm6231, %v6208, -inf
        %v6334 = vmax.f32 %v6330, %v6333
        %v6335 = vsel %vm6231, %v6210, -inf
        %v6336 = vmax.f32 %v6332, %v6335
        %v6337 = vsel %vm6231, %v6212, -inf
        %v6338 = vmax.f32 %v6334, %v6337
        %v6339 = vsel %vm6231, %v6214, -inf
        %v6340 = vmax.f32 %v6336, %v6339
        %v6341 = vsel %vm6231, %v6216, -inf
        %v6342 = vmax.f32 %v6338, %v6341
        %v6343 = vsel %vm6231, %v6218, -inf
        %v6344 = vmax.f32 %v6340, %v6343
        %v6345 = vsel %vm6231, %v6220, -inf
        %v6346 = vmax.f32 %v6342, %v6345
        %v6347 = vsel %vm6231, %v6222, -inf
        %v6348 = vmax.f32 %v6344, %v6347
        %v6349 = vsel %vm6231, %v6224, -inf
        %v6350 = vmax.f32 %v6346, %v6349
        %v6351 = vsel %vm6231, %v6226, -inf
        %v6352 = vmax.f32 %v6348, %v6351
        %v6353 = vsel %vm6231, %v6228, -inf
        %v6354 = vmax.f32 %v6350, %v6353
        %v6355 = vsel %vm6231, %v6230, -inf
        %v6356 = vmax.f32 %v6352, %v6355
        %v6357 = vmax.f32 %v6354, %v6356
        %v6358 = vlaneseq
        %v6359 = vshrl.u32 %v6358, 7
        %v6360 = vsub.s32 0, %v6359
        %v6361 = vrot.slane %v6294, %v6360
        %v6362 = vlaneseq
        %v6363 = vshrl.u32 %v6362, 7
        %v6364 = vsub.s32 0, %v6363
        %v6365 = vrot.slane %v6357, %v6364
        %v6366 = vsub.f32 %v6167, %v6361
        %v6367 = vsub.f32 %v6168, %v6365
        %v6368 = vsub.f32 %v6169, %v6361
        %v6369 = vsub.f32 %v6170, %v6365
        %v6370 = vsub.f32 %v6171, %v6361
        %v6371 = vsub.f32 %v6172, %v6365
        %v6372 = vsub.f32 %v6173, %v6361
        %v6373 = vsub.f32 %v6174, %v6365
        %v6374 = vsub.f32 %v6175, %v6361
        %v6375 = vsub.f32 %v6176, %v6365
        %v6376 = vsub.f32 %v6177, %v6361
        %v6377 = vsub.f32 %v6178, %v6365
        %v6378 = vsub.f32 %v6179, %v6361
        %v6379 = vsub.f32 %v6180, %v6365
        %v6380 = vsub.f32 %v6181, %v6361
        %v6381 = vsub.f32 %v6182, %v6365
        %v6382 = vsub.f32 %v6183, %v6361
        %v6383 = vsub.f32 %v6184, %v6365
        %v6384 = vsub.f32 %v6185, %v6361
        %v6385 = vsub.f32 %v6186, %v6365
        %v6386 = vsub.f32 %v6187, %v6361
        %v6387 = vsub.f32 %v6188, %v6365
        %v6388 = vsub.f32 %v6189, %v6361
        %v6389 = vsub.f32 %v6190, %v6365
        %v6390 = vsub.f32 %v6191, %v6361
        %v6391 = vsub.f32 %v6192, %v6365
        %v6392 = vsub.f32 %v6193, %v6361
        %v6393 = vsub.f32 %v6194, %v6365
        %v6394 = vsub.f32 %v6195, %v6361
        %v6395 = vsub.f32 %v6196, %v6365
        %v6396 = vsub.f32 %v6197, %v6361
        %v6397 = vsub.f32 %v6198, %v6365
        %v6398 = vsub.f32 %v6199, %v6361
        %v6399 = vsub.f32 %v6200, %v6365
        %v6400 = vsub.f32 %v6201, %v6361
        %v6401 = vsub.f32 %v6202, %v6365
        %v6402 = vsub.f32 %v6203, %v6361
        %v6403 = vsub.f32 %v6204, %v6365
        %v6404 = vsub.f32 %v6205, %v6361
        %v6405 = vsub.f32 %v6206, %v6365
        %v6406 = vsub.f32 %v6207, %v6361
        %v6407 = vsub.f32 %v6208, %v6365
        %v6408 = vsub.f32 %v6209, %v6361
        %v6409 = vsub.f32 %v6210, %v6365
        %v6410 = vsub.f32 %v6211, %v6361
        %v6411 = vsub.f32 %v6212, %v6365
        %v6412 = vsub.f32 %v6213, %v6361
        %v6413 = vsub.f32 %v6214, %v6365
        %v6414 = vsub.f32 %v6215, %v6361
        %v6415 = vsub.f32 %v6216, %v6365
        %v6416 = vsub.f32 %v6217, %v6361
        %v6417 = vsub.f32 %v6218, %v6365
        %v6418 = vsub.f32 %v6219, %v6361
        %v6419 = vsub.f32 %v6220, %v6365
        %v6420 = vsub.f32 %v6221, %v6361
        %v6421 = vsub.f32 %v6222, %v6365
        %v6422 = vsub.f32 %v6223, %v6361
        %v6423 = vsub.f32 %v6224, %v6365
        %v6424 = vsub.f32 %v6225, %v6361
        %v6425 = vsub.f32 %v6226, %v6365
        %v6426 = vsub.f32 %v6227, %v6361
        %v6427 = vsub.f32 %v6228, %v6365
        %v6428 = vsub.f32 %v6229, %v6361
        %v6429 = vsub.f32 %v6230, %v6365
        %v6430 = vmul.f32 %v6366, 1.442695
        %v6431 = vpow.pop %v6430
        %v6432 = vmul.f32 %v6367, 1.442695
        %v6433 = vpow.pop %v6432
        %v6434 = vmul.f32 %v6368, 1.442695
        %v6435 = vpow.pop %v6434
        %v6436 = vmul.f32 %v6369, 1.442695
        %v6437 = vpow.pop %v6436
        %v6438 = vmul.f32 %v6370, 1.442695
        %v6439 = vpow.pop %v6438
        %v6440 = vmul.f32 %v6371, 1.442695
        %v6441 = vpow.pop %v6440
        %v6442 = vmul.f32 %v6372, 1.442695
        %v6443 = vpow.pop %v6442
        %v6444 = vmul.f32 %v6373, 1.442695
        %v6445 = vpow.pop %v6444
        %v6446 = vmul.f32 %v6374, 1.442695
        %v6447 = vpow.pop %v6446
        %v6448 = vmul.f32 %v6375, 1.442695
        %v6449 = vpow.pop %v6448
        %v6450 = vmul.f32 %v6376, 1.442695
        %v6451 = vpow.pop %v6450
        %v6452 = vmul.f32 %v6377, 1.442695
        %v6453 = vpow.pop %v6452
        %v6454 = vmul.f32 %v6378, 1.442695
        %v6455 = vpow.pop %v6454
        %v6456 = vmul.f32 %v6379, 1.442695
        %v6457 = vpow.pop %v6456
        %v6458 = vmul.f32 %v6380, 1.442695
        %v6459 = vpow.pop %v6458
        %v6460 = vmul.f32 %v6381, 1.442695
        %v6461 = vpow.pop %v6460
        %v6462 = vmul.f32 %v6382, 1.442695
        %v6463 = vpow.pop %v6462
        %v6464 = vmul.f32 %v6383, 1.442695
        %v6465 = vpow.pop %v6464
        %v6466 = vmul.f32 %v6384, 1.442695
        %v6467 = vpow.pop %v6466
        %v6468 = vmul.f32 %v6385, 1.442695
        %v6469 = vpow.pop %v6468
        %v6470 = vmul.f32 %v6386, 1.442695
        %v6471 = vpow.pop %v6470
        %v6472 = vmul.f32 %v6387, 1.442695
        %v6473 = vpow.pop %v6472
        %v6474 = vmul.f32 %v6388, 1.442695
        %v6475 = vpow.pop %v6474
        %v6476 = vmul.f32 %v6389, 1.442695
        %v6477 = vpow.pop %v6476
        %v6478 = vmul.f32 %v6390, 1.442695
        %v6479 = vpow.pop %v6478
        %v6480 = vmul.f32 %v6391, 1.442695
        %v6481 = vpow.pop %v6480
        %v6482 = vmul.f32 %v6392, 1.442695
        %v6483 = vpow.pop %v6482
        %v6484 = vmul.f32 %v6393, 1.442695
        %v6485 = vpow.pop %v6484
        %v6486 = vmul.f32 %v6394, 1.442695
        %v6487 = vpow.pop %v6486
        %v6488 = vmul.f32 %v6395, 1.442695
        %v6489 = vpow.pop %v6488
        %v6490 = vmul.f32 %v6396, 1.442695
        %v6491 = vpow.pop %v6490
        %v6492 = vmul.f32 %v6397, 1.442695
        %v6493 = vpow.pop %v6492
        %v6494 = vmul.f32 %v6398, 1.442695
        %v6495 = vpow.pop %v6494
        %v6496 = vmul.f32 %v6399, 1.442695
        %v6497 = vpow.pop %v6496
        %v6498 = vmul.f32 %v6400, 1.442695
        %v6499 = vpow.pop %v6498
        %v6500 = vmul.f32 %v6401, 1.442695
        %v6501 = vpow.pop %v6500
        %v6502 = vmul.f32 %v6402, 1.442695
        %v6503 = vpow.pop %v6502
        %v6504 = vmul.f32 %v6403, 1.442695
        %v6505 = vpow.pop %v6504
        %v6506 = vmul.f32 %v6404, 1.442695
        %v6507 = vpow.pop %v6506
        %v6508 = vmul.f32 %v6405, 1.442695
        %v6509 = vpow.pop %v6508
        %v6510 = vmul.f32 %v6406, 1.442695
        %v6511 = vpow.pop %v6510
        %v6512 = vmul.f32 %v6407, 1.442695
        %v6513 = vpow.pop %v6512
        %v6514 = vmul.f32 %v6408, 1.442695
        %v6515 = vpow.pop %v6514
        %v6516 = vmul.f32 %v6409, 1.442695
        %v6517 = vpow.pop %v6516
        %v6518 = vmul.f32 %v6410, 1.442695
        %v6519 = vpow.pop %v6518
        %v6520 = vmul.f32 %v6411, 1.442695
        %v6521 = vpow.pop %v6520
        %v6522 = vmul.f32 %v6412, 1.442695
        %v6523 = vpow.pop %v6522
        %v6524 = vmul.f32 %v6413, 1.442695
        %v6525 = vpow.pop %v6524
        %v6526 = vmul.f32 %v6414, 1.442695
        %v6527 = vpow.pop %v6526
        %v6528 = vmul.f32 %v6415, 1.442695
        %v6529 = vpow.pop %v6528
        %v6530 = vmul.f32 %v6416, 1.442695
        %v6531 = vpow.pop %v6530
        %v6532 = vmul.f32 %v6417, 1.442695
        %v6533 = vpow.pop %v6532
        %v6534 = vmul.f32 %v6418, 1.442695
        %v6535 = vpow.pop %v6534
        %v6536 = vmul.f32 %v6419, 1.442695
        %v6537 = vpow.pop %v6536
        %v6538 = vmul.f32 %v6420, 1.442695
        %v6539 = vpow.pop %v6538
        %v6540 = vmul.f32 %v6421, 1.442695
        %v6541 = vpow.pop %v6540
        %v6542 = vmul.f32 %v6422, 1.442695
        %v6543 = vpow.pop %v6542
        %v6544 = vmul.f32 %v6423, 1.442695
        %v6545 = vpow.pop %v6544
        %v6546 = vmul.f32 %v6424, 1.442695
        %v6547 = vpow.pop %v6546
        %v6548 = vmul.f32 %v6425, 1.442695
        %v6549 = vpow.pop %v6548
        %v6550 = vmul.f32 %v6426, 1.442695
        %v6551 = vpow.pop %v6550
        %v6552 = vmul.f32 %v6427, 1.442695
        %v6553 = vpow.pop %v6552
        %v6554 = vmul.f32 %v6428, 1.442695
        %v6555 = vpow.pop %v6554
        %v6556 = vmul.f32 %v6429, 1.442695
        %v6557 = vpow.pop %v6556
        %v6622 = vrot.slane %v6435, 7
        %vm6623 = vcmask 1041409
        %v6624 = vsel %vm6623, %v6622, %v6431
        %v6625 = vrot.slane %v6439, 6
        %vm6626 = vcmask 1042434
        %v6627 = vsel %vm6626, %v6625, %v6624
        %v6628 = vrot.slane %v6443, 5
        %vm6629 = vcmask 1043459
        %v6630 = vsel %vm6629, %v6628, %v6627
        %v6631 = vrot.slane %v6447, 4
        %vm6632 = vcmask 1044484
        %v6633 = vsel %vm6632, %v6631, %v6630
        %v6634 = vrot.slane %v6451, 3
        %vm6635 = vcmask 1045509
        %v6636 = vsel %vm6635, %v6634, %v6633
        %v6637 = vrot.slane %v6455, 2
        %vm6638 = vcmask 1046534
        %v6639 = vsel %vm6638, %v6637, %v6636
        %v6640 = vrot.slane %v6459, 1
        %vm6641 = vcmask 1047559
        %v6642 = vsel %vm6641, %v6640, %v6639
        %v6643 = vrot.slane %v6437, 7
        %v6644 = vsel %vm6623, %v6643, %v6433
        %v6645 = vrot.slane %v6441, 6
        %v6646 = vsel %vm6626, %v6645, %v6644
        %v6647 = vrot.slane %v6445, 5
        %v6648 = vsel %vm6629, %v6647, %v6646
        %v6649 = vrot.slane %v6449, 4
        %v6650 = vsel %vm6632, %v6649, %v6648
        %v6651 = vrot.slane %v6453, 3
        %v6652 = vsel %vm6635, %v6651, %v6650
        %v6653 = vrot.slane %v6457, 2
        %v6654 = vsel %vm6638, %v6653, %v6652
        %v6655 = vrot.slane %v6461, 1
        %v6656 = vsel %vm6641, %v6655, %v6654
        %v6657 = vrot.slane %v6467, 7
        %v6658 = vsel %vm6623, %v6657, %v6463
        %v6659 = vrot.slane %v6471, 6
        %v6660 = vsel %vm6626, %v6659, %v6658
        %v6661 = vrot.slane %v6475, 5
        %v6662 = vsel %vm6629, %v6661, %v6660
        %v6663 = vrot.slane %v6479, 4
        %v6664 = vsel %vm6632, %v6663, %v6662
        %v6665 = vrot.slane %v6483, 3
        %v6666 = vsel %vm6635, %v6665, %v6664
        %v6667 = vrot.slane %v6487, 2
        %v6668 = vsel %vm6638, %v6667, %v6666
        %v6669 = vrot.slane %v6491, 1
        %v6670 = vsel %vm6641, %v6669, %v6668
        %v6671 = vrot.slane %v6469, 7
        %v6672 = vsel %vm6623, %v6671, %v6465
        %v6673 = vrot.slane %v6473, 6
        %v6674 = vsel %vm6626, %v6673, %v6672
        %v6675 = vrot.slane %v6477, 5
        %v6676 = vsel %vm6629, %v6675, %v6674
        %v6677 = vrot.slane %v6481, 4
        %v6678 = vsel %vm6632, %v6677, %v6676
        %v6679 = vrot.slane %v6485, 3
        %v6680 = vsel %vm6635, %v6679, %v6678
        %v6681 = vrot.slane %v6489, 2
        %v6682 = vsel %vm6638, %v6681, %v6680
        %v6683 = vrot.slane %v6493, 1
        %v6684 = vsel %vm6641, %v6683, %v6682
        %v6685 = vrot.slane %v6499, 7
        %v6686 = vsel %vm6623, %v6685, %v6495
        %v6687 = vrot.slane %v6503, 6
        %v6688 = vsel %vm6626, %v6687, %v6686
        %v6689 = vrot.slane %v6507, 5
        %v6690 = vsel %vm6629, %v6689, %v6688
        %v6691 = vrot.slane %v6511, 4
        %v6692 = vsel %vm6632, %v6691, %v6690
        %v6693 = vrot.slane %v6515, 3
        %v6694 = vsel %vm6635, %v6693, %v6692
        %v6695 = vrot.slane %v6519, 2
        %v6696 = vsel %vm6638, %v6695, %v6694
        %v6697 = vrot.slane %v6523, 1
        %v6698 = vsel %vm6641, %v6697, %v6696
        %v6699 = vrot.slane %v6501, 7
        %v6700 = vsel %vm6623, %v6699, %v6497
        %v6701 = vrot.slane %v6505, 6
        %v6702 = vsel %vm6626, %v6701, %v6700
        %v6703 = vrot.slane %v6509, 5
        %v6704 = vsel %vm6629, %v6703, %v6702
        %v6705 = vrot.slane %v6513, 4
        %v6706 = vsel %vm6632, %v6705, %v6704
        %v6707 = vrot.slane %v6517, 3
        %v6708 = vsel %vm6635, %v6707, %v6706
        %v6709 = vrot.slane %v6521, 2
        %v6710 = vsel %vm6638, %v6709, %v6708
        %v6711 = vrot.slane %v6525, 1
        %v6712 = vsel %vm6641, %v6711, %v6710
        %v6713 = vrot.slane %v6531, 7
        %v6714 = vsel %vm6623, %v6713, %v6527
        %v6715 = vrot.slane %v6535, 6
        %v6716 = vsel %vm6626, %v6715, %v6714
        %v6717 = vrot.slane %v6539, 5
        %v6718 = vsel %vm6629, %v6717, %v6716
        %v6719 = vrot.slane %v6543, 4
        %v6720 = vsel %vm6632, %v6719, %v6718
        %v6721 = vrot.slane %v6547, 3
        %v6722 = vsel %vm6635, %v6721, %v6720
        %v6723 = vrot.slane %v6551, 2
        %v6724 = vsel %vm6638, %v6723, %v6722
        %v6725 = vrot.slane %v6555, 1
        %v6726 = vsel %vm6641, %v6725, %v6724
        %v6727 = vrot.slane %v6533, 7
        %v6728 = vsel %vm6623, %v6727, %v6529
        %v6729 = vrot.slane %v6537, 6
        %v6730 = vsel %vm6626, %v6729, %v6728
        %v6731 = vrot.slane %v6541, 5
        %v6732 = vsel %vm6629, %v6731, %v6730
        %v6733 = vrot.slane %v6545, 4
        %v6734 = vsel %vm6632, %v6733, %v6732
        %v6735 = vrot.slane %v6549, 3
        %v6736 = vsel %vm6635, %v6735, %v6734
        %v6737 = vrot.slane %v6553, 2
        %v6738 = vsel %vm6638, %v6737, %v6736
        %v6739 = vrot.slane %v6557, 1
        %v6740 = vsel %vm6641, %v6739, %v6738
        %v6749 = vadd.f32 %v6642, %v6670
        %v6750 = vadd.f32 %v6749, %v6698
        %v6751 = vadd.f32 %v6750, %v6726
        %v6752 = vrot.slane %v6751, 4
        %v6753 = vadd.f32 %v6751, %v6752
        %v6754 = vrot.slane %v6753, 2
        %v6755 = vadd.f32 %v6753, %v6754
        %v6756 = vrot.slane %v6755, 1
        %v6757 = vadd.f32 %v6755, %v6756
        %v6758 = vadd.f32 %v6656, %v6684
        %v6759 = vadd.f32 %v6758, %v6712
        %v6760 = vadd.f32 %v6759, %v6740
        %v6761 = vrot.slane %v6760, 4
        %v6762 = vadd.f32 %v6760, %v6761
        %v6763 = vrot.slane %v6762, 2
        %v6764 = vadd.f32 %v6762, %v6763
        %v6765 = vrot.slane %v6764, 1
        %v6766 = vadd.f32 %v6764, %v6765
        %v6767 = vrcp.pop %v6757
        %v6768 = vrcp.pop %v6766
        %v6769 = vlaneseq
        %v6770 = vshrl.u32 %v6769, 7
        %v6771 = vsub.s32 0, %v6770
        %v6772 = vrot.slane %v6767, %v6771
        %v6773 = vlaneseq
        %v6774 = vshrl.u32 %v6773, 7
        %v6775 = vsub.s32 0, %v6774
        %v6776 = vrot.slane %v6768, %v6775
        %v6777 = vmul.f32 %v6431, %v6772
        %v6778 = vmul.f32 %v6433, %v6776
        %v6779 = vmul.f32 %v6435, %v6772
        %v6780 = vmul.f32 %v6437, %v6776
        %v6781 = vmul.f32 %v6439, %v6772
        %v6782 = vmul.f32 %v6441, %v6776
        %v6783 = vmul.f32 %v6443, %v6772
        %v6784 = vmul.f32 %v6445, %v6776
        %v6785 = vmul.f32 %v6447, %v6772
        %v6786 = vmul.f32 %v6449, %v6776
        %v6787 = vmul.f32 %v6451, %v6772
        %v6788 = vmul.f32 %v6453, %v6776
        %v6789 = vmul.f32 %v6455, %v6772
        %v6790 = vmul.f32 %v6457, %v6776
        %v6791 = vmul.f32 %v6459, %v6772
        %v6792 = vmul.f32 %v6461, %v6776
        %v6793 = vmul.f32 %v6463, %v6772
        %v6794 = vmul.f32 %v6465, %v6776
        %v6795 = vmul.f32 %v6467, %v6772
        %v6796 = vmul.f32 %v6469, %v6776
        %v6797 = vmul.f32 %v6471, %v6772
        %v6798 = vmul.f32 %v6473, %v6776
        %v6799 = vmul.f32 %v6475, %v6772
        %v6800 = vmul.f32 %v6477, %v6776
        %v6801 = vmul.f32 %v6479, %v6772
        %v6802 = vmul.f32 %v6481, %v6776
        %v6803 = vmul.f32 %v6483, %v6772
        %v6804 = vmul.f32 %v6485, %v6776
        %v6805 = vmul.f32 %v6487, %v6772
        %v6806 = vmul.f32 %v6489, %v6776
        %v6807 = vmul.f32 %v6491, %v6772
        %v6808 = vmul.f32 %v6493, %v6776
        %v6809 = vmul.f32 %v6495, %v6772
        %v6810 = vmul.f32 %v6497, %v6776
        %v6811 = vmul.f32 %v6499, %v6772
        %v6812 = vmul.f32 %v6501, %v6776
        %v6813 = vmul.f32 %v6503, %v6772
        %v6814 = vmul.f32 %v6505, %v6776
        %v6815 = vmul.f32 %v6507, %v6772
        %v6816 = vmul.f32 %v6509, %v6776
        %v6817 = vmul.f32 %v6511, %v6772
        %v6818 = vmul.f32 %v6513, %v6776
        %v6819 = vmul.f32 %v6515, %v6772
        %v6820 = vmul.f32 %v6517, %v6776
        %v6821 = vmul.f32 %v6519, %v6772
        %v6822 = vmul.f32 %v6521, %v6776
        %v6823 = vmul.f32 %v6523, %v6772
        %v6824 = vmul.f32 %v6525, %v6776
        %v6825 = vmul.f32 %v6527, %v6772
        %v6826 = vmul.f32 %v6529, %v6776
        %v6827 = vmul.f32 %v6531, %v6772
        %v6828 = vmul.f32 %v6533, %v6776
        %v6829 = vmul.f32 %v6535, %v6772
        %v6830 = vmul.f32 %v6537, %v6776
        %v6831 = vmul.f32 %v6539, %v6772
        %v6832 = vmul.f32 %v6541, %v6776
        %v6833 = vmul.f32 %v6543, %v6772
        %v6834 = vmul.f32 %v6545, %v6776
        %v6835 = vmul.f32 %v6547, %v6772
        %v6836 = vmul.f32 %v6549, %v6776
        %v6837 = vmul.f32 %v6551, %v6772
        %v6838 = vmul.f32 %v6553, %v6776
        %v6839 = vmul.f32 %v6555, %v6772
        %v6840 = vmul.f32 %v6557, %v6776
        %v6905 = vrot.slane %v6779, 7
        %v6906 = vsel %vm6623, %v6905, %v6777
        %v6907 = vrot.slane %v6781, 6
        %v6908 = vsel %vm6626, %v6907, %v6906
        %v6909 = vrot.slane %v6783, 5
        %v6910 = vsel %vm6629, %v6909, %v6908
        %v6911 = vrot.slane %v6785, 4
        %v6912 = vsel %vm6632, %v6911, %v6910
        %v6913 = vrot.slane %v6787, 3
        %v6914 = vsel %vm6635, %v6913, %v6912
        %v6915 = vrot.slane %v6789, 2
        %v6916 = vsel %vm6638, %v6915, %v6914
        %v6917 = vrot.slane %v6791, 1
        %v6918 = vsel %vm6641, %v6917, %v6916
        %v6919 = vrot.slane %v6780, 7
        %v6920 = vsel %vm6623, %v6919, %v6778
        %v6921 = vrot.slane %v6782, 6
        %v6922 = vsel %vm6626, %v6921, %v6920
        %v6923 = vrot.slane %v6784, 5
        %v6924 = vsel %vm6629, %v6923, %v6922
        %v6925 = vrot.slane %v6786, 4
        %v6926 = vsel %vm6632, %v6925, %v6924
        %v6927 = vrot.slane %v6788, 3
        %v6928 = vsel %vm6635, %v6927, %v6926
        %v6929 = vrot.slane %v6790, 2
        %v6930 = vsel %vm6638, %v6929, %v6928
        %v6931 = vrot.slane %v6792, 1
        %v6932 = vsel %vm6641, %v6931, %v6930
        %v6933 = vrot.slane %v6795, 7
        %v6934 = vsel %vm6623, %v6933, %v6793
        %v6935 = vrot.slane %v6797, 6
        %v6936 = vsel %vm6626, %v6935, %v6934
        %v6937 = vrot.slane %v6799, 5
        %v6938 = vsel %vm6629, %v6937, %v6936
        %v6939 = vrot.slane %v6801, 4
        %v6940 = vsel %vm6632, %v6939, %v6938
        %v6941 = vrot.slane %v6803, 3
        %v6942 = vsel %vm6635, %v6941, %v6940
        %v6943 = vrot.slane %v6805, 2
        %v6944 = vsel %vm6638, %v6943, %v6942
        %v6945 = vrot.slane %v6807, 1
        %v6946 = vsel %vm6641, %v6945, %v6944
        %v6947 = vrot.slane %v6796, 7
        %v6948 = vsel %vm6623, %v6947, %v6794
        %v6949 = vrot.slane %v6798, 6
        %v6950 = vsel %vm6626, %v6949, %v6948
        %v6951 = vrot.slane %v6800, 5
        %v6952 = vsel %vm6629, %v6951, %v6950
        %v6953 = vrot.slane %v6802, 4
        %v6954 = vsel %vm6632, %v6953, %v6952
        %v6955 = vrot.slane %v6804, 3
        %v6956 = vsel %vm6635, %v6955, %v6954
        %v6957 = vrot.slane %v6806, 2
        %v6958 = vsel %vm6638, %v6957, %v6956
        %v6959 = vrot.slane %v6808, 1
        %v6960 = vsel %vm6641, %v6959, %v6958
        %v6961 = vrot.slane %v6811, 7
        %v6962 = vsel %vm6623, %v6961, %v6809
        %v6963 = vrot.slane %v6813, 6
        %v6964 = vsel %vm6626, %v6963, %v6962
        %v6965 = vrot.slane %v6815, 5
        %v6966 = vsel %vm6629, %v6965, %v6964
        %v6967 = vrot.slane %v6817, 4
        %v6968 = vsel %vm6632, %v6967, %v6966
        %v6969 = vrot.slane %v6819, 3
        %v6970 = vsel %vm6635, %v6969, %v6968
        %v6971 = vrot.slane %v6821, 2
        %v6972 = vsel %vm6638, %v6971, %v6970
        %v6973 = vrot.slane %v6823, 1
        %v6974 = vsel %vm6641, %v6973, %v6972
        %v6975 = vrot.slane %v6812, 7
        %v6976 = vsel %vm6623, %v6975, %v6810
        %v6977 = vrot.slane %v6814, 6
        %v6978 = vsel %vm6626, %v6977, %v6976
        %v6979 = vrot.slane %v6816, 5
        %v6980 = vsel %vm6629, %v6979, %v6978
        %v6981 = vrot.slane %v6818, 4
        %v6982 = vsel %vm6632, %v6981, %v6980
        %v6983 = vrot.slane %v6820, 3
        %v6984 = vsel %vm6635, %v6983, %v6982
        %v6985 = vrot.slane %v6822, 2
        %v6986 = vsel %vm6638, %v6985, %v6984
        %v6987 = vrot.slane %v6824, 1
        %v6988 = vsel %vm6641, %v6987, %v6986
        %v6989 = vrot.slane %v6827, 7
        %v6990 = vsel %vm6623, %v6989, %v6825
        %v6991 = vrot.slane %v6829, 6
        %v6992 = vsel %vm6626, %v6991, %v6990
        %v6993 = vrot.slane %v6831, 5
        %v6994 = vsel %vm6629, %v6993, %v6992
        %v6995 = vrot.slane %v6833, 4
        %v6996 = vsel %vm6632, %v6995, %v6994
        %v6997 = vrot.slane %v6835, 3
        %v6998 = vsel %vm6635, %v6997, %v6996
        %v6999 = vrot.slane %v6837, 2
        %v7000 = vsel %vm6638, %v6999, %v6998
        %v7001 = vrot.slane %v6839, 1
        %v7002 = vsel %vm6641, %v7001, %v7000
        %v7003 = vrot.slane %v6828, 7
        %v7004 = vsel %vm6623, %v7003, %v6826
        %v7005 = vrot.slane %v6830, 6
        %v7006 = vsel %vm6626, %v7005, %v7004
        %v7007 = vrot.slane %v6832, 5
        %v7008 = vsel %vm6629, %v7007, %v7006
        %v7009 = vrot.slane %v6834, 4
        %v7010 = vsel %vm6632, %v7009, %v7008
        %v7011 = vrot.slane %v6836, 3
        %v7012 = vsel %vm6635, %v7011, %v7010
        %v7013 = vrot.slane %v6838, 2
        %v7014 = vsel %vm6638, %v7013, %v7012
        %v7015 = vrot.slane %v6840, 1
        %v7016 = vsel %vm6641, %v7015, %v7014
        %7025 = vxpose.xlu0.b32.start [1/16] %v6918, 128
        %7026 = vxpose.xlu0.b32.cont [2/16] %v6946, 128
        %7027 = vxpose.xlu0.b32.cont [3/16] %v6974, 128
        %7028 = vxpose.xlu0.b32.cont [4/16] %v7002, 128
        %7029 = vxpose.xlu0.b32.cont [5/16] 0.0, 128
        %7030 = vxpose.xlu0.b32.cont [6/16] 0.0, 128
        %7031 = vxpose.xlu0.b32.cont [7/16] 0.0, 128
        %7032 = vxpose.xlu0.b32.cont [8/16] 0.0, 128
        %7033 = vxpose.xlu0.b32.cont [9/16] 0.0, 128
        %7034 = vxpose.xlu0.b32.cont [10/16] 0.0, 128
        %7035 = vxpose.xlu0.b32.cont [11/16] 0.0, 128
        %7036 = vxpose.xlu0.b32.cont [12/16] 0.0, 128
        %7037 = vxpose.xlu0.b32.cont [13/16] 0.0, 128
        %7038 = vxpose.xlu0.b32.cont [14/16] 0.0, 128
        %7039 = vxpose.xlu0.b32.cont [15/16] 0.0, 128
        %7040 = vxpose.xlu0.b32.end [16/16] 0.0, 128
        %v7041 = vpop.trf.xlu0
        %v7042 = vpop.trf.xlu0
        %v7043 = vpop.trf.xlu0
        %v7044 = vpop.trf.xlu0
        %v7045 = vpop.trf.xlu0
        %v7046 = vpop.trf.xlu0
        %v7047 = vpop.trf.xlu0
        %v7048 = vpop.trf.xlu0
        %v7049 = vpop.trf.xlu0
        %v7050 = vpop.trf.xlu0
        %v7051 = vpop.trf.xlu0
        %v7052 = vpop.trf.xlu0
        %v7053 = vpop.trf.xlu0
        %v7054 = vpop.trf.xlu0
        %v7055 = vpop.trf.xlu0
        %v7056 = vpop.trf.xlu0
        %7057 = vxpose.xlu0.b32.start [1/16] %v6932, 128
        %7058 = vxpose.xlu0.b32.cont [2/16] %v6960, 128
        %7059 = vxpose.xlu0.b32.cont [3/16] %v6988, 128
        %7060 = vxpose.xlu0.b32.cont [4/16] %v7016, 128
        %7061 = vxpose.xlu0.b32.cont [5/16] 0.0, 128
        %7062 = vxpose.xlu0.b32.cont [6/16] 0.0, 128
        %7063 = vxpose.xlu0.b32.cont [7/16] 0.0, 128
        %7064 = vxpose.xlu0.b32.cont [8/16] 0.0, 128
        %7065 = vxpose.xlu0.b32.cont [9/16] 0.0, 128
        %7066 = vxpose.xlu0.b32.cont [10/16] 0.0, 128
        %7067 = vxpose.xlu0.b32.cont [11/16] 0.0, 128
        %7068 = vxpose.xlu0.b32.cont [12/16] 0.0, 128
        %7069 = vxpose.xlu0.b32.cont [13/16] 0.0, 128
        %7070 = vxpose.xlu0.b32.cont [14/16] 0.0, 128
        %7071 = vxpose.xlu0.b32.cont [15/16] 0.0, 128
        %7072 = vxpose.xlu0.b32.end [16/16] 0.0, 128
        %v7073 = vpop.trf.xlu0
        %v7074 = vpop.trf.xlu0
        %v7075 = vpop.trf.xlu0
        %v7076 = vpop.trf.xlu0
        %v7077 = vpop.trf.xlu0
        %v7078 = vpop.trf.xlu0
        %v7079 = vpop.trf.xlu0
        %v7080 = vpop.trf.xlu0
        %v7081 = vpop.trf.xlu0
        %v7082 = vpop.trf.xlu0
        %v7083 = vpop.trf.xlu0
        %v7084 = vpop.trf.xlu0
        %v7085 = vpop.trf.xlu0
        %v7086 = vpop.trf.xlu0
        %v7087 = vpop.trf.xlu0
        %v7088 = vpop.trf.xlu0
        %v7089 = vsel %vm653, %v7041, 0.0
        %v7090 = vrot.slane %v7089, 4
        %v7091 = vadd.f32 %v7089, %v7090
        %v7092 = vrot.slane %v7091, 2
        %v7093 = vadd.f32 %v7091, %v7092
        %v7094 = vrot.slane %v7093, 1
        %v7095 = vadd.f32 %v7093, %v7094
        %v7096 = vsel %vm653, %v7042, 0.0
        %v7097 = vrot.slane %v7096, 4
        %v7098 = vadd.f32 %v7096, %v7097
        %v7099 = vrot.slane %v7098, 2
        %v7100 = vadd.f32 %v7098, %v7099
        %v7101 = vrot.slane %v7100, 1
        %v7102 = vadd.f32 %v7100, %v7101
        %v7103 = vsel %vm653, %v7043, 0.0
        %v7104 = vrot.slane %v7103, 4
        %v7105 = vadd.f32 %v7103, %v7104
        %v7106 = vrot.slane %v7105, 2
        %v7107 = vadd.f32 %v7105, %v7106
        %v7108 = vrot.slane %v7107, 1
        %v7109 = vadd.f32 %v7107, %v7108
        %v7110 = vsel %vm653, %v7044, 0.0
        %v7111 = vrot.slane %v7110, 4
        %v7112 = vadd.f32 %v7110, %v7111
        %v7113 = vrot.slane %v7112, 2
        %v7114 = vadd.f32 %v7112, %v7113
        %v7115 = vrot.slane %v7114, 1
        %v7116 = vadd.f32 %v7114, %v7115
        %v7117 = vsel %vm653, %v7045, 0.0
        %v7118 = vrot.slane %v7117, 4
        %v7119 = vadd.f32 %v7117, %v7118
        %v7120 = vrot.slane %v7119, 2
        %v7121 = vadd.f32 %v7119, %v7120
        %v7122 = vrot.slane %v7121, 1
        %v7123 = vadd.f32 %v7121, %v7122
        %v7124 = vsel %vm653, %v7046, 0.0
        %v7125 = vrot.slane %v7124, 4
        %v7126 = vadd.f32 %v7124, %v7125
        %v7127 = vrot.slane %v7126, 2
        %v7128 = vadd.f32 %v7126, %v7127
        %v7129 = vrot.slane %v7128, 1
        %v7130 = vadd.f32 %v7128, %v7129
        %v7131 = vsel %vm653, %v7047, 0.0
        %v7132 = vrot.slane %v7131, 4
        %v7133 = vadd.f32 %v7131, %v7132
        %v7134 = vrot.slane %v7133, 2
        %v7135 = vadd.f32 %v7133, %v7134
        %v7136 = vrot.slane %v7135, 1
        %v7137 = vadd.f32 %v7135, %v7136
        %v7138 = vsel %vm653, %v7048, 0.0
        %v7139 = vrot.slane %v7138, 4
        %v7140 = vadd.f32 %v7138, %v7139
        %v7141 = vrot.slane %v7140, 2
        %v7142 = vadd.f32 %v7140, %v7141
        %v7143 = vrot.slane %v7142, 1
        %v7144 = vadd.f32 %v7142, %v7143
        %7146 = vbcast.lane.b32.xlu0 %v7095, 256
        %v7147 = vpop.permute.xlu0 %7146
        %s7149 = sor.u32 256, 8
        %7150 = vbcast.lane.b32.xlu0 %v7095, %s7149
        %v7151 = vpop.permute.xlu0 %7150
        %s7153 = sor.u32 256, 16
        %7154 = vbcast.lane.b32.xlu0 %v7095, %s7153
        %v7155 = vpop.permute.xlu0 %7154
        %s7157 = sor.u32 256, 24
        %7158 = vbcast.lane.b32.xlu0 %v7095, %s7157
        %v7159 = vpop.permute.xlu0 %7158
        %7161 = vbcast.lane.b32.xlu0 %v7102, 256
        %v7162 = vpop.permute.xlu0 %7161
        %s7164 = sor.u32 256, 8
        %7165 = vbcast.lane.b32.xlu0 %v7102, %s7164
        %v7166 = vpop.permute.xlu0 %7165
        %s7168 = sor.u32 256, 16
        %7169 = vbcast.lane.b32.xlu0 %v7102, %s7168
        %v7170 = vpop.permute.xlu0 %7169
        %s7172 = sor.u32 256, 24
        %7173 = vbcast.lane.b32.xlu0 %v7102, %s7172
        %v7174 = vpop.permute.xlu0 %7173
        %7176 = vbcast.lane.b32.xlu0 %v7109, 256
        %v7177 = vpop.permute.xlu0 %7176
        %s7179 = sor.u32 256, 8
        %7180 = vbcast.lane.b32.xlu0 %v7109, %s7179
        %v7181 = vpop.permute.xlu0 %7180
        %s7183 = sor.u32 256, 16
        %7184 = vbcast.lane.b32.xlu0 %v7109, %s7183
        %v7185 = vpop.permute.xlu0 %7184
        %s7187 = sor.u32 256, 24
        %7188 = vbcast.lane.b32.xlu0 %v7109, %s7187
        %v7189 = vpop.permute.xlu0 %7188
        %7191 = vbcast.lane.b32.xlu0 %v7116, 256
        %v7192 = vpop.permute.xlu0 %7191
        %s7194 = sor.u32 256, 8
        %7195 = vbcast.lane.b32.xlu0 %v7116, %s7194
        %v7196 = vpop.permute.xlu0 %7195
        %s7198 = sor.u32 256, 16
        %7199 = vbcast.lane.b32.xlu0 %v7116, %s7198
        %v7200 = vpop.permute.xlu0 %7199
        %s7202 = sor.u32 256, 24
        %7203 = vbcast.lane.b32.xlu0 %v7116, %s7202
        %v7204 = vpop.permute.xlu0 %7203
        %7206 = vbcast.lane.b32.xlu0 %v7123, 256
        %v7207 = vpop.permute.xlu0 %7206
        %s7209 = sor.u32 256, 8
        %7210 = vbcast.lane.b32.xlu0 %v7123, %s7209
        %v7211 = vpop.permute.xlu0 %7210
        %s7213 = sor.u32 256, 16
        %7214 = vbcast.lane.b32.xlu0 %v7123, %s7213
        %v7215 = vpop.permute.xlu0 %7214
        %s7217 = sor.u32 256, 24
        %7218 = vbcast.lane.b32.xlu0 %v7123, %s7217
        %v7219 = vpop.permute.xlu0 %7218
        %7221 = vbcast.lane.b32.xlu0 %v7130, 256
        %v7222 = vpop.permute.xlu0 %7221
        %s7224 = sor.u32 256, 8
        %7225 = vbcast.lane.b32.xlu0 %v7130, %s7224
        %v7226 = vpop.permute.xlu0 %7225
        %s7228 = sor.u32 256, 16
        %7229 = vbcast.lane.b32.xlu0 %v7130, %s7228
        %v7230 = vpop.permute.xlu0 %7229
        %s7232 = sor.u32 256, 24
        %7233 = vbcast.lane.b32.xlu0 %v7130, %s7232
        %v7234 = vpop.permute.xlu0 %7233
        %7236 = vbcast.lane.b32.xlu0 %v7137, 256
        %v7237 = vpop.permute.xlu0 %7236
        %s7239 = sor.u32 256, 8
        %7240 = vbcast.lane.b32.xlu0 %v7137, %s7239
        %v7241 = vpop.permute.xlu0 %7240
        %s7243 = sor.u32 256, 16
        %7244 = vbcast.lane.b32.xlu0 %v7137, %s7243
        %v7245 = vpop.permute.xlu0 %7244
        %s7247 = sor.u32 256, 24
        %7248 = vbcast.lane.b32.xlu0 %v7137, %s7247
        %v7249 = vpop.permute.xlu0 %7248
        %7251 = vbcast.lane.b32.xlu0 %v7144, 256
        %v7252 = vpop.permute.xlu0 %7251
        %s7254 = sor.u32 256, 8
        %7255 = vbcast.lane.b32.xlu0 %v7144, %s7254
        %v7256 = vpop.permute.xlu0 %7255
        %s7258 = sor.u32 256, 16
        %7259 = vbcast.lane.b32.xlu0 %v7144, %s7258
        %v7260 = vpop.permute.xlu0 %7259
        %s7262 = sor.u32 256, 24
        %7263 = vbcast.lane.b32.xlu0 %v7144, %s7262
        %v7264 = vpop.permute.xlu0 %7263
        %v7265 = vmul.f32 %v7147, %v1289
        %v7266 = vmul.f32 %v7151, %v1294
        %v7267 = vmul.f32 %v7155, %v1299
        %v7268 = vmul.f32 %v7159, %v1304
        %v7269 = vmul.f32 %v7162, %v1309
        %v7270 = vmul.f32 %v7166, %v1314
        %v7271 = vmul.f32 %v7170, %v1319
        %v7272 = vmul.f32 %v7174, %v1324
        %v7273 = vmul.f32 %v7177, %v1329
        %v7274 = vmul.f32 %v7181, %v1334
        %v7275 = vmul.f32 %v7185, %v1339
        %v7276 = vmul.f32 %v7189, %v1344
        %v7277 = vmul.f32 %v7192, %v1349
        %v7278 = vmul.f32 %v7196, %v1354
        %v7279 = vmul.f32 %v7200, %v1359
        %v7280 = vmul.f32 %v7204, %v1364
        %v7281 = vmul.f32 %v7207, %v1369
        %v7282 = vmul.f32 %v7211, %v1374
        %v7283 = vmul.f32 %v7215, %v1379
        %v7284 = vmul.f32 %v7219, %v1384
        %v7285 = vmul.f32 %v7222, %v1389
        %v7286 = vmul.f32 %v7226, %v1394
        %v7287 = vmul.f32 %v7230, %v1399
        %v7288 = vmul.f32 %v7234, %v1404
        %v7289 = vmul.f32 %v7237, %v1409
        %v7290 = vmul.f32 %v7241, %v1414
        %v7291 = vmul.f32 %v7245, %v1419
        %v7292 = vmul.f32 %v7249, %v1424
        %v7293 = vmul.f32 %v7252, %v1429
        %v7294 = vmul.f32 %v7256, %v1434
        %v7295 = vmul.f32 %v7260, %v1439
        %v7296 = vmul.f32 %v7264, %v1444
        %v7297 = vsel %vm1447, %v7265, 0.0
        %v7298 = vsel %vm1447, %v7266, 0.0
        %v7299 = vadd.f32 %v7297, %v7298
        %v7300 = vsel %vm1447, %v7267, 0.0
        %v7301 = vadd.f32 %v7299, %v7300
        %v7302 = vsel %vm1447, %v7268, 0.0
        %v7303 = vadd.f32 %v7301, %v7302
        %v7304 = vrot.slane %v7303, 4
        %v7305 = vadd.f32 %v7303, %v7304
        %v7306 = vrot.slane %v7305, 2
        %v7307 = vadd.f32 %v7305, %v7306
        %v7308 = vrot.slane %v7307, 1
        %v7309 = vadd.f32 %v7307, %v7308
        %v7310 = vsel %vm1447, %v7269, 0.0
        %v7311 = vsel %vm1447, %v7270, 0.0
        %v7312 = vadd.f32 %v7310, %v7311
        %v7313 = vsel %vm1447, %v7271, 0.0
        %v7314 = vadd.f32 %v7312, %v7313
        %v7315 = vsel %vm1447, %v7272, 0.0
        %v7316 = vadd.f32 %v7314, %v7315
        %v7317 = vrot.slane %v7316, 4
        %v7318 = vadd.f32 %v7316, %v7317
        %v7319 = vrot.slane %v7318, 2
        %v7320 = vadd.f32 %v7318, %v7319
        %v7321 = vrot.slane %v7320, 1
        %v7322 = vadd.f32 %v7320, %v7321
        %v7323 = vsel %vm1447, %v7273, 0.0
        %v7324 = vsel %vm1447, %v7274, 0.0
        %v7325 = vadd.f32 %v7323, %v7324
        %v7326 = vsel %vm1447, %v7275, 0.0
        %v7327 = vadd.f32 %v7325, %v7326
        %v7328 = vsel %vm1447, %v7276, 0.0
        %v7329 = vadd.f32 %v7327, %v7328
        %v7330 = vrot.slane %v7329, 4
        %v7331 = vadd.f32 %v7329, %v7330
        %v7332 = vrot.slane %v7331, 2
        %v7333 = vadd.f32 %v7331, %v7332
        %v7334 = vrot.slane %v7333, 1
        %v7335 = vadd.f32 %v7333, %v7334
        %v7336 = vsel %vm1447, %v7277, 0.0
        %v7337 = vsel %vm1447, %v7278, 0.0
        %v7338 = vadd.f32 %v7336, %v7337
        %v7339 = vsel %vm1447, %v7279, 0.0
        %v7340 = vadd.f32 %v7338, %v7339
        %v7341 = vsel %vm1447, %v7280, 0.0
        %v7342 = vadd.f32 %v7340, %v7341
        %v7343 = vrot.slane %v7342, 4
        %v7344 = vadd.f32 %v7342, %v7343
        %v7345 = vrot.slane %v7344, 2
        %v7346 = vadd.f32 %v7344, %v7345
        %v7347 = vrot.slane %v7346, 1
        %v7348 = vadd.f32 %v7346, %v7347
        %v7349 = vsel %vm1447, %v7281, 0.0
        %v7350 = vsel %vm1447, %v7282, 0.0
        %v7351 = vadd.f32 %v7349, %v7350
        %v7352 = vsel %vm1447, %v7283, 0.0
        %v7353 = vadd.f32 %v7351, %v7352
        %v7354 = vsel %vm1447, %v7284, 0.0
        %v7355 = vadd.f32 %v7353, %v7354
        %v7356 = vrot.slane %v7355, 4
        %v7357 = vadd.f32 %v7355, %v7356
        %v7358 = vrot.slane %v7357, 2
        %v7359 = vadd.f32 %v7357, %v7358
        %v7360 = vrot.slane %v7359, 1
        %v7361 = vadd.f32 %v7359, %v7360
        %v7362 = vsel %vm1447, %v7285, 0.0
        %v7363 = vsel %vm1447, %v7286, 0.0
        %v7364 = vadd.f32 %v7362, %v7363
        %v7365 = vsel %vm1447, %v7287, 0.0
        %v7366 = vadd.f32 %v7364, %v7365
        %v7367 = vsel %vm1447, %v7288, 0.0
        %v7368 = vadd.f32 %v7366, %v7367
        %v7369 = vrot.slane %v7368, 4
        %v7370 = vadd.f32 %v7368, %v7369
        %v7371 = vrot.slane %v7370, 2
        %v7372 = vadd.f32 %v7370, %v7371
        %v7373 = vrot.slane %v7372, 1
        %v7374 = vadd.f32 %v7372, %v7373
        %v7375 = vsel %vm1447, %v7289, 0.0
        %v7376 = vsel %vm1447, %v7290, 0.0
        %v7377 = vadd.f32 %v7375, %v7376
        %v7378 = vsel %vm1447, %v7291, 0.0
        %v7379 = vadd.f32 %v7377, %v7378
        %v7380 = vsel %vm1447, %v7292, 0.0
        %v7381 = vadd.f32 %v7379, %v7380
        %v7382 = vrot.slane %v7381, 4
        %v7383 = vadd.f32 %v7381, %v7382
        %v7384 = vrot.slane %v7383, 2
        %v7385 = vadd.f32 %v7383, %v7384
        %v7386 = vrot.slane %v7385, 1
        %v7387 = vadd.f32 %v7385, %v7386
        %v7388 = vsel %vm1447, %v7293, 0.0
        %v7389 = vsel %vm1447, %v7294, 0.0
        %v7390 = vadd.f32 %v7388, %v7389
        %v7391 = vsel %vm1447, %v7295, 0.0
        %v7392 = vadd.f32 %v7390, %v7391
        %v7393 = vsel %vm1447, %v7296, 0.0
        %v7394 = vadd.f32 %v7392, %v7393
        %v7395 = vrot.slane %v7394, 4
        %v7396 = vadd.f32 %v7394, %v7395
        %v7397 = vrot.slane %v7396, 2
        %v7398 = vadd.f32 %v7396, %v7397
        %v7399 = vrot.slane %v7398, 1
        %v7400 = vadd.f32 %v7398, %v7399
        %v7401 = vsel %vm653, %v7049, 0.0
        %v7402 = vrot.slane %v7401, 4
        %v7403 = vadd.f32 %v7401, %v7402
        %v7404 = vrot.slane %v7403, 2
        %v7405 = vadd.f32 %v7403, %v7404
        %v7406 = vrot.slane %v7405, 1
        %v7407 = vadd.f32 %v7405, %v7406
        %v7408 = vsel %vm653, %v7050, 0.0
        %v7409 = vrot.slane %v7408, 4
        %v7410 = vadd.f32 %v7408, %v7409
        %v7411 = vrot.slane %v7410, 2
        %v7412 = vadd.f32 %v7410, %v7411
        %v7413 = vrot.slane %v7412, 1
        %v7414 = vadd.f32 %v7412, %v7413
        %v7415 = vsel %vm653, %v7051, 0.0
        %v7416 = vrot.slane %v7415, 4
        %v7417 = vadd.f32 %v7415, %v7416
        %v7418 = vrot.slane %v7417, 2
        %v7419 = vadd.f32 %v7417, %v7418
        %v7420 = vrot.slane %v7419, 1
        %v7421 = vadd.f32 %v7419, %v7420
        %v7422 = vsel %vm653, %v7052, 0.0
        %v7423 = vrot.slane %v7422, 4
        %v7424 = vadd.f32 %v7422, %v7423
        %v7425 = vrot.slane %v7424, 2
        %v7426 = vadd.f32 %v7424, %v7425
        %v7427 = vrot.slane %v7426, 1
        %v7428 = vadd.f32 %v7426, %v7427
        %v7429 = vsel %vm653, %v7053, 0.0
        %v7430 = vrot.slane %v7429, 4
        %v7431 = vadd.f32 %v7429, %v7430
        %v7432 = vrot.slane %v7431, 2
        %v7433 = vadd.f32 %v7431, %v7432
        %v7434 = vrot.slane %v7433, 1
        %v7435 = vadd.f32 %v7433, %v7434
        %v7436 = vsel %vm653, %v7054, 0.0
        %v7437 = vrot.slane %v7436, 4
        %v7438 = vadd.f32 %v7436, %v7437
        %v7439 = vrot.slane %v7438, 2
        %v7440 = vadd.f32 %v7438, %v7439
        %v7441 = vrot.slane %v7440, 1
        %v7442 = vadd.f32 %v7440, %v7441
        %v7443 = vsel %vm653, %v7055, 0.0
        %v7444 = vrot.slane %v7443, 4
        %v7445 = vadd.f32 %v7443, %v7444
        %v7446 = vrot.slane %v7445, 2
        %v7447 = vadd.f32 %v7445, %v7446
        %v7448 = vrot.slane %v7447, 1
        %v7449 = vadd.f32 %v7447, %v7448
        %v7450 = vsel %vm653, %v7056, 0.0
        %v7451 = vrot.slane %v7450, 4
        %v7452 = vadd.f32 %v7450, %v7451
        %v7453 = vrot.slane %v7452, 2
        %v7454 = vadd.f32 %v7452, %v7453
        %v7455 = vrot.slane %v7454, 1
        %v7456 = vadd.f32 %v7454, %v7455
        %7458 = vbcast.lane.b32.xlu0 %v7407, 256
        %v7459 = vpop.permute.xlu0 %7458
        %s7461 = sor.u32 256, 8
        %7462 = vbcast.lane.b32.xlu0 %v7407, %s7461
        %v7463 = vpop.permute.xlu0 %7462
        %s7465 = sor.u32 256, 16
        %7466 = vbcast.lane.b32.xlu0 %v7407, %s7465
        %v7467 = vpop.permute.xlu0 %7466
        %s7469 = sor.u32 256, 24
        %7470 = vbcast.lane.b32.xlu0 %v7407, %s7469
        %v7471 = vpop.permute.xlu0 %7470
        %7473 = vbcast.lane.b32.xlu0 %v7414, 256
        %v7474 = vpop.permute.xlu0 %7473
        %s7476 = sor.u32 256, 8
        %7477 = vbcast.lane.b32.xlu0 %v7414, %s7476
        %v7478 = vpop.permute.xlu0 %7477
        %s7480 = sor.u32 256, 16
        %7481 = vbcast.lane.b32.xlu0 %v7414, %s7480
        %v7482 = vpop.permute.xlu0 %7481
        %s7484 = sor.u32 256, 24
        %7485 = vbcast.lane.b32.xlu0 %v7414, %s7484
        %v7486 = vpop.permute.xlu0 %7485
        %7488 = vbcast.lane.b32.xlu0 %v7421, 256
        %v7489 = vpop.permute.xlu0 %7488
        %s7491 = sor.u32 256, 8
        %7492 = vbcast.lane.b32.xlu0 %v7421, %s7491
        %v7493 = vpop.permute.xlu0 %7492
        %s7495 = sor.u32 256, 16
        %7496 = vbcast.lane.b32.xlu0 %v7421, %s7495
        %v7497 = vpop.permute.xlu0 %7496
        %s7499 = sor.u32 256, 24
        %7500 = vbcast.lane.b32.xlu0 %v7421, %s7499
        %v7501 = vpop.permute.xlu0 %7500
        %7503 = vbcast.lane.b32.xlu0 %v7428, 256
        %v7504 = vpop.permute.xlu0 %7503
        %s7506 = sor.u32 256, 8
        %7507 = vbcast.lane.b32.xlu0 %v7428, %s7506
        %v7508 = vpop.permute.xlu0 %7507
        %s7510 = sor.u32 256, 16
        %7511 = vbcast.lane.b32.xlu0 %v7428, %s7510
        %v7512 = vpop.permute.xlu0 %7511
        %s7514 = sor.u32 256, 24
        %7515 = vbcast.lane.b32.xlu0 %v7428, %s7514
        %v7516 = vpop.permute.xlu0 %7515
        %7518 = vbcast.lane.b32.xlu0 %v7435, 256
        %v7519 = vpop.permute.xlu0 %7518
        %s7521 = sor.u32 256, 8
        %7522 = vbcast.lane.b32.xlu0 %v7435, %s7521
        %v7523 = vpop.permute.xlu0 %7522
        %s7525 = sor.u32 256, 16
        %7526 = vbcast.lane.b32.xlu0 %v7435, %s7525
        %v7527 = vpop.permute.xlu0 %7526
        %s7529 = sor.u32 256, 24
        %7530 = vbcast.lane.b32.xlu0 %v7435, %s7529
        %v7531 = vpop.permute.xlu0 %7530
        %7533 = vbcast.lane.b32.xlu0 %v7442, 256
        %v7534 = vpop.permute.xlu0 %7533
        %s7536 = sor.u32 256, 8
        %7537 = vbcast.lane.b32.xlu0 %v7442, %s7536
        %v7538 = vpop.permute.xlu0 %7537
        %s7540 = sor.u32 256, 16
        %7541 = vbcast.lane.b32.xlu0 %v7442, %s7540
        %v7542 = vpop.permute.xlu0 %7541
        %s7544 = sor.u32 256, 24
        %7545 = vbcast.lane.b32.xlu0 %v7442, %s7544
        %v7546 = vpop.permute.xlu0 %7545
        %7548 = vbcast.lane.b32.xlu0 %v7449, 256
        %v7549 = vpop.permute.xlu0 %7548
        %s7551 = sor.u32 256, 8
        %7552 = vbcast.lane.b32.xlu0 %v7449, %s7551
        %v7553 = vpop.permute.xlu0 %7552
        %s7555 = sor.u32 256, 16
        %7556 = vbcast.lane.b32.xlu0 %v7449, %s7555
        %v7557 = vpop.permute.xlu0 %7556
        %s7559 = sor.u32 256, 24
        %7560 = vbcast.lane.b32.xlu0 %v7449, %s7559
        %v7561 = vpop.permute.xlu0 %7560
        %7563 = vbcast.lane.b32.xlu0 %v7456, 256
        %v7564 = vpop.permute.xlu0 %7563
        %s7566 = sor.u32 256, 8
        %7567 = vbcast.lane.b32.xlu0 %v7456, %s7566
        %v7568 = vpop.permute.xlu0 %7567
        %s7570 = sor.u32 256, 16
        %7571 = vbcast.lane.b32.xlu0 %v7456, %s7570
        %v7572 = vpop.permute.xlu0 %7571
        %s7574 = sor.u32 256, 24
        %7575 = vbcast.lane.b32.xlu0 %v7456, %s7574
        %v7576 = vpop.permute.xlu0 %7575
        %v7577 = vmul.f32 %v7459, %v1289
        %v7578 = vmul.f32 %v7463, %v1294
        %v7579 = vmul.f32 %v7467, %v1299
        %v7580 = vmul.f32 %v7471, %v1304
        %v7581 = vmul.f32 %v7474, %v1309
        %v7582 = vmul.f32 %v7478, %v1314
        %v7583 = vmul.f32 %v7482, %v1319
        %v7584 = vmul.f32 %v7486, %v1324
        %v7585 = vmul.f32 %v7489, %v1329
        %v7586 = vmul.f32 %v7493, %v1334
        %v7587 = vmul.f32 %v7497, %v1339
        %v7588 = vmul.f32 %v7501, %v1344
        %v7589 = vmul.f32 %v7504, %v1349
        %v7590 = vmul.f32 %v7508, %v1354
        %v7591 = vmul.f32 %v7512, %v1359
        %v7592 = vmul.f32 %v7516, %v1364
        %v7593 = vmul.f32 %v7519, %v1369
        %v7594 = vmul.f32 %v7523, %v1374
        %v7595 = vmul.f32 %v7527, %v1379
        %v7596 = vmul.f32 %v7531, %v1384
        %v7597 = vmul.f32 %v7534, %v1389
        %v7598 = vmul.f32 %v7538, %v1394
        %v7599 = vmul.f32 %v7542, %v1399
        %v7600 = vmul.f32 %v7546, %v1404
        %v7601 = vmul.f32 %v7549, %v1409
        %v7602 = vmul.f32 %v7553, %v1414
        %v7603 = vmul.f32 %v7557, %v1419
        %v7604 = vmul.f32 %v7561, %v1424
        %v7605 = vmul.f32 %v7564, %v1429
        %v7606 = vmul.f32 %v7568, %v1434
        %v7607 = vmul.f32 %v7572, %v1439
        %v7608 = vmul.f32 %v7576, %v1444
        %vm7609 = vcmask 130112
        %v7610 = vsel %vm7609, %v7577, 0.0
        %v7611 = vsel %vm7609, %v7578, 0.0
        %v7612 = vadd.f32 %v7610, %v7611
        %v7613 = vsel %vm7609, %v7579, 0.0
        %v7614 = vadd.f32 %v7612, %v7613
        %v7615 = vsel %vm7609, %v7580, 0.0
        %v7616 = vadd.f32 %v7614, %v7615
        %v7617 = vrot.slane %v7616, 4
        %v7618 = vadd.f32 %v7616, %v7617
        %v7619 = vrot.slane %v7618, 2
        %v7620 = vadd.f32 %v7618, %v7619
        %v7621 = vrot.slane %v7620, 1
        %v7622 = vadd.f32 %v7620, %v7621
        %v7623 = vsel %vm7609, %v7581, 0.0
        %v7624 = vsel %vm7609, %v7582, 0.0
        %v7625 = vadd.f32 %v7623, %v7624
        %v7626 = vsel %vm7609, %v7583, 0.0
        %v7627 = vadd.f32 %v7625, %v7626
        %v7628 = vsel %vm7609, %v7584, 0.0
        %v7629 = vadd.f32 %v7627, %v7628
        %v7630 = vrot.slane %v7629, 4
        %v7631 = vadd.f32 %v7629, %v7630
        %v7632 = vrot.slane %v7631, 2
        %v7633 = vadd.f32 %v7631, %v7632
        %v7634 = vrot.slane %v7633, 1
        %v7635 = vadd.f32 %v7633, %v7634
        %v7636 = vsel %vm7609, %v7585, 0.0
        %v7637 = vsel %vm7609, %v7586, 0.0
        %v7638 = vadd.f32 %v7636, %v7637
        %v7639 = vsel %vm7609, %v7587, 0.0
        %v7640 = vadd.f32 %v7638, %v7639
        %v7641 = vsel %vm7609, %v7588, 0.0
        %v7642 = vadd.f32 %v7640, %v7641
        %v7643 = vrot.slane %v7642, 4
        %v7644 = vadd.f32 %v7642, %v7643
        %v7645 = vrot.slane %v7644, 2
        %v7646 = vadd.f32 %v7644, %v7645
        %v7647 = vrot.slane %v7646, 1
        %v7648 = vadd.f32 %v7646, %v7647
        %v7649 = vsel %vm7609, %v7589, 0.0
        %v7650 = vsel %vm7609, %v7590, 0.0
        %v7651 = vadd.f32 %v7649, %v7650
        %v7652 = vsel %vm7609, %v7591, 0.0
        %v7653 = vadd.f32 %v7651, %v7652
        %v7654 = vsel %vm7609, %v7592, 0.0
        %v7655 = vadd.f32 %v7653, %v7654
        %v7656 = vrot.slane %v7655, 4
        %v7657 = vadd.f32 %v7655, %v7656
        %v7658 = vrot.slane %v7657, 2
        %v7659 = vadd.f32 %v7657, %v7658
        %v7660 = vrot.slane %v7659, 1
        %v7661 = vadd.f32 %v7659, %v7660
        %v7662 = vsel %vm7609, %v7593, 0.0
        %v7663 = vsel %vm7609, %v7594, 0.0
        %v7664 = vadd.f32 %v7662, %v7663
        %v7665 = vsel %vm7609, %v7595, 0.0
        %v7666 = vadd.f32 %v7664, %v7665
        %v7667 = vsel %vm7609, %v7596, 0.0
        %v7668 = vadd.f32 %v7666, %v7667
        %v7669 = vrot.slane %v7668, 4
        %v7670 = vadd.f32 %v7668, %v7669
        %v7671 = vrot.slane %v7670, 2
        %v7672 = vadd.f32 %v7670, %v7671
        %v7673 = vrot.slane %v7672, 1
        %v7674 = vadd.f32 %v7672, %v7673
        %v7675 = vsel %vm7609, %v7597, 0.0
        %v7676 = vsel %vm7609, %v7598, 0.0
        %v7677 = vadd.f32 %v7675, %v7676
        %v7678 = vsel %vm7609, %v7599, 0.0
        %v7679 = vadd.f32 %v7677, %v7678
        %v7680 = vsel %vm7609, %v7600, 0.0
        %v7681 = vadd.f32 %v7679, %v7680
        %v7682 = vrot.slane %v7681, 4
        %v7683 = vadd.f32 %v7681, %v7682
        %v7684 = vrot.slane %v7683, 2
        %v7685 = vadd.f32 %v7683, %v7684
        %v7686 = vrot.slane %v7685, 1
        %v7687 = vadd.f32 %v7685, %v7686
        %v7688 = vsel %vm7609, %v7601, 0.0
        %v7689 = vsel %vm7609, %v7602, 0.0
        %v7690 = vadd.f32 %v7688, %v7689
        %v7691 = vsel %vm7609, %v7603, 0.0
        %v7692 = vadd.f32 %v7690, %v7691
        %v7693 = vsel %vm7609, %v7604, 0.0
        %v7694 = vadd.f32 %v7692, %v7693
        %v7695 = vrot.slane %v7694, 4
        %v7696 = vadd.f32 %v7694, %v7695
        %v7697 = vrot.slane %v7696, 2
        %v7698 = vadd.f32 %v7696, %v7697
        %v7699 = vrot.slane %v7698, 1
        %v7700 = vadd.f32 %v7698, %v7699
        %v7701 = vsel %vm7609, %v7605, 0.0
        %v7702 = vsel %vm7609, %v7606, 0.0
        %v7703 = vadd.f32 %v7701, %v7702
        %v7704 = vsel %vm7609, %v7607, 0.0
        %v7705 = vadd.f32 %v7703, %v7704
        %v7706 = vsel %vm7609, %v7608, 0.0
        %v7707 = vadd.f32 %v7705, %v7706
        %v7708 = vrot.slane %v7707, 4
        %v7709 = vadd.f32 %v7707, %v7708
        %v7710 = vrot.slane %v7709, 2
        %v7711 = vadd.f32 %v7709, %v7710
        %v7712 = vrot.slane %v7711, 1
        %v7713 = vadd.f32 %v7711, %v7712
        %v7714 = vsel %vm653, %v7073, 0.0
        %v7715 = vrot.slane %v7714, 4
        %v7716 = vadd.f32 %v7714, %v7715
        %v7717 = vrot.slane %v7716, 2
        %v7718 = vadd.f32 %v7716, %v7717
        %v7719 = vrot.slane %v7718, 1
        %v7720 = vadd.f32 %v7718, %v7719
        %v7721 = vsel %vm653, %v7074, 0.0
        %v7722 = vrot.slane %v7721, 4
        %v7723 = vadd.f32 %v7721, %v7722
        %v7724 = vrot.slane %v7723, 2
        %v7725 = vadd.f32 %v7723, %v7724
        %v7726 = vrot.slane %v7725, 1
        %v7727 = vadd.f32 %v7725, %v7726
        %v7728 = vsel %vm653, %v7075, 0.0
        %v7729 = vrot.slane %v7728, 4
        %v7730 = vadd.f32 %v7728, %v7729
        %v7731 = vrot.slane %v7730, 2
        %v7732 = vadd.f32 %v7730, %v7731
        %v7733 = vrot.slane %v7732, 1
        %v7734 = vadd.f32 %v7732, %v7733
        %v7735 = vsel %vm653, %v7076, 0.0
        %v7736 = vrot.slane %v7735, 4
        %v7737 = vadd.f32 %v7735, %v7736
        %v7738 = vrot.slane %v7737, 2
        %v7739 = vadd.f32 %v7737, %v7738
        %v7740 = vrot.slane %v7739, 1
        %v7741 = vadd.f32 %v7739, %v7740
        %v7742 = vsel %vm653, %v7077, 0.0
        %v7743 = vrot.slane %v7742, 4
        %v7744 = vadd.f32 %v7742, %v7743
        %v7745 = vrot.slane %v7744, 2
        %v7746 = vadd.f32 %v7744, %v7745
        %v7747 = vrot.slane %v7746, 1
        %v7748 = vadd.f32 %v7746, %v7747
        %v7749 = vsel %vm653, %v7078, 0.0
        %v7750 = vrot.slane %v7749, 4
        %v7751 = vadd.f32 %v7749, %v7750
        %v7752 = vrot.slane %v7751, 2
        %v7753 = vadd.f32 %v7751, %v7752
        %v7754 = vrot.slane %v7753, 1
        %v7755 = vadd.f32 %v7753, %v7754
        %v7756 = vsel %vm653, %v7079, 0.0
        %v7757 = vrot.slane %v7756, 4
        %v7758 = vadd.f32 %v7756, %v7757
        %v7759 = vrot.slane %v7758, 2
        %v7760 = vadd.f32 %v7758, %v7759
        %v7761 = vrot.slane %v7760, 1
        %v7762 = vadd.f32 %v7760, %v7761
        %v7763 = vsel %vm653, %v7080, 0.0
        %v7764 = vrot.slane %v7763, 4
        %v7765 = vadd.f32 %v7763, %v7764
        %v7766 = vrot.slane %v7765, 2
        %v7767 = vadd.f32 %v7765, %v7766
        %v7768 = vrot.slane %v7767, 1
        %v7769 = vadd.f32 %v7767, %v7768
        %7771 = vbcast.lane.b32.xlu0 %v7720, 256
        %v7772 = vpop.permute.xlu0 %7771
        %s7774 = sor.u32 256, 8
        %7775 = vbcast.lane.b32.xlu0 %v7720, %s7774
        %v7776 = vpop.permute.xlu0 %7775
        %s7778 = sor.u32 256, 16
        %7779 = vbcast.lane.b32.xlu0 %v7720, %s7778
        %v7780 = vpop.permute.xlu0 %7779
        %s7782 = sor.u32 256, 24
        %7783 = vbcast.lane.b32.xlu0 %v7720, %s7782
        %v7784 = vpop.permute.xlu0 %7783
        %7786 = vbcast.lane.b32.xlu0 %v7727, 256
        %v7787 = vpop.permute.xlu0 %7786
        %s7789 = sor.u32 256, 8
        %7790 = vbcast.lane.b32.xlu0 %v7727, %s7789
        %v7791 = vpop.permute.xlu0 %7790
        %s7793 = sor.u32 256, 16
        %7794 = vbcast.lane.b32.xlu0 %v7727, %s7793
        %v7795 = vpop.permute.xlu0 %7794
        %s7797 = sor.u32 256, 24
        %7798 = vbcast.lane.b32.xlu0 %v7727, %s7797
        %v7799 = vpop.permute.xlu0 %7798
        %7801 = vbcast.lane.b32.xlu0 %v7734, 256
        %v7802 = vpop.permute.xlu0 %7801
        %s7804 = sor.u32 256, 8
        %7805 = vbcast.lane.b32.xlu0 %v7734, %s7804
        %v7806 = vpop.permute.xlu0 %7805
        %s7808 = sor.u32 256, 16
        %7809 = vbcast.lane.b32.xlu0 %v7734, %s7808
        %v7810 = vpop.permute.xlu0 %7809
        %s7812 = sor.u32 256, 24
        %7813 = vbcast.lane.b32.xlu0 %v7734, %s7812
        %v7814 = vpop.permute.xlu0 %7813
        %7816 = vbcast.lane.b32.xlu0 %v7741, 256
        %v7817 = vpop.permute.xlu0 %7816
        %s7819 = sor.u32 256, 8
        %7820 = vbcast.lane.b32.xlu0 %v7741, %s7819
        %v7821 = vpop.permute.xlu0 %7820
        %s7823 = sor.u32 256, 16
        %7824 = vbcast.lane.b32.xlu0 %v7741, %s7823
        %v7825 = vpop.permute.xlu0 %7824
        %s7827 = sor.u32 256, 24
        %7828 = vbcast.lane.b32.xlu0 %v7741, %s7827
        %v7829 = vpop.permute.xlu0 %7828
        %7831 = vbcast.lane.b32.xlu0 %v7748, 256
        %v7832 = vpop.permute.xlu0 %7831
        %s7834 = sor.u32 256, 8
        %7835 = vbcast.lane.b32.xlu0 %v7748, %s7834
        %v7836 = vpop.permute.xlu0 %7835
        %s7838 = sor.u32 256, 16
        %7839 = vbcast.lane.b32.xlu0 %v7748, %s7838
        %v7840 = vpop.permute.xlu0 %7839
        %s7842 = sor.u32 256, 24
        %7843 = vbcast.lane.b32.xlu0 %v7748, %s7842
        %v7844 = vpop.permute.xlu0 %7843
        %7846 = vbcast.lane.b32.xlu0 %v7755, 256
        %v7847 = vpop.permute.xlu0 %7846
        %s7849 = sor.u32 256, 8
        %7850 = vbcast.lane.b32.xlu0 %v7755, %s7849
        %v7851 = vpop.permute.xlu0 %7850
        %s7853 = sor.u32 256, 16
        %7854 = vbcast.lane.b32.xlu0 %v7755, %s7853
        %v7855 = vpop.permute.xlu0 %7854
        %s7857 = sor.u32 256, 24
        %7858 = vbcast.lane.b32.xlu0 %v7755, %s7857
        %v7859 = vpop.permute.xlu0 %7858
        %7861 = vbcast.lane.b32.xlu0 %v7762, 256
        %v7862 = vpop.permute.xlu0 %7861
        %s7864 = sor.u32 256, 8
        %7865 = vbcast.lane.b32.xlu0 %v7762, %s7864
        %v7866 = vpop.permute.xlu0 %7865
        %s7868 = sor.u32 256, 16
        %7869 = vbcast.lane.b32.xlu0 %v7762, %s7868
        %v7870 = vpop.permute.xlu0 %7869
        %s7872 = sor.u32 256, 24
        %7873 = vbcast.lane.b32.xlu0 %v7762, %s7872
        %v7874 = vpop.permute.xlu0 %7873
        %7876 = vbcast.lane.b32.xlu0 %v7769, 256
        %v7877 = vpop.permute.xlu0 %7876
        %s7879 = sor.u32 256, 8
        %7880 = vbcast.lane.b32.xlu0 %v7769, %s7879
        %v7881 = vpop.permute.xlu0 %7880
        %s7883 = sor.u32 256, 16
        %7884 = vbcast.lane.b32.xlu0 %v7769, %s7883
        %v7885 = vpop.permute.xlu0 %7884
        %s7887 = sor.u32 256, 24
        %7888 = vbcast.lane.b32.xlu0 %v7769, %s7887
        %v7889 = vpop.permute.xlu0 %7888
        %v7890 = vmul.f32 %v7772, %v1289
        %v7891 = vmul.f32 %v7776, %v1294
        %v7892 = vmul.f32 %v7780, %v1299
        %v7893 = vmul.f32 %v7784, %v1304
        %v7894 = vmul.f32 %v7787, %v1309
        %v7895 = vmul.f32 %v7791, %v1314
        %v7896 = vmul.f32 %v7795, %v1319
        %v7897 = vmul.f32 %v7799, %v1324
        %v7898 = vmul.f32 %v7802, %v1329
        %v7899 = vmul.f32 %v7806, %v1334
        %v7900 = vmul.f32 %v7810, %v1339
        %v7901 = vmul.f32 %v7814, %v1344
        %v7902 = vmul.f32 %v7817, %v1349
        %v7903 = vmul.f32 %v7821, %v1354
        %v7904 = vmul.f32 %v7825, %v1359
        %v7905 = vmul.f32 %v7829, %v1364
        %v7906 = vmul.f32 %v7832, %v1369
        %v7907 = vmul.f32 %v7836, %v1374
        %v7908 = vmul.f32 %v7840, %v1379
        %v7909 = vmul.f32 %v7844, %v1384
        %v7910 = vmul.f32 %v7847, %v1389
        %v7911 = vmul.f32 %v7851, %v1394
        %v7912 = vmul.f32 %v7855, %v1399
        %v7913 = vmul.f32 %v7859, %v1404
        %v7914 = vmul.f32 %v7862, %v1409
        %v7915 = vmul.f32 %v7866, %v1414
        %v7916 = vmul.f32 %v7870, %v1419
        %v7917 = vmul.f32 %v7874, %v1424
        %v7918 = vmul.f32 %v7877, %v1429
        %v7919 = vmul.f32 %v7881, %v1434
        %v7920 = vmul.f32 %v7885, %v1439
        %v7921 = vmul.f32 %v7889, %v1444
        %vm7922 = vcmask 195712
        %v7923 = vsel %vm7922, %v7890, 0.0
        %v7924 = vsel %vm7922, %v7891, 0.0
        %v7925 = vadd.f32 %v7923, %v7924
        %v7926 = vsel %vm7922, %v7892, 0.0
        %v7927 = vadd.f32 %v7925, %v7926
        %v7928 = vsel %vm7922, %v7893, 0.0
        %v7929 = vadd.f32 %v7927, %v7928
        %v7930 = vrot.slane %v7929, 4
        %v7931 = vadd.f32 %v7929, %v7930
        %v7932 = vrot.slane %v7931, 2
        %v7933 = vadd.f32 %v7931, %v7932
        %v7934 = vrot.slane %v7933, 1
        %v7935 = vadd.f32 %v7933, %v7934
        %v7936 = vsel %vm7922, %v7894, 0.0
        %v7937 = vsel %vm7922, %v7895, 0.0
        %v7938 = vadd.f32 %v7936, %v7937
        %v7939 = vsel %vm7922, %v7896, 0.0
        %v7940 = vadd.f32 %v7938, %v7939
        %v7941 = vsel %vm7922, %v7897, 0.0
        %v7942 = vadd.f32 %v7940, %v7941
        %v7943 = vrot.slane %v7942, 4
        %v7944 = vadd.f32 %v7942, %v7943
        %v7945 = vrot.slane %v7944, 2
        %v7946 = vadd.f32 %v7944, %v7945
        %v7947 = vrot.slane %v7946, 1
        %v7948 = vadd.f32 %v7946, %v7947
        %v7949 = vsel %vm7922, %v7898, 0.0
        %v7950 = vsel %vm7922, %v7899, 0.0
        %v7951 = vadd.f32 %v7949, %v7950
        %v7952 = vsel %vm7922, %v7900, 0.0
        %v7953 = vadd.f32 %v7951, %v7952
        %v7954 = vsel %vm7922, %v7901, 0.0
        %v7955 = vadd.f32 %v7953, %v7954
        %v7956 = vrot.slane %v7955, 4
        %v7957 = vadd.f32 %v7955, %v7956
        %v7958 = vrot.slane %v7957, 2
        %v7959 = vadd.f32 %v7957, %v7958
        %v7960 = vrot.slane %v7959, 1
        %v7961 = vadd.f32 %v7959, %v7960
        %v7962 = vsel %vm7922, %v7902, 0.0
        %v7963 = vsel %vm7922, %v7903, 0.0
        %v7964 = vadd.f32 %v7962, %v7963
        %v7965 = vsel %vm7922, %v7904, 0.0
        %v7966 = vadd.f32 %v7964, %v7965
        %v7967 = vsel %vm7922, %v7905, 0.0
        %v7968 = vadd.f32 %v7966, %v7967
        %v7969 = vrot.slane %v7968, 4
        %v7970 = vadd.f32 %v7968, %v7969
        %v7971 = vrot.slane %v7970, 2
        %v7972 = vadd.f32 %v7970, %v7971
        %v7973 = vrot.slane %v7972, 1
        %v7974 = vadd.f32 %v7972, %v7973
        %v7975 = vsel %vm7922, %v7906, 0.0
        %v7976 = vsel %vm7922, %v7907, 0.0
        %v7977 = vadd.f32 %v7975, %v7976
        %v7978 = vsel %vm7922, %v7908, 0.0
        %v7979 = vadd.f32 %v7977, %v7978
        %v7980 = vsel %vm7922, %v7909, 0.0
        %v7981 = vadd.f32 %v7979, %v7980
        %v7982 = vrot.slane %v7981, 4
        %v7983 = vadd.f32 %v7981, %v7982
        %v7984 = vrot.slane %v7983, 2
        %v7985 = vadd.f32 %v7983, %v7984
        %v7986 = vrot.slane %v7985, 1
        %v7987 = vadd.f32 %v7985, %v7986
        %v7988 = vsel %vm7922, %v7910, 0.0
        %v7989 = vsel %vm7922, %v7911, 0.0
        %v7990 = vadd.f32 %v7988, %v7989
        %v7991 = vsel %vm7922, %v7912, 0.0
        %v7992 = vadd.f32 %v7990, %v7991
        %v7993 = vsel %vm7922, %v7913, 0.0
        %v7994 = vadd.f32 %v7992, %v7993
        %v7995 = vrot.slane %v7994, 4
        %v7996 = vadd.f32 %v7994, %v7995
        %v7997 = vrot.slane %v7996, 2
        %v7998 = vadd.f32 %v7996, %v7997
        %v7999 = vrot.slane %v7998, 1
        %v8000 = vadd.f32 %v7998, %v7999
        %v8001 = vsel %vm7922, %v7914, 0.0
        %v8002 = vsel %vm7922, %v7915, 0.0
        %v8003 = vadd.f32 %v8001, %v8002
        %v8004 = vsel %vm7922, %v7916, 0.0
        %v8005 = vadd.f32 %v8003, %v8004
        %v8006 = vsel %vm7922, %v7917, 0.0
        %v8007 = vadd.f32 %v8005, %v8006
        %v8008 = vrot.slane %v8007, 4
        %v8009 = vadd.f32 %v8007, %v8008
        %v8010 = vrot.slane %v8009, 2
        %v8011 = vadd.f32 %v8009, %v8010
        %v8012 = vrot.slane %v8011, 1
        %v8013 = vadd.f32 %v8011, %v8012
        %v8014 = vsel %vm7922, %v7918, 0.0
        %v8015 = vsel %vm7922, %v7919, 0.0
        %v8016 = vadd.f32 %v8014, %v8015
        %v8017 = vsel %vm7922, %v7920, 0.0
        %v8018 = vadd.f32 %v8016, %v8017
        %v8019 = vsel %vm7922, %v7921, 0.0
        %v8020 = vadd.f32 %v8018, %v8019
        %v8021 = vrot.slane %v8020, 4
        %v8022 = vadd.f32 %v8020, %v8021
        %v8023 = vrot.slane %v8022, 2
        %v8024 = vadd.f32 %v8022, %v8023
        %v8025 = vrot.slane %v8024, 1
        %v8026 = vadd.f32 %v8024, %v8025
        %v8027 = vsel %vm653, %v7081, 0.0
        %v8028 = vrot.slane %v8027, 4
        %v8029 = vadd.f32 %v8027, %v8028
        %v8030 = vrot.slane %v8029, 2
        %v8031 = vadd.f32 %v8029, %v8030
        %v8032 = vrot.slane %v8031, 1
        %v8033 = vadd.f32 %v8031, %v8032
        %v8034 = vsel %vm653, %v7082, 0.0
        %v8035 = vrot.slane %v8034, 4
        %v8036 = vadd.f32 %v8034, %v8035
        %v8037 = vrot.slane %v8036, 2
        %v8038 = vadd.f32 %v8036, %v8037
        %v8039 = vrot.slane %v8038, 1
        %v8040 = vadd.f32 %v8038, %v8039
        %v8041 = vsel %vm653, %v7083, 0.0
        %v8042 = vrot.slane %v8041, 4
        %v8043 = vadd.f32 %v8041, %v8042
        %v8044 = vrot.slane %v8043, 2
        %v8045 = vadd.f32 %v8043, %v8044
        %v8046 = vrot.slane %v8045, 1
        %v8047 = vadd.f32 %v8045, %v8046
        %v8048 = vsel %vm653, %v7084, 0.0
        %v8049 = vrot.slane %v8048, 4
        %v8050 = vadd.f32 %v8048, %v8049
        %v8051 = vrot.slane %v8050, 2
        %v8052 = vadd.f32 %v8050, %v8051
        %v8053 = vrot.slane %v8052, 1
        %v8054 = vadd.f32 %v8052, %v8053
        %v8055 = vsel %vm653, %v7085, 0.0
        %v8056 = vrot.slane %v8055, 4
        %v8057 = vadd.f32 %v8055, %v8056
        %v8058 = vrot.slane %v8057, 2
        %v8059 = vadd.f32 %v8057, %v8058
        %v8060 = vrot.slane %v8059, 1
        %v8061 = vadd.f32 %v8059, %v8060
        %v8062 = vsel %vm653, %v7086, 0.0
        %v8063 = vrot.slane %v8062, 4
        %v8064 = vadd.f32 %v8062, %v8063
        %v8065 = vrot.slane %v8064, 2
        %v8066 = vadd.f32 %v8064, %v8065
        %v8067 = vrot.slane %v8066, 1
        %v8068 = vadd.f32 %v8066, %v8067
        %v8069 = vsel %vm653, %v7087, 0.0
        %v8070 = vrot.slane %v8069, 4
        %v8071 = vadd.f32 %v8069, %v8070
        %v8072 = vrot.slane %v8071, 2
        %v8073 = vadd.f32 %v8071, %v8072
        %v8074 = vrot.slane %v8073, 1
        %v8075 = vadd.f32 %v8073, %v8074
        %v8076 = vsel %vm653, %v7088, 0.0
        %v8077 = vrot.slane %v8076, 4
        %v8078 = vadd.f32 %v8076, %v8077
        %v8079 = vrot.slane %v8078, 2
        %v8080 = vadd.f32 %v8078, %v8079
        %v8081 = vrot.slane %v8080, 1
        %v8082 = vadd.f32 %v8080, %v8081
        %8084 = vbcast.lane.b32.xlu0 %v8033, 256
        %v8085 = vpop.permute.xlu0 %8084
        %s8087 = sor.u32 256, 8
        %8088 = vbcast.lane.b32.xlu0 %v8033, %s8087
        %v8089 = vpop.permute.xlu0 %8088
        %s8091 = sor.u32 256, 16
        %8092 = vbcast.lane.b32.xlu0 %v8033, %s8091
        %v8093 = vpop.permute.xlu0 %8092
        %s8095 = sor.u32 256, 24
        %8096 = vbcast.lane.b32.xlu0 %v8033, %s8095
        %v8097 = vpop.permute.xlu0 %8096
        %8099 = vbcast.lane.b32.xlu0 %v8040, 256
        %v8100 = vpop.permute.xlu0 %8099
        %s8102 = sor.u32 256, 8
        %8103 = vbcast.lane.b32.xlu0 %v8040, %s8102
        %v8104 = vpop.permute.xlu0 %8103
        %s8106 = sor.u32 256, 16
        %8107 = vbcast.lane.b32.xlu0 %v8040, %s8106
        %v8108 = vpop.permute.xlu0 %8107
        %s8110 = sor.u32 256, 24
        %8111 = vbcast.lane.b32.xlu0 %v8040, %s8110
        %v8112 = vpop.permute.xlu0 %8111
        %8114 = vbcast.lane.b32.xlu0 %v8047, 256
        %v8115 = vpop.permute.xlu0 %8114
        %s8117 = sor.u32 256, 8
        %8118 = vbcast.lane.b32.xlu0 %v8047, %s8117
        %v8119 = vpop.permute.xlu0 %8118
        %s8121 = sor.u32 256, 16
        %8122 = vbcast.lane.b32.xlu0 %v8047, %s8121
        %v8123 = vpop.permute.xlu0 %8122
        %s8125 = sor.u32 256, 24
        %8126 = vbcast.lane.b32.xlu0 %v8047, %s8125
        %v8127 = vpop.permute.xlu0 %8126
        %8129 = vbcast.lane.b32.xlu0 %v8054, 256
        %v8130 = vpop.permute.xlu0 %8129
        %s8132 = sor.u32 256, 8
        %8133 = vbcast.lane.b32.xlu0 %v8054, %s8132
        %v8134 = vpop.permute.xlu0 %8133
        %s8136 = sor.u32 256, 16
        %8137 = vbcast.lane.b32.xlu0 %v8054, %s8136
        %v8138 = vpop.permute.xlu0 %8137
        %s8140 = sor.u32 256, 24
        %8141 = vbcast.lane.b32.xlu0 %v8054, %s8140
        %v8142 = vpop.permute.xlu0 %8141
        %8144 = vbcast.lane.b32.xlu0 %v8061, 256
        %v8145 = vpop.permute.xlu0 %8144
        %s8147 = sor.u32 256, 8
        %8148 = vbcast.lane.b32.xlu0 %v8061, %s8147
        %v8149 = vpop.permute.xlu0 %8148
        %s8151 = sor.u32 256, 16
        %8152 = vbcast.lane.b32.xlu0 %v8061, %s8151
        %v8153 = vpop.permute.xlu0 %8152
        %s8155 = sor.u32 256, 24
        %8156 = vbcast.lane.b32.xlu0 %v8061, %s8155
        %v8157 = vpop.permute.xlu0 %8156
        %8159 = vbcast.lane.b32.xlu0 %v8068, 256
        %v8160 = vpop.permute.xlu0 %8159
        %s8162 = sor.u32 256, 8
        %8163 = vbcast.lane.b32.xlu0 %v8068, %s8162
        %v8164 = vpop.permute.xlu0 %8163
        %s8166 = sor.u32 256, 16
        %8167 = vbcast.lane.b32.xlu0 %v8068, %s8166
        %v8168 = vpop.permute.xlu0 %8167
        %s8170 = sor.u32 256, 24
        %8171 = vbcast.lane.b32.xlu0 %v8068, %s8170
        %v8172 = vpop.permute.xlu0 %8171
        %8174 = vbcast.lane.b32.xlu0 %v8075, 256
        %v8175 = vpop.permute.xlu0 %8174
        %s8177 = sor.u32 256, 8
        %8178 = vbcast.lane.b32.xlu0 %v8075, %s8177
        %v8179 = vpop.permute.xlu0 %8178
        %s8181 = sor.u32 256, 16
        %8182 = vbcast.lane.b32.xlu0 %v8075, %s8181
        %v8183 = vpop.permute.xlu0 %8182
        %s8185 = sor.u32 256, 24
        %8186 = vbcast.lane.b32.xlu0 %v8075, %s8185
        %v8187 = vpop.permute.xlu0 %8186
        %8189 = vbcast.lane.b32.xlu0 %v8082, 256
        %v8190 = vpop.permute.xlu0 %8189
        %s8192 = sor.u32 256, 8
        %8193 = vbcast.lane.b32.xlu0 %v8082, %s8192
        %v8194 = vpop.permute.xlu0 %8193
        %s8196 = sor.u32 256, 16
        %8197 = vbcast.lane.b32.xlu0 %v8082, %s8196
        %v8198 = vpop.permute.xlu0 %8197
        %s8200 = sor.u32 256, 24
        %8201 = vbcast.lane.b32.xlu0 %v8082, %s8200
        %v8202 = vpop.permute.xlu0 %8201
        %v8203 = vmul.f32 %v8085, %v1289
        %v8204 = vmul.f32 %v8089, %v1294
        %v8205 = vmul.f32 %v8093, %v1299
        %v8206 = vmul.f32 %v8097, %v1304
        %v8207 = vmul.f32 %v8100, %v1309
        %v8208 = vmul.f32 %v8104, %v1314
        %v8209 = vmul.f32 %v8108, %v1319
        %v8210 = vmul.f32 %v8112, %v1324
        %v8211 = vmul.f32 %v8115, %v1329
        %v8212 = vmul.f32 %v8119, %v1334
        %v8213 = vmul.f32 %v8123, %v1339
        %v8214 = vmul.f32 %v8127, %v1344
        %v8215 = vmul.f32 %v8130, %v1349
        %v8216 = vmul.f32 %v8134, %v1354
        %v8217 = vmul.f32 %v8138, %v1359
        %v8218 = vmul.f32 %v8142, %v1364
        %v8219 = vmul.f32 %v8145, %v1369
        %v8220 = vmul.f32 %v8149, %v1374
        %v8221 = vmul.f32 %v8153, %v1379
        %v8222 = vmul.f32 %v8157, %v1384
        %v8223 = vmul.f32 %v8160, %v1389
        %v8224 = vmul.f32 %v8164, %v1394
        %v8225 = vmul.f32 %v8168, %v1399
        %v8226 = vmul.f32 %v8172, %v1404
        %v8227 = vmul.f32 %v8175, %v1409
        %v8228 = vmul.f32 %v8179, %v1414
        %v8229 = vmul.f32 %v8183, %v1419
        %v8230 = vmul.f32 %v8187, %v1424
        %v8231 = vmul.f32 %v8190, %v1429
        %v8232 = vmul.f32 %v8194, %v1434
        %v8233 = vmul.f32 %v8198, %v1439
        %v8234 = vmul.f32 %v8202, %v1444
        %vm8235 = vcmask 261312
        %v8236 = vsel %vm8235, %v8203, 0.0
        %v8237 = vsel %vm8235, %v8204, 0.0
        %v8238 = vadd.f32 %v8236, %v8237
        %v8239 = vsel %vm8235, %v8205, 0.0
        %v8240 = vadd.f32 %v8238, %v8239
        %v8241 = vsel %vm8235, %v8206, 0.0
        %v8242 = vadd.f32 %v8240, %v8241
        %v8243 = vrot.slane %v8242, 4
        %v8244 = vadd.f32 %v8242, %v8243
        %v8245 = vrot.slane %v8244, 2
        %v8246 = vadd.f32 %v8244, %v8245
        %v8247 = vrot.slane %v8246, 1
        %v8248 = vadd.f32 %v8246, %v8247
        %v8249 = vsel %vm8235, %v8207, 0.0
        %v8250 = vsel %vm8235, %v8208, 0.0
        %v8251 = vadd.f32 %v8249, %v8250
        %v8252 = vsel %vm8235, %v8209, 0.0
        %v8253 = vadd.f32 %v8251, %v8252
        %v8254 = vsel %vm8235, %v8210, 0.0
        %v8255 = vadd.f32 %v8253, %v8254
        %v8256 = vrot.slane %v8255, 4
        %v8257 = vadd.f32 %v8255, %v8256
        %v8258 = vrot.slane %v8257, 2
        %v8259 = vadd.f32 %v8257, %v8258
        %v8260 = vrot.slane %v8259, 1
        %v8261 = vadd.f32 %v8259, %v8260
        %v8262 = vsel %vm8235, %v8211, 0.0
        %v8263 = vsel %vm8235, %v8212, 0.0
        %v8264 = vadd.f32 %v8262, %v8263
        %v8265 = vsel %vm8235, %v8213, 0.0
        %v8266 = vadd.f32 %v8264, %v8265
        %v8267 = vsel %vm8235, %v8214, 0.0
        %v8268 = vadd.f32 %v8266, %v8267
        %v8269 = vrot.slane %v8268, 4
        %v8270 = vadd.f32 %v8268, %v8269
        %v8271 = vrot.slane %v8270, 2
        %v8272 = vadd.f32 %v8270, %v8271
        %v8273 = vrot.slane %v8272, 1
        %v8274 = vadd.f32 %v8272, %v8273
        %v8275 = vsel %vm8235, %v8215, 0.0
        %v8276 = vsel %vm8235, %v8216, 0.0
        %v8277 = vadd.f32 %v8275, %v8276
        %v8278 = vsel %vm8235, %v8217, 0.0
        %v8279 = vadd.f32 %v8277, %v8278
        %v8280 = vsel %vm8235, %v8218, 0.0
        %v8281 = vadd.f32 %v8279, %v8280
        %v8282 = vrot.slane %v8281, 4
        %v8283 = vadd.f32 %v8281, %v8282
        %v8284 = vrot.slane %v8283, 2
        %v8285 = vadd.f32 %v8283, %v8284
        %v8286 = vrot.slane %v8285, 1
        %v8287 = vadd.f32 %v8285, %v8286
        %v8288 = vsel %vm8235, %v8219, 0.0
        %v8289 = vsel %vm8235, %v8220, 0.0
        %v8290 = vadd.f32 %v8288, %v8289
        %v8291 = vsel %vm8235, %v8221, 0.0
        %v8292 = vadd.f32 %v8290, %v8291
        %v8293 = vsel %vm8235, %v8222, 0.0
        %v8294 = vadd.f32 %v8292, %v8293
        %v8295 = vrot.slane %v8294, 4
        %v8296 = vadd.f32 %v8294, %v8295
        %v8297 = vrot.slane %v8296, 2
        %v8298 = vadd.f32 %v8296, %v8297
        %v8299 = vrot.slane %v8298, 1
        %v8300 = vadd.f32 %v8298, %v8299
        %v8301 = vsel %vm8235, %v8223, 0.0
        %v8302 = vsel %vm8235, %v8224, 0.0
        %v8303 = vadd.f32 %v8301, %v8302
        %v8304 = vsel %vm8235, %v8225, 0.0
        %v8305 = vadd.f32 %v8303, %v8304
        %v8306 = vsel %vm8235, %v8226, 0.0
        %v8307 = vadd.f32 %v8305, %v8306
        %v8308 = vrot.slane %v8307, 4
        %v8309 = vadd.f32 %v8307, %v8308
        %v8310 = vrot.slane %v8309, 2
        %v8311 = vadd.f32 %v8309, %v8310
        %v8312 = vrot.slane %v8311, 1
        %v8313 = vadd.f32 %v8311, %v8312
        %v8314 = vsel %vm8235, %v8227, 0.0
        %v8315 = vsel %vm8235, %v8228, 0.0
        %v8316 = vadd.f32 %v8314, %v8315
        %v8317 = vsel %vm8235, %v8229, 0.0
        %v8318 = vadd.f32 %v8316, %v8317
        %v8319 = vsel %vm8235, %v8230, 0.0
        %v8320 = vadd.f32 %v8318, %v8319
        %v8321 = vrot.slane %v8320, 4
        %v8322 = vadd.f32 %v8320, %v8321
        %v8323 = vrot.slane %v8322, 2
        %v8324 = vadd.f32 %v8322, %v8323
        %v8325 = vrot.slane %v8324, 1
        %v8326 = vadd.f32 %v8324, %v8325
        %v8327 = vsel %vm8235, %v8231, 0.0
        %v8328 = vsel %vm8235, %v8232, 0.0
        %v8329 = vadd.f32 %v8327, %v8328
        %v8330 = vsel %vm8235, %v8233, 0.0
        %v8331 = vadd.f32 %v8329, %v8330
        %v8332 = vsel %vm8235, %v8234, 0.0
        %v8333 = vadd.f32 %v8331, %v8332
        %v8334 = vrot.slane %v8333, 4
        %v8335 = vadd.f32 %v8333, %v8334
        %v8336 = vrot.slane %v8335, 2
        %v8337 = vadd.f32 %v8335, %v8336
        %v8338 = vrot.slane %v8337, 1
        %v8339 = vadd.f32 %v8337, %v8338
        %v8348 = vsel %vm6623, %v7322, %v7309
        %v8349 = vsel %vm6626, %v7335, %v8348
        %v8350 = vsel %vm6629, %v7348, %v8349
        %v8351 = vsel %vm6632, %v7361, %v8350
        %v8352 = vsel %vm6635, %v7374, %v8351
        %v8353 = vsel %vm6638, %v7387, %v8352
        %v8354 = vsel %vm6641, %v7400, %v8353
        %v8364 = vsel %vm6623, %v7635, %v7622
        %v8365 = vsel %vm6626, %v7648, %v8364
        %v8366 = vsel %vm6629, %v7661, %v8365
        %v8367 = vsel %vm6632, %v7674, %v8366
        %v8368 = vsel %vm6635, %v7687, %v8367
        %v8369 = vsel %vm6638, %v7700, %v8368
        %v8370 = vsel %vm6641, %v7713, %v8369
        %v8380 = vsel %vm6623, %v7948, %v7935
        %v8381 = vsel %vm6626, %v7961, %v8380
        %v8382 = vsel %vm6629, %v7974, %v8381
        %v8383 = vsel %vm6632, %v7987, %v8382
        %v8384 = vsel %vm6635, %v8000, %v8383
        %v8385 = vsel %vm6638, %v8013, %v8384
        %v8386 = vsel %vm6641, %v8026, %v8385
        %v8396 = vsel %vm6623, %v8261, %v8248
        %v8397 = vsel %vm6626, %v8274, %v8396
        %v8398 = vsel %vm6629, %v8287, %v8397
        %v8399 = vsel %vm6632, %v8300, %v8398
        %v8400 = vsel %vm6635, %v8313, %v8399
        %v8401 = vsel %vm6638, %v8326, %v8400
        %v8402 = vsel %vm6641, %v8339, %v8401
        %v8404 = vsel %vm1447, %v8354, %v8370
        %vm8405 = vcmask 130048
        %v8406 = vsel %vm8405, %v8404, %v8386
        %vm8407 = vcmask 195584
        %v8408 = vsel %vm8407, %v8406, %v8402
        %v8409 = vld [vmem:[%s9] sm:$0xff]
        %v8410 = vld [vmem:[%s9 + $0x8] sm:$0xff]
        %v8411 = vld [vmem:[%s9 + $0x10] sm:$0xff]
        %v8412 = vld [vmem:[%s9 + $0x18] sm:$0xff]
        %v8413 = vld [vmem:[%s10] sm:$0x1]
        %v8415 = vlaneseq
        %v8416 = vshrl.u32 %v8415, 7
        %v8417 = vsub.s32 0, %v8416
        %v8418 = vrot.slane %v8413, %v8417
        %v8421 = vsel %vm653, %v8408, 0
        %8423 = vmatprep.subr.mxu0 0.0
        %8424 = vmatpush1.msra.mxu0 0.0
        %8425 = vmatprep.subr.mxu0 0.0
        %8426 = vmatpush1.msra.mxu0 0.0
        %8427 = vmatprep.subr.mxu0 0.0
        %8428 = vmatpush1.msra.mxu0 0.0
        %8429 = vmatprep.subr.mxu0 0.0
        %8430 = vmatpush1.msra.mxu0 0.0
        %8431 = vmatprep.subr.mxu0 0.0
        %8432 = vmatpush1.msra.mxu0 0.0
        %8433 = vmatprep.subr.mxu0 0.0
        %8434 = vmatpush1.msra.mxu0 0.0
        %8435 = vmatprep.subr.mxu0 0.0
        %8436 = vmatpush1.msra.mxu0 0.0
        %8437 = vmatprep.subr.mxu0 0.0
        %8438 = vmatpush1.msra.mxu0 0.0
        %8439 = vmatprep.subr.mxu0 0.0
        %8440 = vmatpush1.msra.mxu0 0.0
        %8441 = vmatprep.subr.mxu0 0.0
        %8442 = vmatpush1.msra.mxu0 0.0
        %8443 = vmatprep.subr.mxu0 0.0
        %8444 = vmatpush1.msra.mxu0 0.0
        %8445 = vmatprep.subr.mxu0 0.0
        %8446 = vmatpush1.msra.mxu0 0.0
        %8447 = vmatprep.subr.mxu0 0.0
        %8448 = vmatpush1.msra.mxu0 %v8412
        %8449 = vmatprep.subr.mxu0 0.0
        %8450 = vmatpush1.msra.mxu0 %v8411
        %8451 = vmatprep.subr.mxu0 0.0
        %8452 = vmatpush1.msra.mxu0 %v8410
        %8453 = vmatprep.subr.mxu0 0.0
        %8454 = vmatpush1.msra.mxu0 %v8409
        %8455 = vmatprep.subr.mxu0 0.0
        %8456 = vmatpush2.msra.mxu0 0.0
        %8457 = vmatprep.subr.mxu0 0.0
        %8458 = vmatpush2.msra.mxu0 0.0
        %8459 = vmatprep.subr.mxu0 0.0
        %8460 = vmatpush2.msra.mxu0 0.0
        %8461 = vmatprep.subr.mxu0 0.0
        %8462 = vmatpush2.msra.mxu0 0.0
        %8463 = vmatprep.subr.mxu0 0.0
        %8464 = vmatpush2.msra.mxu0 0.0
        %8465 = vmatprep.subr.mxu0 0.0
        %8466 = vmatpush2.msra.mxu0 0.0
        %8467 = vmatprep.subr.mxu0 0.0
        %8468 = vmatpush2.msra.mxu0 0.0
        %8469 = vmatprep.subr.mxu0 0.0
        %8470 = vmatpush2.msra.mxu0 0.0
        %8471 = vmatprep.subr.mxu0 0.0
        %8472 = vmatpush2.msra.mxu0 0.0
        %8473 = vmatprep.subr.mxu0 0.0
        %8474 = vmatpush2.msra.mxu0 0.0
        %8475 = vmatprep.subr.mxu0 0.0
        %8476 = vmatpush2.msra.mxu0 0.0
        %8477 = vmatprep.subr.mxu0 0.0
        %8478 = vmatpush2.msra.mxu0 0.0
        %8479 = vmatprep.subr.mxu0 0.0
        %8480 = vmatpush2.msra.mxu0 0.0
        %8481 = vmatprep.subr.mxu0 0.0
        %8482 = vmatpush2.msra.mxu0 0.0
        %8483 = vmatprep.subr.mxu0 0.0
        %8484 = vmatpush2.msra.mxu0 0.0
        %8485 = vmatprep.subr.mxu0 0.0
        %8486 = vmatpush2.msra.mxu0 0.0
        %8487 = vmatprep.mubr.f32.mxu0 0.0
        %8488 = vmatmul.mubr.f32.gmra.mxu0 %v8421
        %v8489 = vpop.f32.mrf.mxu0
        %v8490 = vadd.f32 %v8418, %v8489
        %v8491 = vpop.f32.mrf.mxu0
        %8492 = vdwg.mxu0
        %vm8493 = vcmask 31744
        %v8494 = vsel %vm8493, %v8490, -inf
        %8495 = vmax.xlane.f32.xlu0 %v8494
        %v8496 = vpop.xlane.xlu0 %8495
        %v8497 = vsub.f32 %v8490, %v8496
        %v8498 = vmul.f32 %v8497, 1.442695
        %v8499 = vpow.pop %v8498
        %v8500 = vsel %vm8493, %v8499, 0.0
        %8501 = vadd.xlane.f32.xlu0 %v8500
        %v8502 = vpop.xlane.xlu0 %8501
        %v8503 = vrcp.pop %v8502
        %v8504 = vmul.f32 %v8499, %v8503
        %v8506 = vcombine.high %v8504, %v8504
        %v8508 = vunpack.c.l.s4 1966171168
        %v8509 = vunpack.c.0.s8 %v8508
        %v8510 = vlaneseq
        %v8511 = vshrl.u32 %v8510, 7
        %v8512 = vsub.s32 %v8509, %v8511
        %v8513 = vrot.slane %v8504, %v8512
        %v8515 = vunpack.c.l.s4 1966171168
        %v8516 = vunpack.c.0.s8 %v8515
        %v8517 = vlaneseq
        %v8518 = vshrl.u32 %v8517, 7
        %v8519 = vsub.s32 %v8516, %v8518
        %v8520 = vrot.slane %v8506, %v8519
        %v8521 = vcombine.high %v8513, %v8513
        %v8522 = vcombine.high %v8520, %v8520
        %v8524 = vunpack.c.l.s4 1966171168
        %v8525 = vunpack.c.0.s8 %v8524
        %v8526 = vlaneseq
        %v8527 = vshrl.u32 %v8526, 7
        %v8528 = vsub.s32 %v8525, %v8527
        %v8529 = vrot.slane %v8513, %v8528
        %v8531 = vunpack.c.l.s4 1966171168
        %v8532 = vunpack.c.0.s8 %v8531
        %v8533 = vlaneseq
        %v8534 = vshrl.u32 %v8533, 7
        %v8535 = vsub.s32 %v8532, %v8534
        %v8536 = vrot.slane %v8520, %v8535
        %v8538 = vunpack.c.l.s4 1966171168
        %v8539 = vunpack.c.0.s8 %v8538
        %v8540 = vlaneseq
        %v8541 = vshrl.u32 %v8540, 7
        %v8542 = vsub.s32 %v8539, %v8541
        %v8543 = vrot.slane %v8521, %v8542
        %v8545 = vunpack.c.l.s4 1966171168
        %v8546 = vunpack.c.0.s8 %v8545
        %v8547 = vlaneseq
        %v8548 = vshrl.u32 %v8547, 7
        %v8549 = vsub.s32 %v8546, %v8548
        %v8550 = vrot.slane %v8522, %v8549
        %v8551 = vcombine.high %v8529, %v8529
        %v8552 = vcombine.high %v8536, %v8536
        %v8553 = vcombine.high %v8543, %v8543
        %v8554 = vcombine.high %v8550, %v8550
        %v8555 = vlaneseq
        %v8556 = vshrl.u32 %v8555, 7
        %v8557 = vsub.s32 0, %v8556
        %v8558 = vrot.slane %v8529, %v8557
        %v8559 = vlaneseq
        %v8560 = vshrl.u32 %v8559, 7
        %v8561 = vsub.s32 0, %v8560
        %v8562 = vrot.slane %v8543, %v8561
        %v8563 = vlaneseq
        %v8564 = vshrl.u32 %v8563, 7
        %v8565 = vsub.s32 0, %v8564
        %v8566 = vrot.slane %v8551, %v8565
        %v8567 = vlaneseq
        %v8568 = vshrl.u32 %v8567, 7
        %v8569 = vsub.s32 0, %v8568
        %v8570 = vrot.slane %v8553, %v8569
        %v8571 = vlaneseq
        %v8572 = vshrl.u32 %v8571, 7
        %v8573 = vsub.s32 0, %v8572
        %v8574 = vrot.slane %v8536, %v8573
        %v8575 = vlaneseq
        %v8576 = vshrl.u32 %v8575, 7
        %v8577 = vsub.s32 0, %v8576
        %v8578 = vrot.slane %v8550, %v8577
        %v8579 = vlaneseq
        %v8580 = vshrl.u32 %v8579, 7
        %v8581 = vsub.s32 0, %v8580
        %v8582 = vrot.slane %v8552, %v8581
        %v8583 = vlaneseq
        %v8584 = vshrl.u32 %v8583, 7
        %v8585 = vsub.s32 0, %v8584
        %v8586 = vrot.slane %v8554, %v8585
        %8587 = vset.pattern.permute.xlu0 0
        %8588 = vperm.xlu0 %8587, %v8558
        %v8589 = vpop.permute.xlu0 %8588
        %8591 = vset.pattern.permute.xlu0 0
        %8592 = vperm.xlu0 %8591, %v8562
        %v8593 = vpop.permute.xlu0 %8592
        %8595 = vset.pattern.permute.xlu0 0
        %8596 = vperm.xlu0 %8595, %v8566
        %v8597 = vpop.permute.xlu0 %8596
        %8599 = vset.pattern.permute.xlu0 0
        %8600 = vperm.xlu0 %8599, %v8570
        %v8601 = vpop.permute.xlu0 %8600
        %8603 = vset.pattern.permute.xlu0 0
        %8604 = vperm.xlu0 %8603, %v8574
        %v8605 = vpop.permute.xlu0 %8604
        %8607 = vset.pattern.permute.xlu0 0
        %8608 = vperm.xlu0 %8607, %v8578
        %v8609 = vpop.permute.xlu0 %8608
        %8611 = vset.pattern.permute.xlu0 0
        %8612 = vperm.xlu0 %8611, %v8582
        %v8613 = vpop.permute.xlu0 %8612
        %8615 = vset.pattern.permute.xlu0 0
        %8616 = vperm.xlu0 %8615, %v8586
        %v8617 = vpop.permute.xlu0 %8616
        %v8619 = vmul.f32 %v7041, %v8589
        %v8620 = vmul.f32 %v7042, %v8593
        %v8621 = vmul.f32 %v7043, %v8597
        %v8622 = vmul.f32 %v7044, %v8601
        %v8623 = vmul.f32 %v7045, %v8605
        %v8624 = vmul.f32 %v7046, %v8609
        %v8625 = vmul.f32 %v7047, %v8613
        %v8626 = vmul.f32 %v7048, %v8617
        %8627 = vset.pattern.permute.xlu0 1
        %8628 = vperm.xlu0 %8627, %v8558
        %v8629 = vpop.permute.xlu0 %8628
        %8631 = vset.pattern.permute.xlu0 1
        %8632 = vperm.xlu0 %8631, %v8562
        %v8633 = vpop.permute.xlu0 %8632
        %8635 = vset.pattern.permute.xlu0 1
        %8636 = vperm.xlu0 %8635, %v8566
        %v8637 = vpop.permute.xlu0 %8636
        %8639 = vset.pattern.permute.xlu0 1
        %8640 = vperm.xlu0 %8639, %v8570
        %v8641 = vpop.permute.xlu0 %8640
        %8643 = vset.pattern.permute.xlu0 1
        %8644 = vperm.xlu0 %8643, %v8574
        %v8645 = vpop.permute.xlu0 %8644
        %8647 = vset.pattern.permute.xlu0 1
        %8648 = vperm.xlu0 %8647, %v8578
        %v8649 = vpop.permute.xlu0 %8648
        %8651 = vset.pattern.permute.xlu0 1
        %8652 = vperm.xlu0 %8651, %v8582
        %v8653 = vpop.permute.xlu0 %8652
        %8655 = vset.pattern.permute.xlu0 1
        %8656 = vperm.xlu0 %8655, %v8586
        %v8657 = vpop.permute.xlu0 %8656
        %v8659 = vmul.f32 %v7049, %v8629
        %v8660 = vmul.f32 %v7050, %v8633
        %v8661 = vmul.f32 %v7051, %v8637
        %v8662 = vmul.f32 %v7052, %v8641
        %v8663 = vmul.f32 %v7053, %v8645
        %v8664 = vmul.f32 %v7054, %v8649
        %v8665 = vmul.f32 %v7055, %v8653
        %v8666 = vmul.f32 %v7056, %v8657
        %8667 = vset.pattern.permute.xlu0 2
        %8668 = vperm.xlu0 %8667, %v8558
        %v8669 = vpop.permute.xlu0 %8668
        %8671 = vset.pattern.permute.xlu0 2
        %8672 = vperm.xlu0 %8671, %v8562
        %v8673 = vpop.permute.xlu0 %8672
        %8675 = vset.pattern.permute.xlu0 2
        %8676 = vperm.xlu0 %8675, %v8566
        %v8677 = vpop.permute.xlu0 %8676
        %8679 = vset.pattern.permute.xlu0 2
        %8680 = vperm.xlu0 %8679, %v8570
        %v8681 = vpop.permute.xlu0 %8680
        %8683 = vset.pattern.permute.xlu0 2
        %8684 = vperm.xlu0 %8683, %v8574
        %v8685 = vpop.permute.xlu0 %8684
        %8687 = vset.pattern.permute.xlu0 2
        %8688 = vperm.xlu0 %8687, %v8578
        %v8689 = vpop.permute.xlu0 %8688
        %8691 = vset.pattern.permute.xlu0 2
        %8692 = vperm.xlu0 %8691, %v8582
        %v8693 = vpop.permute.xlu0 %8692
        %8695 = vset.pattern.permute.xlu0 2
        %8696 = vperm.xlu0 %8695, %v8586
        %v8697 = vpop.permute.xlu0 %8696
        %v8699 = vmul.f32 %v7073, %v8669
        %v8700 = vmul.f32 %v7074, %v8673
        %v8701 = vmul.f32 %v7075, %v8677
        %v8702 = vmul.f32 %v7076, %v8681
        %v8703 = vmul.f32 %v7077, %v8685
        %v8704 = vmul.f32 %v7078, %v8689
        %v8705 = vmul.f32 %v7079, %v8693
        %v8706 = vmul.f32 %v7080, %v8697
        %8707 = vset.pattern.permute.xlu0 3
        %8708 = vperm.xlu0 %8707, %v8558
        %v8709 = vpop.permute.xlu0 %8708
        %8711 = vset.pattern.permute.xlu0 3
        %8712 = vperm.xlu0 %8711, %v8562
        %v8713 = vpop.permute.xlu0 %8712
        %8715 = vset.pattern.permute.xlu0 3
        %8716 = vperm.xlu0 %8715, %v8566
        %v8717 = vpop.permute.xlu0 %8716
        %8719 = vset.pattern.permute.xlu0 3
        %8720 = vperm.xlu0 %8719, %v8570
        %v8721 = vpop.permute.xlu0 %8720
        %8723 = vset.pattern.permute.xlu0 3
        %8724 = vperm.xlu0 %8723, %v8574
        %v8725 = vpop.permute.xlu0 %8724
        %8727 = vset.pattern.permute.xlu0 3
        %8728 = vperm.xlu0 %8727, %v8578
        %v8729 = vpop.permute.xlu0 %8728
        %8731 = vset.pattern.permute.xlu0 3
        %8732 = vperm.xlu0 %8731, %v8582
        %v8733 = vpop.permute.xlu0 %8732
        %8735 = vset.pattern.permute.xlu0 3
        %8736 = vperm.xlu0 %8735, %v8586
        %v8737 = vpop.permute.xlu0 %8736
        %v8739 = vmul.f32 %v7081, %v8709
        %v8740 = vmul.f32 %v7082, %v8713
        %v8741 = vmul.f32 %v7083, %v8717
        %v8742 = vmul.f32 %v7084, %v8721
        %v8743 = vmul.f32 %v7085, %v8725
        %v8744 = vmul.f32 %v7086, %v8729
        %v8745 = vmul.f32 %v7087, %v8733
        %v8746 = vmul.f32 %v7088, %v8737
        %8755 = vrot.lane.b32.xlu0 %v8659, 32
        %v8756 = vpop.permute.xlu0 %8755
        %8757 = vrot.lane.b32.xlu0 %v8660, 32
        %v8758 = vpop.permute.xlu0 %8757
        %8759 = vrot.lane.b32.xlu0 %v8661, 32
        %v8760 = vpop.permute.xlu0 %8759
        %8761 = vrot.lane.b32.xlu0 %v8662, 32
        %v8762 = vpop.permute.xlu0 %8761
        %8763 = vrot.lane.b32.xlu0 %v8663, 32
        %v8764 = vpop.permute.xlu0 %8763
        %8765 = vrot.lane.b32.xlu0 %v8664, 32
        %v8766 = vpop.permute.xlu0 %8765
        %8767 = vrot.lane.b32.xlu0 %v8665, 32
        %v8768 = vpop.permute.xlu0 %8767
        %8769 = vrot.lane.b32.xlu0 %v8666, 32
        %v8770 = vpop.permute.xlu0 %8769
        %8787 = vrot.lane.b32.xlu0 %v8699, 64
        %v8788 = vpop.permute.xlu0 %8787
        %8789 = vrot.lane.b32.xlu0 %v8700, 64
        %v8790 = vpop.permute.xlu0 %8789
        %8791 = vrot.lane.b32.xlu0 %v8701, 64
        %v8792 = vpop.permute.xlu0 %8791
        %8793 = vrot.lane.b32.xlu0 %v8702, 64
        %v8794 = vpop.permute.xlu0 %8793
        %8795 = vrot.lane.b32.xlu0 %v8703, 64
        %v8796 = vpop.permute.xlu0 %8795
        %8797 = vrot.lane.b32.xlu0 %v8704, 64
        %v8798 = vpop.permute.xlu0 %8797
        %8799 = vrot.lane.b32.xlu0 %v8705, 64
        %v8800 = vpop.permute.xlu0 %8799
        %8801 = vrot.lane.b32.xlu0 %v8706, 64
        %v8802 = vpop.permute.xlu0 %8801
        %8819 = vrot.lane.b32.xlu0 %v8739, 96
        %v8820 = vpop.permute.xlu0 %8819
        %8821 = vrot.lane.b32.xlu0 %v8740, 96
        %v8822 = vpop.permute.xlu0 %8821
        %8823 = vrot.lane.b32.xlu0 %v8741, 96
        %v8824 = vpop.permute.xlu0 %8823
        %8825 = vrot.lane.b32.xlu0 %v8742, 96
        %v8826 = vpop.permute.xlu0 %8825
        %8827 = vrot.lane.b32.xlu0 %v8743, 96
        %v8828 = vpop.permute.xlu0 %8827
        %8829 = vrot.lane.b32.xlu0 %v8744, 96
        %v8830 = vpop.permute.xlu0 %8829
        %8831 = vrot.lane.b32.xlu0 %v8745, 96
        %v8832 = vpop.permute.xlu0 %8831
        %8833 = vrot.lane.b32.xlu0 %v8746, 96
        %v8834 = vpop.permute.xlu0 %8833
        %v8843 = vsel %vm653, %v8619, %v8756
        %v8844 = vsel %vm653, %v8620, %v8758
        %v8845 = vsel %vm653, %v8621, %v8760
        %v8846 = vsel %vm653, %v8622, %v8762
        %v8847 = vsel %vm653, %v8623, %v8764
        %v8848 = vsel %vm653, %v8624, %v8766
        %v8849 = vsel %vm653, %v8625, %v8768
        %v8850 = vsel %vm653, %v8626, %v8770
        %vm8851 = vcmask 523264
        %v8852 = vsel %vm8851, %v8843, %v8788
        %v8853 = vsel %vm8851, %v8844, %v8790
        %v8854 = vsel %vm8851, %v8845, %v8792
        %v8855 = vsel %vm8851, %v8846, %v8794
        %v8856 = vsel %vm8851, %v8847, %v8796
        %v8857 = vsel %vm8851, %v8848, %v8798
        %v8858 = vsel %vm8851, %v8849, %v8800
        %v8859 = vsel %vm8851, %v8850, %v8802
        %vm8860 = vcmask 785408
        %v8861 = vsel %vm8860, %v8852, %v8820
        %v8862 = vsel %vm8860, %v8853, %v8822
        %v8863 = vsel %vm8860, %v8854, %v8824
        %v8864 = vsel %vm8860, %v8855, %v8826
        %v8865 = vsel %vm8860, %v8856, %v8828
        %v8866 = vsel %vm8860, %v8857, %v8830
        %v8867 = vsel %vm8860, %v8858, %v8832
        %v8868 = vsel %vm8860, %v8859, %v8834
        %8901 = vrot.lane.b32.xlu0 %v1289, 120
        %v8902 = vpop.permute.xlu0 %8901
        %8903 = vrot.lane.b32.xlu0 %v1294, 120
        %v8904 = vpop.permute.xlu0 %8903
        %8905 = vrot.lane.b32.xlu0 %v1299, 120
        %v8906 = vpop.permute.xlu0 %8905
        %8907 = vrot.lane.b32.xlu0 %v1304, 120
        %v8908 = vpop.permute.xlu0 %8907
        %8909 = vrot.lane.b32.xlu0 %v1309, 120
        %v8910 = vpop.permute.xlu0 %8909
        %8911 = vrot.lane.b32.xlu0 %v1314, 120
        %v8912 = vpop.permute.xlu0 %8911
        %8913 = vrot.lane.b32.xlu0 %v1319, 120
        %v8914 = vpop.permute.xlu0 %8913
        %8915 = vrot.lane.b32.xlu0 %v1324, 120
        %v8916 = vpop.permute.xlu0 %8915
        %8917 = vrot.lane.b32.xlu0 %v1329, 120
        %v8918 = vpop.permute.xlu0 %8917
        %8919 = vrot.lane.b32.xlu0 %v1334, 120
        %v8920 = vpop.permute.xlu0 %8919
        %8921 = vrot.lane.b32.xlu0 %v1339, 120
        %v8922 = vpop.permute.xlu0 %8921
        %8923 = vrot.lane.b32.xlu0 %v1344, 120
        %v8924 = vpop.permute.xlu0 %8923
        %8925 = vrot.lane.b32.xlu0 %v1349, 120
        %v8926 = vpop.permute.xlu0 %8925
        %8927 = vrot.lane.b32.xlu0 %v1354, 120
        %v8928 = vpop.permute.xlu0 %8927
        %8929 = vrot.lane.b32.xlu0 %v1359, 120
        %v8930 = vpop.permute.xlu0 %8929
        %8931 = vrot.lane.b32.xlu0 %v1364, 120
        %v8932 = vpop.permute.xlu0 %8931
        %8933 = vrot.lane.b32.xlu0 %v1369, 120
        %v8934 = vpop.permute.xlu0 %8933
        %8935 = vrot.lane.b32.xlu0 %v1374, 120
        %v8936 = vpop.permute.xlu0 %8935
        %8937 = vrot.lane.b32.xlu0 %v1379, 120
        %v8938 = vpop.permute.xlu0 %8937
        %8939 = vrot.lane.b32.xlu0 %v1384, 120
        %v8940 = vpop.permute.xlu0 %8939
        %8941 = vrot.lane.b32.xlu0 %v1389, 120
        %v8942 = vpop.permute.xlu0 %8941
        %8943 = vrot.lane.b32.xlu0 %v1394, 120
        %v8944 = vpop.permute.xlu0 %8943
        %8945 = vrot.lane.b32.xlu0 %v1399, 120
        %v8946 = vpop.permute.xlu0 %8945
        %8947 = vrot.lane.b32.xlu0 %v1404, 120
        %v8948 = vpop.permute.xlu0 %8947
        %8949 = vrot.lane.b32.xlu0 %v1409, 120
        %v8950 = vpop.permute.xlu0 %8949
        %8951 = vrot.lane.b32.xlu0 %v1414, 120
        %v8952 = vpop.permute.xlu0 %8951
        %8953 = vrot.lane.b32.xlu0 %v1419, 120
        %v8954 = vpop.permute.xlu0 %8953
        %8955 = vrot.lane.b32.xlu0 %v1424, 120
        %v8956 = vpop.permute.xlu0 %8955
        %8957 = vrot.lane.b32.xlu0 %v1429, 120
        %v8958 = vpop.permute.xlu0 %8957
        %8959 = vrot.lane.b32.xlu0 %v1434, 120
        %v8960 = vpop.permute.xlu0 %8959
        %8961 = vrot.lane.b32.xlu0 %v1439, 120
        %v8962 = vpop.permute.xlu0 %8961
        %8963 = vrot.lane.b32.xlu0 %v1444, 120
        %v8964 = vpop.permute.xlu0 %8963
        %8997 = vrot.lane.b32.xlu0 %v1289, 112
        %v8998 = vpop.permute.xlu0 %8997
        %8999 = vrot.lane.b32.xlu0 %v1294, 112
        %v9000 = vpop.permute.xlu0 %8999
        %9001 = vrot.lane.b32.xlu0 %v1299, 112
        %v9002 = vpop.permute.xlu0 %9001
        %9003 = vrot.lane.b32.xlu0 %v1304, 112
        %v9004 = vpop.permute.xlu0 %9003
        %9005 = vrot.lane.b32.xlu0 %v1309, 112
        %v9006 = vpop.permute.xlu0 %9005
        %9007 = vrot.lane.b32.xlu0 %v1314, 112
        %v9008 = vpop.permute.xlu0 %9007
        %9009 = vrot.lane.b32.xlu0 %v1319, 112
        %v9010 = vpop.permute.xlu0 %9009
        %9011 = vrot.lane.b32.xlu0 %v1324, 112
        %v9012 = vpop.permute.xlu0 %9011
        %9013 = vrot.lane.b32.xlu0 %v1329, 112
        %v9014 = vpop.permute.xlu0 %9013
        %9015 = vrot.lane.b32.xlu0 %v1334, 112
        %v9016 = vpop.permute.xlu0 %9015
        %9017 = vrot.lane.b32.xlu0 %v1339, 112
        %v9018 = vpop.permute.xlu0 %9017
        %9019 = vrot.lane.b32.xlu0 %v1344, 112
        %v9020 = vpop.permute.xlu0 %9019
        %9021 = vrot.lane.b32.xlu0 %v1349, 112
        %v9022 = vpop.permute.xlu0 %9021
        %9023 = vrot.lane.b32.xlu0 %v1354, 112
        %v9024 = vpop.permute.xlu0 %9023
        %9025 = vrot.lane.b32.xlu0 %v1359, 112
        %v9026 = vpop.permute.xlu0 %9025
        %9027 = vrot.lane.b32.xlu0 %v1364, 112
        %v9028 = vpop.permute.xlu0 %9027
        %9029 = vrot.lane.b32.xlu0 %v1369, 112
        %v9030 = vpop.permute.xlu0 %9029
        %9031 = vrot.lane.b32.xlu0 %v1374, 112
        %v9032 = vpop.permute.xlu0 %9031
        %9033 = vrot.lane.b32.xlu0 %v1379, 112
        %v9034 = vpop.permute.xlu0 %9033
        %9035 = vrot.lane.b32.xlu0 %v1384, 112
        %v9036 = vpop.permute.xlu0 %9035
        %9037 = vrot.lane.b32.xlu0 %v1389, 112
        %v9038 = vpop.permute.xlu0 %9037
        %9039 = vrot.lane.b32.xlu0 %v1394, 112
        %v9040 = vpop.permute.xlu0 %9039
        %9041 = vrot.lane.b32.xlu0 %v1399, 112
        %v9042 = vpop.permute.xlu0 %9041
        %9043 = vrot.lane.b32.xlu0 %v1404, 112
        %v9044 = vpop.permute.xlu0 %9043
        %9045 = vrot.lane.b32.xlu0 %v1409, 112
        %v9046 = vpop.permute.xlu0 %9045
        %9047 = vrot.lane.b32.xlu0 %v1414, 112
        %v9048 = vpop.permute.xlu0 %9047
        %9049 = vrot.lane.b32.xlu0 %v1419, 112
        %v9050 = vpop.permute.xlu0 %9049
        %9051 = vrot.lane.b32.xlu0 %v1424, 112
        %v9052 = vpop.permute.xlu0 %9051
        %9053 = vrot.lane.b32.xlu0 %v1429, 112
        %v9054 = vpop.permute.xlu0 %9053
        %9055 = vrot.lane.b32.xlu0 %v1434, 112
        %v9056 = vpop.permute.xlu0 %9055
        %9057 = vrot.lane.b32.xlu0 %v1439, 112
        %v9058 = vpop.permute.xlu0 %9057
        %9059 = vrot.lane.b32.xlu0 %v1444, 112
        %v9060 = vpop.permute.xlu0 %9059
        %9093 = vrot.lane.b32.xlu0 %v1289, 104
        %v9094 = vpop.permute.xlu0 %9093
        %9095 = vrot.lane.b32.xlu0 %v1294, 104
        %v9096 = vpop.permute.xlu0 %9095
        %9097 = vrot.lane.b32.xlu0 %v1299, 104
        %v9098 = vpop.permute.xlu0 %9097
        %9099 = vrot.lane.b32.xlu0 %v1304, 104
        %v9100 = vpop.permute.xlu0 %9099
        %9101 = vrot.lane.b32.xlu0 %v1309, 104
        %v9102 = vpop.permute.xlu0 %9101
        %9103 = vrot.lane.b32.xlu0 %v1314, 104
        %v9104 = vpop.permute.xlu0 %9103
        %9105 = vrot.lane.b32.xlu0 %v1319, 104
        %v9106 = vpop.permute.xlu0 %9105
        %9107 = vrot.lane.b32.xlu0 %v1324, 104
        %v9108 = vpop.permute.xlu0 %9107
        %9109 = vrot.lane.b32.xlu0 %v1329, 104
        %v9110 = vpop.permute.xlu0 %9109
        %9111 = vrot.lane.b32.xlu0 %v1334, 104
        %v9112 = vpop.permute.xlu0 %9111
        %9113 = vrot.lane.b32.xlu0 %v1339, 104
        %v9114 = vpop.permute.xlu0 %9113
        %9115 = vrot.lane.b32.xlu0 %v1344, 104
        %v9116 = vpop.permute.xlu0 %9115
        %9117 = vrot.lane.b32.xlu0 %v1349, 104
        %v9118 = vpop.permute.xlu0 %9117
        %9119 = vrot.lane.b32.xlu0 %v1354, 104
        %v9120 = vpop.permute.xlu0 %9119
        %9121 = vrot.lane.b32.xlu0 %v1359, 104
        %v9122 = vpop.permute.xlu0 %9121
        %9123 = vrot.lane.b32.xlu0 %v1364, 104
        %v9124 = vpop.permute.xlu0 %9123
        %9125 = vrot.lane.b32.xlu0 %v1369, 104
        %v9126 = vpop.permute.xlu0 %9125
        %9127 = vrot.lane.b32.xlu0 %v1374, 104
        %v9128 = vpop.permute.xlu0 %9127
        %9129 = vrot.lane.b32.xlu0 %v1379, 104
        %v9130 = vpop.permute.xlu0 %9129
        %9131 = vrot.lane.b32.xlu0 %v1384, 104
        %v9132 = vpop.permute.xlu0 %9131
        %9133 = vrot.lane.b32.xlu0 %v1389, 104
        %v9134 = vpop.permute.xlu0 %9133
        %9135 = vrot.lane.b32.xlu0 %v1394, 104
        %v9136 = vpop.permute.xlu0 %9135
        %9137 = vrot.lane.b32.xlu0 %v1399, 104
        %v9138 = vpop.permute.xlu0 %9137
        %9139 = vrot.lane.b32.xlu0 %v1404, 104
        %v9140 = vpop.permute.xlu0 %9139
        %9141 = vrot.lane.b32.xlu0 %v1409, 104
        %v9142 = vpop.permute.xlu0 %9141
        %9143 = vrot.lane.b32.xlu0 %v1414, 104
        %v9144 = vpop.permute.xlu0 %9143
        %9145 = vrot.lane.b32.xlu0 %v1419, 104
        %v9146 = vpop.permute.xlu0 %9145
        %9147 = vrot.lane.b32.xlu0 %v1424, 104
        %v9148 = vpop.permute.xlu0 %9147
        %9149 = vrot.lane.b32.xlu0 %v1429, 104
        %v9150 = vpop.permute.xlu0 %9149
        %9151 = vrot.lane.b32.xlu0 %v1434, 104
        %v9152 = vpop.permute.xlu0 %9151
        %9153 = vrot.lane.b32.xlu0 %v1439, 104
        %v9154 = vpop.permute.xlu0 %9153
        %9155 = vrot.lane.b32.xlu0 %v1444, 104
        %v9156 = vpop.permute.xlu0 %9155
        %9189 = vmatprep.subr.mxu0 0.0
        %9190 = vmatpush1.msra.mxu0 %v9100
        %9191 = vmatprep.subr.mxu0 0.0
        %9192 = vmatpush1.msra.mxu0 %v9098
        %9193 = vmatprep.subr.mxu0 0.0
        %9194 = vmatpush1.msra.mxu0 %v9096
        %9195 = vmatprep.subr.mxu0 0.0
        %9196 = vmatpush1.msra.mxu0 %v9094
        %9197 = vmatprep.subr.mxu0 0.0
        %9198 = vmatpush1.msra.mxu0 %v9004
        %9199 = vmatprep.subr.mxu0 0.0
        %9200 = vmatpush1.msra.mxu0 %v9002
        %9201 = vmatprep.subr.mxu0 0.0
        %9202 = vmatpush1.msra.mxu0 %v9000
        %9203 = vmatprep.subr.mxu0 0.0
        %9204 = vmatpush1.msra.mxu0 %v8998
        %9205 = vmatprep.subr.mxu0 0.0
        %9206 = vmatpush1.msra.mxu0 %v8908
        %9207 = vmatprep.subr.mxu0 0.0
        %9208 = vmatpush1.msra.mxu0 %v8906
        %9209 = vmatprep.subr.mxu0 0.0
        %9210 = vmatpush1.msra.mxu0 %v8904
        %9211 = vmatprep.subr.mxu0 0.0
        %9212 = vmatpush1.msra.mxu0 %v8902
        %9213 = vmatprep.subr.mxu0 0.0
        %9214 = vmatpush1.msra.mxu0 %v1304
        %9215 = vmatprep.subr.mxu0 0.0
        %9216 = vmatpush1.msra.mxu0 %v1299
        %9217 = vmatprep.subr.mxu0 0.0
        %9218 = vmatpush1.msra.mxu0 %v1294
        %9219 = vmatprep.subr.mxu0 0.0
        %9220 = vmatpush1.msra.mxu0 %v1289
        %9221 = vmatprep.subr.mxu0 0.0
        %9222 = vmatpush2.msra.mxu0 0.0
        %9223 = vmatprep.subr.mxu0 0.0
        %9224 = vmatpush2.msra.mxu0 0.0
        %9225 = vmatprep.subr.mxu0 0.0
        %9226 = vmatpush2.msra.mxu0 0.0
        %9227 = vmatprep.subr.mxu0 0.0
        %9228 = vmatpush2.msra.mxu0 0.0
        %9229 = vmatprep.subr.mxu0 0.0
        %9230 = vmatpush2.msra.mxu0 0.0
        %9231 = vmatprep.subr.mxu0 0.0
        %9232 = vmatpush2.msra.mxu0 0.0
        %9233 = vmatprep.subr.mxu0 0.0
        %9234 = vmatpush2.msra.mxu0 0.0
        %9235 = vmatprep.subr.mxu0 0.0
        %9236 = vmatpush2.msra.mxu0 0.0
        %9237 = vmatprep.subr.mxu0 0.0
        %9238 = vmatpush2.msra.mxu0 0.0
        %9239 = vmatprep.subr.mxu0 0.0
        %9240 = vmatpush2.msra.mxu0 0.0
        %9241 = vmatprep.subr.mxu0 0.0
        %9242 = vmatpush2.msra.mxu0 0.0
        %9243 = vmatprep.subr.mxu0 0.0
        %9244 = vmatpush2.msra.mxu0 0.0
        %9245 = vmatprep.subr.mxu0 0.0
        %9246 = vmatpush2.msra.mxu0 0.0
        %9247 = vmatprep.subr.mxu0 0.0
        %9248 = vmatpush2.msra.mxu0 0.0
        %9249 = vmatprep.subr.mxu0 0.0
        %9250 = vmatpush2.msra.mxu0 0.0
        %9251 = vmatprep.subr.mxu0 0.0
        %9252 = vmatpush2.msra.mxu0 0.0
        %9253 = vmatprep.mubr.f32.mxu0 0.0
        %9254 = vmatmul.mubr.f32.gmra.mxu0 %v8861
        %v9255 = vpop.f32.mrf.mxu0
        %v9256 = vadd.f32 0.0, %v9255
        %v9257 = vpop.f32.mrf.mxu0
        %9258 = vdwg.mxu0
        %9259 = vmatprep.subr.mxu0 0.0
        %9260 = vmatpush1.msra.mxu0 %v9108
        %9261 = vmatprep.subr.mxu0 0.0
        %9262 = vmatpush1.msra.mxu0 %v9106
        %9263 = vmatprep.subr.mxu0 0.0
        %9264 = vmatpush1.msra.mxu0 %v9104
        %9265 = vmatprep.subr.mxu0 0.0
        %9266 = vmatpush1.msra.mxu0 %v9102
        %9267 = vmatprep.subr.mxu0 0.0
        %9268 = vmatpush1.msra.mxu0 %v9012
        %9269 = vmatprep.subr.mxu0 0.0
        %9270 = vmatpush1.msra.mxu0 %v9010
        %9271 = vmatprep.subr.mxu0 0.0
        %9272 = vmatpush1.msra.mxu0 %v9008
        %9273 = vmatprep.subr.mxu0 0.0
        %9274 = vmatpush1.msra.mxu0 %v9006
        %9275 = vmatprep.subr.mxu0 0.0
        %9276 = vmatpush1.msra.mxu0 %v8916
        %9277 = vmatprep.subr.mxu0 0.0
        %9278 = vmatpush1.msra.mxu0 %v8914
        %9279 = vmatprep.subr.mxu0 0.0
        %9280 = vmatpush1.msra.mxu0 %v8912
        %9281 = vmatprep.subr.mxu0 0.0
        %9282 = vmatpush1.msra.mxu0 %v8910
        %9283 = vmatprep.subr.mxu0 0.0
        %9284 = vmatpush1.msra.mxu0 %v1324
        %9285 = vmatprep.subr.mxu0 0.0
        %9286 = vmatpush1.msra.mxu0 %v1319
        %9287 = vmatprep.subr.mxu0 0.0
        %9288 = vmatpush1.msra.mxu0 %v1314
        %9289 = vmatprep.subr.mxu0 0.0
        %9290 = vmatpush1.msra.mxu0 %v1309
        %9291 = vmatprep.subr.mxu0 0.0
        %9292 = vmatpush2.msra.mxu0 0.0
        %9293 = vmatprep.subr.mxu0 0.0
        %9294 = vmatpush2.msra.mxu0 0.0
        %9295 = vmatprep.subr.mxu0 0.0
        %9296 = vmatpush2.msra.mxu0 0.0
        %9297 = vmatprep.subr.mxu0 0.0
        %9298 = vmatpush2.msra.mxu0 0.0
        %9299 = vmatprep.subr.mxu0 0.0
        %9300 = vmatpush2.msra.mxu0 0.0
        %9301 = vmatprep.subr.mxu0 0.0
        %9302 = vmatpush2.msra.mxu0 0.0
        %9303 = vmatprep.subr.mxu0 0.0
        %9304 = vmatpush2.msra.mxu0 0.0
        %9305 = vmatprep.subr.mxu0 0.0
        %9306 = vmatpush2.msra.mxu0 0.0
        %9307 = vmatprep.subr.mxu0 0.0
        %9308 = vmatpush2.msra.mxu0 0.0
        %9309 = vmatprep.subr.mxu0 0.0
        %9310 = vmatpush2.msra.mxu0 0.0
        %9311 = vmatprep.subr.mxu0 0.0
        %9312 = vmatpush2.msra.mxu0 0.0
        %9313 = vmatprep.subr.mxu0 0.0
        %9314 = vmatpush2.msra.mxu0 0.0
        %9315 = vmatprep.subr.mxu0 0.0
        %9316 = vmatpush2.msra.mxu0 0.0
        %9317 = vmatprep.subr.mxu0 0.0
        %9318 = vmatpush2.msra.mxu0 0.0
        %9319 = vmatprep.subr.mxu0 0.0
        %9320 = vmatpush2.msra.mxu0 0.0
        %9321 = vmatprep.subr.mxu0 0.0
        %9322 = vmatpush2.msra.mxu0 0.0
        %9323 = vmatprep.mubr.f32.mxu0 0.0
        %9324 = vmatmul.mubr.f32.gmra.mxu0 %v8862
        %v9325 = vpop.f32.mrf.mxu0
        %v9326 = vadd.f32 0.0, %v9325
        %v9327 = vpop.f32.mrf.mxu0
        %9328 = vdwg.mxu0
        %9329 = vmatprep.subr.mxu0 0.0
        %9330 = vmatpush1.msra.mxu0 %v9116
        %9331 = vmatprep.subr.mxu0 0.0
        %9332 = vmatpush1.msra.mxu0 %v9114
        %9333 = vmatprep.subr.mxu0 0.0
        %9334 = vmatpush1.msra.mxu0 %v9112
        %9335 = vmatprep.subr.mxu0 0.0
        %9336 = vmatpush1.msra.mxu0 %v9110
        %9337 = vmatprep.subr.mxu0 0.0
        %9338 = vmatpush1.msra.mxu0 %v9020
        %9339 = vmatprep.subr.mxu0 0.0
        %9340 = vmatpush1.msra.mxu0 %v9018
        %9341 = vmatprep.subr.mxu0 0.0
        %9342 = vmatpush1.msra.mxu0 %v9016
        %9343 = vmatprep.subr.mxu0 0.0
        %9344 = vmatpush1.msra.mxu0 %v9014
        %9345 = vmatprep.subr.mxu0 0.0
        %9346 = vmatpush1.msra.mxu0 %v8924
        %9347 = vmatprep.subr.mxu0 0.0
        %9348 = vmatpush1.msra.mxu0 %v8922
        %9349 = vmatprep.subr.mxu0 0.0
        %9350 = vmatpush1.msra.mxu0 %v8920
        %9351 = vmatprep.subr.mxu0 0.0
        %9352 = vmatpush1.msra.mxu0 %v8918
        %9353 = vmatprep.subr.mxu0 0.0
        %9354 = vmatpush1.msra.mxu0 %v1344
        %9355 = vmatprep.subr.mxu0 0.0
        %9356 = vmatpush1.msra.mxu0 %v1339
        %9357 = vmatprep.subr.mxu0 0.0
        %9358 = vmatpush1.msra.mxu0 %v1334
        %9359 = vmatprep.subr.mxu0 0.0
        %9360 = vmatpush1.msra.mxu0 %v1329
        %9361 = vmatprep.subr.mxu0 0.0
        %9362 = vmatpush2.msra.mxu0 0.0
        %9363 = vmatprep.subr.mxu0 0.0
        %9364 = vmatpush2.msra.mxu0 0.0
        %9365 = vmatprep.subr.mxu0 0.0
        %9366 = vmatpush2.msra.mxu0 0.0
        %9367 = vmatprep.subr.mxu0 0.0
        %9368 = vmatpush2.msra.mxu0 0.0
        %9369 = vmatprep.subr.mxu0 0.0
        %9370 = vmatpush2.msra.mxu0 0.0
        %9371 = vmatprep.subr.mxu0 0.0
        %9372 = vmatpush2.msra.mxu0 0.0
        %9373 = vmatprep.subr.mxu0 0.0
        %9374 = vmatpush2.msra.mxu0 0.0
        %9375 = vmatprep.subr.mxu0 0.0
        %9376 = vmatpush2.msra.mxu0 0.0
        %9377 = vmatprep.subr.mxu0 0.0
        %9378 = vmatpush2.msra.mxu0 0.0
        %9379 = vmatprep.subr.mxu0 0.0
        %9380 = vmatpush2.msra.mxu0 0.0
        %9381 = vmatprep.subr.mxu0 0.0
        %9382 = vmatpush2.msra.mxu0 0.0
        %9383 = vmatprep.subr.mxu0 0.0
        %9384 = vmatpush2.msra.mxu0 0.0
        %9385 = vmatprep.subr.mxu0 0.0
        %9386 = vmatpush2.msra.mxu0 0.0
        %9387 = vmatprep.subr.mxu0 0.0
        %9388 = vmatpush2.msra.mxu0 0.0
        %9389 = vmatprep.subr.mxu0 0.0
        %9390 = vmatpush2.msra.mxu0 0.0
        %9391 = vmatprep.subr.mxu0 0.0
        %9392 = vmatpush2.msra.mxu0 0.0
        %9393 = vmatprep.mubr.f32.mxu0 0.0
        %9394 = vmatmul.mubr.f32.gmra.mxu0 %v8863
        %v9395 = vpop.f32.mrf.mxu0
        %v9396 = vadd.f32 0.0, %v9395
        %v9397 = vpop.f32.mrf.mxu0
        %9398 = vdwg.mxu0
        %9399 = vmatprep.subr.mxu0 0.0
        %9400 = vmatpush1.msra.mxu0 %v9124
        %9401 = vmatprep.subr.mxu0 0.0
        %9402 = vmatpush1.msra.mxu0 %v9122
        %9403 = vmatprep.subr.mxu0 0.0
        %9404 = vmatpush1.msra.mxu0 %v9120
        %9405 = vmatprep.subr.mxu0 0.0
        %9406 = vmatpush1.msra.mxu0 %v9118
        %9407 = vmatprep.subr.mxu0 0.0
        %9408 = vmatpush1.msra.mxu0 %v9028
        %9409 = vmatprep.subr.mxu0 0.0
        %9410 = vmatpush1.msra.mxu0 %v9026
        %9411 = vmatprep.subr.mxu0 0.0
        %9412 = vmatpush1.msra.mxu0 %v9024
        %9413 = vmatprep.subr.mxu0 0.0
        %9414 = vmatpush1.msra.mxu0 %v9022
        %9415 = vmatprep.subr.mxu0 0.0
        %9416 = vmatpush1.msra.mxu0 %v8932
        %9417 = vmatprep.subr.mxu0 0.0
        %9418 = vmatpush1.msra.mxu0 %v8930
        %9419 = vmatprep.subr.mxu0 0.0
        %9420 = vmatpush1.msra.mxu0 %v8928
        %9421 = vmatprep.subr.mxu0 0.0
        %9422 = vmatpush1.msra.mxu0 %v8926
        %9423 = vmatprep.subr.mxu0 0.0
        %9424 = vmatpush1.msra.mxu0 %v1364
        %9425 = vmatprep.subr.mxu0 0.0
        %9426 = vmatpush1.msra.mxu0 %v1359
        %9427 = vmatprep.subr.mxu0 0.0
        %9428 = vmatpush1.msra.mxu0 %v1354
        %9429 = vmatprep.subr.mxu0 0.0
        %9430 = vmatpush1.msra.mxu0 %v1349
        %9431 = vmatprep.subr.mxu0 0.0
        %9432 = vmatpush2.msra.mxu0 0.0
        %9433 = vmatprep.subr.mxu0 0.0
        %9434 = vmatpush2.msra.mxu0 0.0
        %9435 = vmatprep.subr.mxu0 0.0
        %9436 = vmatpush2.msra.mxu0 0.0
        %9437 = vmatprep.subr.mxu0 0.0
        %9438 = vmatpush2.msra.mxu0 0.0
        %9439 = vmatprep.subr.mxu0 0.0
        %9440 = vmatpush2.msra.mxu0 0.0
        %9441 = vmatprep.subr.mxu0 0.0
        %9442 = vmatpush2.msra.mxu0 0.0
        %9443 = vmatprep.subr.mxu0 0.0
        %9444 = vmatpush2.msra.mxu0 0.0
        %9445 = vmatprep.subr.mxu0 0.0
        %9446 = vmatpush2.msra.mxu0 0.0
        %9447 = vmatprep.subr.mxu0 0.0
        %9448 = vmatpush2.msra.mxu0 0.0
        %9449 = vmatprep.subr.mxu0 0.0
        %9450 = vmatpush2.msra.mxu0 0.0
        %9451 = vmatprep.subr.mxu0 0.0
        %9452 = vmatpush2.msra.mxu0 0.0
        %9453 = vmatprep.subr.mxu0 0.0
        %9454 = vmatpush2.msra.mxu0 0.0
        %9455 = vmatprep.subr.mxu0 0.0
        %9456 = vmatpush2.msra.mxu0 0.0
        %9457 = vmatprep.subr.mxu0 0.0
        %9458 = vmatpush2.msra.mxu0 0.0
        %9459 = vmatprep.subr.mxu0 0.0
        %9460 = vmatpush2.msra.mxu0 0.0
        %9461 = vmatprep.subr.mxu0 0.0
        %9462 = vmatpush2.msra.mxu0 0.0
        %9463 = vmatprep.mubr.f32.mxu0 0.0
        %9464 = vmatmul.mubr.f32.gmra.mxu0 %v8864
        %v9465 = vpop.f32.mrf.mxu0
        %v9466 = vadd.f32 0.0, %v9465
        %v9467 = vpop.f32.mrf.mxu0
        %9468 = vdwg.mxu0
        %9469 = vmatprep.subr.mxu0 0.0
        %9470 = vmatpush1.msra.mxu0 %v9132
        %9471 = vmatprep.subr.mxu0 0.0
        %9472 = vmatpush1.msra.mxu0 %v9130
        %9473 = vmatprep.subr.mxu0 0.0
        %9474 = vmatpush1.msra.mxu0 %v9128
        %9475 = vmatprep.subr.mxu0 0.0
        %9476 = vmatpush1.msra.mxu0 %v9126
        %9477 = vmatprep.subr.mxu0 0.0
        %9478 = vmatpush1.msra.mxu0 %v9036
        %9479 = vmatprep.subr.mxu0 0.0
        %9480 = vmatpush1.msra.mxu0 %v9034
        %9481 = vmatprep.subr.mxu0 0.0
        %9482 = vmatpush1.msra.mxu0 %v9032
        %9483 = vmatprep.subr.mxu0 0.0
        %9484 = vmatpush1.msra.mxu0 %v9030
        %9485 = vmatprep.subr.mxu0 0.0
        %9486 = vmatpush1.msra.mxu0 %v8940
        %9487 = vmatprep.subr.mxu0 0.0
        %9488 = vmatpush1.msra.mxu0 %v8938
        %9489 = vmatprep.subr.mxu0 0.0
        %9490 = vmatpush1.msra.mxu0 %v8936
        %9491 = vmatprep.subr.mxu0 0.0
        %9492 = vmatpush1.msra.mxu0 %v8934
        %9493 = vmatprep.subr.mxu0 0.0
        %9494 = vmatpush1.msra.mxu0 %v1384
        %9495 = vmatprep.subr.mxu0 0.0
        %9496 = vmatpush1.msra.mxu0 %v1379
        %9497 = vmatprep.subr.mxu0 0.0
        %9498 = vmatpush1.msra.mxu0 %v1374
        %9499 = vmatprep.subr.mxu0 0.0
        %9500 = vmatpush1.msra.mxu0 %v1369
        %9501 = vmatprep.subr.mxu0 0.0
        %9502 = vmatpush2.msra.mxu0 0.0
        %9503 = vmatprep.subr.mxu0 0.0
        %9504 = vmatpush2.msra.mxu0 0.0
        %9505 = vmatprep.subr.mxu0 0.0
        %9506 = vmatpush2.msra.mxu0 0.0
        %9507 = vmatprep.subr.mxu0 0.0
        %9508 = vmatpush2.msra.mxu0 0.0
        %9509 = vmatprep.subr.mxu0 0.0
        %9510 = vmatpush2.msra.mxu0 0.0
        %9511 = vmatprep.subr.mxu0 0.0
        %9512 = vmatpush2.msra.mxu0 0.0
        %9513 = vmatprep.subr.mxu0 0.0
        %9514 = vmatpush2.msra.mxu0 0.0
        %9515 = vmatprep.subr.mxu0 0.0
        %9516 = vmatpush2.msra.mxu0 0.0
        %9517 = vmatprep.subr.mxu0 0.0
        %9518 = vmatpush2.msra.mxu0 0.0
        %9519 = vmatprep.subr.mxu0 0.0
        %9520 = vmatpush2.msra.mxu0 0.0
        %9521 = vmatprep.subr.mxu0 0.0
        %9522 = vmatpush2.msra.mxu0 0.0
        %9523 = vmatprep.subr.mxu0 0.0
        %9524 = vmatpush2.msra.mxu0 0.0
        %9525 = vmatprep.subr.mxu0 0.0
        %9526 = vmatpush2.msra.mxu0 0.0
        %9527 = vmatprep.subr.mxu0 0.0
        %9528 = vmatpush2.msra.mxu0 0.0
        %9529 = vmatprep.subr.mxu0 0.0
        %9530 = vmatpush2.msra.mxu0 0.0
        %9531 = vmatprep.subr.mxu0 0.0
        %9532 = vmatpush2.msra.mxu0 0.0
        %9533 = vmatprep.mubr.f32.mxu0 0.0
        %9534 = vmatmul.mubr.f32.gmra.mxu0 %v8865
        %v9535 = vpop.f32.mrf.mxu0
        %v9536 = vadd.f32 0.0, %v9535
        %v9537 = vpop.f32.mrf.mxu0
        %9538 = vdwg.mxu0
        %9539 = vmatprep.subr.mxu0 0.0
        %9540 = vmatpush1.msra.mxu0 %v9140
        %9541 = vmatprep.subr.mxu0 0.0
        %9542 = vmatpush1.msra.mxu0 %v9138
        %9543 = vmatprep.subr.mxu0 0.0
        %9544 = vmatpush1.msra.mxu0 %v9136
        %9545 = vmatprep.subr.mxu0 0.0
        %9546 = vmatpush1.msra.mxu0 %v9134
        %9547 = vmatprep.subr.mxu0 0.0
        %9548 = vmatpush1.msra.mxu0 %v9044
        %9549 = vmatprep.subr.mxu0 0.0
        %9550 = vmatpush1.msra.mxu0 %v9042
        %9551 = vmatprep.subr.mxu0 0.0
        %9552 = vmatpush1.msra.mxu0 %v9040
        %9553 = vmatprep.subr.mxu0 0.0
        %9554 = vmatpush1.msra.mxu0 %v9038
        %9555 = vmatprep.subr.mxu0 0.0
        %9556 = vmatpush1.msra.mxu0 %v8948
        %9557 = vmatprep.subr.mxu0 0.0
        %9558 = vmatpush1.msra.mxu0 %v8946
        %9559 = vmatprep.subr.mxu0 0.0
        %9560 = vmatpush1.msra.mxu0 %v8944
        %9561 = vmatprep.subr.mxu0 0.0
        %9562 = vmatpush1.msra.mxu0 %v8942
        %9563 = vmatprep.subr.mxu0 0.0
        %9564 = vmatpush1.msra.mxu0 %v1404
        %9565 = vmatprep.subr.mxu0 0.0
        %9566 = vmatpush1.msra.mxu0 %v1399
        %9567 = vmatprep.subr.mxu0 0.0
        %9568 = vmatpush1.msra.mxu0 %v1394
        %9569 = vmatprep.subr.mxu0 0.0
        %9570 = vmatpush1.msra.mxu0 %v1389
        %9571 = vmatprep.subr.mxu0 0.0
        %9572 = vmatpush2.msra.mxu0 0.0
        %9573 = vmatprep.subr.mxu0 0.0
        %9574 = vmatpush2.msra.mxu0 0.0
        %9575 = vmatprep.subr.mxu0 0.0
        %9576 = vmatpush2.msra.mxu0 0.0
        %9577 = vmatprep.subr.mxu0 0.0
        %9578 = vmatpush2.msra.mxu0 0.0
        %9579 = vmatprep.subr.mxu0 0.0
        %9580 = vmatpush2.msra.mxu0 0.0
        %9581 = vmatprep.subr.mxu0 0.0
        %9582 = vmatpush2.msra.mxu0 0.0
        %9583 = vmatprep.subr.mxu0 0.0
        %9584 = vmatpush2.msra.mxu0 0.0
        %9585 = vmatprep.subr.mxu0 0.0
        %9586 = vmatpush2.msra.mxu0 0.0
        %9587 = vmatprep.subr.mxu0 0.0
        %9588 = vmatpush2.msra.mxu0 0.0
        %9589 = vmatprep.subr.mxu0 0.0
        %9590 = vmatpush2.msra.mxu0 0.0
        %9591 = vmatprep.subr.mxu0 0.0
        %9592 = vmatpush2.msra.mxu0 0.0
        %9593 = vmatprep.subr.mxu0 0.0
        %9594 = vmatpush2.msra.mxu0 0.0
        %9595 = vmatprep.subr.mxu0 0.0
        %9596 = vmatpush2.msra.mxu0 0.0
        %9597 = vmatprep.subr.mxu0 0.0
        %9598 = vmatpush2.msra.mxu0 0.0
        %9599 = vmatprep.subr.mxu0 0.0
        %9600 = vmatpush2.msra.mxu0 0.0
        %9601 = vmatprep.subr.mxu0 0.0
        %9602 = vmatpush2.msra.mxu0 0.0
        %9603 = vmatprep.mubr.f32.mxu0 0.0
        %9604 = vmatmul.mubr.f32.gmra.mxu0 %v8866
        %v9605 = vpop.f32.mrf.mxu0
        %v9606 = vadd.f32 0.0, %v9605
        %v9607 = vpop.f32.mrf.mxu0
        %9608 = vdwg.mxu0
        %9609 = vmatprep.subr.mxu0 0.0
        %9610 = vmatpush1.msra.mxu0 %v9148
        %9611 = vmatprep.subr.mxu0 0.0
        %9612 = vmatpush1.msra.mxu0 %v9146
        %9613 = vmatprep.subr.mxu0 0.0
        %9614 = vmatpush1.msra.mxu0 %v9144
        %9615 = vmatprep.subr.mxu0 0.0
        %9616 = vmatpush1.msra.mxu0 %v9142
        %9617 = vmatprep.subr.mxu0 0.0
        %9618 = vmatpush1.msra.mxu0 %v9052
        %9619 = vmatprep.subr.mxu0 0.0
        %9620 = vmatpush1.msra.mxu0 %v9050
        %9621 = vmatprep.subr.mxu0 0.0
        %9622 = vmatpush1.msra.mxu0 %v9048
        %9623 = vmatprep.subr.mxu0 0.0
        %9624 = vmatpush1.msra.mxu0 %v9046
        %9625 = vmatprep.subr.mxu0 0.0
        %9626 = vmatpush1.msra.mxu0 %v8956
        %9627 = vmatprep.subr.mxu0 0.0
        %9628 = vmatpush1.msra.mxu0 %v8954
        %9629 = vmatprep.subr.mxu0 0.0
        %9630 = vmatpush1.msra.mxu0 %v8952
        %9631 = vmatprep.subr.mxu0 0.0
        %9632 = vmatpush1.msra.mxu0 %v8950
        %9633 = vmatprep.subr.mxu0 0.0
        %9634 = vmatpush1.msra.mxu0 %v1424
        %9635 = vmatprep.subr.mxu0 0.0
        %9636 = vmatpush1.msra.mxu0 %v1419
        %9637 = vmatprep.subr.mxu0 0.0
        %9638 = vmatpush1.msra.mxu0 %v1414
        %9639 = vmatprep.subr.mxu0 0.0
        %9640 = vmatpush1.msra.mxu0 %v1409
        %9641 = vmatprep.subr.mxu0 0.0
        %9642 = vmatpush2.msra.mxu0 0.0
        %9643 = vmatprep.subr.mxu0 0.0
        %9644 = vmatpush2.msra.mxu0 0.0
        %9645 = vmatprep.subr.mxu0 0.0
        %9646 = vmatpush2.msra.mxu0 0.0
        %9647 = vmatprep.subr.mxu0 0.0
        %9648 = vmatpush2.msra.mxu0 0.0
        %9649 = vmatprep.subr.mxu0 0.0
        %9650 = vmatpush2.msra.mxu0 0.0
        %9651 = vmatprep.subr.mxu0 0.0
        %9652 = vmatpush2.msra.mxu0 0.0
        %9653 = vmatprep.subr.mxu0 0.0
        %9654 = vmatpush2.msra.mxu0 0.0
        %9655 = vmatprep.subr.mxu0 0.0
        %9656 = vmatpush2.msra.mxu0 0.0
        %9657 = vmatprep.subr.mxu0 0.0
        %9658 = vmatpush2.msra.mxu0 0.0
        %9659 = vmatprep.subr.mxu0 0.0
        %9660 = vmatpush2.msra.mxu0 0.0
        %9661 = vmatprep.subr.mxu0 0.0
        %9662 = vmatpush2.msra.mxu0 0.0
        %9663 = vmatprep.subr.mxu0 0.0
        %9664 = vmatpush2.msra.mxu0 0.0
        %9665 = vmatprep.subr.mxu0 0.0
        %9666 = vmatpush2.msra.mxu0 0.0
        %9667 = vmatprep.subr.mxu0 0.0
        %9668 = vmatpush2.msra.mxu0 0.0
        %9669 = vmatprep.subr.mxu0 0.0
        %9670 = vmatpush2.msra.mxu0 0.0
        %9671 = vmatprep.subr.mxu0 0.0
        %9672 = vmatpush2.msra.mxu0 0.0
        %9673 = vmatprep.mubr.f32.mxu0 0.0
        %9674 = vmatmul.mubr.f32.gmra.mxu0 %v8867
        %v9675 = vpop.f32.mrf.mxu0
        %v9676 = vadd.f32 0.0, %v9675
        %v9677 = vpop.f32.mrf.mxu0
        %9678 = vdwg.mxu0
        %9679 = vmatprep.subr.mxu0 0.0
        %9680 = vmatpush1.msra.mxu0 %v9156
        %9681 = vmatprep.subr.mxu0 0.0
        %9682 = vmatpush1.msra.mxu0 %v9154
        %9683 = vmatprep.subr.mxu0 0.0
        %9684 = vmatpush1.msra.mxu0 %v9152
        %9685 = vmatprep.subr.mxu0 0.0
        %9686 = vmatpush1.msra.mxu0 %v9150
        %9687 = vmatprep.subr.mxu0 0.0
        %9688 = vmatpush1.msra.mxu0 %v9060
        %9689 = vmatprep.subr.mxu0 0.0
        %9690 = vmatpush1.msra.mxu0 %v9058
        %9691 = vmatprep.subr.mxu0 0.0
        %9692 = vmatpush1.msra.mxu0 %v9056
        %9693 = vmatprep.subr.mxu0 0.0
        %9694 = vmatpush1.msra.mxu0 %v9054
        %9695 = vmatprep.subr.mxu0 0.0
        %9696 = vmatpush1.msra.mxu0 %v8964
        %9697 = vmatprep.subr.mxu0 0.0
        %9698 = vmatpush1.msra.mxu0 %v8962
        %9699 = vmatprep.subr.mxu0 0.0
        %9700 = vmatpush1.msra.mxu0 %v8960
        %9701 = vmatprep.subr.mxu0 0.0
        %9702 = vmatpush1.msra.mxu0 %v8958
        %9703 = vmatprep.subr.mxu0 0.0
        %9704 = vmatpush1.msra.mxu0 %v1444
        %9705 = vmatprep.subr.mxu0 0.0
        %9706 = vmatpush1.msra.mxu0 %v1439
        %9707 = vmatprep.subr.mxu0 0.0
        %9708 = vmatpush1.msra.mxu0 %v1434
        %9709 = vmatprep.subr.mxu0 0.0
        %9710 = vmatpush1.msra.mxu0 %v1429
        %9711 = vmatprep.subr.mxu0 0.0
        %9712 = vmatpush2.msra.mxu0 0.0
        %9713 = vmatprep.subr.mxu0 0.0
        %9714 = vmatpush2.msra.mxu0 0.0
        %9715 = vmatprep.subr.mxu0 0.0
        %9716 = vmatpush2.msra.mxu0 0.0
        %9717 = vmatprep.subr.mxu0 0.0
        %9718 = vmatpush2.msra.mxu0 0.0
        %9719 = vmatprep.subr.mxu0 0.0
        %9720 = vmatpush2.msra.mxu0 0.0
        %9721 = vmatprep.subr.mxu0 0.0
        %9722 = vmatpush2.msra.mxu0 0.0
        %9723 = vmatprep.subr.mxu0 0.0
        %9724 = vmatpush2.msra.mxu0 0.0
        %9725 = vmatprep.subr.mxu0 0.0
        %9726 = vmatpush2.msra.mxu0 0.0
        %9727 = vmatprep.subr.mxu0 0.0
        %9728 = vmatpush2.msra.mxu0 0.0
        %9729 = vmatprep.subr.mxu0 0.0
        %9730 = vmatpush2.msra.mxu0 0.0
        %9731 = vmatprep.subr.mxu0 0.0
        %9732 = vmatpush2.msra.mxu0 0.0
        %9733 = vmatprep.subr.mxu0 0.0
        %9734 = vmatpush2.msra.mxu0 0.0
        %9735 = vmatprep.subr.mxu0 0.0
        %9736 = vmatpush2.msra.mxu0 0.0
        %9737 = vmatprep.subr.mxu0 0.0
        %9738 = vmatpush2.msra.mxu0 0.0
        %9739 = vmatprep.subr.mxu0 0.0
        %9740 = vmatpush2.msra.mxu0 0.0
        %9741 = vmatprep.subr.mxu0 0.0
        %9742 = vmatpush2.msra.mxu0 0.0
        %9743 = vmatprep.mubr.f32.mxu0 0.0
        %9744 = vmatmul.mubr.f32.gmra.mxu0 %v8868
        %v9745 = vpop.f32.mrf.mxu0
        %v9746 = vadd.f32 0.0, %v9745
        %v9747 = vpop.f32.mrf.mxu0
        %9748 = vdwg.mxu0
        %v9749 = vld [vmem:[%s11] sm:$0xff]
        %v9750 = vld [vmem:[%s12] sm:$0x1]
        %v9752 = vlaneseq
        %v9753 = vshrl.u32 %v9752, 7
        %v9754 = vsub.s32 0, %v9753
        %v9755 = vrot.slane %v9750, %v9754
        %v9758 = vsel %vm1447, %v9256, 0
        %v9761 = vsel %vm1447, %v9326, 0
        %v9764 = vsel %vm1447, %v9396, 0
        %v9767 = vsel %vm1447, %v9466, 0
        %v9770 = vsel %vm1447, %v9536, 0
        %v9773 = vsel %vm1447, %v9606, 0
        %v9776 = vsel %vm1447, %v9676, 0
        %v9779 = vsel %vm1447, %v9746, 0
        %9781 = vmatprep.subr.mxu0 0.0
        %9782 = vmatpush1.msra.mxu0 0.0
        %9783 = vmatprep.subr.mxu0 0.0
        %9784 = vmatpush1.msra.mxu0 0.0
        %9785 = vmatprep.subr.mxu0 0.0
        %9786 = vmatpush1.msra.mxu0 0.0
        %9787 = vmatprep.subr.mxu0 0.0
        %9788 = vmatpush1.msra.mxu0 0.0
        %9789 = vmatprep.subr.mxu0 0.0
        %9790 = vmatpush1.msra.mxu0 0.0
        %9791 = vmatprep.subr.mxu0 0.0
        %9792 = vmatpush1.msra.mxu0 0.0
        %9793 = vmatprep.subr.mxu0 0.0
        %9794 = vmatpush1.msra.mxu0 0.0
        %9795 = vmatprep.subr.mxu0 0.0
        %9796 = vmatpush1.msra.mxu0 0.0
        %9797 = vmatprep.subr.mxu0 0.0
        %9798 = vmatpush1.msra.mxu0 0.0
        %9799 = vmatprep.subr.mxu0 0.0
        %9800 = vmatpush1.msra.mxu0 0.0
        %9801 = vmatprep.subr.mxu0 0.0
        %9802 = vmatpush1.msra.mxu0 0.0
        %9803 = vmatprep.subr.mxu0 0.0
        %9804 = vmatpush1.msra.mxu0 0.0
        %9805 = vmatprep.subr.mxu0 0.0
        %9806 = vmatpush1.msra.mxu0 0.0
        %9807 = vmatprep.subr.mxu0 0.0
        %9808 = vmatpush1.msra.mxu0 0.0
        %9809 = vmatprep.subr.mxu0 0.0
        %9810 = vmatpush1.msra.mxu0 0.0
        %9811 = vmatprep.subr.mxu0 0.0
        %9812 = vmatpush1.msra.mxu0 %v9749
        %9813 = vmatprep.subr.mxu0 0.0
        %9814 = vmatpush2.msra.mxu0 0.0
        %9815 = vmatprep.subr.mxu0 0.0
        %9816 = vmatpush2.msra.mxu0 0.0
        %9817 = vmatprep.subr.mxu0 0.0
        %9818 = vmatpush2.msra.mxu0 0.0
        %9819 = vmatprep.subr.mxu0 0.0
        %9820 = vmatpush2.msra.mxu0 0.0
        %9821 = vmatprep.subr.mxu0 0.0
        %9822 = vmatpush2.msra.mxu0 0.0
        %9823 = vmatprep.subr.mxu0 0.0
        %9824 = vmatpush2.msra.mxu0 0.0
        %9825 = vmatprep.subr.mxu0 0.0
        %9826 = vmatpush2.msra.mxu0 0.0
        %9827 = vmatprep.subr.mxu0 0.0
        %9828 = vmatpush2.msra.mxu0 0.0
        %9829 = vmatprep.subr.mxu0 0.0
        %9830 = vmatpush2.msra.mxu0 0.0
        %9831 = vmatprep.subr.mxu0 0.0
        %9832 = vmatpush2.msra.mxu0 0.0
        %9833 = vmatprep.subr.mxu0 0.0
        %9834 = vmatpush2.msra.mxu0 0.0
        %9835 = vmatprep.subr.mxu0 0.0
        %9836 = vmatpush2.msra.mxu0 0.0
        %9837 = vmatprep.subr.mxu0 0.0
        %9838 = vmatpush2.msra.mxu0 0.0
        %9839 = vmatprep.subr.mxu0 0.0
        %9840 = vmatpush2.msra.mxu0 0.0
        %9841 = vmatprep.subr.mxu0 0.0
        %9842 = vmatpush2.msra.mxu0 0.0
        %9843 = vmatprep.subr.mxu0 0.0
        %9844 = vmatpush2.msra.mxu0 0.0
        %9845 = vmatprep.mubr.f32.mxu0 0.0
        %9846 = vmatmul.mubr.f32.gmra.mxu0 %v9758
        %v9847 = vpop.f32.mrf.mxu0
        %v9848 = vadd.f32 %v9755, %v9847
        %v9849 = vpop.f32.mrf.mxu0
        %9850 = vmatprep.mubr.f32.mxu0 0.0
        %9851 = vmatmul.mubr.f32.gmra.mxu0 %v9761
        %v9852 = vpop.f32.mrf.mxu0
        %v9853 = vadd.f32 %v9755, %v9852
        %v9854 = vpop.f32.mrf.mxu0
        %9855 = vmatprep.mubr.f32.mxu0 0.0
        %9856 = vmatmul.mubr.f32.gmra.mxu0 %v9764
        %v9857 = vpop.f32.mrf.mxu0
        %v9858 = vadd.f32 %v9755, %v9857
        %v9859 = vpop.f32.mrf.mxu0
        %9860 = vmatprep.mubr.f32.mxu0 0.0
        %9861 = vmatmul.mubr.f32.gmra.mxu0 %v9767
        %v9862 = vpop.f32.mrf.mxu0
        %v9863 = vadd.f32 %v9755, %v9862
        %v9864 = vpop.f32.mrf.mxu0
        %9865 = vmatprep.mubr.f32.mxu0 0.0
        %9866 = vmatmul.mubr.f32.gmra.mxu0 %v9770
        %v9867 = vpop.f32.mrf.mxu0
        %v9868 = vadd.f32 %v9755, %v9867
        %v9869 = vpop.f32.mrf.mxu0
        %9870 = vmatprep.mubr.f32.mxu0 0.0
        %9871 = vmatmul.mubr.f32.gmra.mxu0 %v9773
        %v9872 = vpop.f32.mrf.mxu0
        %v9873 = vadd.f32 %v9755, %v9872
        %v9874 = vpop.f32.mrf.mxu0
        %9875 = vmatprep.mubr.f32.mxu0 0.0
        %9876 = vmatmul.mubr.f32.gmra.mxu0 %v9776
        %v9877 = vpop.f32.mrf.mxu0
        %v9878 = vadd.f32 %v9755, %v9877
        %v9879 = vpop.f32.mrf.mxu0
        %9880 = vmatprep.mubr.f32.mxu0 0.0
        %9881 = vmatmul.mubr.f32.gmra.mxu0 %v9779
        %v9882 = vpop.f32.mrf.mxu0
        %v9883 = vadd.f32 %v9755, %v9882
        %v9884 = vpop.f32.mrf.mxu0
        %9885 = vdwg.mxu0
        %v9894 = vrot.slane %v9853, 7
        %v9895 = vsel %vm6623, %v9894, %v9848
        %v9896 = vrot.slane %v9858, 6
        %v9897 = vsel %vm6626, %v9896, %v9895
        %v9898 = vrot.slane %v9863, 5
        %v9899 = vsel %vm6629, %v9898, %v9897
        %v9900 = vrot.slane %v9868, 4
        %v9901 = vsel %vm6632, %v9900, %v9899
        %v9902 = vrot.slane %v9873, 3
        %v9903 = vsel %vm6635, %v9902, %v9901
        %v9904 = vrot.slane %v9878, 2
        %v9905 = vsel %vm6638, %v9904, %v9903
        %v9906 = vrot.slane %v9883, 1
        %v9907 = vsel %vm6641, %v9906, %v9905
        %v9909 = vrot.slane %v9848, 1
        %v9910 = vsel %vm6623, %v9853, %v9909
        %v9911 = vrot.slane %v9858, 7
        %v9912 = vsel %vm6626, %v9911, %v9910
        %v9913 = vrot.slane %v9863, 6
        %v9914 = vsel %vm6629, %v9913, %v9912
        %v9915 = vrot.slane %v9868, 5
        %v9916 = vsel %vm6632, %v9915, %v9914
        %v9917 = vrot.slane %v9873, 4
        %v9918 = vsel %vm6635, %v9917, %v9916
        %v9919 = vrot.slane %v9878, 3
        %v9920 = vsel %vm6638, %v9919, %v9918
        %v9921 = vrot.slane %v9883, 2
        %v9922 = vsel %vm6641, %v9921, %v9920
        %9923 = vrot.lane.b32.xlu0 %v9922, 32
        %v9924 = vpop.permute.xlu0 %9923
        %v9926 = vrot.slane %v9848, 2
        %v9927 = vrot.slane %v9853, 1
        %v9928 = vsel %vm6623, %v9927, %v9926
        %v9929 = vsel %vm6626, %v9858, %v9928
        %v9930 = vrot.slane %v9863, 7
        %v9931 = vsel %vm6629, %v9930, %v9929
        %v9932 = vrot.slane %v9868, 6
        %v9933 = vsel %vm6632, %v9932, %v9931
        %v9934 = vrot.slane %v9873, 5
        %v9935 = vsel %vm6635, %v9934, %v9933
        %v9936 = vrot.slane %v9878, 4
        %v9937 = vsel %vm6638, %v9936, %v9935
        %v9938 = vrot.slane %v9883, 3
        %v9939 = vsel %vm6641, %v9938, %v9937
        %9940 = vrot.lane.b32.xlu0 %v9939, 64
        %v9941 = vpop.permute.xlu0 %9940
        %v9943 = vrot.slane %v9848, 3
        %v9944 = vrot.slane %v9853, 2
        %v9945 = vsel %vm6623, %v9944, %v9943
        %v9946 = vrot.slane %v9858, 1
        %v9947 = vsel %vm6626, %v9946, %v9945
        %v9948 = vsel %vm6629, %v9863, %v9947
        %v9949 = vrot.slane %v9868, 7
        %v9950 = vsel %vm6632, %v9949, %v9948
        %v9951 = vrot.slane %v9873, 6
        %v9952 = vsel %vm6635, %v9951, %v9950
        %v9953 = vrot.slane %v9878, 5
        %v9954 = vsel %vm6638, %v9953, %v9952
        %v9955 = vrot.slane %v9883, 4
        %v9956 = vsel %vm6641, %v9955, %v9954
        %9957 = vrot.lane.b32.xlu0 %v9956, 96
        %v9958 = vpop.permute.xlu0 %9957
        %v9960 = vrot.slane %v9848, 4
        %v9961 = vrot.slane %v9853, 3
        %v9962 = vsel %vm6623, %v9961, %v9960
        %v9963 = vrot.slane %v9858, 2
        %v9964 = vsel %vm6626, %v9963, %v9962
        %v9965 = vrot.slane %v9863, 1
        %v9966 = vsel %vm6629, %v9965, %v9964
        %v9967 = vsel %vm6632, %v9868, %v9966
        %v9968 = vrot.slane %v9873, 7
        %v9969 = vsel %vm6635, %v9968, %v9967
        %v9970 = vrot.slane %v9878, 6
        %v9971 = vsel %vm6638, %v9970, %v9969
        %v9972 = vrot.slane %v9883, 5
        %v9973 = vsel %vm6641, %v9972, %v9971
        %v9975 = vrot.slane %v9848, 5
        %v9976 = vrot.slane %v9853, 4
        %v9977 = vsel %vm6623, %v9976, %v9975
        %v9978 = vrot.slane %v9858, 3
        %v9979 = vsel %vm6626, %v9978, %v9977
        %v9980 = vrot.slane %v9863, 2
        %v9981 = vsel %vm6629, %v9980, %v9979
        %v9982 = vrot.slane %v9868, 1
        %v9983 = vsel %vm6632, %v9982, %v9981
        %v9984 = vsel %vm6635, %v9873, %v9983
        %v9985 = vrot.slane %v9878, 7
        %v9986 = vsel %vm6638, %v9985, %v9984
        %v9987 = vrot.slane %v9883, 6
        %v9988 = vsel %vm6641, %v9987, %v9986
        %9989 = vrot.lane.b32.xlu0 %v9988, 32
        %v9990 = vpop.permute.xlu0 %9989
        %v9992 = vrot.slane %v9848, 6
        %v9993 = vrot.slane %v9853, 5
        %v9994 = vsel %vm6623, %v9993, %v9992
        %v9995 = vrot.slane %v9858, 4
        %v9996 = vsel %vm6626, %v9995, %v9994
        %v9997 = vrot.slane %v9863, 3
        %v9998 = vsel %vm6629, %v9997, %v9996
        %v9999 = vrot.slane %v9868, 2
        %v10000 = vsel %vm6632, %v9999, %v9998
        %v10001 = vrot.slane %v9873, 1
        %v10002 = vsel %vm6635, %v10001, %v10000
        %v10003 = vsel %vm6638, %v9878, %v10002
        %v10004 = vrot.slane %v9883, 7
        %v10005 = vsel %vm6641, %v10004, %v10003
        %10006 = vrot.lane.b32.xlu0 %v10005, 64
        %v10007 = vpop.permute.xlu0 %10006
        %v10009 = vrot.slane %v9848, 7
        %v10010 = vrot.slane %v9853, 6
        %v10011 = vsel %vm6623, %v10010, %v10009
        %v10012 = vrot.slane %v9858, 5
        %v10013 = vsel %vm6626, %v10012, %v10011
        %v10014 = vrot.slane %v9863, 4
        %v10015 = vsel %vm6629, %v10014, %v10013
        %v10016 = vrot.slane %v9868, 3
        %v10017 = vsel %vm6632, %v10016, %v10015
        %v10018 = vrot.slane %v9873, 2
        %v10019 = vsel %vm6635, %v10018, %v10017
        %v10020 = vrot.slane %v9878, 1
        %v10021 = vsel %vm6638, %v10020, %v10019
        %v10022 = vsel %vm6641, %v9883, %v10021
        %10023 = vrot.lane.b32.xlu0 %v10022, 96
        %v10024 = vpop.permute.xlu0 %10023
        %v10026 = vsel %vm653, %v9907, %v9924
        %v10027 = vsel %vm8851, %v10026, %v9941
        %v10028 = vsel %vm8860, %v10027, %v9958
        %v10029 = vsel %vm653, %v9973, %v9990
        %v10030 = vsel %vm8851, %v10029, %v10007
        %v10031 = vsel %vm8860, %v10030, %v10024
        %10032 = vst [vmem:[%s566] sm:$0xff] %v10028
        %10033 = vst [vmem:[%s566 + $0x8] sm:$0xff] %v10031
        %s10034 = sand.u32 %s330, 1
        %s10035 = scalar_lea.sflag [#allocation4], %s10034
        %s10036 = sand.u32 %s330, 1
        %s10037 = smul.addr %s10036, 16
        %s10038 = scalar_lea.vmem [#allocation11], %s10037
        // Predicated region
        $region93: #{tpu_custom_call.1} parent=71 // pred_check
          %p10039 = pneg %p340
        $region94: #{tpu_custom_call.1} parent=71 // pred_check_branch
          %10041 = sbr.rel (%p10039) target = $region96
        $region95: #{tpu_custom_call.1} parent=71 // pred_region
          %s10043 = ssub.s32 256, 256
          %10044 = vsyncadd %s10035, %s10043
          %s10045 = smul.addr %s34, 2
          %s10046 = smul.addr %s10045, 128
          %s10047 = scalar_lea.hbm %s13, %s10046
          %s10049 = sshll.u32 %s10038, 4
          %s10050 = int_to_ptr.vmem [resolvable:$true] %s10049
          %10052 = dma.vmem_to_hbm [thread:$0]  %s10050, 256, %s10047, %s10035
        $region96: #{tpu_custom_call.1} parent=71 // pred_fallthru
          _
      $region72: #{tpu_custom_call.1} parent=5 // pred_fallthru
        _
      %p10053 = scmp.le.s32.totalorder 2, %s29
      // Predicated region
      $region97: #{tpu_custom_call.1} parent=5 // pred_check
        %p10054 = pneg %p10053
      $region98: #{tpu_custom_call.1} parent=5 // pred_check_branch
        %10056 = sbr.rel (%p10054) target = $region100
      $region99: #{tpu_custom_call.1} parent=5 // pred_region
        %s10057 = ssub.s32 %s29, 2
        // Predicated region
        $region101: #{tpu_custom_call.1} parent=99 // pred_check
          %p10058 = pneg %p346
        $region102: #{tpu_custom_call.1} parent=99 // pred_check_branch
          %10060 = sbr.rel (%p10058) target = $region104
        $region103: #{tpu_custom_call.1} parent=99 // pred_region
          %s10061 = sand.u32 %s331, 1
          %s10062 = scalar_lea.sflag [#allocation4], %s10061
          %s10063 = sand.u32 %s331, 1
          %s10064 = smul.addr %s10063, 16
          %s10065 = scalar_lea.vmem [#allocation11], %s10064
          %10066 = dma.done %s10062, 256
        $region104: #{tpu_custom_call.1} parent=99 // pred_fallthru
          _
      $region100: #{tpu_custom_call.1} parent=5 // pred_fallthru
        _
    $region6: #{tpu_custom_call.1} parent=1 // loop_footer
      %s33 = sadd.s32 1, %s29
    $region7: #{tpu_custom_call.1} parent=1 // loop_footer_branch
      %28 = sbr.rel target = $region3
    $region8: #{tpu_custom_call.1} parent=1 // loop_exit
      _
    %10067 = vsyncpa [#allocation3], 1
    %s10068 = scalar_lea.sflag [#allocation3], 1
    %10069 = vsyncpa %s10068, 1
    %10070 = vsyncpa [#allocation6], 1
    %s10071 = scalar_lea.sflag [#allocation6], 1
    %10072 = vsyncpa %s10071, 1
    %10073 = vsyncpa [#allocation9], 1
    %10074 = vsyncpa [#allocation4], 1
    %s10075 = scalar_lea.sflag [#allocation4], 1
    %10076 = vsyncpa %s10075, 1

</llo_original>
